<compile_context>
chip_gen: v7x
topology: tpu7x:2x2x1
jax: 0.10.0
libtpu: 0.0.40
codegen_flags: <defaults>
</compile_context>

<pallas_src>
import jax
import jax.numpy as jnp
from jax import lax
from jax.experimental import pallas as pl
from jax.experimental.pallas import tpu as pltpu


# MXU matmul input dtype.  bfloat16 roughly doubles MXU throughput on
# v6e/v7x; all accumulation, GroupNorm statistics and gate math stay in
# float32.  Set to jnp.float32 for <1e-3 agreement with the f32 reference.
MM_DTYPE = jnp.bfloat16


def _make_kernel(B, T, H, W, Cin, F, K, G):
    PAD = (K - 1) // 2
    C = Cin + F                  # conv input channels (x ++ h)
    C4 = 4 * F                   # conv output channels (i, f, c, o gates)
    CG = C4 // G                 # channels per GroupNorm group
    HW = H * W
    N_NORM = float(HW * CG)      # elements per (sample, group)

    def sigmoid(z):
        # exp runs on the EUP; pl.reciprocal keeps the divide off the VALU.
        # (pl.reciprocal(..., approx=True) is cheaper still if the extra
        #  approximation error is acceptable.)
        return pl.reciprocal(1.0 + jnp.exp(-z))

    def kernel(x_ref, h0_ref, c0_ref, w_ref, b_ref, gamma_ref, beta_ref,
               gmat_ref, gmatt_ref, ci_ref, cf_ref, co_ref,
               hseq_ref, hfin_ref, cfin_ref, pad_scr):
        t = pl.program_id(1)

        @pl.when(t == 0)
        def _():
            # Seed the recurrent carry for this batch element and zero the
            # conv halo once (only the interior is rewritten afterwards).
            hfin_ref[...] = h0_ref[...]
            cfin_ref[...] = c0_ref[...]
            pad_scr[...] = jnp.zeros_like(pad_scr)

        x = x_ref[0, 0]                          # (H, W, Cin)  f32
        hx = hfin_ref[0]                         # (H, W, F)    f32 carry
        cx = cfin_ref[0].reshape(HW, F)          # (HW, F)      f32 carry

        # ---- conv(cat([x, h])): padded slab + K*K deep MXU matmuls --------
        pad_scr[PAD:PAD + H, PAD:PAD + W, 0:Cin] = x
        pad_scr[PAD:PAD + H, PAD:PAD + W, Cin:C] = hx

        z = None
        for ky in range(K):
            for kx in range(K):
                tap = pad_scr[ky:ky + H, kx:kx + W, :]        # (H, W, C)
                lhs = tap.reshape(HW, C).astype(MM_DTYPE)     # (HW, C) bf16
                part = jnp.dot(lhs, w_ref[ky * K + kx],
                               preferred_element_type=jnp.float32)
                z = part if z is None else z + part           # (HW, 4F) f32

        # ---- GroupNorm: single stats pass, conv-bias/gamma/beta folded ----
        b = b_ref[...]                                   # (1, 4F)
        s1 = jnp.sum(z, axis=0, keepdims=True)           # (1, 4F)
        s2 = jnp.sum(z * z, axis=0, keepdims=True)       # (1, 4F)
        # moments of (z + conv_bias) derived from moments of z -> the bias is
        # never added to the full slab.
        sy1 = s1 + float(HW) * b
        sy2 = s2 + 2.0 * b * s1 + float(HW) * b * b
        gmean = jnp.dot(sy1, gmat_ref[...],
                        preferred_element_type=jnp.float32) * (1.0 / N_NORM)
        gms = jnp.dot(sy2, gmat_ref[...],
                      preferred_element_type=jnp.float32) * (1.0 / N_NORM)
        grstd = lax.rsqrt(gms - gmean * gmean + 1e-5)             # (1, G)
        mean_c = jnp.dot(gmean, gmatt_ref[...],
                         preferred_element_type=jnp.float32)      # (1, 4F)
        rstd_c = jnp.dot(grstd, gmatt_ref[...],
                         preferred_element_type=jnp.float32)      # (1, 4F)
        scale_c = rstd_c * gamma_ref[...]
        shift_c = beta_ref[...] + (b - mean_c) * scale_c
        grs = z * scale_c + shift_c        # single lane-dense (HW, 128) pass

        # ---- peephole LSTM gates ------------------------------------------
        i_g = grs[:, 0:F]
        f_g = grs[:, F:2 * F]
        c_g = grs[:, 2 * F:3 * F]
        o_g = grs[:, 3 * F:4 * F]
        c = jnp.tanh(c_g)
        i = sigmoid(i_g + ci_ref[...] * cx)
        f = sigmoid(f_g + cf_ref[...] * cx)
        o = sigmoid(o_g + co_ref[...] * c)   # module: co * candidate cell
        cy = f * cx + i * c
        hy = o * jnp.tanh(cy)

        hy3 = hy.reshape(H, W, F)
        hseq_ref[0, 0] = hy3
        hfin_ref[0] = hy3                    # carry for step t + 1
        cfin_ref[0] = cy.reshape(H, W, F)

    return kernel


def conv_lstm_pallas(x_seq, h0, c0, w_packed, bias, gamma, beta, ci, cf, co):
    """x_seq (B,T,H,W,Cin) f32; states (B,H,W,F) f32; peepholes (H*W,F) f32;
    w_packed (K*K, Cin+F, 4F) in MM_DTYPE; bias/gamma/beta (1, 4F) f32."""
    B, T, H, W, Cin = x_seq.shape
    F = h0.shape[-1]
    KK, C, C4 = w_packed.shape
    K = int(round(KK ** 0.5))
    G = F // 4
    CG = C4 // G

    # Group-membership matrices used to reduce per-channel sums to per-group
    # stats (and broadcast them back) with tiny MXU matmuls.
    gmat = (jnp.arange(C4)[:, None] // CG
            == jnp.arange(G)[None, :]).astype(jnp.float32)    # (4F, G)
    gmatt = gmat.T                                            # (G, 4F)

    kernel = _make_kernel(B, T, H, W, Cin, F, K, G)

    grid_spec = pltpu.PrefetchScalarGridSpec(
        num_scalar_prefetch=0,
        grid=(B, T),            # batch (parallel) x time (serial recurrence)
        in_specs=[
            pl.BlockSpec((1, 1, H, W, Cin), lambda b, t: (b, t, 0, 0, 0)),
            pl.BlockSpec((1, H, W, F), lambda b, t: (b, 0, 0, 0)),   # h0
            pl.BlockSpec((1, H, W, F), lambda b, t: (b, 0, 0, 0)),   # c0
            pl.BlockSpec((KK, C, C4), lambda b, t: (0, 0, 0)),       # weights
            pl.BlockSpec((1, C4), lambda b, t: (0, 0)),              # bias
            pl.BlockSpec((1, C4), lambda b, t: (0, 0)),              # gamma
            pl.BlockSpec((1, C4), lambda b, t: (0, 0)),              # beta
            pl.BlockSpec((C4, G), lambda b, t: (0, 0)),              # gmat
            pl.BlockSpec((G, C4), lambda b, t: (0, 0)),              # gmat.T
            pl.BlockSpec((H * W, F), lambda b, t: (0, 0)),           # ci
            pl.BlockSpec((H * W, F), lambda b, t: (0, 0)),           # cf
            pl.BlockSpec((H * W, F), lambda b, t: (0, 0)),           # co
        ],
        out_specs=[
            pl.BlockSpec((1, 1, H, W, F), lambda b, t: (b, t, 0, 0, 0)),  # h_seq
            pl.BlockSpec((1, H, W, F), lambda b, t: (b, 0, 0, 0)),        # h_T
            pl.BlockSpec((1, H, W, F), lambda b, t: (b, 0, 0, 0)),        # c_T
        ],
        scratch_shapes=[
            # zero-padded [x ++ h] conv-input slab (halo written once per b)
            pltpu.VMEM((H + K - 1, W + K - 1, C), jnp.float32),
        ],
    )

    out_shapes = (
        jax.ShapeDtypeStruct((B, T, H, W, F), jnp.float32),
        jax.ShapeDtypeStruct((B, H, W, F), jnp.float32),
        jax.ShapeDtypeStruct((B, H, W, F), jnp.float32),
    )

    return pl.pallas_call(
        kernel,
        out_shape=out_shapes,
        grid_spec=grid_spec,
        # NOTE(v7x): when scaling H/W/F, re-budget the resident per-step
        # working set against the 64 MiB VMEM and set vmem_limit_bytes here.
        compiler_params=pltpu.CompilerParams(
            dimension_semantics=("parallel", "arbitrary")),
    )(x_seq, h0, c0, w_packed, bias, gamma, beta, gmat, gmatt, ci, cf, co)


def conv_lstm_forward(inputs, hidden, params):
    """PyTorch-convention wrapper: inputs (B,Cin,T,H,W) -> (B,F,T,H,W), (hT,cT)."""
    # TODO(synk): the module's hidden=None / inputs=None torch.randn().cuda()
    # initialization paths have no in-kernel equivalent; callers must pass
    # explicit tensors (as the test below does).
    wx, wh, bias, gamma, beta, ci, cf, co = params
    h0, c0 = hidden
    Cin = inputs.shape[1]
    K = wx.shape[0]
    F = h0.shape[1]
    C4 = 4 * F

    x_seq = jnp.transpose(inputs, (0, 2, 3, 4, 1)).astype(jnp.float32)
    h0k = jnp.transpose(h0, (0, 2, 3, 1)).astype(jnp.float32)
    c0k = jnp.transpose(c0, (0, 2, 3, 1)).astype(jnp.float32)
    H, W = h0k.shape[1:3]
    cik = jnp.transpose(ci, (1, 2, 0)).reshape(H * W, F).astype(jnp.float32)
    cfk = jnp.transpose(cf, (1, 2, 0)).reshape(H * W, F).astype(jnp.float32)
    cok = jnp.transpose(co, (1, 2, 0)).reshape(H * W, F).astype(jnp.float32)
    # Pack conv weights once: (K, K, Cin+F, 4F) -> (K*K, Cin+F, 4F), cast to
    # the MXU input dtype (f32 accumulation happens inside the kernel).
    w_packed = jnp.concatenate([wx, wh], axis=2).reshape(K * K, Cin + F, C4)
    w_packed = w_packed.astype(MM_DTYPE)

    hseq, hT, cT = conv_lstm_pallas(
        x_seq, h0k, c0k, w_packed,
        bias.reshape(1, C4).astype(jnp.float32),
        gamma.reshape(1, C4).astype(jnp.float32),
        beta.reshape(1, C4).astype(jnp.float32),
        cik, cfk, cok)

    out = jnp.transpose(hseq, (0, 4, 1, 2, 3))      # (B, F, T, H, W)
    hT = jnp.transpose(hT, (0, 3, 1, 2))
    cT = jnp.transpose(cT, (0, 3, 1, 2))
    return out, (hT, cT)


def _ref_forward(inputs, h0, c0, w_oihw, bias, gamma, beta, ci, cf, co, groups):
    # Pure-JAX f32 reference in PyTorch NCHW convention (lax.conv + GroupNorm).
    K = w_oihw.shape[-1]
    pad = (K - 1) // 2

    def gn(x):
        B, C, H, W = x.shape
        xg = x.reshape(B, groups, C // groups, H, W)
        mean = xg.mean(axis=(2, 3, 4), keepdims=True)
        var = xg.var(axis=(2, 3, 4), keepdims=True)       # biased, like torch
        xg = (xg - mean) / jnp.sqrt(var + 1e-5)
        x = xg.reshape(B, C, H, W)
        return x * gamma[None, :, None, None] + beta[None, :, None, None]

    def sig(z):
        return 1.0 / (1.0 + jnp.exp(-z))

    def step(carry, x):
        hx, cx = carry
        inp = jnp.concatenate([x, hx], axis=1)
        grs = lax.conv_general_dilated(
            inp, w_oihw, (1, 1), [(pad, pad), (pad, pad)],
            dimension_numbers=('NCHW', 'OIHW', 'NCHW'))
        grs = grs + bias[None, :, None, None]
        grs = gn(grs)
        i_g, f_g, c_g, o_g = jnp.split(grs, 4, axis=1)
        i = sig(i_g + ci[None] * cx)
        f = sig(f_g + cf[None] * cx)
        c = jnp.tanh(c_g)
        o = sig(o_g + co[None] * c)
        cy = f * cx + i * c
        hy = o * jnp.tanh(cy)
        return (hy, cy), hy

    x_t = jnp.moveaxis(inputs, 2, 0)                     # (T, B, Cin, H, W)
    (hT, cT), hseq = lax.scan(step, (h0, c0), x_t)
    return jnp.moveaxis(hseq, 0, 2), hT, cT              # (B, F, T, H, W)


if __name__ == "__main__":
    B, Cin, T, H, W = 2, 4, 8, 16, 16
    F, K = 32, 3
    G = F // 4
    C4 = 4 * F

    key = jax.random.PRNGKey(0)
    ks = jax.random.split(key, 8)
    inputs = jax.random.normal(ks[0], (B, Cin, T, H, W), jnp.float32)
    # hidden provided explicitly (module's hidden=None path just draws randn).
    h0 = jax.random.normal(ks[1], (B, F, H, W), jnp.float32)
    c0 = jax.random.normal(ks[2], (B, F, H, W), jnp.float32)
    # Deterministic synthetic Conv2d(in=Cin+F, out=4F, k=K) params.
    w_kkio = jax.random.normal(ks[3], (K, K, Cin + F, C4), jnp.float32) * 0.05
    bias = jax.random.normal(ks[4], (C4,), jnp.float32) * 0.05
    gamma = jnp.ones((C4,), jnp.float32)     # GroupNorm default affine init
    beta = jnp.zeros((C4,), jnp.float32)
    ci = jax.random.normal(ks[5], (F, H, W), jnp.float32)
    cf = jax.random.normal(ks[6], (F, H, W), jnp.float32)
    co = jax.random.normal(ks[7], (F, H, W), jnp.float32)

    wx = w_kkio[:, :, :Cin, :]     # weights acting on x channels
    wh = w_kkio[:, :, Cin:, :]     # weights acting on hidden channels
    params = (wx, wh, bias, gamma, beta, ci, cf, co)

    out, (hT, cT) = conv_lstm_forward(inputs, (h0, c0), params)
    jax.block_until_ready(out)

    w_oihw = jnp.transpose(w_kkio, (3, 2, 0, 1))
    ref_out, ref_hT, ref_cT = _ref_forward(inputs, h0, c0, w_oihw, bias,
                                           gamma, beta, ci, cf, co, G)
    err = max(float(jnp.max(jnp.abs(out - ref_out))),
              float(jnp.max(jnp.abs(hT - ref_hT))),
              float(jnp.max(jnp.abs(cT - ref_cT))))
    # Tolerance sized for bfloat16 MXU inputs (eps ~ 7.8e-3) carried through
    # an 8-step recurrence vs. a pure-f32 reference; with MM_DTYPE=float32
    # the max abs error is < 1e-3.
    assert err < 5e-2, f"mismatch vs reference: max abs err = {err}"
    print("KERNEL_OK")
</pallas_src>

<mosaic_0001>
module attributes {stable_mosaic.version = 11 : i64} {
  func.func @kernel(%arg0: i32, %arg1: i32, %arg2: memref<1x1x16x16x4xf32, #tpu.memory_space<vmem>>, %arg3: memref<1x16x16x32xf32, #tpu.memory_space<vmem>>, %arg4: memref<1x16x16x32xf32, #tpu.memory_space<vmem>>, %arg5: memref<9x36x128xbf16, #tpu.memory_space<vmem>>, %arg6: memref<1x128xf32, #tpu.memory_space<vmem>>, %arg7: memref<1x128xf32, #tpu.memory_space<vmem>>, %arg8: memref<1x128xf32, #tpu.memory_space<vmem>>, %arg9: memref<128x8xf32, #tpu.memory_space<vmem>>, %arg10: memref<8x128xf32, #tpu.memory_space<vmem>>, %arg11: memref<256x32xf32, #tpu.memory_space<vmem>>, %arg12: memref<256x32xf32, #tpu.memory_space<vmem>>, %arg13: memref<256x32xf32, #tpu.memory_space<vmem>>, %arg14: memref<1x1x16x16x32xf32, #tpu.memory_space<vmem>>, %arg15: memref<1x16x16x32xf32, #tpu.memory_space<vmem>>, %arg16: memref<1x16x16x32xf32, #tpu.memory_space<vmem>>, %arg17: memref<18x18x36xf32, #tpu.memory_space<vmem>>) attributes {dimension_semantics = [#tpu.dimension_semantics<parallel>, #tpu.dimension_semantics<arbitrary>], iteration_bounds = array<i64: 2, 8>, scalar_prefetch = 0 : i64, scratch_operands = 1 : i64, tpu.core_type = #tpu.core_type<tc>, window_params = [{transform_indices = @transform_0, window_bounds = array<i64: 1, 1, 16, 16, 4>}, {transform_indices = @transform_1, window_bounds = array<i64: 1, 16, 16, 32>}, {transform_indices = @transform_2, window_bounds = array<i64: 1, 16, 16, 32>}, {pipeline_mode = #tpu.pipeline_mode<synchronous>, transform_indices = @transform_3, window_bounds = array<i64: 9, 36, 128>}, {pipeline_mode = #tpu.pipeline_mode<synchronous>, transform_indices = @transform_4, window_bounds = array<i64: 1, 128>}, {pipeline_mode = #tpu.pipeline_mode<synchronous>, transform_indices = @transform_5, window_bounds = array<i64: 1, 128>}, {pipeline_mode = #tpu.pipeline_mode<synchronous>, transform_indices = @transform_6, window_bounds = array<i64: 1, 128>}, {pipeline_mode = #tpu.pipeline_mode<synchronous>, transform_indices = @transform_7, window_bounds = array<i64: 128, 8>}, {pipeline_mode = #tpu.pipeline_mode<synchronous>, transform_indices = @transform_8, window_bounds = array<i64: 8, 128>}, {pipeline_mode = #tpu.pipeline_mode<synchronous>, transform_indices = @transform_9, window_bounds = array<i64: 256, 32>}, {pipeline_mode = #tpu.pipeline_mode<synchronous>, transform_indices = @transform_10, window_bounds = array<i64: 256, 32>}, {pipeline_mode = #tpu.pipeline_mode<synchronous>, transform_indices = @transform_11, window_bounds = array<i64: 256, 32>}, {transform_indices = @transform_12, window_bounds = array<i64: 1, 1, 16, 16, 32>}, {transform_indices = @transform_13, window_bounds = array<i64: 1, 16, 16, 32>}, {transform_indices = @transform_14, window_bounds = array<i64: 1, 16, 16, 32>}]} {
    %c0_i32 = arith.constant 0 : i32
    %0 = arith.cmpi eq, %arg1, %c0_i32 : i32
    %1 = arith.extui %0 : i1 to i32
    %c0_i32_0 = arith.constant 0 : i32
    %2 = arith.cmpi ne, %1, %c0_i32_0 : i32
    scf.if %2 {
      %c0_124 = arith.constant 0 : index
      %c0_125 = arith.constant 0 : index
      %c0_126 = arith.constant 0 : index
      %c0_127 = arith.constant 0 : index
      %166 = vector.load %arg3[%c0_124, %c0_125, %c0_126, %c0_127] : memref<1x16x16x32xf32, #tpu.memory_space<vmem>>, vector<1x16x16x32xf32>
      %c0_128 = arith.constant 0 : index
      %c0_129 = arith.constant 0 : index
      %c0_130 = arith.constant 0 : index
      %c0_131 = arith.constant 0 : index
      %167 = vector.load %arg15[%c0_128, %c0_129, %c0_130, %c0_131] : memref<1x16x16x32xf32, #tpu.memory_space<vmem>>, vector<1x16x16x32xf32>
      tpu.vector_store %arg15[%c0_128, %c0_129, %c0_130, %c0_131], %166 {strides = array<i32>} : memref<1x16x16x32xf32, #tpu.memory_space<vmem>>, vector<1x16x16x32xf32>,
      %c0_132 = arith.constant 0 : index
      %c0_133 = arith.constant 0 : index
      %c0_134 = arith.constant 0 : index
      %c0_135 = arith.constant 0 : index
      %168 = vector.load %arg4[%c0_132, %c0_133, %c0_134, %c0_135] : memref<1x16x16x32xf32, #tpu.memory_space<vmem>>, vector<1x16x16x32xf32>
      %c0_136 = arith.constant 0 : index
      %c0_137 = arith.constant 0 : index
      %c0_138 = arith.constant 0 : index
      %c0_139 = arith.constant 0 : index
      %169 = vector.load %arg16[%c0_136, %c0_137, %c0_138, %c0_139] : memref<1x16x16x32xf32, #tpu.memory_space<vmem>>, vector<1x16x16x32xf32>
      tpu.vector_store %arg16[%c0_136, %c0_137, %c0_138, %c0_139], %168 {strides = array<i32>} : memref<1x16x16x32xf32, #tpu.memory_space<vmem>>, vector<1x16x16x32xf32>,
      %cst_140 = arith.constant 0.000000e+00 : f32
      %170 = vector.broadcast %cst_140 : f32 to vector<18x18x36xf32>
      %c0_141 = arith.constant 0 : index
      %c0_142 = arith.constant 0 : index
      %c0_143 = arith.constant 0 : index
      %171 = vector.load %arg17[%c0_141, %c0_142, %c0_143] : memref<18x18x36xf32, #tpu.memory_space<vmem>>, vector<18x18x36xf32>
      tpu.vector_store %arg17[%c0_141, %c0_142, %c0_143], %170 {strides = array<i32>} : memref<18x18x36xf32, #tpu.memory_space<vmem>>, vector<18x18x36xf32>,
    } else {
    }
    %c0 = arith.constant 0 : index
    %c0_1 = arith.constant 0 : index
    %c0_2 = arith.constant 0 : index
    %c0_3 = arith.constant 0 : index
    %c0_4 = arith.constant 0 : index
    %3 = vector.load %arg2[%c0, %c0_1, %c0_2, %c0_3, %c0_4] : memref<1x1x16x16x4xf32, #tpu.memory_space<vmem>>, vector<1x1x16x16x4xf32>
    %4 = vector.shape_cast %3 : vector<1x1x16x16x4xf32> to vector<16x16x4xf32>
    %c0_5 = arith.constant 0 : index
    %c0_6 = arith.constant 0 : index
    %c0_7 = arith.constant 0 : index
    %c0_8 = arith.constant 0 : index
    %5 = vector.load %arg15[%c0_5, %c0_6, %c0_7, %c0_8] : memref<1x16x16x32xf32, #tpu.memory_space<vmem>>, vector<1x16x16x32xf32>
    %6 = vector.shape_cast %5 : vector<1x16x16x32xf32> to vector<16x16x32xf32>
    %c0_9 = arith.constant 0 : index
    %c0_10 = arith.constant 0 : index
    %c0_11 = arith.constant 0 : index
    %c0_12 = arith.constant 0 : index
    %7 = vector.load %arg16[%c0_9, %c0_10, %c0_11, %c0_12] : memref<1x16x16x32xf32, #tpu.memory_space<vmem>>, vector<1x16x16x32xf32>
    %8 = vector.shape_cast %7 : vector<1x16x16x32xf32> to vector<16x16x32xf32>
    %9 = vector.shape_cast %8 : vector<16x16x32xf32> to vector<256x32xf32>
    %c1 = arith.constant 1 : index
    %c1_13 = arith.constant 1 : index
    %c0_14 = arith.constant 0 : index
    %10 = vector.load %arg17[%c1, %c1_13, %c0_14] : memref<18x18x36xf32, #tpu.memory_space<vmem>>, vector<16x16x4xf32>
    tpu.vector_store %arg17[%c1, %c1_13, %c0_14], %4 {strides = array<i32>} : memref<18x18x36xf32, #tpu.memory_space<vmem>>, vector<16x16x4xf32>,
    %c1_15 = arith.constant 1 : index
    %c1_16 = arith.constant 1 : index
    %c4 = arith.constant 4 : index
    %11 = vector.load %arg17[%c1_15, %c1_16, %c4] : memref<18x18x36xf32, #tpu.memory_space<vmem>>, vector<16x16x32xf32>
    tpu.vector_store %arg17[%c1_15, %c1_16, %c4], %6 {strides = array<i32>} : memref<18x18x36xf32, #tpu.memory_space<vmem>>, vector<16x16x32xf32>,
    %c0_17 = arith.constant 0 : index
    %c0_18 = arith.constant 0 : index
    %c0_19 = arith.constant 0 : index
    %12 = vector.load %arg17[%c0_17, %c0_18, %c0_19] : memref<18x18x36xf32, #tpu.memory_space<vmem>>, vector<16x16x36xf32>
    %13 = vector.shape_cast %12 : vector<16x16x36xf32> to vector<256x36xf32>
    %14 = arith.truncf %13 : vector<256x36xf32> to vector<256x36xbf16>
    %c0_20 = arith.constant 0 : index
    %c0_21 = arith.constant 0 : index
    %c0_22 = arith.constant 0 : index
    %15 = vector.load %arg5[%c0_20, %c0_21, %c0_22] : memref<9x36x128xbf16, #tpu.memory_space<vmem>>, vector<1x36x128xbf16>
    %16 = vector.shape_cast %15 : vector<1x36x128xbf16> to vector<36x128xbf16>
    %cst = arith.constant dense<0.000000e+00> : vector<256x128xf32>
    %17 = tpu.matmul %14, %16, %cst {dimension_numbers = #tpu.dot_dimension_numbers<[1], [0], [0], [1], [0, 0, 1, 1], [], []>} : vector<256x36xbf16>, vector<36x128xbf16>, vector<256x128xf32> -> vector<256x128xf32>
    %c0_23 = arith.constant 0 : index
    %c1_24 = arith.constant 1 : index
    %c0_25 = arith.constant 0 : index
    %18 = vector.load %arg17[%c0_23, %c1_24, %c0_25] : memref<18x18x36xf32, #tpu.memory_space<vmem>>, vector<16x16x36xf32>
    %19 = vector.shape_cast %18 : vector<16x16x36xf32> to vector<256x36xf32>
    %20 = arith.truncf %19 : vector<256x36xf32> to vector<256x36xbf16>
    %c1_26 = arith.constant 1 : index
    %c0_27 = arith.constant 0 : index
    %c0_28 = arith.constant 0 : index
    %21 = vector.load %arg5[%c1_26, %c0_27, %c0_28] : memref<9x36x128xbf16, #tpu.memory_space<vmem>>, vector<1x36x128xbf16>
    %22 = vector.shape_cast %21 : vector<1x36x128xbf16> to vector<36x128xbf16>
    %cst_29 = arith.constant dense<0.000000e+00> : vector<256x128xf32>
    %23 = tpu.matmul %20, %22, %cst_29 {dimension_numbers = #tpu.dot_dimension_numbers<[1], [0], [0], [1], [0, 0, 1, 1], [], []>} : vector<256x36xbf16>, vector<36x128xbf16>, vector<256x128xf32> -> vector<256x128xf32>
    %24 = arith.addf %17, %23 : vector<256x128xf32>
    %c0_30 = arith.constant 0 : index
    %c2 = arith.constant 2 : index
    %c0_31 = arith.constant 0 : index
    %25 = vector.load %arg17[%c0_30, %c2, %c0_31] : memref<18x18x36xf32, #tpu.memory_space<vmem>>, vector<16x16x36xf32>
    %26 = vector.shape_cast %25 : vector<16x16x36xf32> to vector<256x36xf32>
    %27 = arith.truncf %26 : vector<256x36xf32> to vector<256x36xbf16>
    %c2_32 = arith.constant 2 : index
    %c0_33 = arith.constant 0 : index
    %c0_34 = arith.constant 0 : index
    %28 = vector.load %arg5[%c2_32, %c0_33, %c0_34] : memref<9x36x128xbf16, #tpu.memory_space<vmem>>, vector<1x36x128xbf16>
    %29 = vector.shape_cast %28 : vector<1x36x128xbf16> to vector<36x128xbf16>
    %cst_35 = arith.constant dense<0.000000e+00> : vector<256x128xf32>
    %30 = tpu.matmul %27, %29, %cst_35 {dimension_numbers = #tpu.dot_dimension_numbers<[1], [0], [0], [1], [0, 0, 1, 1], [], []>} : vector<256x36xbf16>, vector<36x128xbf16>, vector<256x128xf32> -> vector<256x128xf32>
    %31 = arith.addf %24, %30 : vector<256x128xf32>
    %c1_36 = arith.constant 1 : index
    %c0_37 = arith.constant 0 : index
    %c0_38 = arith.constant 0 : index
    %32 = vector.load %arg17[%c1_36, %c0_37, %c0_38] : memref<18x18x36xf32, #tpu.memory_space<vmem>>, vector<16x16x36xf32>
    %33 = vector.shape_cast %32 : vector<16x16x36xf32> to vector<256x36xf32>
    %34 = arith.truncf %33 : vector<256x36xf32> to vector<256x36xbf16>
    %c3 = arith.constant 3 : index
    %c0_39 = arith.constant 0 : index
    %c0_40 = arith.constant 0 : index
    %35 = vector.load %arg5[%c3, %c0_39, %c0_40] : memref<9x36x128xbf16, #tpu.memory_space<vmem>>, vector<1x36x128xbf16>
    %36 = vector.shape_cast %35 : vector<1x36x128xbf16> to vector<36x128xbf16>
    %cst_41 = arith.constant dense<0.000000e+00> : vector<256x128xf32>
    %37 = tpu.matmul %34, %36, %cst_41 {dimension_numbers = #tpu.dot_dimension_numbers<[1], [0], [0], [1], [0, 0, 1, 1], [], []>} : vector<256x36xbf16>, vector<36x128xbf16>, vector<256x128xf32> -> vector<256x128xf32>
    %38 = arith.addf %31, %37 : vector<256x128xf32>
    %c1_42 = arith.constant 1 : index
    %c1_43 = arith.constant 1 : index
    %c0_44 = arith.constant 0 : index
    %39 = vector.load %arg17[%c1_42, %c1_43, %c0_44] : memref<18x18x36xf32, #tpu.memory_space<vmem>>, vector<16x16x36xf32>
    %40 = vector.shape_cast %39 : vector<16x16x36xf32> to vector<256x36xf32>
    %41 = arith.truncf %40 : vector<256x36xf32> to vector<256x36xbf16>
    %c4_45 = arith.constant 4 : index
    %c0_46 = arith.constant 0 : index
    %c0_47 = arith.constant 0 : index
    %42 = vector.load %arg5[%c4_45, %c0_46, %c0_47] : memref<9x36x128xbf16, #tpu.memory_space<vmem>>, vector<1x36x128xbf16>
    %43 = vector.shape_cast %42 : vector<1x36x128xbf16> to vector<36x128xbf16>
    %cst_48 = arith.constant dense<0.000000e+00> : vector<256x128xf32>
    %44 = tpu.matmul %41, %43, %cst_48 {dimension_numbers = #tpu.dot_dimension_numbers<[1], [0], [0], [1], [0, 0, 1, 1], [], []>} : vector<256x36xbf16>, vector<36x128xbf16>, vector<256x128xf32> -> vector<256x128xf32>
    %45 = arith.addf %38, %44 : vector<256x128xf32>
    %c1_49 = arith.constant 1 : index
    %c2_50 = arith.constant 2 : index
    %c0_51 = arith.constant 0 : index
    %46 = vector.load %arg17[%c1_49, %c2_50, %c0_51] : memref<18x18x36xf32, #tpu.memory_space<vmem>>, vector<16x16x36xf32>
    %47 = vector.shape_cast %46 : vector<16x16x36xf32> to vector<256x36xf32>
    %48 = arith.truncf %47 : vector<256x36xf32> to vector<256x36xbf16>
    %c5 = arith.constant 5 : index
    %c0_52 = arith.constant 0 : index
    %c0_53 = arith.constant 0 : index
    %49 = vector.load %arg5[%c5, %c0_52, %c0_53] : memref<9x36x128xbf16, #tpu.memory_space<vmem>>, vector<1x36x128xbf16>
    %50 = vector.shape_cast %49 : vector<1x36x128xbf16> to vector<36x128xbf16>
    %cst_54 = arith.constant dense<0.000000e+00> : vector<256x128xf32>
    %51 = tpu.matmul %48, %50, %cst_54 {dimension_numbers = #tpu.dot_dimension_numbers<[1], [0], [0], [1], [0, 0, 1, 1], [], []>} : vector<256x36xbf16>, vector<36x128xbf16>, vector<256x128xf32> -> vector<256x128xf32>
    %52 = arith.addf %45, %51 : vector<256x128xf32>
    %c2_55 = arith.constant 2 : index
    %c0_56 = arith.constant 0 : index
    %c0_57 = arith.constant 0 : index
    %53 = vector.load %arg17[%c2_55, %c0_56, %c0_57] : memref<18x18x36xf32, #tpu.memory_space<vmem>>, vector<16x16x36xf32>
    %54 = vector.shape_cast %53 : vector<16x16x36xf32> to vector<256x36xf32>
    %55 = arith.truncf %54 : vector<256x36xf32> to vector<256x36xbf16>
    %c6 = arith.constant 6 : index
    %c0_58 = arith.constant 0 : index
    %c0_59 = arith.constant 0 : index
    %56 = vector.load %arg5[%c6, %c0_58, %c0_59] : memref<9x36x128xbf16, #tpu.memory_space<vmem>>, vector<1x36x128xbf16>
    %57 = vector.shape_cast %56 : vector<1x36x128xbf16> to vector<36x128xbf16>
    %cst_60 = arith.constant dense<0.000000e+00> : vector<256x128xf32>
    %58 = tpu.matmul %55, %57, %cst_60 {dimension_numbers = #tpu.dot_dimension_numbers<[1], [0], [0], [1], [0, 0, 1, 1], [], []>} : vector<256x36xbf16>, vector<36x128xbf16>, vector<256x128xf32> -> vector<256x128xf32>
    %59 = arith.addf %52, %58 : vector<256x128xf32>
    %c2_61 = arith.constant 2 : index
    %c1_62 = arith.constant 1 : index
    %c0_63 = arith.constant 0 : index
    %60 = vector.load %arg17[%c2_61, %c1_62, %c0_63] : memref<18x18x36xf32, #tpu.memory_space<vmem>>, vector<16x16x36xf32>
    %61 = vector.shape_cast %60 : vector<16x16x36xf32> to vector<256x36xf32>
    %62 = arith.truncf %61 : vector<256x36xf32> to vector<256x36xbf16>
    %c7 = arith.constant 7 : index
    %c0_64 = arith.constant 0 : index
    %c0_65 = arith.constant 0 : index
    %63 = vector.load %arg5[%c7, %c0_64, %c0_65] : memref<9x36x128xbf16, #tpu.memory_space<vmem>>, vector<1x36x128xbf16>
    %64 = vector.shape_cast %63 : vector<1x36x128xbf16> to vector<36x128xbf16>
    %cst_66 = arith.constant dense<0.000000e+00> : vector<256x128xf32>
    %65 = tpu.matmul %62, %64, %cst_66 {dimension_numbers = #tpu.dot_dimension_numbers<[1], [0], [0], [1], [0, 0, 1, 1], [], []>} : vector<256x36xbf16>, vector<36x128xbf16>, vector<256x128xf32> -> vector<256x128xf32>
    %66 = arith.addf %59, %65 : vector<256x128xf32>
    %c2_67 = arith.constant 2 : index
    %c2_68 = arith.constant 2 : index
    %c0_69 = arith.constant 0 : index
    %67 = vector.load %arg17[%c2_67, %c2_68, %c0_69] : memref<18x18x36xf32, #tpu.memory_space<vmem>>, vector<16x16x36xf32>
    %68 = vector.shape_cast %67 : vector<16x16x36xf32> to vector<256x36xf32>
    %69 = arith.truncf %68 : vector<256x36xf32> to vector<256x36xbf16>
    %c8 = arith.constant 8 : index
    %c0_70 = arith.constant 0 : index
    %c0_71 = arith.constant 0 : index
    %70 = vector.load %arg5[%c8, %c0_70, %c0_71] : memref<9x36x128xbf16, #tpu.memory_space<vmem>>, vector<1x36x128xbf16>
    %71 = vector.shape_cast %70 : vector<1x36x128xbf16> to vector<36x128xbf16>
    %cst_72 = arith.constant dense<0.000000e+00> : vector<256x128xf32>
    %72 = tpu.matmul %69, %71, %cst_72 {dimension_numbers = #tpu.dot_dimension_numbers<[1], [0], [0], [1], [0, 0, 1, 1], [], []>} : vector<256x36xbf16>, vector<36x128xbf16>, vector<256x128xf32> -> vector<256x128xf32>
    %73 = arith.addf %66, %72 : vector<256x128xf32>
    %c0_73 = arith.constant 0 : index
    %c0_74 = arith.constant 0 : index
    %74 = vector.load %arg6[%c0_73, %c0_74] : memref<1x128xf32, #tpu.memory_space<vmem>>, vector<1x128xf32>
    %cst_75 = arith.constant dense<0.000000e+00> : vector<128xf32>
    %75 = vector.multi_reduction <add>, %73, %cst_75 [0] : vector<256x128xf32> to vector<128xf32>
    %76 = vector.shape_cast %75 : vector<128xf32> to vector<1x128xf32>
    %77 = arith.mulf %73, %73 : vector<256x128xf32>
    %cst_76 = arith.constant dense<0.000000e+00> : vector<128xf32>
    %78 = vector.multi_reduction <add>, %77, %cst_76 [0] : vector<256x128xf32> to vector<128xf32>
    %79 = vector.shape_cast %78 : vector<128xf32> to vector<1x128xf32>
    %cst_77 = arith.constant 2.560000e+02 : f32
    %80 = vector.broadcast %cst_77 : f32 to vector<1x128xf32>
    %81 = arith.mulf %80, %74 : vector<1x128xf32>
    %82 = arith.addf %76, %81 : vector<1x128xf32>
    %cst_78 = arith.constant 2.000000e+00 : f32
    %83 = vector.broadcast %cst_78 : f32 to vector<1x128xf32>
    %84 = arith.mulf %83, %74 : vector<1x128xf32>
    %85 = arith.mulf %84, %76 : vector<1x128xf32>
    %86 = arith.addf %79, %85 : vector<1x128xf32>
    %cst_79 = arith.constant 2.560000e+02 : f32
    %87 = vector.broadcast %cst_79 : f32 to vector<1x128xf32>
    %88 = arith.mulf %87, %74 : vector<1x128xf32>
    %89 = arith.mulf %88, %74 : vector<1x128xf32>
    %90 = arith.addf %86, %89 : vector<1x128xf32>
    %c0_80 = arith.constant 0 : index
    %c0_81 = arith.constant 0 : index
    %91 = vector.load %arg9[%c0_80, %c0_81] : memref<128x8xf32, #tpu.memory_space<vmem>>, vector<128x8xf32>
    %cst_82 = arith.constant dense<0.000000e+00> : vector<1x8xf32>
    %92 = tpu.matmul %82, %91, %cst_82 {dimension_numbers = #tpu.dot_dimension_numbers<[1], [0], [0], [1], [0, 0, 1, 1], [], []>} : vector<1x128xf32>, vector<128x8xf32>, vector<1x8xf32> -> vector<1x8xf32>
    %cst_83 = arith.constant 2.44140625E-4 : f32
    %93 = vector.broadcast %cst_83 : f32 to vector<1x8xf32>
    %94 = arith.mulf %92, %93 : vector<1x8xf32>
    %c0_84 = arith.constant 0 : index
    %c0_85 = arith.constant 0 : index
    %95 = vector.load %arg9[%c0_84, %c0_85] : memref<128x8xf32, #tpu.memory_space<vmem>>, vector<128x8xf32>
    %cst_86 = arith.constant dense<0.000000e+00> : vector<1x8xf32>
    %96 = tpu.matmul %90, %95, %cst_86 {dimension_numbers = #tpu.dot_dimension_numbers<[1], [0], [0], [1], [0, 0, 1, 1], [], []>} : vector<1x128xf32>, vector<128x8xf32>, vector<1x8xf32> -> vector<1x8xf32>
    %cst_87 = arith.constant 2.44140625E-4 : f32
    %97 = vector.broadcast %cst_87 : f32 to vector<1x8xf32>
    %98 = arith.mulf %96, %97 : vector<1x8xf32>
    %99 = arith.mulf %94, %94 : vector<1x8xf32>
    %100 = arith.subf %98, %99 : vector<1x8xf32>
    %cst_88 = arith.constant 9.99999974E-6 : f32
    %101 = vector.broadcast %cst_88 : f32 to vector<1x8xf32>
    %102 = arith.addf %100, %101 : vector<1x8xf32>
    %103 = math.rsqrt %102 : vector<1x8xf32>
    %c0_89 = arith.constant 0 : index
    %c0_90 = arith.constant 0 : index
    %104 = vector.load %arg10[%c0_89, %c0_90] : memref<8x128xf32, #tpu.memory_space<vmem>>, vector<8x128xf32>
    %cst_91 = arith.constant dense<0.000000e+00> : vector<1x128xf32>
    %105 = tpu.matmul %94, %104, %cst_91 {dimension_numbers = #tpu.dot_dimension_numbers<[1], [0], [0], [1], [0, 0, 1, 1], [], []>} : vector<1x8xf32>, vector<8x128xf32>, vector<1x128xf32> -> vector<1x128xf32>
    %c0_92 = arith.constant 0 : index
    %c0_93 = arith.constant 0 : index
    %106 = vector.load %arg10[%c0_92, %c0_93] : memref<8x128xf32, #tpu.memory_space<vmem>>, vector<8x128xf32>
    %cst_94 = arith.constant dense<0.000000e+00> : vector<1x128xf32>
    %107 = tpu.matmul %103, %106, %cst_94 {dimension_numbers = #tpu.dot_dimension_numbers<[1], [0], [0], [1], [0, 0, 1, 1], [], []>} : vector<1x8xf32>, vector<8x128xf32>, vector<1x128xf32> -> vector<1x128xf32>
    %c0_95 = arith.constant 0 : index
    %c0_96 = arith.constant 0 : index
    %108 = vector.load %arg7[%c0_95, %c0_96] : memref<1x128xf32, #tpu.memory_space<vmem>>, vector<1x128xf32>
    %109 = arith.mulf %107, %108 : vector<1x128xf32>
    %c0_97 = arith.constant 0 : index
    %c0_98 = arith.constant 0 : index
    %110 = vector.load %arg8[%c0_97, %c0_98] : memref<1x128xf32, #tpu.memory_space<vmem>>, vector<1x128xf32>
    %111 = arith.subf %74, %105 : vector<1x128xf32>
    %112 = arith.mulf %111, %109 : vector<1x128xf32>
    %113 = arith.addf %110, %112 : vector<1x128xf32>
    %114 = vector.broadcast %109 : vector<1x128xf32> to vector<256x128xf32>
    %115 = arith.mulf %73, %114 : vector<256x128xf32>
    %116 = vector.broadcast %113 : vector<1x128xf32> to vector<256x128xf32>
    %117 = arith.addf %115, %116 : vector<256x128xf32>
    %118 = vector.extract_strided_slice %117 {offsets = [0, 0], sizes = [256, 32], strides = [1, 1]} : vector<256x128xf32> to vector<256x32xf32>
    %119 = vector.extract_strided_slice %117 {offsets = [0, 32], sizes = [256, 32], strides = [1, 1]} : vector<256x128xf32> to vector<256x32xf32>
    %120 = vector.extract_strided_slice %117 {offsets = [0, 64], sizes = [256, 32], strides = [1, 1]} : vector<256x128xf32> to vector<256x32xf32>
    %121 = vector.extract_strided_slice %117 {offsets = [0, 96], sizes = [256, 32], strides = [1, 1]} : vector<256x128xf32> to vector<256x32xf32>
    %122 = math.tanh %120 : vector<256x32xf32>
    %c0_99 = arith.constant 0 : index
    %c0_100 = arith.constant 0 : index
    %123 = vector.load %arg11[%c0_99, %c0_100] : memref<256x32xf32, #tpu.memory_space<vmem>>, vector<256x32xf32>
    %124 = arith.mulf %123, %9 : vector<256x32xf32>
    %125 = arith.addf %118, %124 : vector<256x32xf32>
    %cst_101 = arith.constant 0.000000e+00 : f32
    %126 = vector.broadcast %cst_101 : f32 to vector<256x32xf32>
    %127 = arith.subf %126, %125 : vector<256x32xf32>
    %128 = math.exp %127 : vector<256x32xf32>
    %cst_102 = arith.constant 1.000000e+00 : f32
    %129 = vector.broadcast %cst_102 : f32 to vector<256x32xf32>
    %130 = arith.addf %129, %128 : vector<256x32xf32>
    %131 = tpu.reciprocal %130 : vector<256x32xf32> -> vector<256x32xf32>
    %c0_103 = arith.constant 0 : index
    %c0_104 = arith.constant 0 : index
    %132 = vector.load %arg12[%c0_103, %c0_104] : memref<256x32xf32, #tpu.memory_space<vmem>>, vector<256x32xf32>
    %133 = arith.mulf %132, %9 : vector<256x32xf32>
    %134 = arith.addf %119, %133 : vector<256x32xf32>
    %cst_105 = arith.constant 0.000000e+00 : f32
    %135 = vector.broadcast %cst_105 : f32 to vector<256x32xf32>
    %136 = arith.subf %135, %134 : vector<256x32xf32>
    %137 = math.exp %136 : vector<256x32xf32>
    %cst_106 = arith.constant 1.000000e+00 : f32
    %138 = vector.broadcast %cst_106 : f32 to vector<256x32xf32>
    %139 = arith.addf %138, %137 : vector<256x32xf32>
    %140 = tpu.reciprocal %139 : vector<256x32xf32> -> vector<256x32xf32>
    %c0_107 = arith.constant 0 : index
    %c0_108 = arith.constant 0 : index
    %141 = vector.load %arg13[%c0_107, %c0_108] : memref<256x32xf32, #tpu.memory_space<vmem>>, vector<256x32xf32>
    %142 = arith.mulf %141, %122 : vector<256x32xf32>
    %143 = arith.addf %121, %142 : vector<256x32xf32>
    %cst_109 = arith.constant 0.000000e+00 : f32
    %144 = vector.broadcast %cst_109 : f32 to vector<256x32xf32>
    %145 = arith.subf %144, %143 : vector<256x32xf32>
    %146 = math.exp %145 : vector<256x32xf32>
    %cst_110 = arith.constant 1.000000e+00 : f32
    %147 = vector.broadcast %cst_110 : f32 to vector<256x32xf32>
    %148 = arith.addf %147, %146 : vector<256x32xf32>
    %149 = tpu.reciprocal %148 : vector<256x32xf32> -> vector<256x32xf32>
    %150 = arith.mulf %140, %9 : vector<256x32xf32>
    %151 = arith.mulf %131, %122 : vector<256x32xf32>
    %152 = arith.addf %150, %151 : vector<256x32xf32>
    %153 = math.tanh %152 : vector<256x32xf32>
    %154 = arith.mulf %149, %153 : vector<256x32xf32>
    %155 = vector.shape_cast %154 : vector<256x32xf32> to vector<16x16x32xf32>
    %c0_111 = arith.constant 0 : index
    %c0_112 = arith.constant 0 : index
    %c0_113 = arith.constant 0 : index
    %c0_114 = arith.constant 0 : index
    %c0_115 = arith.constant 0 : index
    %156 = vector.load %arg14[%c0_111, %c0_112, %c0_113, %c0_114, %c0_115] : memref<1x1x16x16x32xf32, #tpu.memory_space<vmem>>, vector<1x1x16x16x32xf32>
    %157 = vector.shape_cast %156 : vector<1x1x16x16x32xf32> to vector<16x16x32xf32>
    %158 = vector.shape_cast %155 : vector<16x16x32xf32> to vector<1x1x16x16x32xf32>
    tpu.vector_store %arg14[%c0_111, %c0_112, %c0_113, %c0_114, %c0_115], %158 {strides = array<i32>} : memref<1x1x16x16x32xf32, #tpu.memory_space<vmem>>, vector<1x1x16x16x32xf32>,
    %c0_116 = arith.constant 0 : index
    %c0_117 = arith.constant 0 : index
    %c0_118 = arith.constant 0 : index
    %c0_119 = arith.constant 0 : index
    %159 = vector.load %arg15[%c0_116, %c0_117, %c0_118, %c0_119] : memref<1x16x16x32xf32, #tpu.memory_space<vmem>>, vector<1x16x16x32xf32>
    %160 = vector.shape_cast %159 : vector<1x16x16x32xf32> to vector<16x16x32xf32>
    %161 = vector.shape_cast %155 : vector<16x16x32xf32> to vector<1x16x16x32xf32>
    tpu.vector_store %arg15[%c0_116, %c0_117, %c0_118, %c0_119], %161 {strides = array<i32>} : memref<1x16x16x32xf32, #tpu.memory_space<vmem>>, vector<1x16x16x32xf32>,
    %162 = vector.shape_cast %152 : vector<256x32xf32> to vector<16x16x32xf32>
    %c0_120 = arith.constant 0 : index
    %c0_121 = arith.constant 0 : index
    %c0_122 = arith.constant 0 : index
    %c0_123 = arith.constant 0 : index
    %163 = vector.load %arg16[%c0_120, %c0_121, %c0_122, %c0_123] : memref<1x16x16x32xf32, #tpu.memory_space<vmem>>, vector<1x16x16x32xf32>
    %164 = vector.shape_cast %163 : vector<1x16x16x32xf32> to vector<16x16x32xf32>
    %165 = vector.shape_cast %162 : vector<16x16x32xf32> to vector<1x16x16x32xf32>
    tpu.vector_store %arg16[%c0_120, %c0_121, %c0_122, %c0_123], %165 {strides = array<i32>} : memref<1x16x16x32xf32, #tpu.memory_space<vmem>>, vector<1x16x16x32xf32>,
    return
  }
  func.func @transform_0(%arg0: i32, %arg1: i32) -> (i32, i32, i32, i32, i32) {
    %c0_i32 = arith.constant 0 : i32
    %c0_i32_0 = arith.constant 0 : i32
    %c0_i32_1 = arith.constant 0 : i32
    %c0_i32_2 = arith.constant 0 : i32
    return %arg0, %arg1, %c0_i32, %c0_i32_0, %c0_i32_1 : i32, i32, i32, i32, i32
  }
  func.func @transform_1(%arg0: i32, %arg1: i32) -> (i32, i32, i32, i32) {
    %c0_i32 = arith.constant 0 : i32
    %c0_i32_0 = arith.constant 0 : i32
    %c0_i32_1 = arith.constant 0 : i32
    %c0_i32_2 = arith.constant 0 : i32
    return %arg0, %c0_i32, %c0_i32_0, %c0_i32_1 : i32, i32, i32, i32
  }
  func.func @transform_2(%arg0: i32, %arg1: i32) -> (i32, i32, i32, i32) {
    %c0_i32 = arith.constant 0 : i32
    %c0_i32_0 = arith.constant 0 : i32
    %c0_i32_1 = arith.constant 0 : i32
    %c0_i32_2 = arith.constant 0 : i32
    return %arg0, %c0_i32, %c0_i32_0, %c0_i32_1 : i32, i32, i32, i32
  }
  func.func @transform_3(%arg0: i32, %arg1: i32) -> (i32, i32, i32) {
    %c0_i32 = arith.constant 0 : i32
    %c0_i32_0 = arith.constant 0 : i32
    %c0_i32_1 = arith.constant 0 : i32
    %c0_i32_2 = arith.constant 0 : i32
    return %c0_i32, %c0_i32_0, %c0_i32_1 : i32, i32, i32
  }
  func.func @transform_4(%arg0: i32, %arg1: i32) -> (i32, i32) {
    %c0_i32 = arith.constant 0 : i32
    %c0_i32_0 = arith.constant 0 : i32
    %c0_i32_1 = arith.constant 0 : i32
    return %c0_i32, %c0_i32_0 : i32, i32
  }
  func.func @transform_5(%arg0: i32, %arg1: i32) -> (i32, i32) {
    %c0_i32 = arith.constant 0 : i32
    %c0_i32_0 = arith.constant 0 : i32
    %c0_i32_1 = arith.constant 0 : i32
    return %c0_i32, %c0_i32_0 : i32, i32
  }
  func.func @transform_6(%arg0: i32, %arg1: i32) -> (i32, i32) {
    %c0_i32 = arith.constant 0 : i32
    %c0_i32_0 = arith.constant 0 : i32
    %c0_i32_1 = arith.constant 0 : i32
    return %c0_i32, %c0_i32_0 : i32, i32
  }
  func.func @transform_7(%arg0: i32, %arg1: i32) -> (i32, i32) {
    %c0_i32 = arith.constant 0 : i32
    %c0_i32_0 = arith.constant 0 : i32
    %c0_i32_1 = arith.constant 0 : i32
    return %c0_i32, %c0_i32_0 : i32, i32
  }
  func.func @transform_8(%arg0: i32, %arg1: i32) -> (i32, i32) {
    %c0_i32 = arith.constant 0 : i32
    %c0_i32_0 = arith.constant 0 : i32
    %c0_i32_1 = arith.constant 0 : i32
    return %c0_i32, %c0_i32_0 : i32, i32
  }
  func.func @transform_9(%arg0: i32, %arg1: i32) -> (i32, i32) {
    %c0_i32 = arith.constant 0 : i32
    %c0_i32_0 = arith.constant 0 : i32
    %c0_i32_1 = arith.constant 0 : i32
    return %c0_i32, %c0_i32_0 : i32, i32
  }
  func.func @transform_10(%arg0: i32, %arg1: i32) -> (i32, i32) {
    %c0_i32 = arith.constant 0 : i32
    %c0_i32_0 = arith.constant 0 : i32
    %c0_i32_1 = arith.constant 0 : i32
    return %c0_i32, %c0_i32_0 : i32, i32
  }
  func.func @transform_11(%arg0: i32, %arg1: i32) -> (i32, i32) {
    %c0_i32 = arith.constant 0 : i32
    %c0_i32_0 = arith.constant 0 : i32
    %c0_i32_1 = arith.constant 0 : i32
    return %c0_i32, %c0_i32_0 : i32, i32
  }
  func.func @transform_12(%arg0: i32, %arg1: i32) -> (i32, i32, i32, i32, i32) {
    %c0_i32 = arith.constant 0 : i32
    %c0_i32_0 = arith.constant 0 : i32
    %c0_i32_1 = arith.constant 0 : i32
    %c0_i32_2 = arith.constant 0 : i32
    return %arg0, %arg1, %c0_i32, %c0_i32_0, %c0_i32_1 : i32, i32, i32, i32, i32
  }
  func.func @transform_13(%arg0: i32, %arg1: i32) -> (i32, i32, i32, i32) {
    %c0_i32 = arith.constant 0 : i32
    %c0_i32_0 = arith.constant 0 : i32
    %c0_i32_1 = arith.constant 0 : i32
    %c0_i32_2 = arith.constant 0 : i32
    return %arg0, %c0_i32, %c0_i32_0, %c0_i32_1 : i32, i32, i32, i32
  }
  func.func @transform_14(%arg0: i32, %arg1: i32) -> (i32, i32, i32, i32) {
    %c0_i32 = arith.constant 0 : i32
    %c0_i32_0 = arith.constant 0 : i32
    %c0_i32_1 = arith.constant 0 : i32
    %c0_i32_2 = arith.constant 0 : i32
    return %arg0, %c0_i32, %c0_i32_0, %c0_i32_1 : i32, i32, i32, i32
  }
}

</mosaic_0001>

<llo_original>
// kernel: tpu_custom_call.1
$region0: #{tpu_custom_call.1}
  #allocation0 [shape = 'u32[]', space=smem, size = 0x4, offset = 0x4, fixed_abs, tag = 'smem constant byte address 0x4 - core index']
  #allocation1 [shape = 'u32[144,128]{1,0:T(1,128)}', space=vmem, size = 0x12000, scoped, tag = 'internal scratch']
  #allocation2 [shape = 'f32[18,18,36]{2,1,0:T(8,128)}', space=vmem, size = 0x36000, scoped, tag = 'scratch operand']
  %s0 = inlined_call_operand.vmem [shape: f32[2,8,16,16,4], index: 0, kind: input, shape index: {}]
  %s1 = inlined_call_operand.vmem [shape: f32[2,16,16,32], index: 1, kind: input, shape index: {}]
  %s2 = inlined_call_operand.vmem [shape: f32[2,16,16,32], index: 2, kind: input, shape index: {}]
  %s3 = inlined_call_operand.vmem [shape: bf16[9,36,128], index: 3, kind: input, shape index: {}]
  %s4 = inlined_call_operand.vmem [shape: f32[1,128], index: 4, kind: input, shape index: {}]
  %s5 = inlined_call_operand.vmem [shape: f32[1,128], index: 5, kind: input, shape index: {}]
  %s6 = inlined_call_operand.vmem [shape: f32[1,128], index: 6, kind: input, shape index: {}]
  %s7 = inlined_call_operand.vmem [shape: f32[128,8], index: 7, kind: input, shape index: {}]
  %s8 = inlined_call_operand.vmem [shape: f32[8,128], index: 8, kind: input, shape index: {}]
  %s9 = inlined_call_operand.vmem [shape: f32[256,32], index: 9, kind: input, shape index: {}]
  %s10 = inlined_call_operand.vmem [shape: f32[256,32], index: 10, kind: input, shape index: {}]
  %s11 = inlined_call_operand.vmem [shape: f32[256,32], index: 11, kind: input, shape index: {}]
  %s12 = inlined_call_operand.hbm [shape: f32[2,8,16,16,32], index: 12, kind: output, shape index: {0}]
  %s13 = inlined_call_operand.hbm [shape: f32[2,16,16,32], index: 13, kind: output, shape index: {1}]
  %s14 = inlined_call_operand.hbm [shape: f32[2,16,16,32], index: 14, kind: output, shape index: {2}]
  %15 = xla_tuple %s12, %s13, %s14
  %s16 = sld [smem:[#allocation0]]
  $region101: #{tpu_custom_call.1} parent=0
    _
  %s18 = ssub.s32 1, %s16
  %s19 = scalar_select 0, %s18, %s16
  $region1: #{tpu_custom_call.1} parent=0
    #allocation3 [shape = 'u8[262144]{0}', space=vmem, size = 0x40000, scoped, tag = 'output window, operand 0']
    #allocation4 [shape = 's32[2]{0}', space=sflag, size = 0x8, scoped, tag = 'scoped memory for tpu_custom_call.1']
    #allocation5 [shape = 'u8[262144]{0}', space=vmem, size = 0x40000, scoped, tag = 'output window, operand 1']
    #allocation6 [shape = 's32[2]{0}', space=sflag, size = 0x8, scoped, tag = 'scoped memory for tpu_custom_call.1']
    #allocation7 [shape = 'u8[262144]{0}', space=vmem, size = 0x40000, scoped, tag = 'output window, operand 2']
    %20 = vsyncpa [#allocation4], 0
    %s21 = scalar_lea.sflag [#allocation4], 1
    %22 = vsyncpa %s21, 0
    %23 = vsyncpa [#allocation6], 0
    %s24 = scalar_lea.sflag [#allocation6], 1
    %25 = vsyncpa %s24, 0
    loop: start=0, step=1, limit=18
    $region2: #{tpu_custom_call.1} parent=1 // loop_pre_header
      _
    $region3: #{tpu_custom_call.1} parent=1 // loop_header
      %s27 = sphi 0, %s31
      %p28 = scmp.ge.s32.totalorder %s27, 18
      %s34 = sphi 0, %s46
      %s35 = sphi 0, %s42
      %s36 = sphi 0, %s34
      %s37 = sphi 0, %s35
      %s38 = sphi 0, %s36
      %s39 = sphi 0, %s37
      %s51 = sphi 0, %s53
      %s54 = sphi 0, %s51
      %s55 = sphi 0, %s54
      %s71 = sphi 0, %s55
      %s77 = sphi 0, %s79
      %s80 = sphi 0, %s77
      %s81 = sphi 0, %s80
      %s97 = sphi 0, %s81
      %s103 = sphi 0, %s105
      %s106 = sphi 0, %s103
      %s107 = sphi 0, %s106
      %s123 = sphi 0, %s107
      %s127 = sphi 0, %s127
      %s129 = sphi 0, %s127
      %s130 = sphi 0, %s129
      %s144 = sphi 0, %s130
      %s148 = sphi 0, %s148
      %s150 = sphi 0, %s148
      %s151 = sphi 0, %s150
      %s165 = sphi 0, %s151
      %s169 = sphi 0, %s169
      %s171 = sphi 0, %s169
      %s172 = sphi 0, %s171
      %s186 = sphi 0, %s172
      %s190 = sphi 0, %s190
      %s192 = sphi 0, %s190
      %s193 = sphi 0, %s192
      %s207 = sphi 0, %s193
      %s211 = sphi 0, %s211
      %s213 = sphi 0, %s211
      %s214 = sphi 0, %s213
      %s228 = sphi 0, %s214
      %s232 = sphi 0, %s232
      %s234 = sphi 0, %s232
      %s235 = sphi 0, %s234
      %s249 = sphi 0, %s235
      %s253 = sphi 0, %s253
      %s255 = sphi 0, %s253
      %s256 = sphi 0, %s255
      %s270 = sphi 0, %s256
      %s274 = sphi 0, %s274
      %s276 = sphi 0, %s274
      %s277 = sphi 0, %s276
      %s291 = sphi 0, %s277
      %s295 = sphi 0, %s295
      %s297 = sphi 0, %s295
      %s298 = sphi 0, %s297
      %s312 = sphi 0, %s298
      %s320 = sphi 0, %s322
      %s323 = sphi 0, %s320
      %s324 = sphi 0, %s323
      %s340 = sphi 0, %s324
      %s346 = sphi 0, %s348
      %s349 = sphi 0, %s346
      %s350 = sphi 0, %s349
      %s366 = sphi 0, %s350
      %s372 = sphi 0, %s374
      %s375 = sphi 0, %s372
      %s376 = sphi 0, %s375
      %s392 = sphi 0, %s376
    $region4: #{tpu_custom_call.1} parent=1 // loop_header_branch
      %30 = sbr.rel (%p28) target = $region8
    $region5: #{tpu_custom_call.1} parent=1 // loop_body
      %s32 = ssub.s32 %s27, 1
      %s33 = ssub.s32 %s27, 2
      %s40 = sadd.s32 1, %s35
      %p41 = scmp.ge.s32.totalorder %s40, 8
      %s42 = scalar_select %p41, 0, %s40
      %s43 = sadd.s32 1, %s34
      %s44 = scalar_select %p41, %s43, %s34
      %p45 = scmp.ge.s32.totalorder %s44, 2
      %s46 = scalar_select %p45, 0, %s44
      %s47 = ssub.s32 %s34, %s46
      %s48 = ssub.s32 %s35, %s42
      %s49 = sor.u32 %s47, %s48
      %p50 = scmp.eq.s32.totalorder %s49, 0
      %s52 = sadd.s32 %s51, 1
      %s53 = scalar_select %p50, %s51, %s52
      %p56 = pneg %p50
      %p57 = scmp.eq.s32.totalorder %s27, 15
      %p58 = por %p56, %p57
      %p59 = scmp.ne.s32.totalorder %s51, %s54
      %p60 = scmp.eq.s32.totalorder %s27, 0
      %p61 = por %p59, %p60
      %p62 = scmp.ne.s32.totalorder %s51, %s54
      %p63 = scmp.eq.s32.totalorder %s32, 15
      %p64 = por %p62, %p63
      %p65 = scmp.ne.s32.totalorder %s54, %s55
      %p66 = scmp.eq.s32.totalorder %s32, 0
      %p67 = por %p65, %p66
      %p68 = scmp.ne.s32.totalorder %s54, %s55
      %p69 = scmp.eq.s32.totalorder %s33, 15
      %p70 = por %p68, %p69
      %p72 = scmp.ne.s32.totalorder %s55, %s71
      %p73 = scmp.eq.s32.totalorder %s33, 0
      %p74 = por %p72, %p73
      %s75 = ssub.s32 %s34, %s46
      %p76 = scmp.eq.s32.totalorder %s75, 0
      %s78 = sadd.s32 %s77, 1
      %s79 = scalar_select %p76, %s77, %s78
      %p82 = pneg %p76
      %p83 = scmp.eq.s32.totalorder %s27, 15
      %p84 = por %p82, %p83
      %p85 = scmp.ne.s32.totalorder %s77, %s80
      %p86 = scmp.eq.s32.totalorder %s27, 0
      %p87 = por %p85, %p86
      %p88 = scmp.ne.s32.totalorder %s77, %s80
      %p89 = scmp.eq.s32.totalorder %s32, 15
      %p90 = por %p88, %p89
      %p91 = scmp.ne.s32.totalorder %s80, %s81
      %p92 = scmp.eq.s32.totalorder %s32, 0
      %p93 = por %p91, %p92
      %p94 = scmp.ne.s32.totalorder %s80, %s81
      %p95 = scmp.eq.s32.totalorder %s33, 15
      %p96 = por %p94, %p95
      %p98 = scmp.ne.s32.totalorder %s81, %s97
      %p99 = scmp.eq.s32.totalorder %s33, 0
      %p100 = por %p98, %p99
      %s101 = ssub.s32 %s34, %s46
      %p102 = scmp.eq.s32.totalorder %s101, 0
      %s104 = sadd.s32 %s103, 1
      %s105 = scalar_select %p102, %s103, %s104
      %p108 = pneg %p102
      %p109 = scmp.eq.s32.totalorder %s27, 15
      %p110 = por %p108, %p109
      %p111 = scmp.ne.s32.totalorder %s103, %s106
      %p112 = scmp.eq.s32.totalorder %s27, 0
      %p113 = por %p111, %p112
      %p114 = scmp.ne.s32.totalorder %s103, %s106
      %p115 = scmp.eq.s32.totalorder %s32, 15
      %p116 = por %p114, %p115
      %p117 = scmp.ne.s32.totalorder %s106, %s107
      %p118 = scmp.eq.s32.totalorder %s32, 0
      %p119 = por %p117, %p118
      %p120 = scmp.ne.s32.totalorder %s106, %s107
      %p121 = scmp.eq.s32.totalorder %s33, 15
      %p122 = por %p120, %p121
      %p124 = scmp.ne.s32.totalorder %s107, %s123
      %p125 = scmp.eq.s32.totalorder %s33, 0
      %p126 = por %p124, %p125
      %s128 = sadd.s32 %s127, 1
      %p131 = scmp.eq.s32.totalorder %s27, 15
      %p132 = scmp.ne.s32.totalorder %s127, %s129
      %p133 = scmp.eq.s32.totalorder %s27, 0
      %p134 = por %p132, %p133
      %p135 = scmp.ne.s32.totalorder %s127, %s129
      %p136 = scmp.eq.s32.totalorder %s32, 15
      %p137 = por %p135, %p136
      %p138 = scmp.ne.s32.totalorder %s129, %s130
      %p139 = scmp.eq.s32.totalorder %s32, 0
      %p140 = por %p138, %p139
      %p141 = scmp.ne.s32.totalorder %s129, %s130
      %p142 = scmp.eq.s32.totalorder %s33, 15
      %p143 = por %p141, %p142
      %p145 = scmp.ne.s32.totalorder %s130, %s144
      %p146 = scmp.eq.s32.totalorder %s33, 0
      %p147 = por %p145, %p146
      %s149 = sadd.s32 %s148, 1
      %p152 = scmp.eq.s32.totalorder %s27, 15
      %p153 = scmp.ne.s32.totalorder %s148, %s150
      %p154 = scmp.eq.s32.totalorder %s27, 0
      %p155 = por %p153, %p154
      %p156 = scmp.ne.s32.totalorder %s148, %s150
      %p157 = scmp.eq.s32.totalorder %s32, 15
      %p158 = por %p156, %p157
      %p159 = scmp.ne.s32.totalorder %s150, %s151
      %p160 = scmp.eq.s32.totalorder %s32, 0
      %p161 = por %p159, %p160
      %p162 = scmp.ne.s32.totalorder %s150, %s151
      %p163 = scmp.eq.s32.totalorder %s33, 15
      %p164 = por %p162, %p163
      %p166 = scmp.ne.s32.totalorder %s151, %s165
      %p167 = scmp.eq.s32.totalorder %s33, 0
      %p168 = por %p166, %p167
      %s170 = sadd.s32 %s169, 1
      %p173 = scmp.eq.s32.totalorder %s27, 15
      %p174 = scmp.ne.s32.totalorder %s169, %s171
      %p175 = scmp.eq.s32.totalorder %s27, 0
      %p176 = por %p174, %p175
      %p177 = scmp.ne.s32.totalorder %s169, %s171
      %p178 = scmp.eq.s32.totalorder %s32, 15
      %p179 = por %p177, %p178
      %p180 = scmp.ne.s32.totalorder %s171, %s172
      %p181 = scmp.eq.s32.totalorder %s32, 0
      %p182 = por %p180, %p181
      %p183 = scmp.ne.s32.totalorder %s171, %s172
      %p184 = scmp.eq.s32.totalorder %s33, 15
      %p185 = por %p183, %p184
      %p187 = scmp.ne.s32.totalorder %s172, %s186
      %p188 = scmp.eq.s32.totalorder %s33, 0
      %p189 = por %p187, %p188
      %s191 = sadd.s32 %s190, 1
      %p194 = scmp.eq.s32.totalorder %s27, 15
      %p195 = scmp.ne.s32.totalorder %s190, %s192
      %p196 = scmp.eq.s32.totalorder %s27, 0
      %p197 = por %p195, %p196
      %p198 = scmp.ne.s32.totalorder %s190, %s192
      %p199 = scmp.eq.s32.totalorder %s32, 15
      %p200 = por %p198, %p199
      %p201 = scmp.ne.s32.totalorder %s192, %s193
      %p202 = scmp.eq.s32.totalorder %s32, 0
      %p203 = por %p201, %p202
      %p204 = scmp.ne.s32.totalorder %s192, %s193
      %p205 = scmp.eq.s32.totalorder %s33, 15
      %p206 = por %p204, %p205
      %p208 = scmp.ne.s32.totalorder %s193, %s207
      %p209 = scmp.eq.s32.totalorder %s33, 0
      %p210 = por %p208, %p209
      %s212 = sadd.s32 %s211, 1
      %p215 = scmp.eq.s32.totalorder %s27, 15
      %p216 = scmp.ne.s32.totalorder %s211, %s213
      %p217 = scmp.eq.s32.totalorder %s27, 0
      %p218 = por %p216, %p217
      %p219 = scmp.ne.s32.totalorder %s211, %s213
      %p220 = scmp.eq.s32.totalorder %s32, 15
      %p221 = por %p219, %p220
      %p222 = scmp.ne.s32.totalorder %s213, %s214
      %p223 = scmp.eq.s32.totalorder %s32, 0
      %p224 = por %p222, %p223
      %p225 = scmp.ne.s32.totalorder %s213, %s214
      %p226 = scmp.eq.s32.totalorder %s33, 15
      %p227 = por %p225, %p226
      %p229 = scmp.ne.s32.totalorder %s214, %s228
      %p230 = scmp.eq.s32.totalorder %s33, 0
      %p231 = por %p229, %p230
      %s233 = sadd.s32 %s232, 1
      %p236 = scmp.eq.s32.totalorder %s27, 15
      %p237 = scmp.ne.s32.totalorder %s232, %s234
      %p238 = scmp.eq.s32.totalorder %s27, 0
      %p239 = por %p237, %p238
      %p240 = scmp.ne.s32.totalorder %s232, %s234
      %p241 = scmp.eq.s32.totalorder %s32, 15
      %p242 = por %p240, %p241
      %p243 = scmp.ne.s32.totalorder %s234, %s235
      %p244 = scmp.eq.s32.totalorder %s32, 0
      %p245 = por %p243, %p244
      %p246 = scmp.ne.s32.totalorder %s234, %s235
      %p247 = scmp.eq.s32.totalorder %s33, 15
      %p248 = por %p246, %p247
      %p250 = scmp.ne.s32.totalorder %s235, %s249
      %p251 = scmp.eq.s32.totalorder %s33, 0
      %p252 = por %p250, %p251
      %s254 = sadd.s32 %s253, 1
      %p257 = scmp.eq.s32.totalorder %s27, 15
      %p258 = scmp.ne.s32.totalorder %s253, %s255
      %p259 = scmp.eq.s32.totalorder %s27, 0
      %p260 = por %p258, %p259
      %p261 = scmp.ne.s32.totalorder %s253, %s255
      %p262 = scmp.eq.s32.totalorder %s32, 15
      %p263 = por %p261, %p262
      %p264 = scmp.ne.s32.totalorder %s255, %s256
      %p265 = scmp.eq.s32.totalorder %s32, 0
      %p266 = por %p264, %p265
      %p267 = scmp.ne.s32.totalorder %s255, %s256
      %p268 = scmp.eq.s32.totalorder %s33, 15
      %p269 = por %p267, %p268
      %p271 = scmp.ne.s32.totalorder %s256, %s270
      %p272 = scmp.eq.s32.totalorder %s33, 0
      %p273 = por %p271, %p272
      %s275 = sadd.s32 %s274, 1
      %p278 = scmp.eq.s32.totalorder %s27, 15
      %p279 = scmp.ne.s32.totalorder %s274, %s276
      %p280 = scmp.eq.s32.totalorder %s27, 0
      %p281 = por %p279, %p280
      %p282 = scmp.ne.s32.totalorder %s274, %s276
      %p283 = scmp.eq.s32.totalorder %s32, 15
      %p284 = por %p282, %p283
      %p285 = scmp.ne.s32.totalorder %s276, %s277
      %p286 = scmp.eq.s32.totalorder %s32, 0
      %p287 = por %p285, %p286
      %p288 = scmp.ne.s32.totalorder %s276, %s277
      %p289 = scmp.eq.s32.totalorder %s33, 15
      %p290 = por %p288, %p289
      %p292 = scmp.ne.s32.totalorder %s277, %s291
      %p293 = scmp.eq.s32.totalorder %s33, 0
      %p294 = por %p292, %p293
      %s296 = sadd.s32 %s295, 1
      %p299 = scmp.eq.s32.totalorder %s27, 15
      %p300 = scmp.ne.s32.totalorder %s295, %s297
      %p301 = scmp.eq.s32.totalorder %s27, 0
      %p302 = por %p300, %p301
      %p303 = scmp.ne.s32.totalorder %s295, %s297
      %p304 = scmp.eq.s32.totalorder %s32, 15
      %p305 = por %p303, %p304
      %p306 = scmp.ne.s32.totalorder %s297, %s298
      %p307 = scmp.eq.s32.totalorder %s32, 0
      %p308 = por %p306, %p307
      %p309 = scmp.ne.s32.totalorder %s297, %s298
      %p310 = scmp.eq.s32.totalorder %s33, 15
      %p311 = por %p309, %p310
      %p313 = scmp.ne.s32.totalorder %s298, %s312
      %p314 = scmp.eq.s32.totalorder %s33, 0
      %p315 = por %p313, %p314
      %s316 = ssub.s32 %s34, %s46
      %s317 = ssub.s32 %s35, %s42
      %s318 = sor.u32 %s316, %s317
      %p319 = scmp.eq.s32.totalorder %s318, 0
      %s321 = sadd.s32 %s320, 1
      %s322 = scalar_select %p319, %s320, %s321
      %p325 = pneg %p319
      %p326 = scmp.eq.s32.totalorder %s27, 15
      %p327 = por %p325, %p326
      %p328 = scmp.ne.s32.totalorder %s320, %s323
      %p329 = scmp.eq.s32.totalorder %s27, 0
      %p330 = por %p328, %p329
      %p331 = scmp.ne.s32.totalorder %s320, %s323
      %p332 = scmp.eq.s32.totalorder %s32, 15
      %p333 = por %p331, %p332
      %p334 = scmp.ne.s32.totalorder %s323, %s324
      %p335 = scmp.eq.s32.totalorder %s32, 0
      %p336 = por %p334, %p335
      %p337 = scmp.ne.s32.totalorder %s323, %s324
      %p338 = scmp.eq.s32.totalorder %s33, 15
      %p339 = por %p337, %p338
      %p341 = scmp.ne.s32.totalorder %s324, %s340
      %p342 = scmp.eq.s32.totalorder %s33, 0
      %p343 = por %p341, %p342
      %s344 = ssub.s32 %s34, %s46
      %p345 = scmp.eq.s32.totalorder %s344, 0
      %s347 = sadd.s32 %s346, 1
      %s348 = scalar_select %p345, %s346, %s347
      %p351 = pneg %p345
      %p352 = scmp.eq.s32.totalorder %s27, 15
      %p353 = por %p351, %p352
      %p354 = scmp.ne.s32.totalorder %s346, %s349
      %p355 = scmp.eq.s32.totalorder %s27, 0
      %p356 = por %p354, %p355
      %p357 = scmp.ne.s32.totalorder %s346, %s349
      %p358 = scmp.eq.s32.totalorder %s32, 15
      %p359 = por %p357, %p358
      %p360 = scmp.ne.s32.totalorder %s349, %s350
      %p361 = scmp.eq.s32.totalorder %s32, 0
      %p362 = por %p360, %p361
      %p363 = scmp.ne.s32.totalorder %s349, %s350
      %p364 = scmp.eq.s32.totalorder %s33, 15
      %p365 = por %p363, %p364
      %p367 = scmp.ne.s32.totalorder %s350, %s366
      %p368 = scmp.eq.s32.totalorder %s33, 0
      %p369 = por %p367, %p368
      %s370 = ssub.s32 %s34, %s46
      %p371 = scmp.eq.s32.totalorder %s370, 0
      %s373 = sadd.s32 %s372, 1
      %s374 = scalar_select %p371, %s372, %s373
      %p377 = pneg %p371
      %p378 = scmp.eq.s32.totalorder %s27, 15
      %p379 = por %p377, %p378
      %p380 = scmp.ne.s32.totalorder %s372, %s375
      %p381 = scmp.eq.s32.totalorder %s27, 0
      %p382 = por %p380, %p381
      %p383 = scmp.ne.s32.totalorder %s372, %s375
      %p384 = scmp.eq.s32.totalorder %s32, 15
      %p385 = por %p383, %p384
      %p386 = scmp.ne.s32.totalorder %s375, %s376
      %p387 = scmp.eq.s32.totalorder %s32, 0
      %p388 = por %p386, %p387
      %p389 = scmp.ne.s32.totalorder %s375, %s376
      %p390 = scmp.eq.s32.totalorder %s33, 15
      %p391 = por %p389, %p390
      %p393 = scmp.ne.s32.totalorder %s376, %s392
      %p394 = scmp.eq.s32.totalorder %s33, 0
      %p395 = por %p393, %p394
      %p396 = scmp.le.s32.totalorder 1, %s27
      %p397 = scmp.lt.s32.totalorder %s27, 17
      %p398 = pnand %p396, %p397
      %p399 = pneg %p398
      // Predicated region
      $region9: #{tpu_custom_call.1} parent=5 // pred_check
        _
      $region10: #{tpu_custom_call.1} parent=5 // pred_check_branch
        %401 = sbr.rel (%p398) target = $region12
      $region11: #{tpu_custom_call.1} parent=5 // pred_region
        %s402 = ssub.s32 %s27, 1
        // Predicated region
        $region13: #{tpu_custom_call.1} parent=11 // pred_check
          %p403 = pneg %p140
        $region14: #{tpu_custom_call.1} parent=11 // pred_check_branch
          %405 = sbr.rel (%p403) target = $region16
        $region15: #{tpu_custom_call.1} parent=11 // pred_region
          _
        $region16: #{tpu_custom_call.1} parent=11 // pred_fallthru
          _
        // Predicated region
        $region17: #{tpu_custom_call.1} parent=11 // pred_check
          %p406 = pneg %p161
        $region18: #{tpu_custom_call.1} parent=11 // pred_check_branch
          %408 = sbr.rel (%p406) target = $region20
        $region19: #{tpu_custom_call.1} parent=11 // pred_region
          _
        $region20: #{tpu_custom_call.1} parent=11 // pred_fallthru
          _
        // Predicated region
        $region21: #{tpu_custom_call.1} parent=11 // pred_check
          %p409 = pneg %p182
        $region22: #{tpu_custom_call.1} parent=11 // pred_check_branch
          %411 = sbr.rel (%p409) target = $region24
        $region23: #{tpu_custom_call.1} parent=11 // pred_region
          _
        $region24: #{tpu_custom_call.1} parent=11 // pred_fallthru
          _
        // Predicated region
        $region25: #{tpu_custom_call.1} parent=11 // pred_check
          %p412 = pneg %p203
        $region26: #{tpu_custom_call.1} parent=11 // pred_check_branch
          %414 = sbr.rel (%p412) target = $region28
        $region27: #{tpu_custom_call.1} parent=11 // pred_region
          _
        $region28: #{tpu_custom_call.1} parent=11 // pred_fallthru
          _
        // Predicated region
        $region29: #{tpu_custom_call.1} parent=11 // pred_check
          %p415 = pneg %p224
        $region30: #{tpu_custom_call.1} parent=11 // pred_check_branch
          %417 = sbr.rel (%p415) target = $region32
        $region31: #{tpu_custom_call.1} parent=11 // pred_region
          _
        $region32: #{tpu_custom_call.1} parent=11 // pred_fallthru
          _
        // Predicated region
        $region33: #{tpu_custom_call.1} parent=11 // pred_check
          %p418 = pneg %p245
        $region34: #{tpu_custom_call.1} parent=11 // pred_check_branch
          %420 = sbr.rel (%p418) target = $region36
        $region35: #{tpu_custom_call.1} parent=11 // pred_region
          _
        $region36: #{tpu_custom_call.1} parent=11 // pred_fallthru
          _
        // Predicated region
        $region37: #{tpu_custom_call.1} parent=11 // pred_check
          %p421 = pneg %p266
        $region38: #{tpu_custom_call.1} parent=11 // pred_check_branch
          %423 = sbr.rel (%p421) target = $region40
        $region39: #{tpu_custom_call.1} parent=11 // pred_region
          _
        $region40: #{tpu_custom_call.1} parent=11 // pred_fallthru
          _
        // Predicated region
        $region41: #{tpu_custom_call.1} parent=11 // pred_check
          %p424 = pneg %p287
        $region42: #{tpu_custom_call.1} parent=11 // pred_check_branch
          %426 = sbr.rel (%p424) target = $region44
        $region43: #{tpu_custom_call.1} parent=11 // pred_region
          _
        $region44: #{tpu_custom_call.1} parent=11 // pred_fallthru
          _
        // Predicated region
        $region45: #{tpu_custom_call.1} parent=11 // pred_check
          %p427 = pneg %p308
        $region46: #{tpu_custom_call.1} parent=11 // pred_check_branch
          %429 = sbr.rel (%p427) target = $region48
        $region47: #{tpu_custom_call.1} parent=11 // pred_region
          _
        $region48: #{tpu_custom_call.1} parent=11 // pred_fallthru
          _
      $region12: #{tpu_custom_call.1} parent=5 // pred_fallthru
        _
      %p430 = scmp.lt.s32.totalorder %s27, 16
      // Predicated region
      $region49: #{tpu_custom_call.1} parent=5 // pred_check
        %p431 = pneg %p430
      $region50: #{tpu_custom_call.1} parent=5 // pred_check_branch
        %433 = sbr.rel (%p431) target = $region52
      $region51: #{tpu_custom_call.1} parent=5 // pred_region
        // Predicated region
        $region53: #{tpu_custom_call.1} parent=51 // pred_check
          %p434 = pneg %p61
        $region54: #{tpu_custom_call.1} parent=51 // pred_check_branch
          %436 = sbr.rel (%p434) target = $region56
        $region55: #{tpu_custom_call.1} parent=51 // pred_region
          %p437 = scmp.lt.s32.totalorder %s34, 1
          %s438 = scalar_select %p437, %s34, 1
          %p439 = scmp.lt.s32.totalorder %s35, 7
          %s440 = scalar_select %p439, %s35, 7
          %s441 = smul.addr %s440, 32
          %s442 = smul.addr %s438, 256
          %s443 = sadd.s32 %s441, %s442
          %s444 = smul.addr %s443, 8
          %s445 = scalar_lea.vmem %s0, %s444
        $region56: #{tpu_custom_call.1} parent=51 // pred_fallthru
          _
        // Predicated region
        $region57: #{tpu_custom_call.1} parent=51 // pred_check
          %p446 = pneg %p87
        $region58: #{tpu_custom_call.1} parent=51 // pred_check_branch
          %448 = sbr.rel (%p446) target = $region60
        $region59: #{tpu_custom_call.1} parent=51 // pred_region
          %p449 = scmp.lt.s32.totalorder %s34, 1
          %s450 = scalar_select %p449, %s34, 1
          %s451 = smul.addr %s450, 32
          %s452 = smul.addr %s451, 8
          %s453 = scalar_lea.vmem %s1, %s452
        $region60: #{tpu_custom_call.1} parent=51 // pred_fallthru
          _
        // Predicated region
        $region61: #{tpu_custom_call.1} parent=51 // pred_check
          %p454 = pneg %p113
        $region62: #{tpu_custom_call.1} parent=51 // pred_check_branch
          %456 = sbr.rel (%p454) target = $region64
        $region63: #{tpu_custom_call.1} parent=51 // pred_region
          %p457 = scmp.lt.s32.totalorder %s34, 1
          %s458 = scalar_select %p457, %s34, 1
          %s459 = smul.addr %s458, 32
          %s460 = smul.addr %s459, 8
          %s461 = scalar_lea.vmem %s2, %s460
        $region64: #{tpu_custom_call.1} parent=51 // pred_fallthru
          _
      $region52: #{tpu_custom_call.1} parent=5 // pred_fallthru
        _
      %p462 = scmp.le.s32.totalorder 1, %s27
      %p463 = scmp.lt.s32.totalorder %s27, 17
      %p464 = pnand %p462, %p463
      %p465 = pneg %p464
      // Predicated region
      $region65: #{tpu_custom_call.1} parent=5 // pred_check
        _
      $region66: #{tpu_custom_call.1} parent=5 // pred_check_branch
        %467 = sbr.rel (%p464) target = $region68
      $region67: #{tpu_custom_call.1} parent=5 // pred_region
        %s468 = ssub.s32 %s27, 1
        %p469 = scmp.lt.s32.totalorder %s36, 1
        %s470 = scalar_select %p469, %s36, 1
        %p471 = scmp.lt.s32.totalorder %s37, 7
        %s472 = scalar_select %p471, %s37, 7
        %s473 = smul.addr %s472, 32
        %s474 = smul.addr %s470, 256
        %s475 = sadd.s32 %s473, %s474
        %s476 = smul.addr %s475, 8
        %s477 = scalar_lea.vmem %s0, %s476
        %p478 = pneg %p67
        %p479 = pneg %p64
        %p480 = scmp.lt.s32.totalorder %s36, 1
        %s481 = scalar_select %p480, %s36, 1
        %s482 = smul.addr %s481, 32
        %s483 = smul.addr %s482, 8
        %s484 = scalar_lea.vmem %s1, %s483
        %p485 = pneg %p93
        %p486 = pneg %p90
        %p487 = scmp.lt.s32.totalorder %s36, 1
        %s488 = scalar_select %p487, %s36, 1
        %s489 = smul.addr %s488, 32
        %s490 = smul.addr %s489, 8
        %s491 = scalar_lea.vmem %s2, %s490
        %p492 = pneg %p119
        %p493 = pneg %p116
        %p494 = pneg %p140
        %p495 = pneg %p137
        %p496 = pneg %p161
        %p497 = pneg %p158
        %p498 = pneg %p182
        %p499 = pneg %p179
        %p500 = pneg %p203
        %p501 = pneg %p200
        %p502 = pneg %p224
        %p503 = pneg %p221
        %p504 = pneg %p245
        %p505 = pneg %p242
        %p506 = pneg %p266
        %p507 = pneg %p263
        %p508 = pneg %p287
        %p509 = pneg %p284
        %p510 = pneg %p308
        %p511 = pneg %p305
        %p512 = pneg %p336
        %p513 = pneg %p333
        %s514 = sand.u32 %s323, 1
        %s515 = scalar_lea.sflag [#allocation4], %s514
        %s516 = sand.u32 %s323, 1
        %s517 = smul.addr %s516, 256
        %s518 = scalar_lea.vmem [#allocation3], %s517
        %p519 = pneg %p362
        %p520 = pneg %p359
        %s521 = sand.u32 %s32, 1
        %s522 = scalar_lea.sflag [#allocation6], %s521
        %s523 = sand.u32 %s349, 1
        %s524 = smul.addr %s523, 256
        %s525 = scalar_lea.vmem [#allocation5], %s524
        %p526 = pneg %p388
        %p527 = pneg %p385
        %s528 = sand.u32 %s32, 1
        %s529 = scalar_lea.sflag [#allocation6], %s528
        %s530 = sand.u32 %s375, 1
        %s531 = smul.addr %s530, 256
        %s532 = scalar_lea.vmem [#allocation7], %s531
        %p533 = scmp.lt.s32.totalorder %s36, 1
        %s534 = scalar_select %p533, %s36, 1
        %p535 = scmp.lt.s32.totalorder %s37, 7
        %s536 = scalar_select %p535, %s37, 7
        %s537 = smul.addr %s536, 32
        %s538 = smul.addr %s534, 256
        %s539 = sadd.s32 %s537, %s538
        %s540 = smul.addr %s539, 8
        %s541 = scalar_lea.vmem %s0, %s540
        %p542 = scmp.lt.s32.totalorder %s36, 1
        %s543 = scalar_select %p542, %s36, 1
        %s544 = smul.addr %s543, 32
        %s545 = smul.addr %s544, 8
        %s546 = scalar_lea.vmem %s1, %s545
        %p547 = scmp.lt.s32.totalorder %s36, 1
        %s548 = scalar_select %p547, %s36, 1
        %s549 = smul.addr %s548, 32
        %s550 = smul.addr %s549, 8
        %s551 = scalar_lea.vmem %s2, %s550
        %p553 = scmp.eq.s32.totalorder %s37, 0
        // Predicated region
        $region69: #{tpu_custom_call.1} parent=67 // pred_check
          %p554 = pneg %p553
        $region70: #{tpu_custom_call.1} parent=67 // pred_check_branch
          %556 = sbr.rel (%p554) target = $region72
        $region71: #{tpu_custom_call.1} parent=67 // pred_region
          %v557 = vld [vmem:[%s546] sm:$0xff]
          %v558 = vld [vmem:[%s546 + $0x8] sm:$0xff]
          %v559 = vld [vmem:[%s546 + $0x10] sm:$0xff]
          %v560 = vld [vmem:[%s546 + $0x18] sm:$0xff]
          %v561 = vld [vmem:[%s546 + $0x20] sm:$0xff]
          %v562 = vld [vmem:[%s546 + $0x28] sm:$0xff]
          %v563 = vld [vmem:[%s546 + $0x30] sm:$0xff]
          %v564 = vld [vmem:[%s546 + $0x38] sm:$0xff]
          %v565 = vld [vmem:[%s546 + $0x40] sm:$0xff]
          %v566 = vld [vmem:[%s546 + $0x48] sm:$0xff]
          %v567 = vld [vmem:[%s546 + $0x50] sm:$0xff]
          %v568 = vld [vmem:[%s546 + $0x58] sm:$0xff]
          %v569 = vld [vmem:[%s546 + $0x60] sm:$0xff]
          %v570 = vld [vmem:[%s546 + $0x68] sm:$0xff]
          %v571 = vld [vmem:[%s546 + $0x70] sm:$0xff]
          %v572 = vld [vmem:[%s546 + $0x78] sm:$0xff]
          %v573 = vld [vmem:[%s546 + $0x80] sm:$0xff]
          %v574 = vld [vmem:[%s546 + $0x88] sm:$0xff]
          %v575 = vld [vmem:[%s546 + $0x90] sm:$0xff]
          %v576 = vld [vmem:[%s546 + $0x98] sm:$0xff]
          %v577 = vld [vmem:[%s546 + $0xa0] sm:$0xff]
          %v578 = vld [vmem:[%s546 + $0xa8] sm:$0xff]
          %v579 = vld [vmem:[%s546 + $0xb0] sm:$0xff]
          %v580 = vld [vmem:[%s546 + $0xb8] sm:$0xff]
          %v581 = vld [vmem:[%s546 + $0xc0] sm:$0xff]
          %v582 = vld [vmem:[%s546 + $0xc8] sm:$0xff]
          %v583 = vld [vmem:[%s546 + $0xd0] sm:$0xff]
          %v584 = vld [vmem:[%s546 + $0xd8] sm:$0xff]
          %v585 = vld [vmem:[%s546 + $0xe0] sm:$0xff]
          %v586 = vld [vmem:[%s546 + $0xe8] sm:$0xff]
          %v587 = vld [vmem:[%s546 + $0xf0] sm:$0xff]
          %v588 = vld [vmem:[%s546 + $0xf8] sm:$0xff]
          %vm589 = vcmask 261120
          %590 = vst.msk [vmem:[%s525] sm:$0xff] %vm589, %v557
          %591 = vst.msk [vmem:[%s525 + $0x8] sm:$0xff] %vm589, %v558
          %592 = vst.msk [vmem:[%s525 + $0x10] sm:$0xff] %vm589, %v559
          %593 = vst.msk [vmem:[%s525 + $0x18] sm:$0xff] %vm589, %v560
          %594 = vst.msk [vmem:[%s525 + $0x20] sm:$0xff] %vm589, %v561
          %595 = vst.msk [vmem:[%s525 + $0x28] sm:$0xff] %vm589, %v562
          %596 = vst.msk [vmem:[%s525 + $0x30] sm:$0xff] %vm589, %v563
          %597 = vst.msk [vmem:[%s525 + $0x38] sm:$0xff] %vm589, %v564
          %598 = vst.msk [vmem:[%s525 + $0x40] sm:$0xff] %vm589, %v565
          %599 = vst.msk [vmem:[%s525 + $0x48] sm:$0xff] %vm589, %v566
          %600 = vst.msk [vmem:[%s525 + $0x50] sm:$0xff] %vm589, %v567
          %601 = vst.msk [vmem:[%s525 + $0x58] sm:$0xff] %vm589, %v568
          %602 = vst.msk [vmem:[%s525 + $0x60] sm:$0xff] %vm589, %v569
          %603 = vst.msk [vmem:[%s525 + $0x68] sm:$0xff] %vm589, %v570
          %604 = vst.msk [vmem:[%s525 + $0x70] sm:$0xff] %vm589, %v571
          %605 = vst.msk [vmem:[%s525 + $0x78] sm:$0xff] %vm589, %v572
          %606 = vst.msk [vmem:[%s525 + $0x80] sm:$0xff] %vm589, %v573
          %607 = vst.msk [vmem:[%s525 + $0x88] sm:$0xff] %vm589, %v574
          %608 = vst.msk [vmem:[%s525 + $0x90] sm:$0xff] %vm589, %v575
          %609 = vst.msk [vmem:[%s525 + $0x98] sm:$0xff] %vm589, %v576
          %610 = vst.msk [vmem:[%s525 + $0xa0] sm:$0xff] %vm589, %v577
          %611 = vst.msk [vmem:[%s525 + $0xa8] sm:$0xff] %vm589, %v578
          %612 = vst.msk [vmem:[%s525 + $0xb0] sm:$0xff] %vm589, %v579
          %613 = vst.msk [vmem:[%s525 + $0xb8] sm:$0xff] %vm589, %v580
          %614 = vst.msk [vmem:[%s525 + $0xc0] sm:$0xff] %vm589, %v581
          %615 = vst.msk [vmem:[%s525 + $0xc8] sm:$0xff] %vm589, %v582
          %616 = vst.msk [vmem:[%s525 + $0xd0] sm:$0xff] %vm589, %v583
          %617 = vst.msk [vmem:[%s525 + $0xd8] sm:$0xff] %vm589, %v584
          %618 = vst.msk [vmem:[%s525 + $0xe0] sm:$0xff] %vm589, %v585
          %619 = vst.msk [vmem:[%s525 + $0xe8] sm:$0xff] %vm589, %v586
          %620 = vst.msk [vmem:[%s525 + $0xf0] sm:$0xff] %vm589, %v587
          %621 = vst.msk [vmem:[%s525 + $0xf8] sm:$0xff] %vm589, %v588
          %v622 = vld [vmem:[%s551] sm:$0xff]
          %v623 = vld [vmem:[%s551 + $0x8] sm:$0xff]
          %v624 = vld [vmem:[%s551 + $0x10] sm:$0xff]
          %v625 = vld [vmem:[%s551 + $0x18] sm:$0xff]
          %v626 = vld [vmem:[%s551 + $0x20] sm:$0xff]
          %v627 = vld [vmem:[%s551 + $0x28] sm:$0xff]
          %v628 = vld [vmem:[%s551 + $0x30] sm:$0xff]
          %v629 = vld [vmem:[%s551 + $0x38] sm:$0xff]
          %v630 = vld [vmem:[%s551 + $0x40] sm:$0xff]
          %v631 = vld [vmem:[%s551 + $0x48] sm:$0xff]
          %v632 = vld [vmem:[%s551 + $0x50] sm:$0xff]
          %v633 = vld [vmem:[%s551 + $0x58] sm:$0xff]
          %v634 = vld [vmem:[%s551 + $0x60] sm:$0xff]
          %v635 = vld [vmem:[%s551 + $0x68] sm:$0xff]
          %v636 = vld [vmem:[%s551 + $0x70] sm:$0xff]
          %v637 = vld [vmem:[%s551 + $0x78] sm:$0xff]
          %v638 = vld [vmem:[%s551 + $0x80] sm:$0xff]
          %v639 = vld [vmem:[%s551 + $0x88] sm:$0xff]
          %v640 = vld [vmem:[%s551 + $0x90] sm:$0xff]
          %v641 = vld [vmem:[%s551 + $0x98] sm:$0xff]
          %v642 = vld [vmem:[%s551 + $0xa0] sm:$0xff]
          %v643 = vld [vmem:[%s551 + $0xa8] sm:$0xff]
          %v644 = vld [vmem:[%s551 + $0xb0] sm:$0xff]
          %v645 = vld [vmem:[%s551 + $0xb8] sm:$0xff]
          %v646 = vld [vmem:[%s551 + $0xc0] sm:$0xff]
          %v647 = vld [vmem:[%s551 + $0xc8] sm:$0xff]
          %v648 = vld [vmem:[%s551 + $0xd0] sm:$0xff]
          %v649 = vld [vmem:[%s551 + $0xd8] sm:$0xff]
          %v650 = vld [vmem:[%s551 + $0xe0] sm:$0xff]
          %v651 = vld [vmem:[%s551 + $0xe8] sm:$0xff]
          %v652 = vld [vmem:[%s551 + $0xf0] sm:$0xff]
          %v653 = vld [vmem:[%s551 + $0xf8] sm:$0xff]
          %654 = vst.msk [vmem:[%s532] sm:$0xff] %vm589, %v622
          %655 = vst.msk [vmem:[%s532 + $0x8] sm:$0xff] %vm589, %v623
          %656 = vst.msk [vmem:[%s532 + $0x10] sm:$0xff] %vm589, %v624
          %657 = vst.msk [vmem:[%s532 + $0x18] sm:$0xff] %vm589, %v625
          %658 = vst.msk [vmem:[%s532 + $0x20] sm:$0xff] %vm589, %v626
          %659 = vst.msk [vmem:[%s532 + $0x28] sm:$0xff] %vm589, %v627
          %660 = vst.msk [vmem:[%s532 + $0x30] sm:$0xff] %vm589, %v628
          %661 = vst.msk [vmem:[%s532 + $0x38] sm:$0xff] %vm589, %v629
          %662 = vst.msk [vmem:[%s532 + $0x40] sm:$0xff] %vm589, %v630
          %663 = vst.msk [vmem:[%s532 + $0x48] sm:$0xff] %vm589, %v631
          %664 = vst.msk [vmem:[%s532 + $0x50] sm:$0xff] %vm589, %v632
          %665 = vst.msk [vmem:[%s532 + $0x58] sm:$0xff] %vm589, %v633
          %666 = vst.msk [vmem:[%s532 + $0x60] sm:$0xff] %vm589, %v634
          %667 = vst.msk [vmem:[%s532 + $0x68] sm:$0xff] %vm589, %v635
          %668 = vst.msk [vmem:[%s532 + $0x70] sm:$0xff] %vm589, %v636
          %669 = vst.msk [vmem:[%s532 + $0x78] sm:$0xff] %vm589, %v637
          %670 = vst.msk [vmem:[%s532 + $0x80] sm:$0xff] %vm589, %v638
          %671 = vst.msk [vmem:[%s532 + $0x88] sm:$0xff] %vm589, %v639
          %672 = vst.msk [vmem:[%s532 + $0x90] sm:$0xff] %vm589, %v640
          %673 = vst.msk [vmem:[%s532 + $0x98] sm:$0xff] %vm589, %v641
          %674 = vst.msk [vmem:[%s532 + $0xa0] sm:$0xff] %vm589, %v642
          %675 = vst.msk [vmem:[%s532 + $0xa8] sm:$0xff] %vm589, %v643
          %676 = vst.msk [vmem:[%s532 + $0xb0] sm:$0xff] %vm589, %v644
          %677 = vst.msk [vmem:[%s532 + $0xb8] sm:$0xff] %vm589, %v645
          %678 = vst.msk [vmem:[%s532 + $0xc0] sm:$0xff] %vm589, %v646
          %679 = vst.msk [vmem:[%s532 + $0xc8] sm:$0xff] %vm589, %v647
          %680 = vst.msk [vmem:[%s532 + $0xd0] sm:$0xff] %vm589, %v648
          %681 = vst.msk [vmem:[%s532 + $0xd8] sm:$0xff] %vm589, %v649
          %682 = vst.msk [vmem:[%s532 + $0xe0] sm:$0xff] %vm589, %v650
          %683 = vst.msk [vmem:[%s532 + $0xe8] sm:$0xff] %vm589, %v651
          %684 = vst.msk [vmem:[%s532 + $0xf0] sm:$0xff] %vm589, %v652
          %685 = vst.msk [vmem:[%s532 + $0xf8] sm:$0xff] %vm589, %v653
          %vm686 = vcmask 293888
          %687 = vst.msk [vmem:[#allocation2] sm:$0xff] %vm686, 0.0
          %688 = vst.msk [vmem:[#allocation2 + $0x8] sm:$0xff] %vm686, 0.0
          %vm689 = vcmask 287744
          %690 = vst.msk [vmem:[#allocation2 + $0x10] sm:$0x3] %vm689, 0.0
          %691 = vst.msk [vmem:[#allocation2 + $0x18] sm:$0xff] %vm686, 0.0
          %692 = vst.msk [vmem:[#allocation2 + $0x20] sm:$0xff] %vm686, 0.0
          %693 = vst.msk [vmem:[#allocation2 + $0x28] sm:$0x3] %vm689, 0.0
          %694 = vst.msk [vmem:[#allocation2 + $0x30] sm:$0xff] %vm686, 0.0
          %695 = vst.msk [vmem:[#allocation2 + $0x38] sm:$0xff] %vm686, 0.0
          %696 = vst.msk [vmem:[#allocation2 + $0x40] sm:$0x3] %vm689, 0.0
          %697 = vst.msk [vmem:[#allocation2 + $0x48] sm:$0xff] %vm686, 0.0
          %698 = vst.msk [vmem:[#allocation2 + $0x50] sm:$0xff] %vm686, 0.0
          %699 = vst.msk [vmem:[#allocation2 + $0x58] sm:$0x3] %vm689, 0.0
          %700 = vst.msk [vmem:[#allocation2 + $0x60] sm:$0xff] %vm686, 0.0
          %701 = vst.msk [vmem:[#allocation2 + $0x68] sm:$0xff] %vm686, 0.0
          %702 = vst.msk [vmem:[#allocation2 + $0x70] sm:$0x3] %vm689, 0.0
          %703 = vst.msk [vmem:[#allocation2 + $0x78] sm:$0xff] %vm686, 0.0
          %704 = vst.msk [vmem:[#allocation2 + $0x80] sm:$0xff] %vm686, 0.0
          %705 = vst.msk [vmem:[#allocation2 + $0x88] sm:$0x3] %vm689, 0.0
          %706 = vst.msk [vmem:[#allocation2 + $0x90] sm:$0xff] %vm686, 0.0
          %707 = vst.msk [vmem:[#allocation2 + $0x98] sm:$0xff] %vm686, 0.0
          %708 = vst.msk [vmem:[#allocation2 + $0xa0] sm:$0x3] %vm689, 0.0
          %709 = vst.msk [vmem:[#allocation2 + $0xa8] sm:$0xff] %vm686, 0.0
          %710 = vst.msk [vmem:[#allocation2 + $0xb0] sm:$0xff] %vm686, 0.0
          %711 = vst.msk [vmem:[#allocation2 + $0xb8] sm:$0x3] %vm689, 0.0
          %712 = vst.msk [vmem:[#allocation2 + $0xc0] sm:$0xff] %vm686, 0.0
          %713 = vst.msk [vmem:[#allocation2 + $0xc8] sm:$0xff] %vm686, 0.0
          %714 = vst.msk [vmem:[#allocation2 + $0xd0] sm:$0x3] %vm689, 0.0
          %715 = vst.msk [vmem:[#allocation2 + $0xd8] sm:$0xff] %vm686, 0.0
          %716 = vst.msk [vmem:[#allocation2 + $0xe0] sm:$0xff] %vm686, 0.0
          %717 = vst.msk [vmem:[#allocation2 + $0xe8] sm:$0x3] %vm689, 0.0
          %718 = vst.msk [vmem:[#allocation2 + $0xf0] sm:$0xff] %vm686, 0.0
          %719 = vst.msk [vmem:[#allocation2 + $0xf8] sm:$0xff] %vm686, 0.0
          %720 = vst.msk [vmem:[#allocation2 + $0x100] sm:$0x3] %vm689, 0.0
          %721 = vst.msk [vmem:[#allocation2 + $0x108] sm:$0xff] %vm686, 0.0
          %722 = vst.msk [vmem:[#allocation2 + $0x110] sm:$0xff] %vm686, 0.0
          %723 = vst.msk [vmem:[#allocation2 + $0x118] sm:$0x3] %vm689, 0.0
          %724 = vst.msk [vmem:[#allocation2 + $0x120] sm:$0xff] %vm686, 0.0
          %725 = vst.msk [vmem:[#allocation2 + $0x128] sm:$0xff] %vm686, 0.0
          %726 = vst.msk [vmem:[#allocation2 + $0x130] sm:$0x3] %vm689, 0.0
          %727 = vst.msk [vmem:[#allocation2 + $0x138] sm:$0xff] %vm686, 0.0
          %728 = vst.msk [vmem:[#allocation2 + $0x140] sm:$0xff] %vm686, 0.0
          %729 = vst.msk [vmem:[#allocation2 + $0x148] sm:$0x3] %vm689, 0.0
          %730 = vst.msk [vmem:[#allocation2 + $0x150] sm:$0xff] %vm686, 0.0
          %731 = vst.msk [vmem:[#allocation2 + $0x158] sm:$0xff] %vm686, 0.0
          %732 = vst.msk [vmem:[#allocation2 + $0x160] sm:$0x3] %vm689, 0.0
          %733 = vst.msk [vmem:[#allocation2 + $0x168] sm:$0xff] %vm686, 0.0
          %734 = vst.msk [vmem:[#allocation2 + $0x170] sm:$0xff] %vm686, 0.0
          %735 = vst.msk [vmem:[#allocation2 + $0x178] sm:$0x3] %vm689, 0.0
          %736 = vst.msk [vmem:[#allocation2 + $0x180] sm:$0xff] %vm686, 0.0
          %737 = vst.msk [vmem:[#allocation2 + $0x188] sm:$0xff] %vm686, 0.0
          %738 = vst.msk [vmem:[#allocation2 + $0x190] sm:$0x3] %vm689, 0.0
          %739 = vst.msk [vmem:[#allocation2 + $0x198] sm:$0xff] %vm686, 0.0
          %740 = vst.msk [vmem:[#allocation2 + $0x1a0] sm:$0xff] %vm686, 0.0
          %741 = vst.msk [vmem:[#allocation2 + $0x1a8] sm:$0x3] %vm689, 0.0
        $region72: #{tpu_custom_call.1} parent=67 // pred_fallthru
          _
        %v742 = vld [vmem:[%s541] sm:$0xff]
        %v743 = vld [vmem:[%s541 + $0x8] sm:$0xff]
        %v744 = vld [vmem:[%s541 + $0x10] sm:$0xff]
        %v745 = vld [vmem:[%s541 + $0x18] sm:$0xff]
        %v746 = vld [vmem:[%s541 + $0x20] sm:$0xff]
        %v747 = vld [vmem:[%s541 + $0x28] sm:$0xff]
        %v748 = vld [vmem:[%s541 + $0x30] sm:$0xff]
        %v749 = vld [vmem:[%s541 + $0x38] sm:$0xff]
        %v750 = vld [vmem:[%s541 + $0x40] sm:$0xff]
        %v751 = vld [vmem:[%s541 + $0x48] sm:$0xff]
        %v752 = vld [vmem:[%s541 + $0x50] sm:$0xff]
        %v753 = vld [vmem:[%s541 + $0x58] sm:$0xff]
        %v754 = vld [vmem:[%s541 + $0x60] sm:$0xff]
        %v755 = vld [vmem:[%s541 + $0x68] sm:$0xff]
        %v756 = vld [vmem:[%s541 + $0x70] sm:$0xff]
        %v757 = vld [vmem:[%s541 + $0x78] sm:$0xff]
        %v758 = vld [vmem:[%s541 + $0x80] sm:$0xff]
        %v759 = vld [vmem:[%s541 + $0x88] sm:$0xff]
        %v760 = vld [vmem:[%s541 + $0x90] sm:$0xff]
        %v761 = vld [vmem:[%s541 + $0x98] sm:$0xff]
        %v762 = vld [vmem:[%s541 + $0xa0] sm:$0xff]
        %v763 = vld [vmem:[%s541 + $0xa8] sm:$0xff]
        %v764 = vld [vmem:[%s541 + $0xb0] sm:$0xff]
        %v765 = vld [vmem:[%s541 + $0xb8] sm:$0xff]
        %v766 = vld [vmem:[%s541 + $0xc0] sm:$0xff]
        %v767 = vld [vmem:[%s541 + $0xc8] sm:$0xff]
        %v768 = vld [vmem:[%s541 + $0xd0] sm:$0xff]
        %v769 = vld [vmem:[%s541 + $0xd8] sm:$0xff]
        %v770 = vld [vmem:[%s541 + $0xe0] sm:$0xff]
        %v771 = vld [vmem:[%s541 + $0xe8] sm:$0xff]
        %v772 = vld [vmem:[%s541 + $0xf0] sm:$0xff]
        %v773 = vld [vmem:[%s541 + $0xf8] sm:$0xff]
        %v774 = vld [vmem:[%s525] sm:$0xff]
        %v775 = vld [vmem:[%s525 + $0x8] sm:$0xff]
        %v776 = vld [vmem:[%s525 + $0x10] sm:$0xff]
        %v777 = vld [vmem:[%s525 + $0x18] sm:$0xff]
        %v778 = vld [vmem:[%s525 + $0x20] sm:$0xff]
        %v779 = vld [vmem:[%s525 + $0x28] sm:$0xff]
        %v780 = vld [vmem:[%s525 + $0x30] sm:$0xff]
        %v781 = vld [vmem:[%s525 + $0x38] sm:$0xff]
        %v782 = vld [vmem:[%s525 + $0x40] sm:$0xff]
        %v783 = vld [vmem:[%s525 + $0x48] sm:$0xff]
        %v784 = vld [vmem:[%s525 + $0x50] sm:$0xff]
        %v785 = vld [vmem:[%s525 + $0x58] sm:$0xff]
        %v786 = vld [vmem:[%s525 + $0x60] sm:$0xff]
        %v787 = vld [vmem:[%s525 + $0x68] sm:$0xff]
        %v788 = vld [vmem:[%s525 + $0x70] sm:$0xff]
        %v789 = vld [vmem:[%s525 + $0x78] sm:$0xff]
        %v790 = vld [vmem:[%s525 + $0x80] sm:$0xff]
        %v791 = vld [vmem:[%s525 + $0x88] sm:$0xff]
        %v792 = vld [vmem:[%s525 + $0x90] sm:$0xff]
        %v793 = vld [vmem:[%s525 + $0x98] sm:$0xff]
        %v794 = vld [vmem:[%s525 + $0xa0] sm:$0xff]
        %v795 = vld [vmem:[%s525 + $0xa8] sm:$0xff]
        %v796 = vld [vmem:[%s525 + $0xb0] sm:$0xff]
        %v797 = vld [vmem:[%s525 + $0xb8] sm:$0xff]
        %v798 = vld [vmem:[%s525 + $0xc0] sm:$0xff]
        %v799 = vld [vmem:[%s525 + $0xc8] sm:$0xff]
        %v800 = vld [vmem:[%s525 + $0xd0] sm:$0xff]
        %v801 = vld [vmem:[%s525 + $0xd8] sm:$0xff]
        %v802 = vld [vmem:[%s525 + $0xe0] sm:$0xff]
        %v803 = vld [vmem:[%s525 + $0xe8] sm:$0xff]
        %v804 = vld [vmem:[%s525 + $0xf0] sm:$0xff]
        %v805 = vld [vmem:[%s525 + $0xf8] sm:$0xff]
        %v806 = vld [vmem:[%s532] sm:$0xff]
        %v807 = vld [vmem:[%s532 + $0x8] sm:$0xff]
        %v808 = vld [vmem:[%s532 + $0x10] sm:$0xff]
        %v809 = vld [vmem:[%s532 + $0x18] sm:$0xff]
        %v810 = vld [vmem:[%s532 + $0x20] sm:$0xff]
        %v811 = vld [vmem:[%s532 + $0x28] sm:$0xff]
        %v812 = vld [vmem:[%s532 + $0x30] sm:$0xff]
        %v813 = vld [vmem:[%s532 + $0x38] sm:$0xff]
        %v814 = vld [vmem:[%s532 + $0x40] sm:$0xff]
        %v815 = vld [vmem:[%s532 + $0x48] sm:$0xff]
        %v816 = vld [vmem:[%s532 + $0x50] sm:$0xff]
        %v817 = vld [vmem:[%s532 + $0x58] sm:$0xff]
        %v818 = vld [vmem:[%s532 + $0x60] sm:$0xff]
        %v819 = vld [vmem:[%s532 + $0x68] sm:$0xff]
        %v820 = vld [vmem:[%s532 + $0x70] sm:$0xff]
        %v821 = vld [vmem:[%s532 + $0x78] sm:$0xff]
        %v822 = vld [vmem:[%s532 + $0x80] sm:$0xff]
        %v823 = vld [vmem:[%s532 + $0x88] sm:$0xff]
        %v824 = vld [vmem:[%s532 + $0x90] sm:$0xff]
        %v825 = vld [vmem:[%s532 + $0x98] sm:$0xff]
        %v826 = vld [vmem:[%s532 + $0xa0] sm:$0xff]
        %v827 = vld [vmem:[%s532 + $0xa8] sm:$0xff]
        %v828 = vld [vmem:[%s532 + $0xb0] sm:$0xff]
        %v829 = vld [vmem:[%s532 + $0xb8] sm:$0xff]
        %v830 = vld [vmem:[%s532 + $0xc0] sm:$0xff]
        %v831 = vld [vmem:[%s532 + $0xc8] sm:$0xff]
        %v832 = vld [vmem:[%s532 + $0xd0] sm:$0xff]
        %v833 = vld [vmem:[%s532 + $0xd8] sm:$0xff]
        %v834 = vld [vmem:[%s532 + $0xe0] sm:$0xff]
        %v835 = vld [vmem:[%s532 + $0xe8] sm:$0xff]
        %v836 = vld [vmem:[%s532 + $0xf0] sm:$0xff]
        %v837 = vld [vmem:[%s532 + $0xf8] sm:$0xff]
        %s838 = scalar_lea.vmem [#allocation2], 24
        %vm839 = vcmask 31744
        %840 = vst.msk [vmem:[%s838 + $0x1] sm:$0xff] %vm839, %v742
        %841 = vst.msk [vmem:[%s838 + $0x9] sm:$0xff] %vm839, %v743
        %842 = vst.msk [vmem:[%s838 + $0x19] sm:$0xff] %vm839, %v744
        %843 = vst.msk [vmem:[%s838 + $0x21] sm:$0xff] %vm839, %v745
        %844 = vst.msk [vmem:[%s838 + $0x31] sm:$0xff] %vm839, %v746
        %845 = vst.msk [vmem:[%s838 + $0x39] sm:$0xff] %vm839, %v747
        %846 = vst.msk [vmem:[%s838 + $0x49] sm:$0xff] %vm839, %v748
        %847 = vst.msk [vmem:[%s838 + $0x51] sm:$0xff] %vm839, %v749
        %848 = vst.msk [vmem:[%s838 + $0x61] sm:$0xff] %vm839, %v750
        %849 = vst.msk [vmem:[%s838 + $0x69] sm:$0xff] %vm839, %v751
        %850 = vst.msk [vmem:[%s838 + $0x79] sm:$0xff] %vm839, %v752
        %851 = vst.msk [vmem:[%s838 + $0x81] sm:$0xff] %vm839, %v753
        %852 = vst.msk [vmem:[%s838 + $0x91] sm:$0xff] %vm839, %v754
        %853 = vst.msk [vmem:[%s838 + $0x99] sm:$0xff] %vm839, %v755
        %854 = vst.msk [vmem:[%s838 + $0xa9] sm:$0xff] %vm839, %v756
        %855 = vst.msk [vmem:[%s838 + $0xb1] sm:$0xff] %vm839, %v757
        %856 = vst.msk [vmem:[%s838 + $0xc1] sm:$0xff] %vm839, %v758
        %857 = vst.msk [vmem:[%s838 + $0xc9] sm:$0xff] %vm839, %v759
        %858 = vst.msk [vmem:[%s838 + $0xd9] sm:$0xff] %vm839, %v760
        %859 = vst.msk [vmem:[%s838 + $0xe1] sm:$0xff] %vm839, %v761
        %860 = vst.msk [vmem:[%s838 + $0xf1] sm:$0xff] %vm839, %v762
        %861 = vst.msk [vmem:[%s838 + $0xf9] sm:$0xff] %vm839, %v763
        %862 = vst.msk [vmem:[%s838 + $0x109] sm:$0xff] %vm839, %v764
        %863 = vst.msk [vmem:[%s838 + $0x111] sm:$0xff] %vm839, %v765
        %864 = vst.msk [vmem:[%s838 + $0x121] sm:$0xff] %vm839, %v766
        %865 = vst.msk [vmem:[%s838 + $0x129] sm:$0xff] %vm839, %v767
        %866 = vst.msk [vmem:[%s838 + $0x139] sm:$0xff] %vm839, %v768
        %867 = vst.msk [vmem:[%s838 + $0x141] sm:$0xff] %vm839, %v769
        %868 = vst.msk [vmem:[%s838 + $0x151] sm:$0xff] %vm839, %v770
        %869 = vst.msk [vmem:[%s838 + $0x159] sm:$0xff] %vm839, %v771
        %870 = vst.msk [vmem:[%s838 + $0x169] sm:$0xff] %vm839, %v772
        %871 = vst.msk [vmem:[%s838 + $0x171] sm:$0xff] %vm839, %v773
        %904 = vrot.lane.b32.xlu0 %v774, 4
        %v905 = vpop.permute.xlu0 %904
        %906 = vrot.lane.b32.xlu0 %v775, 4
        %v907 = vpop.permute.xlu0 %906
        %908 = vrot.lane.b32.xlu0 %v776, 4
        %v909 = vpop.permute.xlu0 %908
        %910 = vrot.lane.b32.xlu0 %v777, 4
        %v911 = vpop.permute.xlu0 %910
        %912 = vrot.lane.b32.xlu0 %v778, 4
        %v913 = vpop.permute.xlu0 %912
        %914 = vrot.lane.b32.xlu0 %v779, 4
        %v915 = vpop.permute.xlu0 %914
        %916 = vrot.lane.b32.xlu0 %v780, 4
        %v917 = vpop.permute.xlu0 %916
        %918 = vrot.lane.b32.xlu0 %v781, 4
        %v919 = vpop.permute.xlu0 %918
        %920 = vrot.lane.b32.xlu0 %v782, 4
        %v921 = vpop.permute.xlu0 %920
        %922 = vrot.lane.b32.xlu0 %v783, 4
        %v923 = vpop.permute.xlu0 %922
        %924 = vrot.lane.b32.xlu0 %v784, 4
        %v925 = vpop.permute.xlu0 %924
        %926 = vrot.lane.b32.xlu0 %v785, 4
        %v927 = vpop.permute.xlu0 %926
        %928 = vrot.lane.b32.xlu0 %v786, 4
        %v929 = vpop.permute.xlu0 %928
        %930 = vrot.lane.b32.xlu0 %v787, 4
        %v931 = vpop.permute.xlu0 %930
        %932 = vrot.lane.b32.xlu0 %v788, 4
        %v933 = vpop.permute.xlu0 %932
        %934 = vrot.lane.b32.xlu0 %v789, 4
        %v935 = vpop.permute.xlu0 %934
        %936 = vrot.lane.b32.xlu0 %v790, 4
        %v937 = vpop.permute.xlu0 %936
        %938 = vrot.lane.b32.xlu0 %v791, 4
        %v939 = vpop.permute.xlu0 %938
        %940 = vrot.lane.b32.xlu0 %v792, 4
        %v941 = vpop.permute.xlu0 %940
        %942 = vrot.lane.b32.xlu0 %v793, 4
        %v943 = vpop.permute.xlu0 %942
        %944 = vrot.lane.b32.xlu0 %v794, 4
        %v945 = vpop.permute.xlu0 %944
        %946 = vrot.lane.b32.xlu0 %v795, 4
        %v947 = vpop.permute.xlu0 %946
        %948 = vrot.lane.b32.xlu0 %v796, 4
        %v949 = vpop.permute.xlu0 %948
        %950 = vrot.lane.b32.xlu0 %v797, 4
        %v951 = vpop.permute.xlu0 %950
        %952 = vrot.lane.b32.xlu0 %v798, 4
        %v953 = vpop.permute.xlu0 %952
        %954 = vrot.lane.b32.xlu0 %v799, 4
        %v955 = vpop.permute.xlu0 %954
        %956 = vrot.lane.b32.xlu0 %v800, 4
        %v957 = vpop.permute.xlu0 %956
        %958 = vrot.lane.b32.xlu0 %v801, 4
        %v959 = vpop.permute.xlu0 %958
        %960 = vrot.lane.b32.xlu0 %v802, 4
        %v961 = vpop.permute.xlu0 %960
        %962 = vrot.lane.b32.xlu0 %v803, 4
        %v963 = vpop.permute.xlu0 %962
        %964 = vrot.lane.b32.xlu0 %v804, 4
        %v965 = vpop.permute.xlu0 %964
        %966 = vrot.lane.b32.xlu0 %v805, 4
        %v967 = vpop.permute.xlu0 %966
        %vm1000 = vcmask 293920
        %1001 = vst.msk [vmem:[%s838 + $0x1] sm:$0xff] %vm1000, %v905
        %1002 = vst.msk [vmem:[%s838 + $0x9] sm:$0xff] %vm1000, %v907
        %1003 = vst.msk [vmem:[%s838 + $0x19] sm:$0xff] %vm1000, %v909
        %1004 = vst.msk [vmem:[%s838 + $0x21] sm:$0xff] %vm1000, %v911
        %1005 = vst.msk [vmem:[%s838 + $0x31] sm:$0xff] %vm1000, %v913
        %1006 = vst.msk [vmem:[%s838 + $0x39] sm:$0xff] %vm1000, %v915
        %1007 = vst.msk [vmem:[%s838 + $0x49] sm:$0xff] %vm1000, %v917
        %1008 = vst.msk [vmem:[%s838 + $0x51] sm:$0xff] %vm1000, %v919
        %1009 = vst.msk [vmem:[%s838 + $0x61] sm:$0xff] %vm1000, %v921
        %1010 = vst.msk [vmem:[%s838 + $0x69] sm:$0xff] %vm1000, %v923
        %1011 = vst.msk [vmem:[%s838 + $0x79] sm:$0xff] %vm1000, %v925
        %1012 = vst.msk [vmem:[%s838 + $0x81] sm:$0xff] %vm1000, %v927
        %1013 = vst.msk [vmem:[%s838 + $0x91] sm:$0xff] %vm1000, %v929
        %1014 = vst.msk [vmem:[%s838 + $0x99] sm:$0xff] %vm1000, %v931
        %1015 = vst.msk [vmem:[%s838 + $0xa9] sm:$0xff] %vm1000, %v933
        %1016 = vst.msk [vmem:[%s838 + $0xb1] sm:$0xff] %vm1000, %v935
        %1017 = vst.msk [vmem:[%s838 + $0xc1] sm:$0xff] %vm1000, %v937
        %1018 = vst.msk [vmem:[%s838 + $0xc9] sm:$0xff] %vm1000, %v939
        %1019 = vst.msk [vmem:[%s838 + $0xd9] sm:$0xff] %vm1000, %v941
        %1020 = vst.msk [vmem:[%s838 + $0xe1] sm:$0xff] %vm1000, %v943
        %1021 = vst.msk [vmem:[%s838 + $0xf1] sm:$0xff] %vm1000, %v945
        %1022 = vst.msk [vmem:[%s838 + $0xf9] sm:$0xff] %vm1000, %v947
        %1023 = vst.msk [vmem:[%s838 + $0x109] sm:$0xff] %vm1000, %v949
        %1024 = vst.msk [vmem:[%s838 + $0x111] sm:$0xff] %vm1000, %v951
        %1025 = vst.msk [vmem:[%s838 + $0x121] sm:$0xff] %vm1000, %v953
        %1026 = vst.msk [vmem:[%s838 + $0x129] sm:$0xff] %vm1000, %v955
        %1027 = vst.msk [vmem:[%s838 + $0x139] sm:$0xff] %vm1000, %v957
        %1028 = vst.msk [vmem:[%s838 + $0x141] sm:$0xff] %vm1000, %v959
        %1029 = vst.msk [vmem:[%s838 + $0x151] sm:$0xff] %vm1000, %v961
        %1030 = vst.msk [vmem:[%s838 + $0x159] sm:$0xff] %vm1000, %v963
        %1031 = vst.msk [vmem:[%s838 + $0x169] sm:$0xff] %vm1000, %v965
        %1032 = vst.msk [vmem:[%s838 + $0x171] sm:$0xff] %vm1000, %v967
        %v1033 = vld [vmem:[#allocation2] sm:$0xff]
        %v1034 = vld [vmem:[#allocation2 + $0x8] sm:$0xff]
        %v1035 = vld [vmem:[#allocation2 + $0x18] sm:$0xff]
        %v1036 = vld [vmem:[#allocation2 + $0x20] sm:$0xff]
        %v1037 = vld [vmem:[#allocation2 + $0x30] sm:$0xff]
        %v1038 = vld [vmem:[#allocation2 + $0x38] sm:$0xff]
        %v1039 = vld [vmem:[#allocation2 + $0x48] sm:$0xff]
        %v1040 = vld [vmem:[#allocation2 + $0x50] sm:$0xff]
        %v1041 = vld [vmem:[#allocation2 + $0x60] sm:$0xff]
        %v1042 = vld [vmem:[#allocation2 + $0x68] sm:$0xff]
        %v1043 = vld [vmem:[#allocation2 + $0x78] sm:$0xff]
        %v1044 = vld [vmem:[#allocation2 + $0x80] sm:$0xff]
        %v1045 = vld [vmem:[#allocation2 + $0x90] sm:$0xff]
        %v1046 = vld [vmem:[#allocation2 + $0x98] sm:$0xff]
        %v1047 = vld [vmem:[#allocation2 + $0xa8] sm:$0xff]
        %v1048 = vld [vmem:[#allocation2 + $0xb0] sm:$0xff]
        %v1049 = vld [vmem:[#allocation2 + $0xc0] sm:$0xff]
        %v1050 = vld [vmem:[#allocation2 + $0xc8] sm:$0xff]
        %v1051 = vld [vmem:[#allocation2 + $0xd8] sm:$0xff]
        %v1052 = vld [vmem:[#allocation2 + $0xe0] sm:$0xff]
        %v1053 = vld [vmem:[#allocation2 + $0xf0] sm:$0xff]
        %v1054 = vld [vmem:[#allocation2 + $0xf8] sm:$0xff]
        %v1055 = vld [vmem:[#allocation2 + $0x108] sm:$0xff]
        %v1056 = vld [vmem:[#allocation2 + $0x110] sm:$0xff]
        %v1057 = vld [vmem:[#allocation2 + $0x120] sm:$0xff]
        %v1058 = vld [vmem:[#allocation2 + $0x128] sm:$0xff]
        %v1059 = vld [vmem:[#allocation2 + $0x138] sm:$0xff]
        %v1060 = vld [vmem:[#allocation2 + $0x140] sm:$0xff]
        %v1061 = vld [vmem:[#allocation2 + $0x150] sm:$0xff]
        %v1062 = vld [vmem:[#allocation2 + $0x158] sm:$0xff]
        %v1063 = vld [vmem:[#allocation2 + $0x168] sm:$0xff]
        %v1064 = vld [vmem:[#allocation2 + $0x170] sm:$0xff]
        %v1065 = vpack.c.bf16 %v1034, %v1033
        %v1066 = vpack.c.bf16 %v1036, %v1035
        %v1067 = vpack.c.bf16 %v1038, %v1037
        %v1068 = vpack.c.bf16 %v1040, %v1039
        %v1069 = vpack.c.bf16 %v1042, %v1041
        %v1070 = vpack.c.bf16 %v1044, %v1043
        %v1071 = vpack.c.bf16 %v1046, %v1045
        %v1072 = vpack.c.bf16 %v1048, %v1047
        %v1073 = vpack.c.bf16 %v1050, %v1049
        %v1074 = vpack.c.bf16 %v1052, %v1051
        %v1075 = vpack.c.bf16 %v1054, %v1053
        %v1076 = vpack.c.bf16 %v1056, %v1055
        %v1077 = vpack.c.bf16 %v1058, %v1057
        %v1078 = vpack.c.bf16 %v1060, %v1059
        %v1079 = vpack.c.bf16 %v1062, %v1061
        %v1080 = vpack.c.bf16 %v1064, %v1063
        %v1081 = vld [vmem:[%s3] sm:$0xf]
        %v1082 = vld [vmem:[%s3 + $0x4] sm:$0xf]
        %v1083 = vld [vmem:[%s3 + $0x8] sm:$0xf]
        %v1084 = vld [vmem:[%s3 + $0xc] sm:$0xf]
        %v1085 = vld [vmem:[%s3 + $0x10] sm:$0x3]
        %v1086 = vld [vmem:[#allocation2 + $0x1] sm:$0xff]
        %v1087 = vld [vmem:[#allocation2 + $0x9] sm:$0xff]
        %v1088 = vld [vmem:[#allocation2 + $0x19] sm:$0xff]
        %v1089 = vld [vmem:[#allocation2 + $0x21] sm:$0xff]
        %v1090 = vld [vmem:[#allocation2 + $0x31] sm:$0xff]
        %v1091 = vld [vmem:[#allocation2 + $0x39] sm:$0xff]
        %v1092 = vld [vmem:[#allocation2 + $0x49] sm:$0xff]
        %v1093 = vld [vmem:[#allocation2 + $0x51] sm:$0xff]
        %v1094 = vld [vmem:[#allocation2 + $0x61] sm:$0xff]
        %v1095 = vld [vmem:[#allocation2 + $0x69] sm:$0xff]
        %v1096 = vld [vmem:[#allocation2 + $0x79] sm:$0xff]
        %v1097 = vld [vmem:[#allocation2 + $0x81] sm:$0xff]
        %v1098 = vld [vmem:[#allocation2 + $0x91] sm:$0xff]
        %v1099 = vld [vmem:[#allocation2 + $0x99] sm:$0xff]
        %v1100 = vld [vmem:[#allocation2 + $0xa9] sm:$0xff]
        %v1101 = vld [vmem:[#allocation2 + $0xb1] sm:$0xff]
        %v1102 = vld [vmem:[#allocation2 + $0xc1] sm:$0xff]
        %v1103 = vld [vmem:[#allocation2 + $0xc9] sm:$0xff]
        %v1104 = vld [vmem:[#allocation2 + $0xd9] sm:$0xff]
        %v1105 = vld [vmem:[#allocation2 + $0xe1] sm:$0xff]
        %v1106 = vld [vmem:[#allocation2 + $0xf1] sm:$0xff]
        %v1107 = vld [vmem:[#allocation2 + $0xf9] sm:$0xff]
        %v1108 = vld [vmem:[#allocation2 + $0x109] sm:$0xff]
        %v1109 = vld [vmem:[#allocation2 + $0x111] sm:$0xff]
        %v1110 = vld [vmem:[#allocation2 + $0x121] sm:$0xff]
        %v1111 = vld [vmem:[#allocation2 + $0x129] sm:$0xff]
        %v1112 = vld [vmem:[#allocation2 + $0x139] sm:$0xff]
        %v1113 = vld [vmem:[#allocation2 + $0x141] sm:$0xff]
        %v1114 = vld [vmem:[#allocation2 + $0x151] sm:$0xff]
        %v1115 = vld [vmem:[#allocation2 + $0x159] sm:$0xff]
        %v1116 = vld [vmem:[#allocation2 + $0x169] sm:$0xff]
        %v1117 = vld [vmem:[#allocation2 + $0x171] sm:$0xff]
        %v1118 = vpack.c.bf16 %v1087, %v1086
        %v1119 = vpack.c.bf16 %v1089, %v1088
        %v1120 = vpack.c.bf16 %v1091, %v1090
        %v1121 = vpack.c.bf16 %v1093, %v1092
        %v1122 = vpack.c.bf16 %v1095, %v1094
        %v1123 = vpack.c.bf16 %v1097, %v1096
        %v1124 = vpack.c.bf16 %v1099, %v1098
        %v1125 = vpack.c.bf16 %v1101, %v1100
        %v1126 = vpack.c.bf16 %v1103, %v1102
        %v1127 = vpack.c.bf16 %v1105, %v1104
        %v1128 = vpack.c.bf16 %v1107, %v1106
        %v1129 = vpack.c.bf16 %v1109, %v1108
        %v1130 = vpack.c.bf16 %v1111, %v1110
        %v1131 = vpack.c.bf16 %v1113, %v1112
        %v1132 = vpack.c.bf16 %v1115, %v1114
        %v1133 = vpack.c.bf16 %v1117, %v1116
        %s1134 = scalar_lea.vmem %s3, 20
        %v1135 = vld [vmem:[%s1134] sm:$0xf]
        %v1136 = vld [vmem:[%s1134 + $0x4] sm:$0xf]
        %v1137 = vld [vmem:[%s1134 + $0x8] sm:$0xf]
        %v1138 = vld [vmem:[%s1134 + $0xc] sm:$0xf]
        %v1139 = vld [vmem:[%s1134 + $0x10] sm:$0x3]
        %v1145 = vunpack.c.l.b16 %v1135
        %v1146 = vunpack.c.l.b16 %v1136
        %v1147 = vunpack.c.l.b16 %v1137
        %v1148 = vunpack.c.l.b16 %v1138
        %v1149 = vunpack.c.l.b16 %v1139
        %v1150 = vpack.c.b16 %v1146, %v1145
        %v1151 = vpack.c.b16 %v1148, %v1147
        %v1152 = vpack.c.b16 %v1149, %v1149
        %vm1155 = vcmask 293888
        %v1157 = vsel %vm1155, %v1118, 0
        %v1160 = vsel %vm1155, %v1119, 0
        %v1163 = vsel %vm1155, %v1120, 0
        %v1166 = vsel %vm1155, %v1121, 0
        %v1169 = vsel %vm1155, %v1122, 0
        %v1172 = vsel %vm1155, %v1123, 0
        %v1175 = vsel %vm1155, %v1124, 0
        %v1178 = vsel %vm1155, %v1125, 0
        %v1181 = vsel %vm1155, %v1126, 0
        %v1184 = vsel %vm1155, %v1127, 0
        %v1187 = vsel %vm1155, %v1128, 0
        %v1190 = vsel %vm1155, %v1129, 0
        %v1193 = vsel %vm1155, %v1130, 0
        %v1196 = vsel %vm1155, %v1131, 0
        %v1199 = vsel %vm1155, %v1132, 0
        %v1202 = vsel %vm1155, %v1133, 0
        %vm1204 = vcmask 1041408
        %v1206 = vsel %vm1204, %v1152, 0
        %1208 = vmatprep.subr.bf16.mxu0 0
        %1209 = vmatpush1.bf16.msra.mxu0 %v1150
        %1210 = vmatprep.subr.bf16.mxu0 0
        %1211 = vmatpush1.bf16.msra.mxu0 %v1151
        %1212 = vmatprep.subr.bf16.mxu0 0
        %1213 = vmatpush1.bf16.msra.mxu0 %v1206
        %1214 = vmatprep.subr.bf16.mxu0 0
        %1215 = vmatpush1.bf16.msra.mxu0 0
        %1216 = vmatprep.subr.bf16.mxu0 0
        %1217 = vmatpush1.bf16.msra.mxu0 0
        %1218 = vmatprep.subr.bf16.mxu0 0
        %1219 = vmatpush1.bf16.msra.mxu0 0
        %1220 = vmatprep.subr.bf16.mxu0 0
        %1221 = vmatpush1.bf16.msra.mxu0 0
        %1222 = vmatprep.subr.bf16.mxu0 0
        %1223 = vmatpush1.bf16.msra.mxu0 0
        %1224 = vmatprep.subr.bf16.mxu0 0
        %1225 = vmatpush1.bf16.msra.mxu0 0
        %1226 = vmatprep.subr.bf16.mxu0 0
        %1227 = vmatpush1.bf16.msra.mxu0 0
        %1228 = vmatprep.subr.bf16.mxu0 0
        %1229 = vmatpush1.bf16.msra.mxu0 0
        %1230 = vmatprep.subr.bf16.mxu0 0
        %1231 = vmatpush1.bf16.msra.mxu0 0
        %1232 = vmatprep.subr.bf16.mxu0 0
        %1233 = vmatpush1.bf16.msra.mxu0 0
        %1234 = vmatprep.subr.bf16.mxu0 0
        %1235 = vmatpush1.bf16.msra.mxu0 0
        %1236 = vmatprep.subr.bf16.mxu0 0
        %1237 = vmatpush1.bf16.msra.mxu0 0
        %1238 = vmatprep.subr.bf16.mxu0 0
        %1239 = vmatpush1.bf16.msra.mxu0 0
        %1240 = vmatprep.mubr.bf16.mxu0 0
        %1241 = vmatmul.mubr.bf16.gmra.mrb[0].mxu0 %v1157
        %v1242 = vpop.f32.mrb[0].mxu0
        %v1243 = vadd.f32 0.0, %v1242
        %v1244 = vpop.f32.mrb[0].mxu0
        %v1245 = vpop.f32.mrb[0].mxu0
        %v1246 = vadd.f32 0.0, %v1245
        %v1247 = vpop.f32.mrb[0].mxu0
        %1248 = vmatprep.mubr.bf16.mxu0 0
        %1249 = vmatmul.mubr.bf16.gmra.mrb[0].mxu0 %v1160
        %v1250 = vpop.f32.mrb[0].mxu0
        %v1251 = vadd.f32 0.0, %v1250
        %v1252 = vpop.f32.mrb[0].mxu0
        %v1253 = vpop.f32.mrb[0].mxu0
        %v1254 = vadd.f32 0.0, %v1253
        %v1255 = vpop.f32.mrb[0].mxu0
        %1256 = vmatprep.mubr.bf16.mxu0 0
        %1257 = vmatmul.mubr.bf16.gmra.mrb[0].mxu0 %v1163
        %v1258 = vpop.f32.mrb[0].mxu0
        %v1259 = vadd.f32 0.0, %v1258
        %v1260 = vpop.f32.mrb[0].mxu0
        %v1261 = vpop.f32.mrb[0].mxu0
        %v1262 = vadd.f32 0.0, %v1261
        %v1263 = vpop.f32.mrb[0].mxu0
        %1264 = vmatprep.mubr.bf16.mxu0 0
        %1265 = vmatmul.mubr.bf16.gmra.mrb[0].mxu0 %v1166
        %v1266 = vpop.f32.mrb[0].mxu0
        %v1267 = vadd.f32 0.0, %v1266
        %v1268 = vpop.f32.mrb[0].mxu0
        %v1269 = vpop.f32.mrb[0].mxu0
        %v1270 = vadd.f32 0.0, %v1269
        %v1271 = vpop.f32.mrb[0].mxu0
        %1272 = vmatprep.mubr.bf16.mxu0 0
        %1273 = vmatmul.mubr.bf16.gmra.mrb[0].mxu0 %v1169
        %v1274 = vpop.f32.mrb[0].mxu0
        %v1275 = vadd.f32 0.0, %v1274
        %v1276 = vpop.f32.mrb[0].mxu0
        %v1277 = vpop.f32.mrb[0].mxu0
        %v1278 = vadd.f32 0.0, %v1277
        %v1279 = vpop.f32.mrb[0].mxu0
        %1280 = vmatprep.mubr.bf16.mxu0 0
        %1281 = vmatmul.mubr.bf16.gmra.mrb[0].mxu0 %v1172
        %v1282 = vpop.f32.mrb[0].mxu0
        %v1283 = vadd.f32 0.0, %v1282
        %v1284 = vpop.f32.mrb[0].mxu0
        %v1285 = vpop.f32.mrb[0].mxu0
        %v1286 = vadd.f32 0.0, %v1285
        %v1287 = vpop.f32.mrb[0].mxu0
        %1288 = vmatprep.mubr.bf16.mxu0 0
        %1289 = vmatmul.mubr.bf16.gmra.mrb[0].mxu0 %v1175
        %v1290 = vpop.f32.mrb[0].mxu0
        %v1291 = vadd.f32 0.0, %v1290
        %v1292 = vpop.f32.mrb[0].mxu0
        %v1293 = vpop.f32.mrb[0].mxu0
        %v1294 = vadd.f32 0.0, %v1293
        %v1295 = vpop.f32.mrb[0].mxu0
        %1296 = vmatprep.mubr.bf16.mxu0 0
        %1297 = vmatmul.mubr.bf16.gmra.mrb[0].mxu0 %v1178
        %v1298 = vpop.f32.mrb[0].mxu0
        %v1299 = vadd.f32 0.0, %v1298
        %v1300 = vpop.f32.mrb[0].mxu0
        %v1301 = vpop.f32.mrb[0].mxu0
        %v1302 = vadd.f32 0.0, %v1301
        %v1303 = vpop.f32.mrb[0].mxu0
        %1304 = vmatprep.mubr.bf16.mxu0 0
        %1305 = vmatmul.mubr.bf16.gmra.mrb[0].mxu0 %v1181
        %v1306 = vpop.f32.mrb[0].mxu0
        %v1307 = vadd.f32 0.0, %v1306
        %v1308 = vpop.f32.mrb[0].mxu0
        %v1309 = vpop.f32.mrb[0].mxu0
        %v1310 = vadd.f32 0.0, %v1309
        %v1311 = vpop.f32.mrb[0].mxu0
        %1312 = vmatprep.mubr.bf16.mxu0 0
        %1313 = vmatmul.mubr.bf16.gmra.mrb[0].mxu0 %v1184
        %v1314 = vpop.f32.mrb[0].mxu0
        %v1315 = vadd.f32 0.0, %v1314
        %v1316 = vpop.f32.mrb[0].mxu0
        %v1317 = vpop.f32.mrb[0].mxu0
        %v1318 = vadd.f32 0.0, %v1317
        %v1319 = vpop.f32.mrb[0].mxu0
        %1320 = vmatprep.mubr.bf16.mxu0 0
        %1321 = vmatmul.mubr.bf16.gmra.mrb[0].mxu0 %v1187
        %v1322 = vpop.f32.mrb[0].mxu0
        %v1323 = vadd.f32 0.0, %v1322
        %v1324 = vpop.f32.mrb[0].mxu0
        %v1325 = vpop.f32.mrb[0].mxu0
        %v1326 = vadd.f32 0.0, %v1325
        %v1327 = vpop.f32.mrb[0].mxu0
        %1328 = vmatprep.mubr.bf16.mxu0 0
        %1329 = vmatmul.mubr.bf16.gmra.mrb[0].mxu0 %v1190
        %v1330 = vpop.f32.mrb[0].mxu0
        %v1331 = vadd.f32 0.0, %v1330
        %v1332 = vpop.f32.mrb[0].mxu0
        %v1333 = vpop.f32.mrb[0].mxu0
        %v1334 = vadd.f32 0.0, %v1333
        %v1335 = vpop.f32.mrb[0].mxu0
        %1336 = vmatprep.mubr.bf16.mxu0 0
        %1337 = vmatmul.mubr.bf16.gmra.mrb[0].mxu0 %v1193
        %v1338 = vpop.f32.mrb[0].mxu0
        %v1339 = vadd.f32 0.0, %v1338
        %v1340 = vpop.f32.mrb[0].mxu0
        %v1341 = vpop.f32.mrb[0].mxu0
        %v1342 = vadd.f32 0.0, %v1341
        %v1343 = vpop.f32.mrb[0].mxu0
        %1344 = vmatprep.mubr.bf16.mxu0 0
        %1345 = vmatmul.mubr.bf16.gmra.mrb[0].mxu0 %v1196
        %v1346 = vpop.f32.mrb[0].mxu0
        %v1347 = vadd.f32 0.0, %v1346
        %v1348 = vpop.f32.mrb[0].mxu0
        %v1349 = vpop.f32.mrb[0].mxu0
        %v1350 = vadd.f32 0.0, %v1349
        %v1351 = vpop.f32.mrb[0].mxu0
        %1352 = vmatprep.mubr.bf16.mxu0 0
        %1353 = vmatmul.mubr.bf16.gmra.mrb[0].mxu0 %v1199
        %v1354 = vpop.f32.mrb[0].mxu0
        %v1355 = vadd.f32 0.0, %v1354
        %v1356 = vpop.f32.mrb[0].mxu0
        %v1357 = vpop.f32.mrb[0].mxu0
        %v1358 = vadd.f32 0.0, %v1357
        %v1359 = vpop.f32.mrb[0].mxu0
        %1360 = vmatprep.mubr.bf16.mxu0 0
        %1361 = vmatmul.mubr.bf16.gmra.mrb[0].mxu0 %v1202
        %v1362 = vpop.f32.mrb[0].mxu0
        %v1363 = vadd.f32 0.0, %v1362
        %v1364 = vpop.f32.mrb[0].mxu0
        %v1365 = vpop.f32.mrb[0].mxu0
        %v1366 = vadd.f32 0.0, %v1365
        %v1367 = vpop.f32.mrb[0].mxu0
        %1368 = vdwg.mxu0
        %v1374 = vunpack.c.l.b16 %v1081
        %v1375 = vunpack.c.l.b16 %v1082
        %v1376 = vunpack.c.l.b16 %v1083
        %v1377 = vunpack.c.l.b16 %v1084
        %v1378 = vunpack.c.l.b16 %v1085
        %v1379 = vpack.c.b16 %v1375, %v1374
        %v1380 = vpack.c.b16 %v1377, %v1376
        %v1381 = vpack.c.b16 %v1378, %v1378
        %v1385 = vsel %vm1155, %v1065, 0
        %v1388 = vsel %vm1155, %v1066, 0
        %v1391 = vsel %vm1155, %v1067, 0
        %v1394 = vsel %vm1155, %v1068, 0
        %v1397 = vsel %vm1155, %v1069, 0
        %v1400 = vsel %vm1155, %v1070, 0
        %v1403 = vsel %vm1155, %v1071, 0
        %v1406 = vsel %vm1155, %v1072, 0
        %v1409 = vsel %vm1155, %v1073, 0
        %v1412 = vsel %vm1155, %v1074, 0
        %v1415 = vsel %vm1155, %v1075, 0
        %v1418 = vsel %vm1155, %v1076, 0
        %v1421 = vsel %vm1155, %v1077, 0
        %v1424 = vsel %vm1155, %v1078, 0
        %v1427 = vsel %vm1155, %v1079, 0
        %v1430 = vsel %vm1155, %v1080, 0
        %v1433 = vsel %vm1204, %v1381, 0
        %1435 = vmatprep.subr.bf16.mxu0 0
        %1436 = vmatpush1.bf16.msra.mxu0 %v1379
        %1437 = vmatprep.subr.bf16.mxu0 0
        %1438 = vmatpush1.bf16.msra.mxu0 %v1380
        %1439 = vmatprep.subr.bf16.mxu0 0
        %1440 = vmatpush1.bf16.msra.mxu0 %v1433
        %1441 = vmatprep.subr.bf16.mxu0 0
        %1442 = vmatpush1.bf16.msra.mxu0 0
        %1443 = vmatprep.subr.bf16.mxu0 0
        %1444 = vmatpush1.bf16.msra.mxu0 0
        %1445 = vmatprep.subr.bf16.mxu0 0
        %1446 = vmatpush1.bf16.msra.mxu0 0
        %1447 = vmatprep.subr.bf16.mxu0 0
        %1448 = vmatpush1.bf16.msra.mxu0 0
        %1449 = vmatprep.subr.bf16.mxu0 0
        %1450 = vmatpush1.bf16.msra.mxu0 0
        %1451 = vmatprep.subr.bf16.mxu0 0
        %1452 = vmatpush1.bf16.msra.mxu0 0
        %1453 = vmatprep.subr.bf16.mxu0 0
        %1454 = vmatpush1.bf16.msra.mxu0 0
        %1455 = vmatprep.subr.bf16.mxu0 0
        %1456 = vmatpush1.bf16.msra.mxu0 0
        %1457 = vmatprep.subr.bf16.mxu0 0
        %1458 = vmatpush1.bf16.msra.mxu0 0
        %1459 = vmatprep.subr.bf16.mxu0 0
        %1460 = vmatpush1.bf16.msra.mxu0 0
        %1461 = vmatprep.subr.bf16.mxu0 0
        %1462 = vmatpush1.bf16.msra.mxu0 0
        %1463 = vmatprep.subr.bf16.mxu0 0
        %1464 = vmatpush1.bf16.msra.mxu0 0
        %1465 = vmatprep.subr.bf16.mxu0 0
        %1466 = vmatpush1.bf16.msra.mxu0 0
        %1467 = vmatprep.mubr.bf16.mxu0 0
        %1468 = vmatmul.mubr.bf16.gmra.mrb[0].mxu0 %v1385
        %v1469 = vpop.f32.mrb[0].mxu0
        %v1470 = vadd.f32 %v1243, %v1469
        %v1471 = vpop.f32.mrb[0].mxu0
        %v1472 = vpop.f32.mrb[0].mxu0
        %v1473 = vadd.f32 %v1246, %v1472
        %v1474 = vpop.f32.mrb[0].mxu0
        %1475 = vmatprep.mubr.bf16.mxu0 0
        %1476 = vmatmul.mubr.bf16.gmra.mrb[0].mxu0 %v1388
        %v1477 = vpop.f32.mrb[0].mxu0
        %v1478 = vadd.f32 %v1251, %v1477
        %v1479 = vpop.f32.mrb[0].mxu0
        %v1480 = vpop.f32.mrb[0].mxu0
        %v1481 = vadd.f32 %v1254, %v1480
        %v1482 = vpop.f32.mrb[0].mxu0
        %1483 = vmatprep.mubr.bf16.mxu0 0
        %1484 = vmatmul.mubr.bf16.gmra.mrb[0].mxu0 %v1391
        %v1485 = vpop.f32.mrb[0].mxu0
        %v1486 = vadd.f32 %v1259, %v1485
        %v1487 = vpop.f32.mrb[0].mxu0
        %v1488 = vpop.f32.mrb[0].mxu0
        %v1489 = vadd.f32 %v1262, %v1488
        %v1490 = vpop.f32.mrb[0].mxu0
        %1491 = vmatprep.mubr.bf16.mxu0 0
        %1492 = vmatmul.mubr.bf16.gmra.mrb[0].mxu0 %v1394
        %v1493 = vpop.f32.mrb[0].mxu0
        %v1494 = vadd.f32 %v1267, %v1493
        %v1495 = vpop.f32.mrb[0].mxu0
        %v1496 = vpop.f32.mrb[0].mxu0
        %v1497 = vadd.f32 %v1270, %v1496
        %v1498 = vpop.f32.mrb[0].mxu0
        %1499 = vmatprep.mubr.bf16.mxu0 0
        %1500 = vmatmul.mubr.bf16.gmra.mrb[0].mxu0 %v1397
        %v1501 = vpop.f32.mrb[0].mxu0
        %v1502 = vadd.f32 %v1275, %v1501
        %v1503 = vpop.f32.mrb[0].mxu0
        %v1504 = vpop.f32.mrb[0].mxu0
        %v1505 = vadd.f32 %v1278, %v1504
        %v1506 = vpop.f32.mrb[0].mxu0
        %1507 = vmatprep.mubr.bf16.mxu0 0
        %1508 = vmatmul.mubr.bf16.gmra.mrb[0].mxu0 %v1400
        %v1509 = vpop.f32.mrb[0].mxu0
        %v1510 = vadd.f32 %v1283, %v1509
        %v1511 = vpop.f32.mrb[0].mxu0
        %v1512 = vpop.f32.mrb[0].mxu0
        %v1513 = vadd.f32 %v1286, %v1512
        %v1514 = vpop.f32.mrb[0].mxu0
        %1515 = vmatprep.mubr.bf16.mxu0 0
        %1516 = vmatmul.mubr.bf16.gmra.mrb[0].mxu0 %v1403
        %v1517 = vpop.f32.mrb[0].mxu0
        %v1518 = vadd.f32 %v1291, %v1517
        %v1519 = vpop.f32.mrb[0].mxu0
        %v1520 = vpop.f32.mrb[0].mxu0
        %v1521 = vadd.f32 %v1294, %v1520
        %v1522 = vpop.f32.mrb[0].mxu0
        %1523 = vmatprep.mubr.bf16.mxu0 0
        %1524 = vmatmul.mubr.bf16.gmra.mrb[0].mxu0 %v1406
        %v1525 = vpop.f32.mrb[0].mxu0
        %v1526 = vadd.f32 %v1299, %v1525
        %v1527 = vpop.f32.mrb[0].mxu0
        %v1528 = vpop.f32.mrb[0].mxu0
        %v1529 = vadd.f32 %v1302, %v1528
        %v1530 = vpop.f32.mrb[0].mxu0
        %1531 = vmatprep.mubr.bf16.mxu0 0
        %1532 = vmatmul.mubr.bf16.gmra.mrb[0].mxu0 %v1409
        %v1533 = vpop.f32.mrb[0].mxu0
        %v1534 = vadd.f32 %v1307, %v1533
        %v1535 = vpop.f32.mrb[0].mxu0
        %v1536 = vpop.f32.mrb[0].mxu0
        %v1537 = vadd.f32 %v1310, %v1536
        %v1538 = vpop.f32.mrb[0].mxu0
        %1539 = vmatprep.mubr.bf16.mxu0 0
        %1540 = vmatmul.mubr.bf16.gmra.mrb[0].mxu0 %v1412
        %v1541 = vpop.f32.mrb[0].mxu0
        %v1542 = vadd.f32 %v1315, %v1541
        %v1543 = vpop.f32.mrb[0].mxu0
        %v1544 = vpop.f32.mrb[0].mxu0
        %v1545 = vadd.f32 %v1318, %v1544
        %v1546 = vpop.f32.mrb[0].mxu0
        %1547 = vmatprep.mubr.bf16.mxu0 0
        %1548 = vmatmul.mubr.bf16.gmra.mrb[0].mxu0 %v1415
        %v1549 = vpop.f32.mrb[0].mxu0
        %v1550 = vadd.f32 %v1323, %v1549
        %v1551 = vpop.f32.mrb[0].mxu0
        %v1552 = vpop.f32.mrb[0].mxu0
        %v1553 = vadd.f32 %v1326, %v1552
        %v1554 = vpop.f32.mrb[0].mxu0
        %1555 = vmatprep.mubr.bf16.mxu0 0
        %1556 = vmatmul.mubr.bf16.gmra.mrb[0].mxu0 %v1418
        %v1557 = vpop.f32.mrb[0].mxu0
        %v1558 = vadd.f32 %v1331, %v1557
        %v1559 = vpop.f32.mrb[0].mxu0
        %v1560 = vpop.f32.mrb[0].mxu0
        %v1561 = vadd.f32 %v1334, %v1560
        %v1562 = vpop.f32.mrb[0].mxu0
        %1563 = vmatprep.mubr.bf16.mxu0 0
        %1564 = vmatmul.mubr.bf16.gmra.mrb[0].mxu0 %v1421
        %v1565 = vpop.f32.mrb[0].mxu0
        %v1566 = vadd.f32 %v1339, %v1565
        %v1567 = vpop.f32.mrb[0].mxu0
        %v1568 = vpop.f32.mrb[0].mxu0
        %v1569 = vadd.f32 %v1342, %v1568
        %v1570 = vpop.f32.mrb[0].mxu0
        %1571 = vmatprep.mubr.bf16.mxu0 0
        %1572 = vmatmul.mubr.bf16.gmra.mrb[0].mxu0 %v1424
        %v1573 = vpop.f32.mrb[0].mxu0
        %v1574 = vadd.f32 %v1347, %v1573
        %v1575 = vpop.f32.mrb[0].mxu0
        %v1576 = vpop.f32.mrb[0].mxu0
        %v1577 = vadd.f32 %v1350, %v1576
        %v1578 = vpop.f32.mrb[0].mxu0
        %1579 = vmatprep.mubr.bf16.mxu0 0
        %1580 = vmatmul.mubr.bf16.gmra.mrb[0].mxu0 %v1427
        %v1581 = vpop.f32.mrb[0].mxu0
        %v1582 = vadd.f32 %v1355, %v1581
        %v1583 = vpop.f32.mrb[0].mxu0
        %v1584 = vpop.f32.mrb[0].mxu0
        %v1585 = vadd.f32 %v1358, %v1584
        %v1586 = vpop.f32.mrb[0].mxu0
        %1587 = vmatprep.mubr.bf16.mxu0 0
        %1588 = vmatmul.mubr.bf16.gmra.mrb[0].mxu0 %v1430
        %v1589 = vpop.f32.mrb[0].mxu0
        %v1590 = vadd.f32 %v1363, %v1589
        %v1591 = vpop.f32.mrb[0].mxu0
        %v1592 = vpop.f32.mrb[0].mxu0
        %v1593 = vadd.f32 %v1366, %v1592
        %v1594 = vpop.f32.mrb[0].mxu0
        %1595 = vdwg.mxu0
        %v1596 = vld [vmem:[#allocation2 + $0x2] sm:$0xff]
        %v1597 = vld [vmem:[#allocation2 + $0xa] sm:$0xff]
        %v1598 = vld [vmem:[#allocation2 + $0x1a] sm:$0xff]
        %v1599 = vld [vmem:[#allocation2 + $0x22] sm:$0xff]
        %v1600 = vld [vmem:[#allocation2 + $0x32] sm:$0xff]
        %v1601 = vld [vmem:[#allocation2 + $0x3a] sm:$0xff]
        %v1602 = vld [vmem:[#allocation2 + $0x4a] sm:$0xff]
        %v1603 = vld [vmem:[#allocation2 + $0x52] sm:$0xff]
        %v1604 = vld [vmem:[#allocation2 + $0x62] sm:$0xff]
        %v1605 = vld [vmem:[#allocation2 + $0x6a] sm:$0xff]
        %v1606 = vld [vmem:[#allocation2 + $0x7a] sm:$0xff]
        %v1607 = vld [vmem:[#allocation2 + $0x82] sm:$0xff]
        %v1608 = vld [vmem:[#allocation2 + $0x92] sm:$0xff]
        %v1609 = vld [vmem:[#allocation2 + $0x9a] sm:$0xff]
        %v1610 = vld [vmem:[#allocation2 + $0xaa] sm:$0xff]
        %v1611 = vld [vmem:[#allocation2 + $0xb2] sm:$0xff]
        %v1612 = vld [vmem:[#allocation2 + $0xc2] sm:$0xff]
        %v1613 = vld [vmem:[#allocation2 + $0xca] sm:$0xff]
        %v1614 = vld [vmem:[#allocation2 + $0xda] sm:$0xff]
        %v1615 = vld [vmem:[#allocation2 + $0xe2] sm:$0xff]
        %v1616 = vld [vmem:[#allocation2 + $0xf2] sm:$0xff]
        %v1617 = vld [vmem:[#allocation2 + $0xfa] sm:$0xff]
        %v1618 = vld [vmem:[#allocation2 + $0x10a] sm:$0xff]
        %v1619 = vld [vmem:[#allocation2 + $0x112] sm:$0xff]
        %v1620 = vld [vmem:[#allocation2 + $0x122] sm:$0xff]
        %v1621 = vld [vmem:[#allocation2 + $0x12a] sm:$0xff]
        %v1622 = vld [vmem:[#allocation2 + $0x13a] sm:$0xff]
        %v1623 = vld [vmem:[#allocation2 + $0x142] sm:$0xff]
        %v1624 = vld [vmem:[#allocation2 + $0x152] sm:$0xff]
        %v1625 = vld [vmem:[#allocation2 + $0x15a] sm:$0xff]
        %v1626 = vld [vmem:[#allocation2 + $0x16a] sm:$0xff]
        %v1627 = vld [vmem:[#allocation2 + $0x172] sm:$0xff]
        %v1628 = vpack.c.bf16 %v1597, %v1596
        %v1629 = vpack.c.bf16 %v1599, %v1598
        %v1630 = vpack.c.bf16 %v1601, %v1600
        %v1631 = vpack.c.bf16 %v1603, %v1602
        %v1632 = vpack.c.bf16 %v1605, %v1604
        %v1633 = vpack.c.bf16 %v1607, %v1606
        %v1634 = vpack.c.bf16 %v1609, %v1608
        %v1635 = vpack.c.bf16 %v1611, %v1610
        %v1636 = vpack.c.bf16 %v1613, %v1612
        %v1637 = vpack.c.bf16 %v1615, %v1614
        %v1638 = vpack.c.bf16 %v1617, %v1616
        %v1639 = vpack.c.bf16 %v1619, %v1618
        %v1640 = vpack.c.bf16 %v1621, %v1620
        %v1641 = vpack.c.bf16 %v1623, %v1622
        %v1642 = vpack.c.bf16 %v1625, %v1624
        %v1643 = vpack.c.bf16 %v1627, %v1626
        %s1644 = scalar_lea.vmem %s3, 40
        %v1645 = vld [vmem:[%s1644] sm:$0xf]
        %v1646 = vld [vmem:[%s1644 + $0x4] sm:$0xf]
        %v1647 = vld [vmem:[%s1644 + $0x8] sm:$0xf]
        %v1648 = vld [vmem:[%s1644 + $0xc] sm:$0xf]
        %v1649 = vld [vmem:[%s1644 + $0x10] sm:$0x3]
        %v1655 = vunpack.c.l.b16 %v1645
        %v1656 = vunpack.c.l.b16 %v1646
        %v1657 = vunpack.c.l.b16 %v1647
        %v1658 = vunpack.c.l.b16 %v1648
        %v1659 = vunpack.c.l.b16 %v1649
        %v1660 = vpack.c.b16 %v1656, %v1655
        %v1661 = vpack.c.b16 %v1658, %v1657
        %v1662 = vpack.c.b16 %v1659, %v1659
        %v1666 = vsel %vm1155, %v1628, 0
        %v1669 = vsel %vm1155, %v1629, 0
        %v1672 = vsel %vm1155, %v1630, 0
        %v1675 = vsel %vm1155, %v1631, 0
        %v1678 = vsel %vm1155, %v1632, 0
        %v1681 = vsel %vm1155, %v1633, 0
        %v1684 = vsel %vm1155, %v1634, 0
        %v1687 = vsel %vm1155, %v1635, 0
        %v1690 = vsel %vm1155, %v1636, 0
        %v1693 = vsel %vm1155, %v1637, 0
        %v1696 = vsel %vm1155, %v1638, 0
        %v1699 = vsel %vm1155, %v1639, 0
        %v1702 = vsel %vm1155, %v1640, 0
        %v1705 = vsel %vm1155, %v1641, 0
        %v1708 = vsel %vm1155, %v1642, 0
        %v1711 = vsel %vm1155, %v1643, 0
        %v1714 = vsel %vm1204, %v1662, 0
        %1716 = vmatprep.subr.bf16.mxu0 0
        %1717 = vmatpush1.bf16.msra.mxu0 %v1660
        %1718 = vmatprep.subr.bf16.mxu0 0
        %1719 = vmatpush1.bf16.msra.mxu0 %v1661
        %1720 = vmatprep.subr.bf16.mxu0 0
        %1721 = vmatpush1.bf16.msra.mxu0 %v1714
        %1722 = vmatprep.subr.bf16.mxu0 0
        %1723 = vmatpush1.bf16.msra.mxu0 0
        %1724 = vmatprep.subr.bf16.mxu0 0
        %1725 = vmatpush1.bf16.msra.mxu0 0
        %1726 = vmatprep.subr.bf16.mxu0 0
        %1727 = vmatpush1.bf16.msra.mxu0 0
        %1728 = vmatprep.subr.bf16.mxu0 0
        %1729 = vmatpush1.bf16.msra.mxu0 0
        %1730 = vmatprep.subr.bf16.mxu0 0
        %1731 = vmatpush1.bf16.msra.mxu0 0
        %1732 = vmatprep.subr.bf16.mxu0 0
        %1733 = vmatpush1.bf16.msra.mxu0 0
        %1734 = vmatprep.subr.bf16.mxu0 0
        %1735 = vmatpush1.bf16.msra.mxu0 0
        %1736 = vmatprep.subr.bf16.mxu0 0
        %1737 = vmatpush1.bf16.msra.mxu0 0
        %1738 = vmatprep.subr.bf16.mxu0 0
        %1739 = vmatpush1.bf16.msra.mxu0 0
        %1740 = vmatprep.subr.bf16.mxu0 0
        %1741 = vmatpush1.bf16.msra.mxu0 0
        %1742 = vmatprep.subr.bf16.mxu0 0
        %1743 = vmatpush1.bf16.msra.mxu0 0
        %1744 = vmatprep.subr.bf16.mxu0 0
        %1745 = vmatpush1.bf16.msra.mxu0 0
        %1746 = vmatprep.subr.bf16.mxu0 0
        %1747 = vmatpush1.bf16.msra.mxu0 0
        %1748 = vmatprep.mubr.bf16.mxu0 0
        %1749 = vmatmul.mubr.bf16.gmra.mrb[0].mxu0 %v1666
        %v1750 = vpop.f32.mrb[0].mxu0
        %v1751 = vadd.f32 0.0, %v1750
        %v1752 = vpop.f32.mrb[0].mxu0
        %v1753 = vpop.f32.mrb[0].mxu0
        %v1754 = vadd.f32 0.0, %v1753
        %v1755 = vpop.f32.mrb[0].mxu0
        %1756 = vmatprep.mubr.bf16.mxu0 0
        %1757 = vmatmul.mubr.bf16.gmra.mrb[0].mxu0 %v1669
        %v1758 = vpop.f32.mrb[0].mxu0
        %v1759 = vadd.f32 0.0, %v1758
        %v1760 = vpop.f32.mrb[0].mxu0
        %v1761 = vpop.f32.mrb[0].mxu0
        %v1762 = vadd.f32 0.0, %v1761
        %v1763 = vpop.f32.mrb[0].mxu0
        %1764 = vmatprep.mubr.bf16.mxu0 0
        %1765 = vmatmul.mubr.bf16.gmra.mrb[0].mxu0 %v1672
        %v1766 = vpop.f32.mrb[0].mxu0
        %v1767 = vadd.f32 0.0, %v1766
        %v1768 = vpop.f32.mrb[0].mxu0
        %v1769 = vpop.f32.mrb[0].mxu0
        %v1770 = vadd.f32 0.0, %v1769
        %v1771 = vpop.f32.mrb[0].mxu0
        %1772 = vmatprep.mubr.bf16.mxu0 0
        %1773 = vmatmul.mubr.bf16.gmra.mrb[0].mxu0 %v1675
        %v1774 = vpop.f32.mrb[0].mxu0
        %v1775 = vadd.f32 0.0, %v1774
        %v1776 = vpop.f32.mrb[0].mxu0
        %v1777 = vpop.f32.mrb[0].mxu0
        %v1778 = vadd.f32 0.0, %v1777
        %v1779 = vpop.f32.mrb[0].mxu0
        %1780 = vmatprep.mubr.bf16.mxu0 0
        %1781 = vmatmul.mubr.bf16.gmra.mrb[0].mxu0 %v1678
        %v1782 = vpop.f32.mrb[0].mxu0
        %v1783 = vadd.f32 0.0, %v1782
        %v1784 = vpop.f32.mrb[0].mxu0
        %v1785 = vpop.f32.mrb[0].mxu0
        %v1786 = vadd.f32 0.0, %v1785
        %v1787 = vpop.f32.mrb[0].mxu0
        %1788 = vmatprep.mubr.bf16.mxu0 0
        %1789 = vmatmul.mubr.bf16.gmra.mrb[0].mxu0 %v1681
        %v1790 = vpop.f32.mrb[0].mxu0
        %v1791 = vadd.f32 0.0, %v1790
        %v1792 = vpop.f32.mrb[0].mxu0
        %v1793 = vpop.f32.mrb[0].mxu0
        %v1794 = vadd.f32 0.0, %v1793
        %v1795 = vpop.f32.mrb[0].mxu0
        %1796 = vmatprep.mubr.bf16.mxu0 0
        %1797 = vmatmul.mubr.bf16.gmra.mrb[0].mxu0 %v1684
        %v1798 = vpop.f32.mrb[0].mxu0
        %v1799 = vadd.f32 0.0, %v1798
        %v1800 = vpop.f32.mrb[0].mxu0
        %v1801 = vpop.f32.mrb[0].mxu0
        %v1802 = vadd.f32 0.0, %v1801
        %v1803 = vpop.f32.mrb[0].mxu0
        %1804 = vmatprep.mubr.bf16.mxu0 0
        %1805 = vmatmul.mubr.bf16.gmra.mrb[0].mxu0 %v1687
        %v1806 = vpop.f32.mrb[0].mxu0
        %v1807 = vadd.f32 0.0, %v1806
        %v1808 = vpop.f32.mrb[0].mxu0
        %v1809 = vpop.f32.mrb[0].mxu0
        %v1810 = vadd.f32 0.0, %v1809
        %v1811 = vpop.f32.mrb[0].mxu0
        %1812 = vmatprep.mubr.bf16.mxu0 0
        %1813 = vmatmul.mubr.bf16.gmra.mrb[0].mxu0 %v1690
        %v1814 = vpop.f32.mrb[0].mxu0
        %v1815 = vadd.f32 0.0, %v1814
        %v1816 = vpop.f32.mrb[0].mxu0
        %v1817 = vpop.f32.mrb[0].mxu0
        %v1818 = vadd.f32 0.0, %v1817
        %v1819 = vpop.f32.mrb[0].mxu0
        %1820 = vmatprep.mubr.bf16.mxu0 0
        %1821 = vmatmul.mubr.bf16.gmra.mrb[0].mxu0 %v1693
        %v1822 = vpop.f32.mrb[0].mxu0
        %v1823 = vadd.f32 0.0, %v1822
        %v1824 = vpop.f32.mrb[0].mxu0
        %v1825 = vpop.f32.mrb[0].mxu0
        %v1826 = vadd.f32 0.0, %v1825
        %v1827 = vpop.f32.mrb[0].mxu0
        %1828 = vmatprep.mubr.bf16.mxu0 0
        %1829 = vmatmul.mubr.bf16.gmra.mrb[0].mxu0 %v1696
        %v1830 = vpop.f32.mrb[0].mxu0
        %v1831 = vadd.f32 0.0, %v1830
        %v1832 = vpop.f32.mrb[0].mxu0
        %v1833 = vpop.f32.mrb[0].mxu0
        %v1834 = vadd.f32 0.0, %v1833
        %v1835 = vpop.f32.mrb[0].mxu0
        %1836 = vmatprep.mubr.bf16.mxu0 0
        %1837 = vmatmul.mubr.bf16.gmra.mrb[0].mxu0 %v1699
        %v1838 = vpop.f32.mrb[0].mxu0
        %v1839 = vadd.f32 0.0, %v1838
        %v1840 = vpop.f32.mrb[0].mxu0
        %v1841 = vpop.f32.mrb[0].mxu0
        %v1842 = vadd.f32 0.0, %v1841
        %v1843 = vpop.f32.mrb[0].mxu0
        %1844 = vmatprep.mubr.bf16.mxu0 0
        %1845 = vmatmul.mubr.bf16.gmra.mrb[0].mxu0 %v1702
        %v1846 = vpop.f32.mrb[0].mxu0
        %v1847 = vadd.f32 0.0, %v1846
        %v1848 = vpop.f32.mrb[0].mxu0
        %v1849 = vpop.f32.mrb[0].mxu0
        %v1850 = vadd.f32 0.0, %v1849
        %v1851 = vpop.f32.mrb[0].mxu0
        %1852 = vmatprep.mubr.bf16.mxu0 0
        %1853 = vmatmul.mubr.bf16.gmra.mrb[0].mxu0 %v1705
        %v1854 = vpop.f32.mrb[0].mxu0
        %v1855 = vadd.f32 0.0, %v1854
        %v1856 = vpop.f32.mrb[0].mxu0
        %v1857 = vpop.f32.mrb[0].mxu0
        %v1858 = vadd.f32 0.0, %v1857
        %v1859 = vpop.f32.mrb[0].mxu0
        %1860 = vmatprep.mubr.bf16.mxu0 0
        %1861 = vmatmul.mubr.bf16.gmra.mrb[0].mxu0 %v1708
        %v1862 = vpop.f32.mrb[0].mxu0
        %v1863 = vadd.f32 0.0, %v1862
        %v1864 = vpop.f32.mrb[0].mxu0
        %v1865 = vpop.f32.mrb[0].mxu0
        %v1866 = vadd.f32 0.0, %v1865
        %v1867 = vpop.f32.mrb[0].mxu0
        %1868 = vmatprep.mubr.bf16.mxu0 0
        %1869 = vmatmul.mubr.bf16.gmra.mrb[0].mxu0 %v1711
        %v1870 = vpop.f32.mrb[0].mxu0
        %v1871 = vadd.f32 0.0, %v1870
        %v1872 = vpop.f32.mrb[0].mxu0
        %v1873 = vpop.f32.mrb[0].mxu0
        %v1874 = vadd.f32 0.0, %v1873
        %v1875 = vpop.f32.mrb[0].mxu0
        %1876 = vdwg.mxu0
        %v1877 = vadd.f32 %v1470, %v1751
        %v1878 = vadd.f32 %v1473, %v1754
        %v1879 = vadd.f32 %v1478, %v1759
        %v1880 = vadd.f32 %v1481, %v1762
        %v1881 = vadd.f32 %v1486, %v1767
        %v1882 = vadd.f32 %v1489, %v1770
        %v1883 = vadd.f32 %v1494, %v1775
        %v1884 = vadd.f32 %v1497, %v1778
        %v1885 = vadd.f32 %v1502, %v1783
        %v1886 = vadd.f32 %v1505, %v1786
        %v1887 = vadd.f32 %v1510, %v1791
        %v1888 = vadd.f32 %v1513, %v1794
        %v1889 = vadd.f32 %v1518, %v1799
        %v1890 = vadd.f32 %v1521, %v1802
        %v1891 = vadd.f32 %v1526, %v1807
        %v1892 = vadd.f32 %v1529, %v1810
        %v1893 = vadd.f32 %v1534, %v1815
        %v1894 = vadd.f32 %v1537, %v1818
        %v1895 = vadd.f32 %v1542, %v1823
        %v1896 = vadd.f32 %v1545, %v1826
        %v1897 = vadd.f32 %v1550, %v1831
        %v1898 = vadd.f32 %v1553, %v1834
        %v1899 = vadd.f32 %v1558, %v1839
        %v1900 = vadd.f32 %v1561, %v1842
        %v1901 = vadd.f32 %v1566, %v1847
        %v1902 = vadd.f32 %v1569, %v1850
        %v1903 = vadd.f32 %v1574, %v1855
        %v1904 = vadd.f32 %v1577, %v1858
        %v1905 = vadd.f32 %v1582, %v1863
        %v1906 = vadd.f32 %v1585, %v1866
        %v1907 = vadd.f32 %v1590, %v1871
        %v1908 = vadd.f32 %v1593, %v1874
        %v1909 = vld [vmem:[%s838] sm:$0xff]
        %v1910 = vld [vmem:[%s838 + $0x8] sm:$0xff]
        %v1911 = vld [vmem:[%s838 + $0x18] sm:$0xff]
        %v1912 = vld [vmem:[%s838 + $0x20] sm:$0xff]
        %v1913 = vld [vmem:[%s838 + $0x30] sm:$0xff]
        %v1914 = vld [vmem:[%s838 + $0x38] sm:$0xff]
        %v1915 = vld [vmem:[%s838 + $0x48] sm:$0xff]
        %v1916 = vld [vmem:[%s838 + $0x50] sm:$0xff]
        %v1917 = vld [vmem:[%s838 + $0x60] sm:$0xff]
        %v1918 = vld [vmem:[%s838 + $0x68] sm:$0xff]
        %v1919 = vld [vmem:[%s838 + $0x78] sm:$0xff]
        %v1920 = vld [vmem:[%s838 + $0x80] sm:$0xff]
        %v1921 = vld [vmem:[%s838 + $0x90] sm:$0xff]
        %v1922 = vld [vmem:[%s838 + $0x98] sm:$0xff]
        %v1923 = vld [vmem:[%s838 + $0xa8] sm:$0xff]
        %v1924 = vld [vmem:[%s838 + $0xb0] sm:$0xff]
        %v1925 = vld [vmem:[%s838 + $0xc0] sm:$0xff]
        %v1926 = vld [vmem:[%s838 + $0xc8] sm:$0xff]
        %v1927 = vld [vmem:[%s838 + $0xd8] sm:$0xff]
        %v1928 = vld [vmem:[%s838 + $0xe0] sm:$0xff]
        %v1929 = vld [vmem:[%s838 + $0xf0] sm:$0xff]
        %v1930 = vld [vmem:[%s838 + $0xf8] sm:$0xff]
        %v1931 = vld [vmem:[%s838 + $0x108] sm:$0xff]
        %v1932 = vld [vmem:[%s838 + $0x110] sm:$0xff]
        %v1933 = vld [vmem:[%s838 + $0x120] sm:$0xff]
        %v1934 = vld [vmem:[%s838 + $0x128] sm:$0xff]
        %v1935 = vld [vmem:[%s838 + $0x138] sm:$0xff]
        %v1936 = vld [vmem:[%s838 + $0x140] sm:$0xff]
        %v1937 = vld [vmem:[%s838 + $0x150] sm:$0xff]
        %v1938 = vld [vmem:[%s838 + $0x158] sm:$0xff]
        %v1939 = vld [vmem:[%s838 + $0x168] sm:$0xff]
        %v1940 = vld [vmem:[%s838 + $0x170] sm:$0xff]
        %v1941 = vpack.c.bf16 %v1910, %v1909
        %v1942 = vpack.c.bf16 %v1912, %v1911
        %v1943 = vpack.c.bf16 %v1914, %v1913
        %v1944 = vpack.c.bf16 %v1916, %v1915
        %v1945 = vpack.c.bf16 %v1918, %v1917
        %v1946 = vpack.c.bf16 %v1920, %v1919
        %v1947 = vpack.c.bf16 %v1922, %v1921
        %v1948 = vpack.c.bf16 %v1924, %v1923
        %v1949 = vpack.c.bf16 %v1926, %v1925
        %v1950 = vpack.c.bf16 %v1928, %v1927
        %v1951 = vpack.c.bf16 %v1930, %v1929
        %v1952 = vpack.c.bf16 %v1932, %v1931
        %v1953 = vpack.c.bf16 %v1934, %v1933
        %v1954 = vpack.c.bf16 %v1936, %v1935
        %v1955 = vpack.c.bf16 %v1938, %v1937
        %v1956 = vpack.c.bf16 %v1940, %v1939
        %s1957 = scalar_lea.vmem %s3, 60
        %v1958 = vld [vmem:[%s1957] sm:$0xf]
        %v1959 = vld [vmem:[%s1957 + $0x4] sm:$0xf]
        %v1960 = vld [vmem:[%s1957 + $0x8] sm:$0xf]
        %v1961 = vld [vmem:[%s1957 + $0xc] sm:$0xf]
        %v1962 = vld [vmem:[%s1957 + $0x10] sm:$0x3]
        %v1968 = vunpack.c.l.b16 %v1958
        %v1969 = vunpack.c.l.b16 %v1959
        %v1970 = vunpack.c.l.b16 %v1960
        %v1971 = vunpack.c.l.b16 %v1961
        %v1972 = vunpack.c.l.b16 %v1962
        %v1973 = vpack.c.b16 %v1969, %v1968
        %v1974 = vpack.c.b16 %v1971, %v1970
        %v1975 = vpack.c.b16 %v1972, %v1972
        %v1979 = vsel %vm1155, %v1941, 0
        %v1982 = vsel %vm1155, %v1942, 0
        %v1985 = vsel %vm1155, %v1943, 0
        %v1988 = vsel %vm1155, %v1944, 0
        %v1991 = vsel %vm1155, %v1945, 0
        %v1994 = vsel %vm1155, %v1946, 0
        %v1997 = vsel %vm1155, %v1947, 0
        %v2000 = vsel %vm1155, %v1948, 0
        %v2003 = vsel %vm1155, %v1949, 0
        %v2006 = vsel %vm1155, %v1950, 0
        %v2009 = vsel %vm1155, %v1951, 0
        %v2012 = vsel %vm1155, %v1952, 0
        %v2015 = vsel %vm1155, %v1953, 0
        %v2018 = vsel %vm1155, %v1954, 0
        %v2021 = vsel %vm1155, %v1955, 0
        %v2024 = vsel %vm1155, %v1956, 0
        %v2027 = vsel %vm1204, %v1975, 0
        %2029 = vmatprep.subr.bf16.mxu0 0
        %2030 = vmatpush1.bf16.msra.mxu0 %v1973
        %2031 = vmatprep.subr.bf16.mxu0 0
        %2032 = vmatpush1.bf16.msra.mxu0 %v1974
        %2033 = vmatprep.subr.bf16.mxu0 0
        %2034 = vmatpush1.bf16.msra.mxu0 %v2027
        %2035 = vmatprep.subr.bf16.mxu0 0
        %2036 = vmatpush1.bf16.msra.mxu0 0
        %2037 = vmatprep.subr.bf16.mxu0 0
        %2038 = vmatpush1.bf16.msra.mxu0 0
        %2039 = vmatprep.subr.bf16.mxu0 0
        %2040 = vmatpush1.bf16.msra.mxu0 0
        %2041 = vmatprep.subr.bf16.mxu0 0
        %2042 = vmatpush1.bf16.msra.mxu0 0
        %2043 = vmatprep.subr.bf16.mxu0 0
        %2044 = vmatpush1.bf16.msra.mxu0 0
        %2045 = vmatprep.subr.bf16.mxu0 0
        %2046 = vmatpush1.bf16.msra.mxu0 0
        %2047 = vmatprep.subr.bf16.mxu0 0
        %2048 = vmatpush1.bf16.msra.mxu0 0
        %2049 = vmatprep.subr.bf16.mxu0 0
        %2050 = vmatpush1.bf16.msra.mxu0 0
        %2051 = vmatprep.subr.bf16.mxu0 0
        %2052 = vmatpush1.bf16.msra.mxu0 0
        %2053 = vmatprep.subr.bf16.mxu0 0
        %2054 = vmatpush1.bf16.msra.mxu0 0
        %2055 = vmatprep.subr.bf16.mxu0 0
        %2056 = vmatpush1.bf16.msra.mxu0 0
        %2057 = vmatprep.subr.bf16.mxu0 0
        %2058 = vmatpush1.bf16.msra.mxu0 0
        %2059 = vmatprep.subr.bf16.mxu0 0
        %2060 = vmatpush1.bf16.msra.mxu0 0
        %2061 = vmatprep.mubr.bf16.mxu0 0
        %2062 = vmatmul.mubr.bf16.gmra.mrb[0].mxu0 %v1979
        %v2063 = vpop.f32.mrb[0].mxu0
        %v2064 = vadd.f32 0.0, %v2063
        %v2065 = vpop.f32.mrb[0].mxu0
        %v2066 = vpop.f32.mrb[0].mxu0
        %v2067 = vadd.f32 0.0, %v2066
        %v2068 = vpop.f32.mrb[0].mxu0
        %2069 = vmatprep.mubr.bf16.mxu0 0
        %2070 = vmatmul.mubr.bf16.gmra.mrb[0].mxu0 %v1982
        %v2071 = vpop.f32.mrb[0].mxu0
        %v2072 = vadd.f32 0.0, %v2071
        %v2073 = vpop.f32.mrb[0].mxu0
        %v2074 = vpop.f32.mrb[0].mxu0
        %v2075 = vadd.f32 0.0, %v2074
        %v2076 = vpop.f32.mrb[0].mxu0
        %2077 = vmatprep.mubr.bf16.mxu0 0
        %2078 = vmatmul.mubr.bf16.gmra.mrb[0].mxu0 %v1985
        %v2079 = vpop.f32.mrb[0].mxu0
        %v2080 = vadd.f32 0.0, %v2079
        %v2081 = vpop.f32.mrb[0].mxu0
        %v2082 = vpop.f32.mrb[0].mxu0
        %v2083 = vadd.f32 0.0, %v2082
        %v2084 = vpop.f32.mrb[0].mxu0
        %2085 = vmatprep.mubr.bf16.mxu0 0
        %2086 = vmatmul.mubr.bf16.gmra.mrb[0].mxu0 %v1988
        %v2087 = vpop.f32.mrb[0].mxu0
        %v2088 = vadd.f32 0.0, %v2087
        %v2089 = vpop.f32.mrb[0].mxu0
        %v2090 = vpop.f32.mrb[0].mxu0
        %v2091 = vadd.f32 0.0, %v2090
        %v2092 = vpop.f32.mrb[0].mxu0
        %2093 = vmatprep.mubr.bf16.mxu0 0
        %2094 = vmatmul.mubr.bf16.gmra.mrb[0].mxu0 %v1991
        %v2095 = vpop.f32.mrb[0].mxu0
        %v2096 = vadd.f32 0.0, %v2095
        %v2097 = vpop.f32.mrb[0].mxu0
        %v2098 = vpop.f32.mrb[0].mxu0
        %v2099 = vadd.f32 0.0, %v2098
        %v2100 = vpop.f32.mrb[0].mxu0
        %2101 = vmatprep.mubr.bf16.mxu0 0
        %2102 = vmatmul.mubr.bf16.gmra.mrb[0].mxu0 %v1994
        %v2103 = vpop.f32.mrb[0].mxu0
        %v2104 = vadd.f32 0.0, %v2103
        %v2105 = vpop.f32.mrb[0].mxu0
        %v2106 = vpop.f32.mrb[0].mxu0
        %v2107 = vadd.f32 0.0, %v2106
        %v2108 = vpop.f32.mrb[0].mxu0
        %2109 = vmatprep.mubr.bf16.mxu0 0
        %2110 = vmatmul.mubr.bf16.gmra.mrb[0].mxu0 %v1997
        %v2111 = vpop.f32.mrb[0].mxu0
        %v2112 = vadd.f32 0.0, %v2111
        %v2113 = vpop.f32.mrb[0].mxu0
        %v2114 = vpop.f32.mrb[0].mxu0
        %v2115 = vadd.f32 0.0, %v2114
        %v2116 = vpop.f32.mrb[0].mxu0
        %2117 = vmatprep.mubr.bf16.mxu0 0
        %2118 = vmatmul.mubr.bf16.gmra.mrb[0].mxu0 %v2000
        %v2119 = vpop.f32.mrb[0].mxu0
        %v2120 = vadd.f32 0.0, %v2119
        %v2121 = vpop.f32.mrb[0].mxu0
        %v2122 = vpop.f32.mrb[0].mxu0
        %v2123 = vadd.f32 0.0, %v2122
        %v2124 = vpop.f32.mrb[0].mxu0
        %2125 = vmatprep.mubr.bf16.mxu0 0
        %2126 = vmatmul.mubr.bf16.gmra.mrb[0].mxu0 %v2003
        %v2127 = vpop.f32.mrb[0].mxu0
        %v2128 = vadd.f32 0.0, %v2127
        %v2129 = vpop.f32.mrb[0].mxu0
        %v2130 = vpop.f32.mrb[0].mxu0
        %v2131 = vadd.f32 0.0, %v2130
        %v2132 = vpop.f32.mrb[0].mxu0
        %2133 = vmatprep.mubr.bf16.mxu0 0
        %2134 = vmatmul.mubr.bf16.gmra.mrb[0].mxu0 %v2006
        %v2135 = vpop.f32.mrb[0].mxu0
        %v2136 = vadd.f32 0.0, %v2135
        %v2137 = vpop.f32.mrb[0].mxu0
        %v2138 = vpop.f32.mrb[0].mxu0
        %v2139 = vadd.f32 0.0, %v2138
        %v2140 = vpop.f32.mrb[0].mxu0
        %2141 = vmatprep.mubr.bf16.mxu0 0
        %2142 = vmatmul.mubr.bf16.gmra.mrb[0].mxu0 %v2009
        %v2143 = vpop.f32.mrb[0].mxu0
        %v2144 = vadd.f32 0.0, %v2143
        %v2145 = vpop.f32.mrb[0].mxu0
        %v2146 = vpop.f32.mrb[0].mxu0
        %v2147 = vadd.f32 0.0, %v2146
        %v2148 = vpop.f32.mrb[0].mxu0
        %2149 = vmatprep.mubr.bf16.mxu0 0
        %2150 = vmatmul.mubr.bf16.gmra.mrb[0].mxu0 %v2012
        %v2151 = vpop.f32.mrb[0].mxu0
        %v2152 = vadd.f32 0.0, %v2151
        %v2153 = vpop.f32.mrb[0].mxu0
        %v2154 = vpop.f32.mrb[0].mxu0
        %v2155 = vadd.f32 0.0, %v2154
        %v2156 = vpop.f32.mrb[0].mxu0
        %2157 = vmatprep.mubr.bf16.mxu0 0
        %2158 = vmatmul.mubr.bf16.gmra.mrb[0].mxu0 %v2015
        %v2159 = vpop.f32.mrb[0].mxu0
        %v2160 = vadd.f32 0.0, %v2159
        %v2161 = vpop.f32.mrb[0].mxu0
        %v2162 = vpop.f32.mrb[0].mxu0
        %v2163 = vadd.f32 0.0, %v2162
        %v2164 = vpop.f32.mrb[0].mxu0
        %2165 = vmatprep.mubr.bf16.mxu0 0
        %2166 = vmatmul.mubr.bf16.gmra.mrb[0].mxu0 %v2018
        %v2167 = vpop.f32.mrb[0].mxu0
        %v2168 = vadd.f32 0.0, %v2167
        %v2169 = vpop.f32.mrb[0].mxu0
        %v2170 = vpop.f32.mrb[0].mxu0
        %v2171 = vadd.f32 0.0, %v2170
        %v2172 = vpop.f32.mrb[0].mxu0
        %2173 = vmatprep.mubr.bf16.mxu0 0
        %2174 = vmatmul.mubr.bf16.gmra.mrb[0].mxu0 %v2021
        %v2175 = vpop.f32.mrb[0].mxu0
        %v2176 = vadd.f32 0.0, %v2175
        %v2177 = vpop.f32.mrb[0].mxu0
        %v2178 = vpop.f32.mrb[0].mxu0
        %v2179 = vadd.f32 0.0, %v2178
        %v2180 = vpop.f32.mrb[0].mxu0
        %2181 = vmatprep.mubr.bf16.mxu0 0
        %2182 = vmatmul.mubr.bf16.gmra.mrb[0].mxu0 %v2024
        %v2183 = vpop.f32.mrb[0].mxu0
        %v2184 = vadd.f32 0.0, %v2183
        %v2185 = vpop.f32.mrb[0].mxu0
        %v2186 = vpop.f32.mrb[0].mxu0
        %v2187 = vadd.f32 0.0, %v2186
        %v2188 = vpop.f32.mrb[0].mxu0
        %2189 = vdwg.mxu0
        %v2190 = vadd.f32 %v1877, %v2064
        %v2191 = vadd.f32 %v1878, %v2067
        %v2192 = vadd.f32 %v1879, %v2072
        %v2193 = vadd.f32 %v1880, %v2075
        %v2194 = vadd.f32 %v1881, %v2080
        %v2195 = vadd.f32 %v1882, %v2083
        %v2196 = vadd.f32 %v1883, %v2088
        %v2197 = vadd.f32 %v1884, %v2091
        %v2198 = vadd.f32 %v1885, %v2096
        %v2199 = vadd.f32 %v1886, %v2099
        %v2200 = vadd.f32 %v1887, %v2104
        %v2201 = vadd.f32 %v1888, %v2107
        %v2202 = vadd.f32 %v1889, %v2112
        %v2203 = vadd.f32 %v1890, %v2115
        %v2204 = vadd.f32 %v1891, %v2120
        %v2205 = vadd.f32 %v1892, %v2123
        %v2206 = vadd.f32 %v1893, %v2128
        %v2207 = vadd.f32 %v1894, %v2131
        %v2208 = vadd.f32 %v1895, %v2136
        %v2209 = vadd.f32 %v1896, %v2139
        %v2210 = vadd.f32 %v1897, %v2144
        %v2211 = vadd.f32 %v1898, %v2147
        %v2212 = vadd.f32 %v1899, %v2152
        %v2213 = vadd.f32 %v1900, %v2155
        %v2214 = vadd.f32 %v1901, %v2160
        %v2215 = vadd.f32 %v1902, %v2163
        %v2216 = vadd.f32 %v1903, %v2168
        %v2217 = vadd.f32 %v1904, %v2171
        %v2218 = vadd.f32 %v1905, %v2176
        %v2219 = vadd.f32 %v1906, %v2179
        %v2220 = vadd.f32 %v1907, %v2184
        %v2221 = vadd.f32 %v1908, %v2187
        %v2222 = vld [vmem:[%s838 + $0x1] sm:$0xff]
        %v2223 = vld [vmem:[%s838 + $0x9] sm:$0xff]
        %v2224 = vld [vmem:[%s838 + $0x19] sm:$0xff]
        %v2225 = vld [vmem:[%s838 + $0x21] sm:$0xff]
        %v2226 = vld [vmem:[%s838 + $0x31] sm:$0xff]
        %v2227 = vld [vmem:[%s838 + $0x39] sm:$0xff]
        %v2228 = vld [vmem:[%s838 + $0x49] sm:$0xff]
        %v2229 = vld [vmem:[%s838 + $0x51] sm:$0xff]
        %v2230 = vld [vmem:[%s838 + $0x61] sm:$0xff]
        %v2231 = vld [vmem:[%s838 + $0x69] sm:$0xff]
        %v2232 = vld [vmem:[%s838 + $0x79] sm:$0xff]
        %v2233 = vld [vmem:[%s838 + $0x81] sm:$0xff]
        %v2234 = vld [vmem:[%s838 + $0x91] sm:$0xff]
        %v2235 = vld [vmem:[%s838 + $0x99] sm:$0xff]
        %v2236 = vld [vmem:[%s838 + $0xa9] sm:$0xff]
        %v2237 = vld [vmem:[%s838 + $0xb1] sm:$0xff]
        %v2238 = vld [vmem:[%s838 + $0xc1] sm:$0xff]
        %v2239 = vld [vmem:[%s838 + $0xc9] sm:$0xff]
        %v2240 = vld [vmem:[%s838 + $0xd9] sm:$0xff]
        %v2241 = vld [vmem:[%s838 + $0xe1] sm:$0xff]
        %v2242 = vld [vmem:[%s838 + $0xf1] sm:$0xff]
        %v2243 = vld [vmem:[%s838 + $0xf9] sm:$0xff]
        %v2244 = vld [vmem:[%s838 + $0x109] sm:$0xff]
        %v2245 = vld [vmem:[%s838 + $0x111] sm:$0xff]
        %v2246 = vld [vmem:[%s838 + $0x121] sm:$0xff]
        %v2247 = vld [vmem:[%s838 + $0x129] sm:$0xff]
        %v2248 = vld [vmem:[%s838 + $0x139] sm:$0xff]
        %v2249 = vld [vmem:[%s838 + $0x141] sm:$0xff]
        %v2250 = vld [vmem:[%s838 + $0x151] sm:$0xff]
        %v2251 = vld [vmem:[%s838 + $0x159] sm:$0xff]
        %v2252 = vld [vmem:[%s838 + $0x169] sm:$0xff]
        %v2253 = vld [vmem:[%s838 + $0x171] sm:$0xff]
        %v2254 = vpack.c.bf16 %v2223, %v2222
        %v2255 = vpack.c.bf16 %v2225, %v2224
        %v2256 = vpack.c.bf16 %v2227, %v2226
        %v2257 = vpack.c.bf16 %v2229, %v2228
        %v2258 = vpack.c.bf16 %v2231, %v2230
        %v2259 = vpack.c.bf16 %v2233, %v2232
        %v2260 = vpack.c.bf16 %v2235, %v2234
        %v2261 = vpack.c.bf16 %v2237, %v2236
        %v2262 = vpack.c.bf16 %v2239, %v2238
        %v2263 = vpack.c.bf16 %v2241, %v2240
        %v2264 = vpack.c.bf16 %v2243, %v2242
        %v2265 = vpack.c.bf16 %v2245, %v2244
        %v2266 = vpack.c.bf16 %v2247, %v2246
        %v2267 = vpack.c.bf16 %v2249, %v2248
        %v2268 = vpack.c.bf16 %v2251, %v2250
        %v2269 = vpack.c.bf16 %v2253, %v2252
        %s2270 = scalar_lea.vmem %s3, 80
        %v2271 = vld [vmem:[%s2270] sm:$0xf]
        %v2272 = vld [vmem:[%s2270 + $0x4] sm:$0xf]
        %v2273 = vld [vmem:[%s2270 + $0x8] sm:$0xf]
        %v2274 = vld [vmem:[%s2270 + $0xc] sm:$0xf]
        %v2275 = vld [vmem:[%s2270 + $0x10] sm:$0x3]
        %v2281 = vunpack.c.l.b16 %v2271
        %v2282 = vunpack.c.l.b16 %v2272
        %v2283 = vunpack.c.l.b16 %v2273
        %v2284 = vunpack.c.l.b16 %v2274
        %v2285 = vunpack.c.l.b16 %v2275
        %v2286 = vpack.c.b16 %v2282, %v2281
        %v2287 = vpack.c.b16 %v2284, %v2283
        %v2288 = vpack.c.b16 %v2285, %v2285
        %v2292 = vsel %vm1155, %v2254, 0
        %v2295 = vsel %vm1155, %v2255, 0
        %v2298 = vsel %vm1155, %v2256, 0
        %v2301 = vsel %vm1155, %v2257, 0
        %v2304 = vsel %vm1155, %v2258, 0
        %v2307 = vsel %vm1155, %v2259, 0
        %v2310 = vsel %vm1155, %v2260, 0
        %v2313 = vsel %vm1155, %v2261, 0
        %v2316 = vsel %vm1155, %v2262, 0
        %v2319 = vsel %vm1155, %v2263, 0
        %v2322 = vsel %vm1155, %v2264, 0
        %v2325 = vsel %vm1155, %v2265, 0
        %v2328 = vsel %vm1155, %v2266, 0
        %v2331 = vsel %vm1155, %v2267, 0
        %v2334 = vsel %vm1155, %v2268, 0
        %v2337 = vsel %vm1155, %v2269, 0
        %v2340 = vsel %vm1204, %v2288, 0
        %2342 = vmatprep.subr.bf16.mxu0 0
        %2343 = vmatpush1.bf16.msra.mxu0 %v2286
        %2344 = vmatprep.subr.bf16.mxu0 0
        %2345 = vmatpush1.bf16.msra.mxu0 %v2287
        %2346 = vmatprep.subr.bf16.mxu0 0
        %2347 = vmatpush1.bf16.msra.mxu0 %v2340
        %2348 = vmatprep.subr.bf16.mxu0 0
        %2349 = vmatpush1.bf16.msra.mxu0 0
        %2350 = vmatprep.subr.bf16.mxu0 0
        %2351 = vmatpush1.bf16.msra.mxu0 0
        %2352 = vmatprep.subr.bf16.mxu0 0
        %2353 = vmatpush1.bf16.msra.mxu0 0
        %2354 = vmatprep.subr.bf16.mxu0 0
        %2355 = vmatpush1.bf16.msra.mxu0 0
        %2356 = vmatprep.subr.bf16.mxu0 0
        %2357 = vmatpush1.bf16.msra.mxu0 0
        %2358 = vmatprep.subr.bf16.mxu0 0
        %2359 = vmatpush1.bf16.msra.mxu0 0
        %2360 = vmatprep.subr.bf16.mxu0 0
        %2361 = vmatpush1.bf16.msra.mxu0 0
        %2362 = vmatprep.subr.bf16.mxu0 0
        %2363 = vmatpush1.bf16.msra.mxu0 0
        %2364 = vmatprep.subr.bf16.mxu0 0
        %2365 = vmatpush1.bf16.msra.mxu0 0
        %2366 = vmatprep.subr.bf16.mxu0 0
        %2367 = vmatpush1.bf16.msra.mxu0 0
        %2368 = vmatprep.subr.bf16.mxu0 0
        %2369 = vmatpush1.bf16.msra.mxu0 0
        %2370 = vmatprep.subr.bf16.mxu0 0
        %2371 = vmatpush1.bf16.msra.mxu0 0
        %2372 = vmatprep.subr.bf16.mxu0 0
        %2373 = vmatpush1.bf16.msra.mxu0 0
        %2374 = vmatprep.mubr.bf16.mxu0 0
        %2375 = vmatmul.mubr.bf16.gmra.mrb[0].mxu0 %v2292
        %v2376 = vpop.f32.mrb[0].mxu0
        %v2377 = vadd.f32 0.0, %v2376
        %v2378 = vpop.f32.mrb[0].mxu0
        %v2379 = vpop.f32.mrb[0].mxu0
        %v2380 = vadd.f32 0.0, %v2379
        %v2381 = vpop.f32.mrb[0].mxu0
        %2382 = vmatprep.mubr.bf16.mxu0 0
        %2383 = vmatmul.mubr.bf16.gmra.mrb[0].mxu0 %v2295
        %v2384 = vpop.f32.mrb[0].mxu0
        %v2385 = vadd.f32 0.0, %v2384
        %v2386 = vpop.f32.mrb[0].mxu0
        %v2387 = vpop.f32.mrb[0].mxu0
        %v2388 = vadd.f32 0.0, %v2387
        %v2389 = vpop.f32.mrb[0].mxu0
        %2390 = vmatprep.mubr.bf16.mxu0 0
        %2391 = vmatmul.mubr.bf16.gmra.mrb[0].mxu0 %v2298
        %v2392 = vpop.f32.mrb[0].mxu0
        %v2393 = vadd.f32 0.0, %v2392
        %v2394 = vpop.f32.mrb[0].mxu0
        %v2395 = vpop.f32.mrb[0].mxu0
        %v2396 = vadd.f32 0.0, %v2395
        %v2397 = vpop.f32.mrb[0].mxu0
        %2398 = vmatprep.mubr.bf16.mxu0 0
        %2399 = vmatmul.mubr.bf16.gmra.mrb[0].mxu0 %v2301
        %v2400 = vpop.f32.mrb[0].mxu0
        %v2401 = vadd.f32 0.0, %v2400
        %v2402 = vpop.f32.mrb[0].mxu0
        %v2403 = vpop.f32.mrb[0].mxu0
        %v2404 = vadd.f32 0.0, %v2403
        %v2405 = vpop.f32.mrb[0].mxu0
        %2406 = vmatprep.mubr.bf16.mxu0 0
        %2407 = vmatmul.mubr.bf16.gmra.mrb[0].mxu0 %v2304
        %v2408 = vpop.f32.mrb[0].mxu0
        %v2409 = vadd.f32 0.0, %v2408
        %v2410 = vpop.f32.mrb[0].mxu0
        %v2411 = vpop.f32.mrb[0].mxu0
        %v2412 = vadd.f32 0.0, %v2411
        %v2413 = vpop.f32.mrb[0].mxu0
        %2414 = vmatprep.mubr.bf16.mxu0 0
        %2415 = vmatmul.mubr.bf16.gmra.mrb[0].mxu0 %v2307
        %v2416 = vpop.f32.mrb[0].mxu0
        %v2417 = vadd.f32 0.0, %v2416
        %v2418 = vpop.f32.mrb[0].mxu0
        %v2419 = vpop.f32.mrb[0].mxu0
        %v2420 = vadd.f32 0.0, %v2419
        %v2421 = vpop.f32.mrb[0].mxu0
        %2422 = vmatprep.mubr.bf16.mxu0 0
        %2423 = vmatmul.mubr.bf16.gmra.mrb[0].mxu0 %v2310
        %v2424 = vpop.f32.mrb[0].mxu0
        %v2425 = vadd.f32 0.0, %v2424
        %v2426 = vpop.f32.mrb[0].mxu0
        %v2427 = vpop.f32.mrb[0].mxu0
        %v2428 = vadd.f32 0.0, %v2427
        %v2429 = vpop.f32.mrb[0].mxu0
        %2430 = vmatprep.mubr.bf16.mxu0 0
        %2431 = vmatmul.mubr.bf16.gmra.mrb[0].mxu0 %v2313
        %v2432 = vpop.f32.mrb[0].mxu0
        %v2433 = vadd.f32 0.0, %v2432
        %v2434 = vpop.f32.mrb[0].mxu0
        %v2435 = vpop.f32.mrb[0].mxu0
        %v2436 = vadd.f32 0.0, %v2435
        %v2437 = vpop.f32.mrb[0].mxu0
        %2438 = vmatprep.mubr.bf16.mxu0 0
        %2439 = vmatmul.mubr.bf16.gmra.mrb[0].mxu0 %v2316
        %v2440 = vpop.f32.mrb[0].mxu0
        %v2441 = vadd.f32 0.0, %v2440
        %v2442 = vpop.f32.mrb[0].mxu0
        %v2443 = vpop.f32.mrb[0].mxu0
        %v2444 = vadd.f32 0.0, %v2443
        %v2445 = vpop.f32.mrb[0].mxu0
        %2446 = vmatprep.mubr.bf16.mxu0 0
        %2447 = vmatmul.mubr.bf16.gmra.mrb[0].mxu0 %v2319
        %v2448 = vpop.f32.mrb[0].mxu0
        %v2449 = vadd.f32 0.0, %v2448
        %v2450 = vpop.f32.mrb[0].mxu0
        %v2451 = vpop.f32.mrb[0].mxu0
        %v2452 = vadd.f32 0.0, %v2451
        %v2453 = vpop.f32.mrb[0].mxu0
        %2454 = vmatprep.mubr.bf16.mxu0 0
        %2455 = vmatmul.mubr.bf16.gmra.mrb[0].mxu0 %v2322
        %v2456 = vpop.f32.mrb[0].mxu0
        %v2457 = vadd.f32 0.0, %v2456
        %v2458 = vpop.f32.mrb[0].mxu0
        %v2459 = vpop.f32.mrb[0].mxu0
        %v2460 = vadd.f32 0.0, %v2459
        %v2461 = vpop.f32.mrb[0].mxu0
        %2462 = vmatprep.mubr.bf16.mxu0 0
        %2463 = vmatmul.mubr.bf16.gmra.mrb[0].mxu0 %v2325
        %v2464 = vpop.f32.mrb[0].mxu0
        %v2465 = vadd.f32 0.0, %v2464
        %v2466 = vpop.f32.mrb[0].mxu0
        %v2467 = vpop.f32.mrb[0].mxu0
        %v2468 = vadd.f32 0.0, %v2467
        %v2469 = vpop.f32.mrb[0].mxu0
        %2470 = vmatprep.mubr.bf16.mxu0 0
        %2471 = vmatmul.mubr.bf16.gmra.mrb[0].mxu0 %v2328
        %v2472 = vpop.f32.mrb[0].mxu0
        %v2473 = vadd.f32 0.0, %v2472
        %v2474 = vpop.f32.mrb[0].mxu0
        %v2475 = vpop.f32.mrb[0].mxu0
        %v2476 = vadd.f32 0.0, %v2475
        %v2477 = vpop.f32.mrb[0].mxu0
        %2478 = vmatprep.mubr.bf16.mxu0 0
        %2479 = vmatmul.mubr.bf16.gmra.mrb[0].mxu0 %v2331
        %v2480 = vpop.f32.mrb[0].mxu0
        %v2481 = vadd.f32 0.0, %v2480
        %v2482 = vpop.f32.mrb[0].mxu0
        %v2483 = vpop.f32.mrb[0].mxu0
        %v2484 = vadd.f32 0.0, %v2483
        %v2485 = vpop.f32.mrb[0].mxu0
        %2486 = vmatprep.mubr.bf16.mxu0 0
        %2487 = vmatmul.mubr.bf16.gmra.mrb[0].mxu0 %v2334
        %v2488 = vpop.f32.mrb[0].mxu0
        %v2489 = vadd.f32 0.0, %v2488
        %v2490 = vpop.f32.mrb[0].mxu0
        %v2491 = vpop.f32.mrb[0].mxu0
        %v2492 = vadd.f32 0.0, %v2491
        %v2493 = vpop.f32.mrb[0].mxu0
        %2494 = vmatprep.mubr.bf16.mxu0 0
        %2495 = vmatmul.mubr.bf16.gmra.mrb[0].mxu0 %v2337
        %v2496 = vpop.f32.mrb[0].mxu0
        %v2497 = vadd.f32 0.0, %v2496
        %v2498 = vpop.f32.mrb[0].mxu0
        %v2499 = vpop.f32.mrb[0].mxu0
        %v2500 = vadd.f32 0.0, %v2499
        %v2501 = vpop.f32.mrb[0].mxu0
        %2502 = vdwg.mxu0
        %v2503 = vadd.f32 %v2190, %v2377
        %v2504 = vadd.f32 %v2191, %v2380
        %v2505 = vadd.f32 %v2192, %v2385
        %v2506 = vadd.f32 %v2193, %v2388
        %v2507 = vadd.f32 %v2194, %v2393
        %v2508 = vadd.f32 %v2195, %v2396
        %v2509 = vadd.f32 %v2196, %v2401
        %v2510 = vadd.f32 %v2197, %v2404
        %v2511 = vadd.f32 %v2198, %v2409
        %v2512 = vadd.f32 %v2199, %v2412
        %v2513 = vadd.f32 %v2200, %v2417
        %v2514 = vadd.f32 %v2201, %v2420
        %v2515 = vadd.f32 %v2202, %v2425
        %v2516 = vadd.f32 %v2203, %v2428
        %v2517 = vadd.f32 %v2204, %v2433
        %v2518 = vadd.f32 %v2205, %v2436
        %v2519 = vadd.f32 %v2206, %v2441
        %v2520 = vadd.f32 %v2207, %v2444
        %v2521 = vadd.f32 %v2208, %v2449
        %v2522 = vadd.f32 %v2209, %v2452
        %v2523 = vadd.f32 %v2210, %v2457
        %v2524 = vadd.f32 %v2211, %v2460
        %v2525 = vadd.f32 %v2212, %v2465
        %v2526 = vadd.f32 %v2213, %v2468
        %v2527 = vadd.f32 %v2214, %v2473
        %v2528 = vadd.f32 %v2215, %v2476
        %v2529 = vadd.f32 %v2216, %v2481
        %v2530 = vadd.f32 %v2217, %v2484
        %v2531 = vadd.f32 %v2218, %v2489
        %v2532 = vadd.f32 %v2219, %v2492
        %v2533 = vadd.f32 %v2220, %v2497
        %v2534 = vadd.f32 %v2221, %v2500
        %v2535 = vld [vmem:[%s838 + $0x2] sm:$0xff]
        %v2536 = vld [vmem:[%s838 + $0xa] sm:$0xff]
        %v2537 = vld [vmem:[%s838 + $0x1a] sm:$0xff]
        %v2538 = vld [vmem:[%s838 + $0x22] sm:$0xff]
        %v2539 = vld [vmem:[%s838 + $0x32] sm:$0xff]
        %v2540 = vld [vmem:[%s838 + $0x3a] sm:$0xff]
        %v2541 = vld [vmem:[%s838 + $0x4a] sm:$0xff]
        %v2542 = vld [vmem:[%s838 + $0x52] sm:$0xff]
        %v2543 = vld [vmem:[%s838 + $0x62] sm:$0xff]
        %v2544 = vld [vmem:[%s838 + $0x6a] sm:$0xff]
        %v2545 = vld [vmem:[%s838 + $0x7a] sm:$0xff]
        %v2546 = vld [vmem:[%s838 + $0x82] sm:$0xff]
        %v2547 = vld [vmem:[%s838 + $0x92] sm:$0xff]
        %v2548 = vld [vmem:[%s838 + $0x9a] sm:$0xff]
        %v2549 = vld [vmem:[%s838 + $0xaa] sm:$0xff]
        %v2550 = vld [vmem:[%s838 + $0xb2] sm:$0xff]
        %v2551 = vld [vmem:[%s838 + $0xc2] sm:$0xff]
        %v2552 = vld [vmem:[%s838 + $0xca] sm:$0xff]
        %v2553 = vld [vmem:[%s838 + $0xda] sm:$0xff]
        %v2554 = vld [vmem:[%s838 + $0xe2] sm:$0xff]
        %v2555 = vld [vmem:[%s838 + $0xf2] sm:$0xff]
        %v2556 = vld [vmem:[%s838 + $0xfa] sm:$0xff]
        %v2557 = vld [vmem:[%s838 + $0x10a] sm:$0xff]
        %v2558 = vld [vmem:[%s838 + $0x112] sm:$0xff]
        %v2559 = vld [vmem:[%s838 + $0x122] sm:$0xff]
        %v2560 = vld [vmem:[%s838 + $0x12a] sm:$0xff]
        %v2561 = vld [vmem:[%s838 + $0x13a] sm:$0xff]
        %v2562 = vld [vmem:[%s838 + $0x142] sm:$0xff]
        %v2563 = vld [vmem:[%s838 + $0x152] sm:$0xff]
        %v2564 = vld [vmem:[%s838 + $0x15a] sm:$0xff]
        %v2565 = vld [vmem:[%s838 + $0x16a] sm:$0xff]
        %v2566 = vld [vmem:[%s838 + $0x172] sm:$0xff]
        %v2567 = vpack.c.bf16 %v2536, %v2535
        %v2568 = vpack.c.bf16 %v2538, %v2537
        %v2569 = vpack.c.bf16 %v2540, %v2539
        %v2570 = vpack.c.bf16 %v2542, %v2541
        %v2571 = vpack.c.bf16 %v2544, %v2543
        %v2572 = vpack.c.bf16 %v2546, %v2545
        %v2573 = vpack.c.bf16 %v2548, %v2547
        %v2574 = vpack.c.bf16 %v2550, %v2549
        %v2575 = vpack.c.bf16 %v2552, %v2551
        %v2576 = vpack.c.bf16 %v2554, %v2553
        %v2577 = vpack.c.bf16 %v2556, %v2555
        %v2578 = vpack.c.bf16 %v2558, %v2557
        %v2579 = vpack.c.bf16 %v2560, %v2559
        %v2580 = vpack.c.bf16 %v2562, %v2561
        %v2581 = vpack.c.bf16 %v2564, %v2563
        %v2582 = vpack.c.bf16 %v2566, %v2565
        %s2583 = scalar_lea.vmem %s3, 100
        %v2584 = vld [vmem:[%s2583] sm:$0xf]
        %v2585 = vld [vmem:[%s2583 + $0x4] sm:$0xf]
        %v2586 = vld [vmem:[%s2583 + $0x8] sm:$0xf]
        %v2587 = vld [vmem:[%s2583 + $0xc] sm:$0xf]
        %v2588 = vld [vmem:[%s2583 + $0x10] sm:$0x3]
        %v2594 = vunpack.c.l.b16 %v2584
        %v2595 = vunpack.c.l.b16 %v2585
        %v2596 = vunpack.c.l.b16 %v2586
        %v2597 = vunpack.c.l.b16 %v2587
        %v2598 = vunpack.c.l.b16 %v2588
        %v2599 = vpack.c.b16 %v2595, %v2594
        %v2600 = vpack.c.b16 %v2597, %v2596
        %v2601 = vpack.c.b16 %v2598, %v2598
        %v2605 = vsel %vm1155, %v2567, 0
        %v2608 = vsel %vm1155, %v2568, 0
        %v2611 = vsel %vm1155, %v2569, 0
        %v2614 = vsel %vm1155, %v2570, 0
        %v2617 = vsel %vm1155, %v2571, 0
        %v2620 = vsel %vm1155, %v2572, 0
        %v2623 = vsel %vm1155, %v2573, 0
        %v2626 = vsel %vm1155, %v2574, 0
        %v2629 = vsel %vm1155, %v2575, 0
        %v2632 = vsel %vm1155, %v2576, 0
        %v2635 = vsel %vm1155, %v2577, 0
        %v2638 = vsel %vm1155, %v2578, 0
        %v2641 = vsel %vm1155, %v2579, 0
        %v2644 = vsel %vm1155, %v2580, 0
        %v2647 = vsel %vm1155, %v2581, 0
        %v2650 = vsel %vm1155, %v2582, 0
        %v2653 = vsel %vm1204, %v2601, 0
        %2655 = vmatprep.subr.bf16.mxu0 0
        %2656 = vmatpush1.bf16.msra.mxu0 %v2599
        %2657 = vmatprep.subr.bf16.mxu0 0
        %2658 = vmatpush1.bf16.msra.mxu0 %v2600
        %2659 = vmatprep.subr.bf16.mxu0 0
        %2660 = vmatpush1.bf16.msra.mxu0 %v2653
        %2661 = vmatprep.subr.bf16.mxu0 0
        %2662 = vmatpush1.bf16.msra.mxu0 0
        %2663 = vmatprep.subr.bf16.mxu0 0
        %2664 = vmatpush1.bf16.msra.mxu0 0
        %2665 = vmatprep.subr.bf16.mxu0 0
        %2666 = vmatpush1.bf16.msra.mxu0 0
        %2667 = vmatprep.subr.bf16.mxu0 0
        %2668 = vmatpush1.bf16.msra.mxu0 0
        %2669 = vmatprep.subr.bf16.mxu0 0
        %2670 = vmatpush1.bf16.msra.mxu0 0
        %2671 = vmatprep.subr.bf16.mxu0 0
        %2672 = vmatpush1.bf16.msra.mxu0 0
        %2673 = vmatprep.subr.bf16.mxu0 0
        %2674 = vmatpush1.bf16.msra.mxu0 0
        %2675 = vmatprep.subr.bf16.mxu0 0
        %2676 = vmatpush1.bf16.msra.mxu0 0
        %2677 = vmatprep.subr.bf16.mxu0 0
        %2678 = vmatpush1.bf16.msra.mxu0 0
        %2679 = vmatprep.subr.bf16.mxu0 0
        %2680 = vmatpush1.bf16.msra.mxu0 0
        %2681 = vmatprep.subr.bf16.mxu0 0
        %2682 = vmatpush1.bf16.msra.mxu0 0
        %2683 = vmatprep.subr.bf16.mxu0 0
        %2684 = vmatpush1.bf16.msra.mxu0 0
        %2685 = vmatprep.subr.bf16.mxu0 0
        %2686 = vmatpush1.bf16.msra.mxu0 0
        %2687 = vmatprep.mubr.bf16.mxu0 0
        %2688 = vmatmul.mubr.bf16.gmra.mrb[0].mxu0 %v2605
        %v2689 = vpop.f32.mrb[0].mxu0
        %v2690 = vadd.f32 0.0, %v2689
        %v2691 = vpop.f32.mrb[0].mxu0
        %v2692 = vpop.f32.mrb[0].mxu0
        %v2693 = vadd.f32 0.0, %v2692
        %v2694 = vpop.f32.mrb[0].mxu0
        %2695 = vmatprep.mubr.bf16.mxu0 0
        %2696 = vmatmul.mubr.bf16.gmra.mrb[0].mxu0 %v2608
        %v2697 = vpop.f32.mrb[0].mxu0
        %v2698 = vadd.f32 0.0, %v2697
        %v2699 = vpop.f32.mrb[0].mxu0
        %v2700 = vpop.f32.mrb[0].mxu0
        %v2701 = vadd.f32 0.0, %v2700
        %v2702 = vpop.f32.mrb[0].mxu0
        %2703 = vmatprep.mubr.bf16.mxu0 0
        %2704 = vmatmul.mubr.bf16.gmra.mrb[0].mxu0 %v2611
        %v2705 = vpop.f32.mrb[0].mxu0
        %v2706 = vadd.f32 0.0, %v2705
        %v2707 = vpop.f32.mrb[0].mxu0
        %v2708 = vpop.f32.mrb[0].mxu0
        %v2709 = vadd.f32 0.0, %v2708
        %v2710 = vpop.f32.mrb[0].mxu0
        %2711 = vmatprep.mubr.bf16.mxu0 0
        %2712 = vmatmul.mubr.bf16.gmra.mrb[0].mxu0 %v2614
        %v2713 = vpop.f32.mrb[0].mxu0
        %v2714 = vadd.f32 0.0, %v2713
        %v2715 = vpop.f32.mrb[0].mxu0
        %v2716 = vpop.f32.mrb[0].mxu0
        %v2717 = vadd.f32 0.0, %v2716
        %v2718 = vpop.f32.mrb[0].mxu0
        %2719 = vmatprep.mubr.bf16.mxu0 0
        %2720 = vmatmul.mubr.bf16.gmra.mrb[0].mxu0 %v2617
        %v2721 = vpop.f32.mrb[0].mxu0
        %v2722 = vadd.f32 0.0, %v2721
        %v2723 = vpop.f32.mrb[0].mxu0
        %v2724 = vpop.f32.mrb[0].mxu0
        %v2725 = vadd.f32 0.0, %v2724
        %v2726 = vpop.f32.mrb[0].mxu0
        %2727 = vmatprep.mubr.bf16.mxu0 0
        %2728 = vmatmul.mubr.bf16.gmra.mrb[0].mxu0 %v2620
        %v2729 = vpop.f32.mrb[0].mxu0
        %v2730 = vadd.f32 0.0, %v2729
        %v2731 = vpop.f32.mrb[0].mxu0
        %v2732 = vpop.f32.mrb[0].mxu0
        %v2733 = vadd.f32 0.0, %v2732
        %v2734 = vpop.f32.mrb[0].mxu0
        %2735 = vmatprep.mubr.bf16.mxu0 0
        %2736 = vmatmul.mubr.bf16.gmra.mrb[0].mxu0 %v2623
        %v2737 = vpop.f32.mrb[0].mxu0
        %v2738 = vadd.f32 0.0, %v2737
        %v2739 = vpop.f32.mrb[0].mxu0
        %v2740 = vpop.f32.mrb[0].mxu0
        %v2741 = vadd.f32 0.0, %v2740
        %v2742 = vpop.f32.mrb[0].mxu0
        %2743 = vmatprep.mubr.bf16.mxu0 0
        %2744 = vmatmul.mubr.bf16.gmra.mrb[0].mxu0 %v2626
        %v2745 = vpop.f32.mrb[0].mxu0
        %v2746 = vadd.f32 0.0, %v2745
        %v2747 = vpop.f32.mrb[0].mxu0
        %v2748 = vpop.f32.mrb[0].mxu0
        %v2749 = vadd.f32 0.0, %v2748
        %v2750 = vpop.f32.mrb[0].mxu0
        %2751 = vmatprep.mubr.bf16.mxu0 0
        %2752 = vmatmul.mubr.bf16.gmra.mrb[0].mxu0 %v2629
        %v2753 = vpop.f32.mrb[0].mxu0
        %v2754 = vadd.f32 0.0, %v2753
        %v2755 = vpop.f32.mrb[0].mxu0
        %v2756 = vpop.f32.mrb[0].mxu0
        %v2757 = vadd.f32 0.0, %v2756
        %v2758 = vpop.f32.mrb[0].mxu0
        %2759 = vmatprep.mubr.bf16.mxu0 0
        %2760 = vmatmul.mubr.bf16.gmra.mrb[0].mxu0 %v2632
        %v2761 = vpop.f32.mrb[0].mxu0
        %v2762 = vadd.f32 0.0, %v2761
        %v2763 = vpop.f32.mrb[0].mxu0
        %v2764 = vpop.f32.mrb[0].mxu0
        %v2765 = vadd.f32 0.0, %v2764
        %v2766 = vpop.f32.mrb[0].mxu0
        %2767 = vmatprep.mubr.bf16.mxu0 0
        %2768 = vmatmul.mubr.bf16.gmra.mrb[0].mxu0 %v2635
        %v2769 = vpop.f32.mrb[0].mxu0
        %v2770 = vadd.f32 0.0, %v2769
        %v2771 = vpop.f32.mrb[0].mxu0
        %v2772 = vpop.f32.mrb[0].mxu0
        %v2773 = vadd.f32 0.0, %v2772
        %v2774 = vpop.f32.mrb[0].mxu0
        %2775 = vmatprep.mubr.bf16.mxu0 0
        %2776 = vmatmul.mubr.bf16.gmra.mrb[0].mxu0 %v2638
        %v2777 = vpop.f32.mrb[0].mxu0
        %v2778 = vadd.f32 0.0, %v2777
        %v2779 = vpop.f32.mrb[0].mxu0
        %v2780 = vpop.f32.mrb[0].mxu0
        %v2781 = vadd.f32 0.0, %v2780
        %v2782 = vpop.f32.mrb[0].mxu0
        %2783 = vmatprep.mubr.bf16.mxu0 0
        %2784 = vmatmul.mubr.bf16.gmra.mrb[0].mxu0 %v2641
        %v2785 = vpop.f32.mrb[0].mxu0
        %v2786 = vadd.f32 0.0, %v2785
        %v2787 = vpop.f32.mrb[0].mxu0
        %v2788 = vpop.f32.mrb[0].mxu0
        %v2789 = vadd.f32 0.0, %v2788
        %v2790 = vpop.f32.mrb[0].mxu0
        %2791 = vmatprep.mubr.bf16.mxu0 0
        %2792 = vmatmul.mubr.bf16.gmra.mrb[0].mxu0 %v2644
        %v2793 = vpop.f32.mrb[0].mxu0
        %v2794 = vadd.f32 0.0, %v2793
        %v2795 = vpop.f32.mrb[0].mxu0
        %v2796 = vpop.f32.mrb[0].mxu0
        %v2797 = vadd.f32 0.0, %v2796
        %v2798 = vpop.f32.mrb[0].mxu0
        %2799 = vmatprep.mubr.bf16.mxu0 0
        %2800 = vmatmul.mubr.bf16.gmra.mrb[0].mxu0 %v2647
        %v2801 = vpop.f32.mrb[0].mxu0
        %v2802 = vadd.f32 0.0, %v2801
        %v2803 = vpop.f32.mrb[0].mxu0
        %v2804 = vpop.f32.mrb[0].mxu0
        %v2805 = vadd.f32 0.0, %v2804
        %v2806 = vpop.f32.mrb[0].mxu0
        %2807 = vmatprep.mubr.bf16.mxu0 0
        %2808 = vmatmul.mubr.bf16.gmra.mrb[0].mxu0 %v2650
        %v2809 = vpop.f32.mrb[0].mxu0
        %v2810 = vadd.f32 0.0, %v2809
        %v2811 = vpop.f32.mrb[0].mxu0
        %v2812 = vpop.f32.mrb[0].mxu0
        %v2813 = vadd.f32 0.0, %v2812
        %v2814 = vpop.f32.mrb[0].mxu0
        %2815 = vdwg.mxu0
        %v2816 = vadd.f32 %v2503, %v2690
        %v2817 = vadd.f32 %v2504, %v2693
        %v2818 = vadd.f32 %v2505, %v2698
        %v2819 = vadd.f32 %v2506, %v2701
        %v2820 = vadd.f32 %v2507, %v2706
        %v2821 = vadd.f32 %v2508, %v2709
        %v2822 = vadd.f32 %v2509, %v2714
        %v2823 = vadd.f32 %v2510, %v2717
        %v2824 = vadd.f32 %v2511, %v2722
        %v2825 = vadd.f32 %v2512, %v2725
        %v2826 = vadd.f32 %v2513, %v2730
        %v2827 = vadd.f32 %v2514, %v2733
        %v2828 = vadd.f32 %v2515, %v2738
        %v2829 = vadd.f32 %v2516, %v2741
        %v2830 = vadd.f32 %v2517, %v2746
        %v2831 = vadd.f32 %v2518, %v2749
        %v2832 = vadd.f32 %v2519, %v2754
        %v2833 = vadd.f32 %v2520, %v2757
        %v2834 = vadd.f32 %v2521, %v2762
        %v2835 = vadd.f32 %v2522, %v2765
        %v2836 = vadd.f32 %v2523, %v2770
        %v2837 = vadd.f32 %v2524, %v2773
        %v2838 = vadd.f32 %v2525, %v2778
        %v2839 = vadd.f32 %v2526, %v2781
        %v2840 = vadd.f32 %v2527, %v2786
        %v2841 = vadd.f32 %v2528, %v2789
        %v2842 = vadd.f32 %v2529, %v2794
        %v2843 = vadd.f32 %v2530, %v2797
        %v2844 = vadd.f32 %v2531, %v2802
        %v2845 = vadd.f32 %v2532, %v2805
        %v2846 = vadd.f32 %v2533, %v2810
        %v2847 = vadd.f32 %v2534, %v2813
        %s2848 = scalar_lea.vmem [#allocation2], 48
        %v2849 = vld [vmem:[%s2848] sm:$0xff]
        %v2850 = vld [vmem:[%s2848 + $0x8] sm:$0xff]
        %v2851 = vld [vmem:[%s2848 + $0x18] sm:$0xff]
        %v2852 = vld [vmem:[%s2848 + $0x20] sm:$0xff]
        %v2853 = vld [vmem:[%s2848 + $0x30] sm:$0xff]
        %v2854 = vld [vmem:[%s2848 + $0x38] sm:$0xff]
        %v2855 = vld [vmem:[%s2848 + $0x48] sm:$0xff]
        %v2856 = vld [vmem:[%s2848 + $0x50] sm:$0xff]
        %v2857 = vld [vmem:[%s2848 + $0x60] sm:$0xff]
        %v2858 = vld [vmem:[%s2848 + $0x68] sm:$0xff]
        %v2859 = vld [vmem:[%s2848 + $0x78] sm:$0xff]
        %v2860 = vld [vmem:[%s2848 + $0x80] sm:$0xff]
        %v2861 = vld [vmem:[%s2848 + $0x90] sm:$0xff]
        %v2862 = vld [vmem:[%s2848 + $0x98] sm:$0xff]
        %v2863 = vld [vmem:[%s2848 + $0xa8] sm:$0xff]
        %v2864 = vld [vmem:[%s2848 + $0xb0] sm:$0xff]
        %v2865 = vld [vmem:[%s2848 + $0xc0] sm:$0xff]
        %v2866 = vld [vmem:[%s2848 + $0xc8] sm:$0xff]
        %v2867 = vld [vmem:[%s2848 + $0xd8] sm:$0xff]
        %v2868 = vld [vmem:[%s2848 + $0xe0] sm:$0xff]
        %v2869 = vld [vmem:[%s2848 + $0xf0] sm:$0xff]
        %v2870 = vld [vmem:[%s2848 + $0xf8] sm:$0xff]
        %v2871 = vld [vmem:[%s2848 + $0x108] sm:$0xff]
        %v2872 = vld [vmem:[%s2848 + $0x110] sm:$0xff]
        %v2873 = vld [vmem:[%s2848 + $0x120] sm:$0xff]
        %v2874 = vld [vmem:[%s2848 + $0x128] sm:$0xff]
        %v2875 = vld [vmem:[%s2848 + $0x138] sm:$0xff]
        %v2876 = vld [vmem:[%s2848 + $0x140] sm:$0xff]
        %v2877 = vld [vmem:[%s2848 + $0x150] sm:$0xff]
        %v2878 = vld [vmem:[%s2848 + $0x158] sm:$0xff]
        %v2879 = vld [vmem:[%s2848 + $0x168] sm:$0xff]
        %v2880 = vld [vmem:[%s2848 + $0x170] sm:$0xff]
        %v2881 = vpack.c.bf16 %v2850, %v2849
        %v2882 = vpack.c.bf16 %v2852, %v2851
        %v2883 = vpack.c.bf16 %v2854, %v2853
        %v2884 = vpack.c.bf16 %v2856, %v2855
        %v2885 = vpack.c.bf16 %v2858, %v2857
        %v2886 = vpack.c.bf16 %v2860, %v2859
        %v2887 = vpack.c.bf16 %v2862, %v2861
        %v2888 = vpack.c.bf16 %v2864, %v2863
        %v2889 = vpack.c.bf16 %v2866, %v2865
        %v2890 = vpack.c.bf16 %v2868, %v2867
        %v2891 = vpack.c.bf16 %v2870, %v2869
        %v2892 = vpack.c.bf16 %v2872, %v2871
        %v2893 = vpack.c.bf16 %v2874, %v2873
        %v2894 = vpack.c.bf16 %v2876, %v2875
        %v2895 = vpack.c.bf16 %v2878, %v2877
        %v2896 = vpack.c.bf16 %v2880, %v2879
        %s2897 = scalar_lea.vmem %s3, 120
        %v2898 = vld [vmem:[%s2897] sm:$0xf]
        %v2899 = vld [vmem:[%s2897 + $0x4] sm:$0xf]
        %v2900 = vld [vmem:[%s2897 + $0x8] sm:$0xf]
        %v2901 = vld [vmem:[%s2897 + $0xc] sm:$0xf]
        %v2902 = vld [vmem:[%s2897 + $0x10] sm:$0x3]
        %v2908 = vunpack.c.l.b16 %v2898
        %v2909 = vunpack.c.l.b16 %v2899
        %v2910 = vunpack.c.l.b16 %v2900
        %v2911 = vunpack.c.l.b16 %v2901
        %v2912 = vunpack.c.l.b16 %v2902
        %v2913 = vpack.c.b16 %v2909, %v2908
        %v2914 = vpack.c.b16 %v2911, %v2910
        %v2915 = vpack.c.b16 %v2912, %v2912
        %v2919 = vsel %vm1155, %v2881, 0
        %v2922 = vsel %vm1155, %v2882, 0
        %v2925 = vsel %vm1155, %v2883, 0
        %v2928 = vsel %vm1155, %v2884, 0
        %v2931 = vsel %vm1155, %v2885, 0
        %v2934 = vsel %vm1155, %v2886, 0
        %v2937 = vsel %vm1155, %v2887, 0
        %v2940 = vsel %vm1155, %v2888, 0
        %v2943 = vsel %vm1155, %v2889, 0
        %v2946 = vsel %vm1155, %v2890, 0
        %v2949 = vsel %vm1155, %v2891, 0
        %v2952 = vsel %vm1155, %v2892, 0
        %v2955 = vsel %vm1155, %v2893, 0
        %v2958 = vsel %vm1155, %v2894, 0
        %v2961 = vsel %vm1155, %v2895, 0
        %v2964 = vsel %vm1155, %v2896, 0
        %v2967 = vsel %vm1204, %v2915, 0
        %2969 = vmatprep.subr.bf16.mxu0 0
        %2970 = vmatpush1.bf16.msra.mxu0 %v2913
        %2971 = vmatprep.subr.bf16.mxu0 0
        %2972 = vmatpush1.bf16.msra.mxu0 %v2914
        %2973 = vmatprep.subr.bf16.mxu0 0
        %2974 = vmatpush1.bf16.msra.mxu0 %v2967
        %2975 = vmatprep.subr.bf16.mxu0 0
        %2976 = vmatpush1.bf16.msra.mxu0 0
        %2977 = vmatprep.subr.bf16.mxu0 0
        %2978 = vmatpush1.bf16.msra.mxu0 0
        %2979 = vmatprep.subr.bf16.mxu0 0
        %2980 = vmatpush1.bf16.msra.mxu0 0
        %2981 = vmatprep.subr.bf16.mxu0 0
        %2982 = vmatpush1.bf16.msra.mxu0 0
        %2983 = vmatprep.subr.bf16.mxu0 0
        %2984 = vmatpush1.bf16.msra.mxu0 0
        %2985 = vmatprep.subr.bf16.mxu0 0
        %2986 = vmatpush1.bf16.msra.mxu0 0
        %2987 = vmatprep.subr.bf16.mxu0 0
        %2988 = vmatpush1.bf16.msra.mxu0 0
        %2989 = vmatprep.subr.bf16.mxu0 0
        %2990 = vmatpush1.bf16.msra.mxu0 0
        %2991 = vmatprep.subr.bf16.mxu0 0
        %2992 = vmatpush1.bf16.msra.mxu0 0
        %2993 = vmatprep.subr.bf16.mxu0 0
        %2994 = vmatpush1.bf16.msra.mxu0 0
        %2995 = vmatprep.subr.bf16.mxu0 0
        %2996 = vmatpush1.bf16.msra.mxu0 0
        %2997 = vmatprep.subr.bf16.mxu0 0
        %2998 = vmatpush1.bf16.msra.mxu0 0
        %2999 = vmatprep.subr.bf16.mxu0 0
        %3000 = vmatpush1.bf16.msra.mxu0 0
        %3001 = vmatprep.mubr.bf16.mxu0 0
        %3002 = vmatmul.mubr.bf16.gmra.mrb[0].mxu0 %v2919
        %v3003 = vpop.f32.mrb[0].mxu0
        %v3004 = vadd.f32 0.0, %v3003
        %v3005 = vpop.f32.mrb[0].mxu0
        %v3006 = vpop.f32.mrb[0].mxu0
        %v3007 = vadd.f32 0.0, %v3006
        %v3008 = vpop.f32.mrb[0].mxu0
        %3009 = vmatprep.mubr.bf16.mxu0 0
        %3010 = vmatmul.mubr.bf16.gmra.mrb[0].mxu0 %v2922
        %v3011 = vpop.f32.mrb[0].mxu0
        %v3012 = vadd.f32 0.0, %v3011
        %v3013 = vpop.f32.mrb[0].mxu0
        %v3014 = vpop.f32.mrb[0].mxu0
        %v3015 = vadd.f32 0.0, %v3014
        %v3016 = vpop.f32.mrb[0].mxu0
        %3017 = vmatprep.mubr.bf16.mxu0 0
        %3018 = vmatmul.mubr.bf16.gmra.mrb[0].mxu0 %v2925
        %v3019 = vpop.f32.mrb[0].mxu0
        %v3020 = vadd.f32 0.0, %v3019
        %v3021 = vpop.f32.mrb[0].mxu0
        %v3022 = vpop.f32.mrb[0].mxu0
        %v3023 = vadd.f32 0.0, %v3022
        %v3024 = vpop.f32.mrb[0].mxu0
        %3025 = vmatprep.mubr.bf16.mxu0 0
        %3026 = vmatmul.mubr.bf16.gmra.mrb[0].mxu0 %v2928
        %v3027 = vpop.f32.mrb[0].mxu0
        %v3028 = vadd.f32 0.0, %v3027
        %v3029 = vpop.f32.mrb[0].mxu0
        %v3030 = vpop.f32.mrb[0].mxu0
        %v3031 = vadd.f32 0.0, %v3030
        %v3032 = vpop.f32.mrb[0].mxu0
        %3033 = vmatprep.mubr.bf16.mxu0 0
        %3034 = vmatmul.mubr.bf16.gmra.mrb[0].mxu0 %v2931
        %v3035 = vpop.f32.mrb[0].mxu0
        %v3036 = vadd.f32 0.0, %v3035
        %v3037 = vpop.f32.mrb[0].mxu0
        %v3038 = vpop.f32.mrb[0].mxu0
        %v3039 = vadd.f32 0.0, %v3038
        %v3040 = vpop.f32.mrb[0].mxu0
        %3041 = vmatprep.mubr.bf16.mxu0 0
        %3042 = vmatmul.mubr.bf16.gmra.mrb[0].mxu0 %v2934
        %v3043 = vpop.f32.mrb[0].mxu0
        %v3044 = vadd.f32 0.0, %v3043
        %v3045 = vpop.f32.mrb[0].mxu0
        %v3046 = vpop.f32.mrb[0].mxu0
        %v3047 = vadd.f32 0.0, %v3046
        %v3048 = vpop.f32.mrb[0].mxu0
        %3049 = vmatprep.mubr.bf16.mxu0 0
        %3050 = vmatmul.mubr.bf16.gmra.mrb[0].mxu0 %v2937
        %v3051 = vpop.f32.mrb[0].mxu0
        %v3052 = vadd.f32 0.0, %v3051
        %v3053 = vpop.f32.mrb[0].mxu0
        %v3054 = vpop.f32.mrb[0].mxu0
        %v3055 = vadd.f32 0.0, %v3054
        %v3056 = vpop.f32.mrb[0].mxu0
        %3057 = vmatprep.mubr.bf16.mxu0 0
        %3058 = vmatmul.mubr.bf16.gmra.mrb[0].mxu0 %v2940
        %v3059 = vpop.f32.mrb[0].mxu0
        %v3060 = vadd.f32 0.0, %v3059
        %v3061 = vpop.f32.mrb[0].mxu0
        %v3062 = vpop.f32.mrb[0].mxu0
        %v3063 = vadd.f32 0.0, %v3062
        %v3064 = vpop.f32.mrb[0].mxu0
        %3065 = vmatprep.mubr.bf16.mxu0 0
        %3066 = vmatmul.mubr.bf16.gmra.mrb[0].mxu0 %v2943
        %v3067 = vpop.f32.mrb[0].mxu0
        %v3068 = vadd.f32 0.0, %v3067
        %v3069 = vpop.f32.mrb[0].mxu0
        %v3070 = vpop.f32.mrb[0].mxu0
        %v3071 = vadd.f32 0.0, %v3070
        %v3072 = vpop.f32.mrb[0].mxu0
        %3073 = vmatprep.mubr.bf16.mxu0 0
        %3074 = vmatmul.mubr.bf16.gmra.mrb[0].mxu0 %v2946
        %v3075 = vpop.f32.mrb[0].mxu0
        %v3076 = vadd.f32 0.0, %v3075
        %v3077 = vpop.f32.mrb[0].mxu0
        %v3078 = vpop.f32.mrb[0].mxu0
        %v3079 = vadd.f32 0.0, %v3078
        %v3080 = vpop.f32.mrb[0].mxu0
        %3081 = vmatprep.mubr.bf16.mxu0 0
        %3082 = vmatmul.mubr.bf16.gmra.mrb[0].mxu0 %v2949
        %v3083 = vpop.f32.mrb[0].mxu0
        %v3084 = vadd.f32 0.0, %v3083
        %v3085 = vpop.f32.mrb[0].mxu0
        %v3086 = vpop.f32.mrb[0].mxu0
        %v3087 = vadd.f32 0.0, %v3086
        %v3088 = vpop.f32.mrb[0].mxu0
        %3089 = vmatprep.mubr.bf16.mxu0 0
        %3090 = vmatmul.mubr.bf16.gmra.mrb[0].mxu0 %v2952
        %v3091 = vpop.f32.mrb[0].mxu0
        %v3092 = vadd.f32 0.0, %v3091
        %v3093 = vpop.f32.mrb[0].mxu0
        %v3094 = vpop.f32.mrb[0].mxu0
        %v3095 = vadd.f32 0.0, %v3094
        %v3096 = vpop.f32.mrb[0].mxu0
        %3097 = vmatprep.mubr.bf16.mxu0 0
        %3098 = vmatmul.mubr.bf16.gmra.mrb[0].mxu0 %v2955
        %v3099 = vpop.f32.mrb[0].mxu0
        %v3100 = vadd.f32 0.0, %v3099
        %v3101 = vpop.f32.mrb[0].mxu0
        %v3102 = vpop.f32.mrb[0].mxu0
        %v3103 = vadd.f32 0.0, %v3102
        %v3104 = vpop.f32.mrb[0].mxu0
        %3105 = vmatprep.mubr.bf16.mxu0 0
        %3106 = vmatmul.mubr.bf16.gmra.mrb[0].mxu0 %v2958
        %v3107 = vpop.f32.mrb[0].mxu0
        %v3108 = vadd.f32 0.0, %v3107
        %v3109 = vpop.f32.mrb[0].mxu0
        %v3110 = vpop.f32.mrb[0].mxu0
        %v3111 = vadd.f32 0.0, %v3110
        %v3112 = vpop.f32.mrb[0].mxu0
        %3113 = vmatprep.mubr.bf16.mxu0 0
        %3114 = vmatmul.mubr.bf16.gmra.mrb[0].mxu0 %v2961
        %v3115 = vpop.f32.mrb[0].mxu0
        %v3116 = vadd.f32 0.0, %v3115
        %v3117 = vpop.f32.mrb[0].mxu0
        %v3118 = vpop.f32.mrb[0].mxu0
        %v3119 = vadd.f32 0.0, %v3118
        %v3120 = vpop.f32.mrb[0].mxu0
        %3121 = vmatprep.mubr.bf16.mxu0 0
        %3122 = vmatmul.mubr.bf16.gmra.mrb[0].mxu0 %v2964
        %v3123 = vpop.f32.mrb[0].mxu0
        %v3124 = vadd.f32 0.0, %v3123
        %v3125 = vpop.f32.mrb[0].mxu0
        %v3126 = vpop.f32.mrb[0].mxu0
        %v3127 = vadd.f32 0.0, %v3126
        %v3128 = vpop.f32.mrb[0].mxu0
        %3129 = vdwg.mxu0
        %v3130 = vadd.f32 %v2816, %v3004
        %v3131 = vadd.f32 %v2817, %v3007
        %v3132 = vadd.f32 %v2818, %v3012
        %v3133 = vadd.f32 %v2819, %v3015
        %v3134 = vadd.f32 %v2820, %v3020
        %v3135 = vadd.f32 %v2821, %v3023
        %v3136 = vadd.f32 %v2822, %v3028
        %v3137 = vadd.f32 %v2823, %v3031
        %v3138 = vadd.f32 %v2824, %v3036
        %v3139 = vadd.f32 %v2825, %v3039
        %v3140 = vadd.f32 %v2826, %v3044
        %v3141 = vadd.f32 %v2827, %v3047
        %v3142 = vadd.f32 %v2828, %v3052
        %v3143 = vadd.f32 %v2829, %v3055
        %v3144 = vadd.f32 %v2830, %v3060
        %v3145 = vadd.f32 %v2831, %v3063
        %v3146 = vadd.f32 %v2832, %v3068
        %v3147 = vadd.f32 %v2833, %v3071
        %v3148 = vadd.f32 %v2834, %v3076
        %v3149 = vadd.f32 %v2835, %v3079
        %v3150 = vadd.f32 %v2836, %v3084
        %v3151 = vadd.f32 %v2837, %v3087
        %v3152 = vadd.f32 %v2838, %v3092
        %v3153 = vadd.f32 %v2839, %v3095
        %v3154 = vadd.f32 %v2840, %v3100
        %v3155 = vadd.f32 %v2841, %v3103
        %v3156 = vadd.f32 %v2842, %v3108
        %v3157 = vadd.f32 %v2843, %v3111
        %v3158 = vadd.f32 %v2844, %v3116
        %v3159 = vadd.f32 %v2845, %v3119
        %v3160 = vadd.f32 %v2846, %v3124
        %v3161 = vadd.f32 %v2847, %v3127
        %v3162 = vld [vmem:[%s2848 + $0x1] sm:$0xff]
        %v3163 = vld [vmem:[%s2848 + $0x9] sm:$0xff]
        %v3164 = vld [vmem:[%s2848 + $0x19] sm:$0xff]
        %v3165 = vld [vmem:[%s2848 + $0x21] sm:$0xff]
        %v3166 = vld [vmem:[%s2848 + $0x31] sm:$0xff]
        %v3167 = vld [vmem:[%s2848 + $0x39] sm:$0xff]
        %v3168 = vld [vmem:[%s2848 + $0x49] sm:$0xff]
        %v3169 = vld [vmem:[%s2848 + $0x51] sm:$0xff]
        %v3170 = vld [vmem:[%s2848 + $0x61] sm:$0xff]
        %v3171 = vld [vmem:[%s2848 + $0x69] sm:$0xff]
        %v3172 = vld [vmem:[%s2848 + $0x79] sm:$0xff]
        %v3173 = vld [vmem:[%s2848 + $0x81] sm:$0xff]
        %v3174 = vld [vmem:[%s2848 + $0x91] sm:$0xff]
        %v3175 = vld [vmem:[%s2848 + $0x99] sm:$0xff]
        %v3176 = vld [vmem:[%s2848 + $0xa9] sm:$0xff]
        %v3177 = vld [vmem:[%s2848 + $0xb1] sm:$0xff]
        %v3178 = vld [vmem:[%s2848 + $0xc1] sm:$0xff]
        %v3179 = vld [vmem:[%s2848 + $0xc9] sm:$0xff]
        %v3180 = vld [vmem:[%s2848 + $0xd9] sm:$0xff]
        %v3181 = vld [vmem:[%s2848 + $0xe1] sm:$0xff]
        %v3182 = vld [vmem:[%s2848 + $0xf1] sm:$0xff]
        %v3183 = vld [vmem:[%s2848 + $0xf9] sm:$0xff]
        %v3184 = vld [vmem:[%s2848 + $0x109] sm:$0xff]
        %v3185 = vld [vmem:[%s2848 + $0x111] sm:$0xff]
        %v3186 = vld [vmem:[%s2848 + $0x121] sm:$0xff]
        %v3187 = vld [vmem:[%s2848 + $0x129] sm:$0xff]
        %v3188 = vld [vmem:[%s2848 + $0x139] sm:$0xff]
        %v3189 = vld [vmem:[%s2848 + $0x141] sm:$0xff]
        %v3190 = vld [vmem:[%s2848 + $0x151] sm:$0xff]
        %v3191 = vld [vmem:[%s2848 + $0x159] sm:$0xff]
        %v3192 = vld [vmem:[%s2848 + $0x169] sm:$0xff]
        %v3193 = vld [vmem:[%s2848 + $0x171] sm:$0xff]
        %v3194 = vpack.c.bf16 %v3163, %v3162
        %v3195 = vpack.c.bf16 %v3165, %v3164
        %v3196 = vpack.c.bf16 %v3167, %v3166
        %v3197 = vpack.c.bf16 %v3169, %v3168
        %v3198 = vpack.c.bf16 %v3171, %v3170
        %v3199 = vpack.c.bf16 %v3173, %v3172
        %v3200 = vpack.c.bf16 %v3175, %v3174
        %v3201 = vpack.c.bf16 %v3177, %v3176
        %v3202 = vpack.c.bf16 %v3179, %v3178
        %v3203 = vpack.c.bf16 %v3181, %v3180
        %v3204 = vpack.c.bf16 %v3183, %v3182
        %v3205 = vpack.c.bf16 %v3185, %v3184
        %v3206 = vpack.c.bf16 %v3187, %v3186
        %v3207 = vpack.c.bf16 %v3189, %v3188
        %v3208 = vpack.c.bf16 %v3191, %v3190
        %v3209 = vpack.c.bf16 %v3193, %v3192
        %s3210 = scalar_lea.vmem %s3, 140
        %v3211 = vld [vmem:[%s3210] sm:$0xf]
        %v3212 = vld [vmem:[%s3210 + $0x4] sm:$0xf]
        %v3213 = vld [vmem:[%s3210 + $0x8] sm:$0xf]
        %v3214 = vld [vmem:[%s3210 + $0xc] sm:$0xf]
        %v3215 = vld [vmem:[%s3210 + $0x10] sm:$0x3]
        %v3221 = vunpack.c.l.b16 %v3211
        %v3222 = vunpack.c.l.b16 %v3212
        %v3223 = vunpack.c.l.b16 %v3213
        %v3224 = vunpack.c.l.b16 %v3214
        %v3225 = vunpack.c.l.b16 %v3215
        %v3226 = vpack.c.b16 %v3222, %v3221
        %v3227 = vpack.c.b16 %v3224, %v3223
        %v3228 = vpack.c.b16 %v3225, %v3225
        %v3232 = vsel %vm1155, %v3194, 0
        %v3235 = vsel %vm1155, %v3195, 0
        %v3238 = vsel %vm1155, %v3196, 0
        %v3241 = vsel %vm1155, %v3197, 0
        %v3244 = vsel %vm1155, %v3198, 0
        %v3247 = vsel %vm1155, %v3199, 0
        %v3250 = vsel %vm1155, %v3200, 0
        %v3253 = vsel %vm1155, %v3201, 0
        %v3256 = vsel %vm1155, %v3202, 0
        %v3259 = vsel %vm1155, %v3203, 0
        %v3262 = vsel %vm1155, %v3204, 0
        %v3265 = vsel %vm1155, %v3205, 0
        %v3268 = vsel %vm1155, %v3206, 0
        %v3271 = vsel %vm1155, %v3207, 0
        %v3274 = vsel %vm1155, %v3208, 0
        %v3277 = vsel %vm1155, %v3209, 0
        %v3280 = vsel %vm1204, %v3228, 0
        %3282 = vmatprep.subr.bf16.mxu0 0
        %3283 = vmatpush1.bf16.msra.mxu0 %v3226
        %3284 = vmatprep.subr.bf16.mxu0 0
        %3285 = vmatpush1.bf16.msra.mxu0 %v3227
        %3286 = vmatprep.subr.bf16.mxu0 0
        %3287 = vmatpush1.bf16.msra.mxu0 %v3280
        %3288 = vmatprep.subr.bf16.mxu0 0
        %3289 = vmatpush1.bf16.msra.mxu0 0
        %3290 = vmatprep.subr.bf16.mxu0 0
        %3291 = vmatpush1.bf16.msra.mxu0 0
        %3292 = vmatprep.subr.bf16.mxu0 0
        %3293 = vmatpush1.bf16.msra.mxu0 0
        %3294 = vmatprep.subr.bf16.mxu0 0
        %3295 = vmatpush1.bf16.msra.mxu0 0
        %3296 = vmatprep.subr.bf16.mxu0 0
        %3297 = vmatpush1.bf16.msra.mxu0 0
        %3298 = vmatprep.subr.bf16.mxu0 0
        %3299 = vmatpush1.bf16.msra.mxu0 0
        %3300 = vmatprep.subr.bf16.mxu0 0
        %3301 = vmatpush1.bf16.msra.mxu0 0
        %3302 = vmatprep.subr.bf16.mxu0 0
        %3303 = vmatpush1.bf16.msra.mxu0 0
        %3304 = vmatprep.subr.bf16.mxu0 0
        %3305 = vmatpush1.bf16.msra.mxu0 0
        %3306 = vmatprep.subr.bf16.mxu0 0
        %3307 = vmatpush1.bf16.msra.mxu0 0
        %3308 = vmatprep.subr.bf16.mxu0 0
        %3309 = vmatpush1.bf16.msra.mxu0 0
        %3310 = vmatprep.subr.bf16.mxu0 0
        %3311 = vmatpush1.bf16.msra.mxu0 0
        %3312 = vmatprep.subr.bf16.mxu0 0
        %3313 = vmatpush1.bf16.msra.mxu0 0
        %3314 = vmatprep.mubr.bf16.mxu0 0
        %3315 = vmatmul.mubr.bf16.gmra.mrb[0].mxu0 %v3232
        %v3316 = vpop.f32.mrb[0].mxu0
        %v3317 = vadd.f32 0.0, %v3316
        %v3318 = vpop.f32.mrb[0].mxu0
        %v3319 = vpop.f32.mrb[0].mxu0
        %v3320 = vadd.f32 0.0, %v3319
        %v3321 = vpop.f32.mrb[0].mxu0
        %3322 = vmatprep.mubr.bf16.mxu0 0
        %3323 = vmatmul.mubr.bf16.gmra.mrb[0].mxu0 %v3235
        %v3324 = vpop.f32.mrb[0].mxu0
        %v3325 = vadd.f32 0.0, %v3324
        %v3326 = vpop.f32.mrb[0].mxu0
        %v3327 = vpop.f32.mrb[0].mxu0
        %v3328 = vadd.f32 0.0, %v3327
        %v3329 = vpop.f32.mrb[0].mxu0
        %3330 = vmatprep.mubr.bf16.mxu0 0
        %3331 = vmatmul.mubr.bf16.gmra.mrb[0].mxu0 %v3238
        %v3332 = vpop.f32.mrb[0].mxu0
        %v3333 = vadd.f32 0.0, %v3332
        %v3334 = vpop.f32.mrb[0].mxu0
        %v3335 = vpop.f32.mrb[0].mxu0
        %v3336 = vadd.f32 0.0, %v3335
        %v3337 = vpop.f32.mrb[0].mxu0
        %3338 = vmatprep.mubr.bf16.mxu0 0
        %3339 = vmatmul.mubr.bf16.gmra.mrb[0].mxu0 %v3241
        %v3340 = vpop.f32.mrb[0].mxu0
        %v3341 = vadd.f32 0.0, %v3340
        %v3342 = vpop.f32.mrb[0].mxu0
        %v3343 = vpop.f32.mrb[0].mxu0
        %v3344 = vadd.f32 0.0, %v3343
        %v3345 = vpop.f32.mrb[0].mxu0
        %3346 = vmatprep.mubr.bf16.mxu0 0
        %3347 = vmatmul.mubr.bf16.gmra.mrb[0].mxu0 %v3244
        %v3348 = vpop.f32.mrb[0].mxu0
        %v3349 = vadd.f32 0.0, %v3348
        %v3350 = vpop.f32.mrb[0].mxu0
        %v3351 = vpop.f32.mrb[0].mxu0
        %v3352 = vadd.f32 0.0, %v3351
        %v3353 = vpop.f32.mrb[0].mxu0
        %3354 = vmatprep.mubr.bf16.mxu0 0
        %3355 = vmatmul.mubr.bf16.gmra.mrb[0].mxu0 %v3247
        %v3356 = vpop.f32.mrb[0].mxu0
        %v3357 = vadd.f32 0.0, %v3356
        %v3358 = vpop.f32.mrb[0].mxu0
        %v3359 = vpop.f32.mrb[0].mxu0
        %v3360 = vadd.f32 0.0, %v3359
        %v3361 = vpop.f32.mrb[0].mxu0
        %3362 = vmatprep.mubr.bf16.mxu0 0
        %3363 = vmatmul.mubr.bf16.gmra.mrb[0].mxu0 %v3250
        %v3364 = vpop.f32.mrb[0].mxu0
        %v3365 = vadd.f32 0.0, %v3364
        %v3366 = vpop.f32.mrb[0].mxu0
        %v3367 = vpop.f32.mrb[0].mxu0
        %v3368 = vadd.f32 0.0, %v3367
        %v3369 = vpop.f32.mrb[0].mxu0
        %3370 = vmatprep.mubr.bf16.mxu0 0
        %3371 = vmatmul.mubr.bf16.gmra.mrb[0].mxu0 %v3253
        %v3372 = vpop.f32.mrb[0].mxu0
        %v3373 = vadd.f32 0.0, %v3372
        %v3374 = vpop.f32.mrb[0].mxu0
        %v3375 = vpop.f32.mrb[0].mxu0
        %v3376 = vadd.f32 0.0, %v3375
        %v3377 = vpop.f32.mrb[0].mxu0
        %3378 = vmatprep.mubr.bf16.mxu0 0
        %3379 = vmatmul.mubr.bf16.gmra.mrb[0].mxu0 %v3256
        %v3380 = vpop.f32.mrb[0].mxu0
        %v3381 = vadd.f32 0.0, %v3380
        %v3382 = vpop.f32.mrb[0].mxu0
        %v3383 = vpop.f32.mrb[0].mxu0
        %v3384 = vadd.f32 0.0, %v3383
        %v3385 = vpop.f32.mrb[0].mxu0
        %3386 = vmatprep.mubr.bf16.mxu0 0
        %3387 = vmatmul.mubr.bf16.gmra.mrb[0].mxu0 %v3259
        %v3388 = vpop.f32.mrb[0].mxu0
        %v3389 = vadd.f32 0.0, %v3388
        %v3390 = vpop.f32.mrb[0].mxu0
        %v3391 = vpop.f32.mrb[0].mxu0
        %v3392 = vadd.f32 0.0, %v3391
        %v3393 = vpop.f32.mrb[0].mxu0
        %3394 = vmatprep.mubr.bf16.mxu0 0
        %3395 = vmatmul.mubr.bf16.gmra.mrb[0].mxu0 %v3262
        %v3396 = vpop.f32.mrb[0].mxu0
        %v3397 = vadd.f32 0.0, %v3396
        %v3398 = vpop.f32.mrb[0].mxu0
        %v3399 = vpop.f32.mrb[0].mxu0
        %v3400 = vadd.f32 0.0, %v3399
        %v3401 = vpop.f32.mrb[0].mxu0
        %3402 = vmatprep.mubr.bf16.mxu0 0
        %3403 = vmatmul.mubr.bf16.gmra.mrb[0].mxu0 %v3265
        %v3404 = vpop.f32.mrb[0].mxu0
        %v3405 = vadd.f32 0.0, %v3404
        %v3406 = vpop.f32.mrb[0].mxu0
        %v3407 = vpop.f32.mrb[0].mxu0
        %v3408 = vadd.f32 0.0, %v3407
        %v3409 = vpop.f32.mrb[0].mxu0
        %3410 = vmatprep.mubr.bf16.mxu0 0
        %3411 = vmatmul.mubr.bf16.gmra.mrb[0].mxu0 %v3268
        %v3412 = vpop.f32.mrb[0].mxu0
        %v3413 = vadd.f32 0.0, %v3412
        %v3414 = vpop.f32.mrb[0].mxu0
        %v3415 = vpop.f32.mrb[0].mxu0
        %v3416 = vadd.f32 0.0, %v3415
        %v3417 = vpop.f32.mrb[0].mxu0
        %3418 = vmatprep.mubr.bf16.mxu0 0
        %3419 = vmatmul.mubr.bf16.gmra.mrb[0].mxu0 %v3271
        %v3420 = vpop.f32.mrb[0].mxu0
        %v3421 = vadd.f32 0.0, %v3420
        %v3422 = vpop.f32.mrb[0].mxu0
        %v3423 = vpop.f32.mrb[0].mxu0
        %v3424 = vadd.f32 0.0, %v3423
        %v3425 = vpop.f32.mrb[0].mxu0
        %3426 = vmatprep.mubr.bf16.mxu0 0
        %3427 = vmatmul.mubr.bf16.gmra.mrb[0].mxu0 %v3274
        %v3428 = vpop.f32.mrb[0].mxu0
        %v3429 = vadd.f32 0.0, %v3428
        %v3430 = vpop.f32.mrb[0].mxu0
        %v3431 = vpop.f32.mrb[0].mxu0
        %v3432 = vadd.f32 0.0, %v3431
        %v3433 = vpop.f32.mrb[0].mxu0
        %3434 = vmatprep.mubr.bf16.mxu0 0
        %3435 = vmatmul.mubr.bf16.gmra.mrb[0].mxu0 %v3277
        %v3436 = vpop.f32.mrb[0].mxu0
        %v3437 = vadd.f32 0.0, %v3436
        %v3438 = vpop.f32.mrb[0].mxu0
        %v3439 = vpop.f32.mrb[0].mxu0
        %v3440 = vadd.f32 0.0, %v3439
        %v3441 = vpop.f32.mrb[0].mxu0
        %3442 = vdwg.mxu0
        %v3443 = vadd.f32 %v3130, %v3317
        %v3444 = vadd.f32 %v3131, %v3320
        %v3445 = vadd.f32 %v3132, %v3325
        %v3446 = vadd.f32 %v3133, %v3328
        %v3447 = vadd.f32 %v3134, %v3333
        %v3448 = vadd.f32 %v3135, %v3336
        %v3449 = vadd.f32 %v3136, %v3341
        %v3450 = vadd.f32 %v3137, %v3344
        %v3451 = vadd.f32 %v3138, %v3349
        %v3452 = vadd.f32 %v3139, %v3352
        %v3453 = vadd.f32 %v3140, %v3357
        %v3454 = vadd.f32 %v3141, %v3360
        %v3455 = vadd.f32 %v3142, %v3365
        %v3456 = vadd.f32 %v3143, %v3368
        %v3457 = vadd.f32 %v3144, %v3373
        %v3458 = vadd.f32 %v3145, %v3376
        %v3459 = vadd.f32 %v3146, %v3381
        %v3460 = vadd.f32 %v3147, %v3384
        %v3461 = vadd.f32 %v3148, %v3389
        %v3462 = vadd.f32 %v3149, %v3392
        %v3463 = vadd.f32 %v3150, %v3397
        %v3464 = vadd.f32 %v3151, %v3400
        %v3465 = vadd.f32 %v3152, %v3405
        %v3466 = vadd.f32 %v3153, %v3408
        %v3467 = vadd.f32 %v3154, %v3413
        %v3468 = vadd.f32 %v3155, %v3416
        %v3469 = vadd.f32 %v3156, %v3421
        %v3470 = vadd.f32 %v3157, %v3424
        %v3471 = vadd.f32 %v3158, %v3429
        %v3472 = vadd.f32 %v3159, %v3432
        %v3473 = vadd.f32 %v3160, %v3437
        %v3474 = vadd.f32 %v3161, %v3440
        %v3475 = vld [vmem:[%s2848 + $0x2] sm:$0xff]
        %v3476 = vld [vmem:[%s2848 + $0xa] sm:$0xff]
        %v3477 = vld [vmem:[%s2848 + $0x1a] sm:$0xff]
        %v3478 = vld [vmem:[%s2848 + $0x22] sm:$0xff]
        %v3479 = vld [vmem:[%s2848 + $0x32] sm:$0xff]
        %v3480 = vld [vmem:[%s2848 + $0x3a] sm:$0xff]
        %v3481 = vld [vmem:[%s2848 + $0x4a] sm:$0xff]
        %v3482 = vld [vmem:[%s2848 + $0x52] sm:$0xff]
        %v3483 = vld [vmem:[%s2848 + $0x62] sm:$0xff]
        %v3484 = vld [vmem:[%s2848 + $0x6a] sm:$0xff]
        %v3485 = vld [vmem:[%s2848 + $0x7a] sm:$0xff]
        %v3486 = vld [vmem:[%s2848 + $0x82] sm:$0xff]
        %v3487 = vld [vmem:[%s2848 + $0x92] sm:$0xff]
        %v3488 = vld [vmem:[%s2848 + $0x9a] sm:$0xff]
        %v3489 = vld [vmem:[%s2848 + $0xaa] sm:$0xff]
        %v3490 = vld [vmem:[%s2848 + $0xb2] sm:$0xff]
        %v3491 = vld [vmem:[%s2848 + $0xc2] sm:$0xff]
        %v3492 = vld [vmem:[%s2848 + $0xca] sm:$0xff]
        %v3493 = vld [vmem:[%s2848 + $0xda] sm:$0xff]
        %v3494 = vld [vmem:[%s2848 + $0xe2] sm:$0xff]
        %v3495 = vld [vmem:[%s2848 + $0xf2] sm:$0xff]
        %v3496 = vld [vmem:[%s2848 + $0xfa] sm:$0xff]
        %v3497 = vld [vmem:[%s2848 + $0x10a] sm:$0xff]
        %v3498 = vld [vmem:[%s2848 + $0x112] sm:$0xff]
        %v3499 = vld [vmem:[%s2848 + $0x122] sm:$0xff]
        %v3500 = vld [vmem:[%s2848 + $0x12a] sm:$0xff]
        %v3501 = vld [vmem:[%s2848 + $0x13a] sm:$0xff]
        %v3502 = vld [vmem:[%s2848 + $0x142] sm:$0xff]
        %v3503 = vld [vmem:[%s2848 + $0x152] sm:$0xff]
        %v3504 = vld [vmem:[%s2848 + $0x15a] sm:$0xff]
        %v3505 = vld [vmem:[%s2848 + $0x16a] sm:$0xff]
        %v3506 = vld [vmem:[%s2848 + $0x172] sm:$0xff]
        %v3507 = vpack.c.bf16 %v3476, %v3475
        %v3508 = vpack.c.bf16 %v3478, %v3477
        %v3509 = vpack.c.bf16 %v3480, %v3479
        %v3510 = vpack.c.bf16 %v3482, %v3481
        %v3511 = vpack.c.bf16 %v3484, %v3483
        %v3512 = vpack.c.bf16 %v3486, %v3485
        %v3513 = vpack.c.bf16 %v3488, %v3487
        %v3514 = vpack.c.bf16 %v3490, %v3489
        %v3515 = vpack.c.bf16 %v3492, %v3491
        %v3516 = vpack.c.bf16 %v3494, %v3493
        %v3517 = vpack.c.bf16 %v3496, %v3495
        %v3518 = vpack.c.bf16 %v3498, %v3497
        %v3519 = vpack.c.bf16 %v3500, %v3499
        %v3520 = vpack.c.bf16 %v3502, %v3501
        %v3521 = vpack.c.bf16 %v3504, %v3503
        %v3522 = vpack.c.bf16 %v3506, %v3505
        %s3523 = scalar_lea.vmem %s3, 160
        %v3524 = vld [vmem:[%s3523] sm:$0xf]
        %v3525 = vld [vmem:[%s3523 + $0x4] sm:$0xf]
        %v3526 = vld [vmem:[%s3523 + $0x8] sm:$0xf]
        %v3527 = vld [vmem:[%s3523 + $0xc] sm:$0xf]
        %v3528 = vld [vmem:[%s3523 + $0x10] sm:$0x3]
        %v3534 = vunpack.c.l.b16 %v3524
        %v3535 = vunpack.c.l.b16 %v3525
        %v3536 = vunpack.c.l.b16 %v3526
        %v3537 = vunpack.c.l.b16 %v3527
        %v3538 = vunpack.c.l.b16 %v3528
        %v3539 = vpack.c.b16 %v3535, %v3534
        %v3540 = vpack.c.b16 %v3537, %v3536
        %v3541 = vpack.c.b16 %v3538, %v3538
        %v3545 = vsel %vm1155, %v3507, 0
        %v3548 = vsel %vm1155, %v3508, 0
        %v3551 = vsel %vm1155, %v3509, 0
        %v3554 = vsel %vm1155, %v3510, 0
        %v3557 = vsel %vm1155, %v3511, 0
        %v3560 = vsel %vm1155, %v3512, 0
        %v3563 = vsel %vm1155, %v3513, 0
        %v3566 = vsel %vm1155, %v3514, 0
        %v3569 = vsel %vm1155, %v3515, 0
        %v3572 = vsel %vm1155, %v3516, 0
        %v3575 = vsel %vm1155, %v3517, 0
        %v3578 = vsel %vm1155, %v3518, 0
        %v3581 = vsel %vm1155, %v3519, 0
        %v3584 = vsel %vm1155, %v3520, 0
        %v3587 = vsel %vm1155, %v3521, 0
        %v3590 = vsel %vm1155, %v3522, 0
        %v3593 = vsel %vm1204, %v3541, 0
        %3595 = vmatprep.subr.bf16.mxu0 0
        %3596 = vmatpush1.bf16.msra.mxu0 %v3539
        %3597 = vmatprep.subr.bf16.mxu0 0
        %3598 = vmatpush1.bf16.msra.mxu0 %v3540
        %3599 = vmatprep.subr.bf16.mxu0 0
        %3600 = vmatpush1.bf16.msra.mxu0 %v3593
        %3601 = vmatprep.subr.bf16.mxu0 0
        %3602 = vmatpush1.bf16.msra.mxu0 0
        %3603 = vmatprep.subr.bf16.mxu0 0
        %3604 = vmatpush1.bf16.msra.mxu0 0
        %3605 = vmatprep.subr.bf16.mxu0 0
        %3606 = vmatpush1.bf16.msra.mxu0 0
        %3607 = vmatprep.subr.bf16.mxu0 0
        %3608 = vmatpush1.bf16.msra.mxu0 0
        %3609 = vmatprep.subr.bf16.mxu0 0
        %3610 = vmatpush1.bf16.msra.mxu0 0
        %3611 = vmatprep.subr.bf16.mxu0 0
        %3612 = vmatpush1.bf16.msra.mxu0 0
        %3613 = vmatprep.subr.bf16.mxu0 0
        %3614 = vmatpush1.bf16.msra.mxu0 0
        %3615 = vmatprep.subr.bf16.mxu0 0
        %3616 = vmatpush1.bf16.msra.mxu0 0
        %3617 = vmatprep.subr.bf16.mxu0 0
        %3618 = vmatpush1.bf16.msra.mxu0 0
        %3619 = vmatprep.subr.bf16.mxu0 0
        %3620 = vmatpush1.bf16.msra.mxu0 0
        %3621 = vmatprep.subr.bf16.mxu0 0
        %3622 = vmatpush1.bf16.msra.mxu0 0
        %3623 = vmatprep.subr.bf16.mxu0 0
        %3624 = vmatpush1.bf16.msra.mxu0 0
        %3625 = vmatprep.subr.bf16.mxu0 0
        %3626 = vmatpush1.bf16.msra.mxu0 0
        %3627 = vmatprep.mubr.bf16.mxu0 0
        %3628 = vmatmul.mubr.bf16.gmra.mrb[0].mxu0 %v3545
        %v3629 = vpop.f32.mrb[0].mxu0
        %v3630 = vadd.f32 0.0, %v3629
        %v3631 = vpop.f32.mrb[0].mxu0
        %v3632 = vpop.f32.mrb[0].mxu0
        %v3633 = vadd.f32 0.0, %v3632
        %v3634 = vpop.f32.mrb[0].mxu0
        %3635 = vmatprep.mubr.bf16.mxu0 0
        %3636 = vmatmul.mubr.bf16.gmra.mrb[0].mxu0 %v3548
        %v3637 = vpop.f32.mrb[0].mxu0
        %v3638 = vadd.f32 0.0, %v3637
        %v3639 = vpop.f32.mrb[0].mxu0
        %v3640 = vpop.f32.mrb[0].mxu0
        %v3641 = vadd.f32 0.0, %v3640
        %v3642 = vpop.f32.mrb[0].mxu0
        %3643 = vmatprep.mubr.bf16.mxu0 0
        %3644 = vmatmul.mubr.bf16.gmra.mrb[0].mxu0 %v3551
        %v3645 = vpop.f32.mrb[0].mxu0
        %v3646 = vadd.f32 0.0, %v3645
        %v3647 = vpop.f32.mrb[0].mxu0
        %v3648 = vpop.f32.mrb[0].mxu0
        %v3649 = vadd.f32 0.0, %v3648
        %v3650 = vpop.f32.mrb[0].mxu0
        %3651 = vmatprep.mubr.bf16.mxu0 0
        %3652 = vmatmul.mubr.bf16.gmra.mrb[0].mxu0 %v3554
        %v3653 = vpop.f32.mrb[0].mxu0
        %v3654 = vadd.f32 0.0, %v3653
        %v3655 = vpop.f32.mrb[0].mxu0
        %v3656 = vpop.f32.mrb[0].mxu0
        %v3657 = vadd.f32 0.0, %v3656
        %v3658 = vpop.f32.mrb[0].mxu0
        %3659 = vmatprep.mubr.bf16.mxu0 0
        %3660 = vmatmul.mubr.bf16.gmra.mrb[0].mxu0 %v3557
        %v3661 = vpop.f32.mrb[0].mxu0
        %v3662 = vadd.f32 0.0, %v3661
        %v3663 = vpop.f32.mrb[0].mxu0
        %v3664 = vpop.f32.mrb[0].mxu0
        %v3665 = vadd.f32 0.0, %v3664
        %v3666 = vpop.f32.mrb[0].mxu0
        %3667 = vmatprep.mubr.bf16.mxu0 0
        %3668 = vmatmul.mubr.bf16.gmra.mrb[0].mxu0 %v3560
        %v3669 = vpop.f32.mrb[0].mxu0
        %v3670 = vadd.f32 0.0, %v3669
        %v3671 = vpop.f32.mrb[0].mxu0
        %v3672 = vpop.f32.mrb[0].mxu0
        %v3673 = vadd.f32 0.0, %v3672
        %v3674 = vpop.f32.mrb[0].mxu0
        %3675 = vmatprep.mubr.bf16.mxu0 0
        %3676 = vmatmul.mubr.bf16.gmra.mrb[0].mxu0 %v3563
        %v3677 = vpop.f32.mrb[0].mxu0
        %v3678 = vadd.f32 0.0, %v3677
        %v3679 = vpop.f32.mrb[0].mxu0
        %v3680 = vpop.f32.mrb[0].mxu0
        %v3681 = vadd.f32 0.0, %v3680
        %v3682 = vpop.f32.mrb[0].mxu0
        %3683 = vmatprep.mubr.bf16.mxu0 0
        %3684 = vmatmul.mubr.bf16.gmra.mrb[0].mxu0 %v3566
        %v3685 = vpop.f32.mrb[0].mxu0
        %v3686 = vadd.f32 0.0, %v3685
        %v3687 = vpop.f32.mrb[0].mxu0
        %v3688 = vpop.f32.mrb[0].mxu0
        %v3689 = vadd.f32 0.0, %v3688
        %v3690 = vpop.f32.mrb[0].mxu0
        %3691 = vmatprep.mubr.bf16.mxu0 0
        %3692 = vmatmul.mubr.bf16.gmra.mrb[0].mxu0 %v3569
        %v3693 = vpop.f32.mrb[0].mxu0
        %v3694 = vadd.f32 0.0, %v3693
        %v3695 = vpop.f32.mrb[0].mxu0
        %v3696 = vpop.f32.mrb[0].mxu0
        %v3697 = vadd.f32 0.0, %v3696
        %v3698 = vpop.f32.mrb[0].mxu0
        %3699 = vmatprep.mubr.bf16.mxu0 0
        %3700 = vmatmul.mubr.bf16.gmra.mrb[0].mxu0 %v3572
        %v3701 = vpop.f32.mrb[0].mxu0
        %v3702 = vadd.f32 0.0, %v3701
        %v3703 = vpop.f32.mrb[0].mxu0
        %v3704 = vpop.f32.mrb[0].mxu0
        %v3705 = vadd.f32 0.0, %v3704
        %v3706 = vpop.f32.mrb[0].mxu0
        %3707 = vmatprep.mubr.bf16.mxu0 0
        %3708 = vmatmul.mubr.bf16.gmra.mrb[0].mxu0 %v3575
        %v3709 = vpop.f32.mrb[0].mxu0
        %v3710 = vadd.f32 0.0, %v3709
        %v3711 = vpop.f32.mrb[0].mxu0
        %v3712 = vpop.f32.mrb[0].mxu0
        %v3713 = vadd.f32 0.0, %v3712
        %v3714 = vpop.f32.mrb[0].mxu0
        %3715 = vmatprep.mubr.bf16.mxu0 0
        %3716 = vmatmul.mubr.bf16.gmra.mrb[0].mxu0 %v3578
        %v3717 = vpop.f32.mrb[0].mxu0
        %v3718 = vadd.f32 0.0, %v3717
        %v3719 = vpop.f32.mrb[0].mxu0
        %v3720 = vpop.f32.mrb[0].mxu0
        %v3721 = vadd.f32 0.0, %v3720
        %v3722 = vpop.f32.mrb[0].mxu0
        %3723 = vmatprep.mubr.bf16.mxu0 0
        %3724 = vmatmul.mubr.bf16.gmra.mrb[0].mxu0 %v3581
        %v3725 = vpop.f32.mrb[0].mxu0
        %v3726 = vadd.f32 0.0, %v3725
        %v3727 = vpop.f32.mrb[0].mxu0
        %v3728 = vpop.f32.mrb[0].mxu0
        %v3729 = vadd.f32 0.0, %v3728
        %v3730 = vpop.f32.mrb[0].mxu0
        %3731 = vmatprep.mubr.bf16.mxu0 0
        %3732 = vmatmul.mubr.bf16.gmra.mrb[0].mxu0 %v3584
        %v3733 = vpop.f32.mrb[0].mxu0
        %v3734 = vadd.f32 0.0, %v3733
        %v3735 = vpop.f32.mrb[0].mxu0
        %v3736 = vpop.f32.mrb[0].mxu0
        %v3737 = vadd.f32 0.0, %v3736
        %v3738 = vpop.f32.mrb[0].mxu0
        %3739 = vmatprep.mubr.bf16.mxu0 0
        %3740 = vmatmul.mubr.bf16.gmra.mrb[0].mxu0 %v3587
        %v3741 = vpop.f32.mrb[0].mxu0
        %v3742 = vadd.f32 0.0, %v3741
        %v3743 = vpop.f32.mrb[0].mxu0
        %v3744 = vpop.f32.mrb[0].mxu0
        %v3745 = vadd.f32 0.0, %v3744
        %v3746 = vpop.f32.mrb[0].mxu0
        %3747 = vmatprep.mubr.bf16.mxu0 0
        %3748 = vmatmul.mubr.bf16.gmra.mrb[0].mxu0 %v3590
        %v3749 = vpop.f32.mrb[0].mxu0
        %v3750 = vadd.f32 0.0, %v3749
        %v3751 = vpop.f32.mrb[0].mxu0
        %v3752 = vpop.f32.mrb[0].mxu0
        %v3753 = vadd.f32 0.0, %v3752
        %v3754 = vpop.f32.mrb[0].mxu0
        %3755 = vdwg.mxu0
        %v3756 = vadd.f32 %v3443, %v3630
        %v3757 = vadd.f32 %v3444, %v3633
        %v3758 = vadd.f32 %v3445, %v3638
        %v3759 = vadd.f32 %v3446, %v3641
        %v3760 = vadd.f32 %v3447, %v3646
        %v3761 = vadd.f32 %v3448, %v3649
        %v3762 = vadd.f32 %v3449, %v3654
        %v3763 = vadd.f32 %v3450, %v3657
        %v3764 = vadd.f32 %v3451, %v3662
        %v3765 = vadd.f32 %v3452, %v3665
        %v3766 = vadd.f32 %v3453, %v3670
        %v3767 = vadd.f32 %v3454, %v3673
        %v3768 = vadd.f32 %v3455, %v3678
        %v3769 = vadd.f32 %v3456, %v3681
        %v3770 = vadd.f32 %v3457, %v3686
        %v3771 = vadd.f32 %v3458, %v3689
        %v3772 = vadd.f32 %v3459, %v3694
        %v3773 = vadd.f32 %v3460, %v3697
        %v3774 = vadd.f32 %v3461, %v3702
        %v3775 = vadd.f32 %v3462, %v3705
        %v3776 = vadd.f32 %v3463, %v3710
        %v3777 = vadd.f32 %v3464, %v3713
        %v3778 = vadd.f32 %v3465, %v3718
        %v3779 = vadd.f32 %v3466, %v3721
        %v3780 = vadd.f32 %v3467, %v3726
        %v3781 = vadd.f32 %v3468, %v3729
        %v3782 = vadd.f32 %v3469, %v3734
        %v3783 = vadd.f32 %v3470, %v3737
        %v3784 = vadd.f32 %v3471, %v3742
        %v3785 = vadd.f32 %v3472, %v3745
        %v3786 = vadd.f32 %v3473, %v3750
        %v3787 = vadd.f32 %v3474, %v3753
        %v3788 = vld [vmem:[%s4] sm:$0x1]
        %v3789 = vadd.f32 %v3756, %v3757
        %v3790 = vadd.f32 %v3789, %v3758
        %v3791 = vadd.f32 %v3790, %v3759
        %v3792 = vadd.f32 %v3791, %v3760
        %v3793 = vadd.f32 %v3792, %v3761
        %v3794 = vadd.f32 %v3793, %v3762
        %v3795 = vadd.f32 %v3794, %v3763
        %v3796 = vadd.f32 %v3795, %v3764
        %v3797 = vadd.f32 %v3796, %v3765
        %v3798 = vadd.f32 %v3797, %v3766
        %v3799 = vadd.f32 %v3798, %v3767
        %v3800 = vadd.f32 %v3799, %v3768
        %v3801 = vadd.f32 %v3800, %v3769
        %v3802 = vadd.f32 %v3801, %v3770
        %v3803 = vadd.f32 %v3802, %v3771
        %v3804 = vadd.f32 %v3803, %v3772
        %v3805 = vadd.f32 %v3804, %v3773
        %v3806 = vadd.f32 %v3805, %v3774
        %v3807 = vadd.f32 %v3806, %v3775
        %v3808 = vadd.f32 %v3807, %v3776
        %v3809 = vadd.f32 %v3808, %v3777
        %v3810 = vadd.f32 %v3809, %v3778
        %v3811 = vadd.f32 %v3810, %v3779
        %v3812 = vadd.f32 %v3811, %v3780
        %v3813 = vadd.f32 %v3812, %v3781
        %v3814 = vadd.f32 %v3813, %v3782
        %v3815 = vadd.f32 %v3814, %v3783
        %v3816 = vadd.f32 %v3815, %v3784
        %v3817 = vadd.f32 %v3816, %v3785
        %v3818 = vadd.f32 %v3817, %v3786
        %v3819 = vadd.f32 %v3818, %v3787
        %v3820 = vrot.slane %v3819, 4
        %v3821 = vadd.f32 %v3819, %v3820
        %v3822 = vrot.slane %v3821, 2
        %v3823 = vadd.f32 %v3821, %v3822
        %v3824 = vrot.slane %v3823, 1
        %v3825 = vadd.f32 %v3823, %v3824
        %v3826 = vmul.f32 %v3756, %v3756
        %v3827 = vmul.f32 %v3757, %v3757
        %v3828 = vmul.f32 %v3758, %v3758
        %v3829 = vmul.f32 %v3759, %v3759
        %v3830 = vmul.f32 %v3760, %v3760
        %v3831 = vmul.f32 %v3761, %v3761
        %v3832 = vmul.f32 %v3762, %v3762
        %v3833 = vmul.f32 %v3763, %v3763
        %v3834 = vmul.f32 %v3764, %v3764
        %v3835 = vmul.f32 %v3765, %v3765
        %v3836 = vmul.f32 %v3766, %v3766
        %v3837 = vmul.f32 %v3767, %v3767
        %v3838 = vmul.f32 %v3768, %v3768
        %v3839 = vmul.f32 %v3769, %v3769
        %v3840 = vmul.f32 %v3770, %v3770
        %v3841 = vmul.f32 %v3771, %v3771
        %v3842 = vmul.f32 %v3772, %v3772
        %v3843 = vmul.f32 %v3773, %v3773
        %v3844 = vmul.f32 %v3774, %v3774
        %v3845 = vmul.f32 %v3775, %v3775
        %v3846 = vmul.f32 %v3776, %v3776
        %v3847 = vmul.f32 %v3777, %v3777
        %v3848 = vmul.f32 %v3778, %v3778
        %v3849 = vmul.f32 %v3779, %v3779
        %v3850 = vmul.f32 %v3780, %v3780
        %v3851 = vmul.f32 %v3781, %v3781
        %v3852 = vmul.f32 %v3782, %v3782
        %v3853 = vmul.f32 %v3783, %v3783
        %v3854 = vmul.f32 %v3784, %v3784
        %v3855 = vmul.f32 %v3785, %v3785
        %v3856 = vmul.f32 %v3786, %v3786
        %v3857 = vmul.f32 %v3787, %v3787
        %v3858 = vadd.f32 %v3826, %v3827
        %v3859 = vadd.f32 %v3858, %v3828
        %v3860 = vadd.f32 %v3859, %v3829
        %v3861 = vadd.f32 %v3860, %v3830
        %v3862 = vadd.f32 %v3861, %v3831
        %v3863 = vadd.f32 %v3862, %v3832
        %v3864 = vadd.f32 %v3863, %v3833
        %v3865 = vadd.f32 %v3864, %v3834
        %v3866 = vadd.f32 %v3865, %v3835
        %v3867 = vadd.f32 %v3866, %v3836
        %v3868 = vadd.f32 %v3867, %v3837
        %v3869 = vadd.f32 %v3868, %v3838
        %v3870 = vadd.f32 %v3869, %v3839
        %v3871 = vadd.f32 %v3870, %v3840
        %v3872 = vadd.f32 %v3871, %v3841
        %v3873 = vadd.f32 %v3872, %v3842
        %v3874 = vadd.f32 %v3873, %v3843
        %v3875 = vadd.f32 %v3874, %v3844
        %v3876 = vadd.f32 %v3875, %v3845
        %v3877 = vadd.f32 %v3876, %v3846
        %v3878 = vadd.f32 %v3877, %v3847
        %v3879 = vadd.f32 %v3878, %v3848
        %v3880 = vadd.f32 %v3879, %v3849
        %v3881 = vadd.f32 %v3880, %v3850
        %v3882 = vadd.f32 %v3881, %v3851
        %v3883 = vadd.f32 %v3882, %v3852
        %v3884 = vadd.f32 %v3883, %v3853
        %v3885 = vadd.f32 %v3884, %v3854
        %v3886 = vadd.f32 %v3885, %v3855
        %v3887 = vadd.f32 %v3886, %v3856
        %v3888 = vadd.f32 %v3887, %v3857
        %v3889 = vrot.slane %v3888, 4
        %v3890 = vadd.f32 %v3888, %v3889
        %v3891 = vrot.slane %v3890, 2
        %v3892 = vadd.f32 %v3890, %v3891
        %v3893 = vrot.slane %v3892, 1
        %v3894 = vadd.f32 %v3892, %v3893
        %v3895 = vmul.f32 %v3788, 256.0
        %v3896 = vadd.f32 %v3825, %v3895
        %v3897 = vmul.f32 %v3788, 2.0
        %v3898 = vmul.f32 %v3897, %v3825
        %v3899 = vadd.f32 %v3894, %v3898
        %v3900 = vmul.f32 %v3895, %v3788
        %v3901 = vadd.f32 %v3899, %v3900
        %v3902 = vld [vmem:[%s7] sm:$0xff]
        %v3903 = vld [vmem:[%s7 + $0x8] sm:$0xff]
        %v3904 = vld [vmem:[%s7 + $0x10] sm:$0xff]
        %v3905 = vld [vmem:[%s7 + $0x18] sm:$0xff]
        %v3906 = vld [vmem:[%s7 + $0x20] sm:$0xff]
        %v3907 = vld [vmem:[%s7 + $0x28] sm:$0xff]
        %v3908 = vld [vmem:[%s7 + $0x30] sm:$0xff]
        %v3909 = vld [vmem:[%s7 + $0x38] sm:$0xff]
        %v3910 = vld [vmem:[%s7 + $0x40] sm:$0xff]
        %v3911 = vld [vmem:[%s7 + $0x48] sm:$0xff]
        %v3912 = vld [vmem:[%s7 + $0x50] sm:$0xff]
        %v3913 = vld [vmem:[%s7 + $0x58] sm:$0xff]
        %v3914 = vld [vmem:[%s7 + $0x60] sm:$0xff]
        %v3915 = vld [vmem:[%s7 + $0x68] sm:$0xff]
        %v3916 = vld [vmem:[%s7 + $0x70] sm:$0xff]
        %v3917 = vld [vmem:[%s7 + $0x78] sm:$0xff]
        %3918 = vmatprep.subr.mxu0 0.0
        %3919 = vmatpush1.msra.mxu0 %v3902
        %3920 = vmatprep.subr.mxu0 0.0
        %3921 = vmatpush1.msra.mxu0 %v3903
        %3922 = vmatprep.subr.mxu0 0.0
        %3923 = vmatpush1.msra.mxu0 %v3904
        %3924 = vmatprep.subr.mxu0 0.0
        %3925 = vmatpush1.msra.mxu0 %v3905
        %3926 = vmatprep.subr.mxu0 0.0
        %3927 = vmatpush1.msra.mxu0 %v3906
        %3928 = vmatprep.subr.mxu0 0.0
        %3929 = vmatpush1.msra.mxu0 %v3907
        %3930 = vmatprep.subr.mxu0 0.0
        %3931 = vmatpush1.msra.mxu0 %v3908
        %3932 = vmatprep.subr.mxu0 0.0
        %3933 = vmatpush1.msra.mxu0 %v3909
        %3934 = vmatprep.subr.mxu0 0.0
        %3935 = vmatpush1.msra.mxu0 %v3910
        %3936 = vmatprep.subr.mxu0 0.0
        %3937 = vmatpush1.msra.mxu0 %v3911
        %3938 = vmatprep.subr.mxu0 0.0
        %3939 = vmatpush1.msra.mxu0 %v3912
        %3940 = vmatprep.subr.mxu0 0.0
        %3941 = vmatpush1.msra.mxu0 %v3913
        %3942 = vmatprep.subr.mxu0 0.0
        %3943 = vmatpush1.msra.mxu0 %v3914
        %3944 = vmatprep.subr.mxu0 0.0
        %3945 = vmatpush1.msra.mxu0 %v3915
        %3946 = vmatprep.subr.mxu0 0.0
        %3947 = vmatpush1.msra.mxu0 %v3916
        %3948 = vmatprep.subr.mxu0 0.0
        %3949 = vmatpush1.msra.mxu0 %v3917
        %3950 = vmatprep.subr.mxu0 0.0
        %3951 = vmatpush1.msra.mxu0 0.0
        %3952 = vmatprep.subr.mxu0 0.0
        %3953 = vmatpush1.msra.mxu0 0.0
        %3954 = vmatprep.subr.mxu0 0.0
        %3955 = vmatpush1.msra.mxu0 0.0
        %3956 = vmatprep.subr.mxu0 0.0
        %3957 = vmatpush1.msra.mxu0 0.0
        %3958 = vmatprep.subr.mxu0 0.0
        %3959 = vmatpush1.msra.mxu0 0.0
        %3960 = vmatprep.subr.mxu0 0.0
        %3961 = vmatpush1.msra.mxu0 0.0
        %3962 = vmatprep.subr.mxu0 0.0
        %3963 = vmatpush1.msra.mxu0 0.0
        %3964 = vmatprep.subr.mxu0 0.0
        %3965 = vmatpush1.msra.mxu0 0.0
        %3966 = vmatprep.subr.mxu0 0.0
        %3967 = vmatpush1.msra.mxu0 0.0
        %3968 = vmatprep.subr.mxu0 0.0
        %3969 = vmatpush1.msra.mxu0 0.0
        %3970 = vmatprep.subr.mxu0 0.0
        %3971 = vmatpush1.msra.mxu0 0.0
        %3972 = vmatprep.subr.mxu0 0.0
        %3973 = vmatpush1.msra.mxu0 0.0
        %3974 = vmatprep.subr.mxu0 0.0
        %3975 = vmatpush1.msra.mxu0 0.0
        %3976 = vmatprep.subr.mxu0 0.0
        %3977 = vmatpush1.msra.mxu0 0.0
        %3978 = vmatprep.subr.mxu0 0.0
        %3979 = vmatpush1.msra.mxu0 0.0
        %3980 = vmatprep.subr.mxu0 0.0
        %3981 = vmatpush1.msra.mxu0 0.0
        %3982 = vmatprep.mubr.f32.mxu0 0.0
        %3983 = vmatmul.mubr.f32.gmra.mrb[0].mxu0 %v3896
        %v3984 = vpop.f32.mrb[0].mxu0
        %v3985 = vadd.f32 0.0, %v3984
        %v3986 = vpop.f32.mrb[0].mxu0
        %3987 = vdwg.mxu0
        %v3988 = vmul.f32 %v3985, 0.00024414063
        %3989 = vmatprep.subr.mxu0 0.0
        %3990 = vmatpush1.msra.mxu0 %v3902
        %3991 = vmatprep.subr.mxu0 0.0
        %3992 = vmatpush1.msra.mxu0 %v3903
        %3993 = vmatprep.subr.mxu0 0.0
        %3994 = vmatpush1.msra.mxu0 %v3904
        %3995 = vmatprep.subr.mxu0 0.0
        %3996 = vmatpush1.msra.mxu0 %v3905
        %3997 = vmatprep.subr.mxu0 0.0
        %3998 = vmatpush1.msra.mxu0 %v3906
        %3999 = vmatprep.subr.mxu0 0.0
        %4000 = vmatpush1.msra.mxu0 %v3907
        %4001 = vmatprep.subr.mxu0 0.0
        %4002 = vmatpush1.msra.mxu0 %v3908
        %4003 = vmatprep.subr.mxu0 0.0
        %4004 = vmatpush1.msra.mxu0 %v3909
        %4005 = vmatprep.subr.mxu0 0.0
        %4006 = vmatpush1.msra.mxu0 %v3910
        %4007 = vmatprep.subr.mxu0 0.0
        %4008 = vmatpush1.msra.mxu0 %v3911
        %4009 = vmatprep.subr.mxu0 0.0
        %4010 = vmatpush1.msra.mxu0 %v3912
        %4011 = vmatprep.subr.mxu0 0.0
        %4012 = vmatpush1.msra.mxu0 %v3913
        %4013 = vmatprep.subr.mxu0 0.0
        %4014 = vmatpush1.msra.mxu0 %v3914
        %4015 = vmatprep.subr.mxu0 0.0
        %4016 = vmatpush1.msra.mxu0 %v3915
        %4017 = vmatprep.subr.mxu0 0.0
        %4018 = vmatpush1.msra.mxu0 %v3916
        %4019 = vmatprep.subr.mxu0 0.0
        %4020 = vmatpush1.msra.mxu0 %v3917
        %4021 = vmatprep.subr.mxu0 0.0
        %4022 = vmatpush1.msra.mxu0 0.0
        %4023 = vmatprep.subr.mxu0 0.0
        %4024 = vmatpush1.msra.mxu0 0.0
        %4025 = vmatprep.subr.mxu0 0.0
        %4026 = vmatpush1.msra.mxu0 0.0
        %4027 = vmatprep.subr.mxu0 0.0
        %4028 = vmatpush1.msra.mxu0 0.0
        %4029 = vmatprep.subr.mxu0 0.0
        %4030 = vmatpush1.msra.mxu0 0.0
        %4031 = vmatprep.subr.mxu0 0.0
        %4032 = vmatpush1.msra.mxu0 0.0
        %4033 = vmatprep.subr.mxu0 0.0
        %4034 = vmatpush1.msra.mxu0 0.0
        %4035 = vmatprep.subr.mxu0 0.0
        %4036 = vmatpush1.msra.mxu0 0.0
        %4037 = vmatprep.subr.mxu0 0.0
        %4038 = vmatpush1.msra.mxu0 0.0
        %4039 = vmatprep.subr.mxu0 0.0
        %4040 = vmatpush1.msra.mxu0 0.0
        %4041 = vmatprep.subr.mxu0 0.0
        %4042 = vmatpush1.msra.mxu0 0.0
        %4043 = vmatprep.subr.mxu0 0.0
        %4044 = vmatpush1.msra.mxu0 0.0
        %4045 = vmatprep.subr.mxu0 0.0
        %4046 = vmatpush1.msra.mxu0 0.0
        %4047 = vmatprep.subr.mxu0 0.0
        %4048 = vmatpush1.msra.mxu0 0.0
        %4049 = vmatprep.subr.mxu0 0.0
        %4050 = vmatpush1.msra.mxu0 0.0
        %4051 = vmatprep.subr.mxu0 0.0
        %4052 = vmatpush1.msra.mxu0 0.0
        %4053 = vmatprep.mubr.f32.mxu0 0.0
        %4054 = vmatmul.mubr.f32.gmra.mrb[0].mxu0 %v3901
        %v4055 = vpop.f32.mrb[0].mxu0
        %v4056 = vadd.f32 0.0, %v4055
        %v4057 = vpop.f32.mrb[0].mxu0
        %4058 = vdwg.mxu0
        %v4059 = vmul.f32 %v4056, 0.00024414063
        %v4060 = vmul.f32 %v3988, %v3988
        %v4061 = vsub.f32 %v4059, %v4060
        %v4062 = vadd.f32 %v4061, 1e-05
        %v4063 = vrsqrt.pop %v4062
        %v4064 = vld [vmem:[%s8] sm:$0xff]
        %vm4065 = vcmask 64512
        %v4067 = vsel %vm4065, %v3988, 0
        %4069 = vmatprep.subr.mxu0 0.0
        %4070 = vmatpush1.msra.mxu0 %v4064
        %4071 = vmatprep.subr.mxu0 0.0
        %4072 = vmatpush1.msra.mxu0 0.0
        %4073 = vmatprep.subr.mxu0 0.0
        %4074 = vmatpush1.msra.mxu0 0.0
        %4075 = vmatprep.subr.mxu0 0.0
        %4076 = vmatpush1.msra.mxu0 0.0
        %4077 = vmatprep.subr.mxu0 0.0
        %4078 = vmatpush1.msra.mxu0 0.0
        %4079 = vmatprep.subr.mxu0 0.0
        %4080 = vmatpush1.msra.mxu0 0.0
        %4081 = vmatprep.subr.mxu0 0.0
        %4082 = vmatpush1.msra.mxu0 0.0
        %4083 = vmatprep.subr.mxu0 0.0
        %4084 = vmatpush1.msra.mxu0 0.0
        %4085 = vmatprep.subr.mxu0 0.0
        %4086 = vmatpush1.msra.mxu0 0.0
        %4087 = vmatprep.subr.mxu0 0.0
        %4088 = vmatpush1.msra.mxu0 0.0
        %4089 = vmatprep.subr.mxu0 0.0
        %4090 = vmatpush1.msra.mxu0 0.0
        %4091 = vmatprep.subr.mxu0 0.0
        %4092 = vmatpush1.msra.mxu0 0.0
        %4093 = vmatprep.subr.mxu0 0.0
        %4094 = vmatpush1.msra.mxu0 0.0
        %4095 = vmatprep.subr.mxu0 0.0
        %4096 = vmatpush1.msra.mxu0 0.0
        %4097 = vmatprep.subr.mxu0 0.0
        %4098 = vmatpush1.msra.mxu0 0.0
        %4099 = vmatprep.subr.mxu0 0.0
        %4100 = vmatpush1.msra.mxu0 0.0
        %4101 = vmatprep.subr.mxu0 0.0
        %4102 = vmatpush1.msra.mxu0 0.0
        %4103 = vmatprep.subr.mxu0 0.0
        %4104 = vmatpush1.msra.mxu0 0.0
        %4105 = vmatprep.subr.mxu0 0.0
        %4106 = vmatpush1.msra.mxu0 0.0
        %4107 = vmatprep.subr.mxu0 0.0
        %4108 = vmatpush1.msra.mxu0 0.0
        %4109 = vmatprep.subr.mxu0 0.0
        %4110 = vmatpush1.msra.mxu0 0.0
        %4111 = vmatprep.subr.mxu0 0.0
        %4112 = vmatpush1.msra.mxu0 0.0
        %4113 = vmatprep.subr.mxu0 0.0
        %4114 = vmatpush1.msra.mxu0 0.0
        %4115 = vmatprep.subr.mxu0 0.0
        %4116 = vmatpush1.msra.mxu0 0.0
        %4117 = vmatprep.subr.mxu0 0.0
        %4118 = vmatpush1.msra.mxu0 0.0
        %4119 = vmatprep.subr.mxu0 0.0
        %4120 = vmatpush1.msra.mxu0 0.0
        %4121 = vmatprep.subr.mxu0 0.0
        %4122 = vmatpush1.msra.mxu0 0.0
        %4123 = vmatprep.subr.mxu0 0.0
        %4124 = vmatpush1.msra.mxu0 0.0
        %4125 = vmatprep.subr.mxu0 0.0
        %4126 = vmatpush1.msra.mxu0 0.0
        %4127 = vmatprep.subr.mxu0 0.0
        %4128 = vmatpush1.msra.mxu0 0.0
        %4129 = vmatprep.subr.mxu0 0.0
        %4130 = vmatpush1.msra.mxu0 0.0
        %4131 = vmatprep.subr.mxu0 0.0
        %4132 = vmatpush1.msra.mxu0 0.0
        %4133 = vmatprep.mubr.f32.mxu0 0.0
        %4134 = vmatmul.mubr.f32.gmra.mrb[0].mxu0 %v4067
        %v4135 = vpop.f32.mrb[0].mxu0
        %v4136 = vadd.f32 0.0, %v4135
        %v4137 = vpop.f32.mrb[0].mxu0
        %4138 = vdwg.mxu0
        %v4140 = vsel %vm4065, %v4063, 0
        %4142 = vmatprep.subr.mxu0 0.0
        %4143 = vmatpush1.msra.mxu0 %v4064
        %4144 = vmatprep.subr.mxu0 0.0
        %4145 = vmatpush1.msra.mxu0 0.0
        %4146 = vmatprep.subr.mxu0 0.0
        %4147 = vmatpush1.msra.mxu0 0.0
        %4148 = vmatprep.subr.mxu0 0.0
        %4149 = vmatpush1.msra.mxu0 0.0
        %4150 = vmatprep.subr.mxu0 0.0
        %4151 = vmatpush1.msra.mxu0 0.0
        %4152 = vmatprep.subr.mxu0 0.0
        %4153 = vmatpush1.msra.mxu0 0.0
        %4154 = vmatprep.subr.mxu0 0.0
        %4155 = vmatpush1.msra.mxu0 0.0
        %4156 = vmatprep.subr.mxu0 0.0
        %4157 = vmatpush1.msra.mxu0 0.0
        %4158 = vmatprep.subr.mxu0 0.0
        %4159 = vmatpush1.msra.mxu0 0.0
        %4160 = vmatprep.subr.mxu0 0.0
        %4161 = vmatpush1.msra.mxu0 0.0
        %4162 = vmatprep.subr.mxu0 0.0
        %4163 = vmatpush1.msra.mxu0 0.0
        %4164 = vmatprep.subr.mxu0 0.0
        %4165 = vmatpush1.msra.mxu0 0.0
        %4166 = vmatprep.subr.mxu0 0.0
        %4167 = vmatpush1.msra.mxu0 0.0
        %4168 = vmatprep.subr.mxu0 0.0
        %4169 = vmatpush1.msra.mxu0 0.0
        %4170 = vmatprep.subr.mxu0 0.0
        %4171 = vmatpush1.msra.mxu0 0.0
        %4172 = vmatprep.subr.mxu0 0.0
        %4173 = vmatpush1.msra.mxu0 0.0
        %4174 = vmatprep.subr.mxu0 0.0
        %4175 = vmatpush1.msra.mxu0 0.0
        %4176 = vmatprep.subr.mxu0 0.0
        %4177 = vmatpush1.msra.mxu0 0.0
        %4178 = vmatprep.subr.mxu0 0.0
        %4179 = vmatpush1.msra.mxu0 0.0
        %4180 = vmatprep.subr.mxu0 0.0
        %4181 = vmatpush1.msra.mxu0 0.0
        %4182 = vmatprep.subr.mxu0 0.0
        %4183 = vmatpush1.msra.mxu0 0.0
        %4184 = vmatprep.subr.mxu0 0.0
        %4185 = vmatpush1.msra.mxu0 0.0
        %4186 = vmatprep.subr.mxu0 0.0
        %4187 = vmatpush1.msra.mxu0 0.0
        %4188 = vmatprep.subr.mxu0 0.0
        %4189 = vmatpush1.msra.mxu0 0.0
        %4190 = vmatprep.subr.mxu0 0.0
        %4191 = vmatpush1.msra.mxu0 0.0
        %4192 = vmatprep.subr.mxu0 0.0
        %4193 = vmatpush1.msra.mxu0 0.0
        %4194 = vmatprep.subr.mxu0 0.0
        %4195 = vmatpush1.msra.mxu0 0.0
        %4196 = vmatprep.subr.mxu0 0.0
        %4197 = vmatpush1.msra.mxu0 0.0
        %4198 = vmatprep.subr.mxu0 0.0
        %4199 = vmatpush1.msra.mxu0 0.0
        %4200 = vmatprep.subr.mxu0 0.0
        %4201 = vmatpush1.msra.mxu0 0.0
        %4202 = vmatprep.subr.mxu0 0.0
        %4203 = vmatpush1.msra.mxu0 0.0
        %4204 = vmatprep.subr.mxu0 0.0
        %4205 = vmatpush1.msra.mxu0 0.0
        %4206 = vmatprep.mubr.f32.mxu0 0.0
        %4207 = vmatmul.mubr.f32.gmra.mrb[0].mxu0 %v4140
        %v4208 = vpop.f32.mrb[0].mxu0
        %v4209 = vadd.f32 0.0, %v4208
        %v4210 = vpop.f32.mrb[0].mxu0
        %4211 = vdwg.mxu0
        %v4212 = vld [vmem:[%s5] sm:$0x1]
        %v4213 = vmul.f32 %v4209, %v4212
        %v4214 = vld [vmem:[%s6] sm:$0x1]
        %v4215 = vsub.f32 %v3788, %v4136
        %v4216 = vmul.f32 %v4215, %v4213
        %v4217 = vadd.f32 %v4214, %v4216
        %v4218 = vlaneseq
        %v4219 = vshrl.u32 %v4218, 7
        %v4220 = vsub.s32 0, %v4219
        %v4221 = vrot.slane %v4213, %v4220
        %v4222 = vmul.f32 %v3756, %v4221
        %v4223 = vmul.f32 %v3757, %v4221
        %v4224 = vmul.f32 %v3758, %v4221
        %v4225 = vmul.f32 %v3759, %v4221
        %v4226 = vmul.f32 %v3760, %v4221
        %v4227 = vmul.f32 %v3761, %v4221
        %v4228 = vmul.f32 %v3762, %v4221
        %v4229 = vmul.f32 %v3763, %v4221
        %v4230 = vmul.f32 %v3764, %v4221
        %v4231 = vmul.f32 %v3765, %v4221
        %v4232 = vmul.f32 %v3766, %v4221
        %v4233 = vmul.f32 %v3767, %v4221
        %v4234 = vmul.f32 %v3768, %v4221
        %v4235 = vmul.f32 %v3769, %v4221
        %v4236 = vmul.f32 %v3770, %v4221
        %v4237 = vmul.f32 %v3771, %v4221
        %v4238 = vmul.f32 %v3772, %v4221
        %v4239 = vmul.f32 %v3773, %v4221
        %v4240 = vmul.f32 %v3774, %v4221
        %v4241 = vmul.f32 %v3775, %v4221
        %v4242 = vmul.f32 %v3776, %v4221
        %v4243 = vmul.f32 %v3777, %v4221
        %v4244 = vmul.f32 %v3778, %v4221
        %v4245 = vmul.f32 %v3779, %v4221
        %v4246 = vmul.f32 %v3780, %v4221
        %v4247 = vmul.f32 %v3781, %v4221
        %v4248 = vmul.f32 %v3782, %v4221
        %v4249 = vmul.f32 %v3783, %v4221
        %v4250 = vmul.f32 %v3784, %v4221
        %v4251 = vmul.f32 %v3785, %v4221
        %v4252 = vmul.f32 %v3786, %v4221
        %v4253 = vmul.f32 %v3787, %v4221
        %v4255 = vlaneseq
        %v4256 = vshrl.u32 %v4255, 7
        %v4257 = vsub.s32 0, %v4256
        %v4258 = vrot.slane %v4217, %v4257
        %v4260 = vadd.f32 %v4222, %v4258
        %v4261 = vadd.f32 %v4223, %v4258
        %v4262 = vadd.f32 %v4224, %v4258
        %v4263 = vadd.f32 %v4225, %v4258
        %v4264 = vadd.f32 %v4226, %v4258
        %v4265 = vadd.f32 %v4227, %v4258
        %v4266 = vadd.f32 %v4228, %v4258
        %v4267 = vadd.f32 %v4229, %v4258
        %v4268 = vadd.f32 %v4230, %v4258
        %v4269 = vadd.f32 %v4231, %v4258
        %v4270 = vadd.f32 %v4232, %v4258
        %v4271 = vadd.f32 %v4233, %v4258
        %v4272 = vadd.f32 %v4234, %v4258
        %v4273 = vadd.f32 %v4235, %v4258
        %v4274 = vadd.f32 %v4236, %v4258
        %v4275 = vadd.f32 %v4237, %v4258
        %v4276 = vadd.f32 %v4238, %v4258
        %v4277 = vadd.f32 %v4239, %v4258
        %v4278 = vadd.f32 %v4240, %v4258
        %v4279 = vadd.f32 %v4241, %v4258
        %v4280 = vadd.f32 %v4242, %v4258
        %v4281 = vadd.f32 %v4243, %v4258
        %v4282 = vadd.f32 %v4244, %v4258
        %v4283 = vadd.f32 %v4245, %v4258
        %v4284 = vadd.f32 %v4246, %v4258
        %v4285 = vadd.f32 %v4247, %v4258
        %v4286 = vadd.f32 %v4248, %v4258
        %v4287 = vadd.f32 %v4249, %v4258
        %v4288 = vadd.f32 %v4250, %v4258
        %v4289 = vadd.f32 %v4251, %v4258
        %v4290 = vadd.f32 %v4252, %v4258
        %v4291 = vadd.f32 %v4253, %v4258
        %v4292 = vtanh.pop %v4260
        %v4293 = vtanh.pop %v4261
        %v4294 = vtanh.pop %v4262
        %v4295 = vtanh.pop %v4263
        %v4296 = vtanh.pop %v4264
        %v4297 = vtanh.pop %v4265
        %v4298 = vtanh.pop %v4266
        %v4299 = vtanh.pop %v4267
        %v4300 = vtanh.pop %v4268
        %v4301 = vtanh.pop %v4269
        %v4302 = vtanh.pop %v4270
        %v4303 = vtanh.pop %v4271
        %v4304 = vtanh.pop %v4272
        %v4305 = vtanh.pop %v4273
        %v4306 = vtanh.pop %v4274
        %v4307 = vtanh.pop %v4275
        %v4308 = vtanh.pop %v4276
        %v4309 = vtanh.pop %v4277
        %v4310 = vtanh.pop %v4278
        %v4311 = vtanh.pop %v4279
        %v4312 = vtanh.pop %v4280
        %v4313 = vtanh.pop %v4281
        %v4314 = vtanh.pop %v4282
        %v4315 = vtanh.pop %v4283
        %v4316 = vtanh.pop %v4284
        %v4317 = vtanh.pop %v4285
        %v4318 = vtanh.pop %v4286
        %v4319 = vtanh.pop %v4287
        %v4320 = vtanh.pop %v4288
        %v4321 = vtanh.pop %v4289
        %v4322 = vtanh.pop %v4290
        %v4323 = vtanh.pop %v4291
        %v4324 = vld [vmem:[%s9] sm:$0xff]
        %v4325 = vld [vmem:[%s9 + $0x8] sm:$0xff]
        %v4326 = vld [vmem:[%s9 + $0x10] sm:$0xff]
        %v4327 = vld [vmem:[%s9 + $0x18] sm:$0xff]
        %v4328 = vld [vmem:[%s9 + $0x20] sm:$0xff]
        %v4329 = vld [vmem:[%s9 + $0x28] sm:$0xff]
        %v4330 = vld [vmem:[%s9 + $0x30] sm:$0xff]
        %v4331 = vld [vmem:[%s9 + $0x38] sm:$0xff]
        %v4332 = vld [vmem:[%s9 + $0x40] sm:$0xff]
        %v4333 = vld [vmem:[%s9 + $0x48] sm:$0xff]
        %v4334 = vld [vmem:[%s9 + $0x50] sm:$0xff]
        %v4335 = vld [vmem:[%s9 + $0x58] sm:$0xff]
        %v4336 = vld [vmem:[%s9 + $0x60] sm:$0xff]
        %v4337 = vld [vmem:[%s9 + $0x68] sm:$0xff]
        %v4338 = vld [vmem:[%s9 + $0x70] sm:$0xff]
        %v4339 = vld [vmem:[%s9 + $0x78] sm:$0xff]
        %v4340 = vld [vmem:[%s9 + $0x80] sm:$0xff]
        %v4341 = vld [vmem:[%s9 + $0x88] sm:$0xff]
        %v4342 = vld [vmem:[%s9 + $0x90] sm:$0xff]
        %v4343 = vld [vmem:[%s9 + $0x98] sm:$0xff]
        %v4344 = vld [vmem:[%s9 + $0xa0] sm:$0xff]
        %v4345 = vld [vmem:[%s9 + $0xa8] sm:$0xff]
        %v4346 = vld [vmem:[%s9 + $0xb0] sm:$0xff]
        %v4347 = vld [vmem:[%s9 + $0xb8] sm:$0xff]
        %v4348 = vld [vmem:[%s9 + $0xc0] sm:$0xff]
        %v4349 = vld [vmem:[%s9 + $0xc8] sm:$0xff]
        %v4350 = vld [vmem:[%s9 + $0xd0] sm:$0xff]
        %v4351 = vld [vmem:[%s9 + $0xd8] sm:$0xff]
        %v4352 = vld [vmem:[%s9 + $0xe0] sm:$0xff]
        %v4353 = vld [vmem:[%s9 + $0xe8] sm:$0xff]
        %v4354 = vld [vmem:[%s9 + $0xf0] sm:$0xff]
        %v4355 = vld [vmem:[%s9 + $0xf8] sm:$0xff]
        %v4356 = vmul.f32 %v4324, %v806
        %v4357 = vmul.f32 %v4325, %v807
        %v4358 = vmul.f32 %v4326, %v808
        %v4359 = vmul.f32 %v4327, %v809
        %v4360 = vmul.f32 %v4328, %v810
        %v4361 = vmul.f32 %v4329, %v811
        %v4362 = vmul.f32 %v4330, %v812
        %v4363 = vmul.f32 %v4331, %v813
        %v4364 = vmul.f32 %v4332, %v814
        %v4365 = vmul.f32 %v4333, %v815
        %v4366 = vmul.f32 %v4334, %v816
        %v4367 = vmul.f32 %v4335, %v817
        %v4368 = vmul.f32 %v4336, %v818
        %v4369 = vmul.f32 %v4337, %v819
        %v4370 = vmul.f32 %v4338, %v820
        %v4371 = vmul.f32 %v4339, %v821
        %v4372 = vmul.f32 %v4340, %v822
        %v4373 = vmul.f32 %v4341, %v823
        %v4374 = vmul.f32 %v4342, %v824
        %v4375 = vmul.f32 %v4343, %v825
        %v4376 = vmul.f32 %v4344, %v826
        %v4377 = vmul.f32 %v4345, %v827
        %v4378 = vmul.f32 %v4346, %v828
        %v4379 = vmul.f32 %v4347, %v829
        %v4380 = vmul.f32 %v4348, %v830
        %v4381 = vmul.f32 %v4349, %v831
        %v4382 = vmul.f32 %v4350, %v832
        %v4383 = vmul.f32 %v4351, %v833
        %v4384 = vmul.f32 %v4352, %v834
        %v4385 = vmul.f32 %v4353, %v835
        %v4386 = vmul.f32 %v4354, %v836
        %v4387 = vmul.f32 %v4355, %v837
        %v4388 = vadd.f32 %v4260, %v4356
        %v4389 = vadd.f32 %v4261, %v4357
        %v4390 = vadd.f32 %v4262, %v4358
        %v4391 = vadd.f32 %v4263, %v4359
        %v4392 = vadd.f32 %v4264, %v4360
        %v4393 = vadd.f32 %v4265, %v4361
        %v4394 = vadd.f32 %v4266, %v4362
        %v4395 = vadd.f32 %v4267, %v4363
        %v4396 = vadd.f32 %v4268, %v4364
        %v4397 = vadd.f32 %v4269, %v4365
        %v4398 = vadd.f32 %v4270, %v4366
        %v4399 = vadd.f32 %v4271, %v4367
        %v4400 = vadd.f32 %v4272, %v4368
        %v4401 = vadd.f32 %v4273, %v4369
        %v4402 = vadd.f32 %v4274, %v4370
        %v4403 = vadd.f32 %v4275, %v4371
        %v4404 = vadd.f32 %v4276, %v4372
        %v4405 = vadd.f32 %v4277, %v4373
        %v4406 = vadd.f32 %v4278, %v4374
        %v4407 = vadd.f32 %v4279, %v4375
        %v4408 = vadd.f32 %v4280, %v4376
        %v4409 = vadd.f32 %v4281, %v4377
        %v4410 = vadd.f32 %v4282, %v4378
        %v4411 = vadd.f32 %v4283, %v4379
        %v4412 = vadd.f32 %v4284, %v4380
        %v4413 = vadd.f32 %v4285, %v4381
        %v4414 = vadd.f32 %v4286, %v4382
        %v4415 = vadd.f32 %v4287, %v4383
        %v4416 = vadd.f32 %v4288, %v4384
        %v4417 = vadd.f32 %v4289, %v4385
        %v4418 = vadd.f32 %v4290, %v4386
        %v4419 = vadd.f32 %v4291, %v4387
        %v4420 = vsub.f32 0.0, %v4388
        %v4421 = vsub.f32 0.0, %v4389
        %v4422 = vsub.f32 0.0, %v4390
        %v4423 = vsub.f32 0.0, %v4391
        %v4424 = vsub.f32 0.0, %v4392
        %v4425 = vsub.f32 0.0, %v4393
        %v4426 = vsub.f32 0.0, %v4394
        %v4427 = vsub.f32 0.0, %v4395
        %v4428 = vsub.f32 0.0, %v4396
        %v4429 = vsub.f32 0.0, %v4397
        %v4430 = vsub.f32 0.0, %v4398
        %v4431 = vsub.f32 0.0, %v4399
        %v4432 = vsub.f32 0.0, %v4400
        %v4433 = vsub.f32 0.0, %v4401
        %v4434 = vsub.f32 0.0, %v4402
        %v4435 = vsub.f32 0.0, %v4403
        %v4436 = vsub.f32 0.0, %v4404
        %v4437 = vsub.f32 0.0, %v4405
        %v4438 = vsub.f32 0.0, %v4406
        %v4439 = vsub.f32 0.0, %v4407
        %v4440 = vsub.f32 0.0, %v4408
        %v4441 = vsub.f32 0.0, %v4409
        %v4442 = vsub.f32 0.0, %v4410
        %v4443 = vsub.f32 0.0, %v4411
        %v4444 = vsub.f32 0.0, %v4412
        %v4445 = vsub.f32 0.0, %v4413
        %v4446 = vsub.f32 0.0, %v4414
        %v4447 = vsub.f32 0.0, %v4415
        %v4448 = vsub.f32 0.0, %v4416
        %v4449 = vsub.f32 0.0, %v4417
        %v4450 = vsub.f32 0.0, %v4418
        %v4451 = vsub.f32 0.0, %v4419
        %v4452 = vmul.f32 %v4420, 1.442695
        %v4453 = vpow.pop %v4452
        %v4454 = vmul.f32 %v4421, 1.442695
        %v4455 = vpow.pop %v4454
        %v4456 = vmul.f32 %v4422, 1.442695
        %v4457 = vpow.pop %v4456
        %v4458 = vmul.f32 %v4423, 1.442695
        %v4459 = vpow.pop %v4458
        %v4460 = vmul.f32 %v4424, 1.442695
        %v4461 = vpow.pop %v4460
        %v4462 = vmul.f32 %v4425, 1.442695
        %v4463 = vpow.pop %v4462
        %v4464 = vmul.f32 %v4426, 1.442695
        %v4465 = vpow.pop %v4464
        %v4466 = vmul.f32 %v4427, 1.442695
        %v4467 = vpow.pop %v4466
        %v4468 = vmul.f32 %v4428, 1.442695
        %v4469 = vpow.pop %v4468
        %v4470 = vmul.f32 %v4429, 1.442695
        %v4471 = vpow.pop %v4470
        %v4472 = vmul.f32 %v4430, 1.442695
        %v4473 = vpow.pop %v4472
        %v4474 = vmul.f32 %v4431, 1.442695
        %v4475 = vpow.pop %v4474
        %v4476 = vmul.f32 %v4432, 1.442695
        %v4477 = vpow.pop %v4476
        %v4478 = vmul.f32 %v4433, 1.442695
        %v4479 = vpow.pop %v4478
        %v4480 = vmul.f32 %v4434, 1.442695
        %v4481 = vpow.pop %v4480
        %v4482 = vmul.f32 %v4435, 1.442695
        %v4483 = vpow.pop %v4482
        %v4484 = vmul.f32 %v4436, 1.442695
        %v4485 = vpow.pop %v4484
        %v4486 = vmul.f32 %v4437, 1.442695
        %v4487 = vpow.pop %v4486
        %v4488 = vmul.f32 %v4438, 1.442695
        %v4489 = vpow.pop %v4488
        %v4490 = vmul.f32 %v4439, 1.442695
        %v4491 = vpow.pop %v4490
        %v4492 = vmul.f32 %v4440, 1.442695
        %v4493 = vpow.pop %v4492
        %v4494 = vmul.f32 %v4441, 1.442695
        %v4495 = vpow.pop %v4494
        %v4496 = vmul.f32 %v4442, 1.442695
        %v4497 = vpow.pop %v4496
        %v4498 = vmul.f32 %v4443, 1.442695
        %v4499 = vpow.pop %v4498
        %v4500 = vmul.f32 %v4444, 1.442695
        %v4501 = vpow.pop %v4500
        %v4502 = vmul.f32 %v4445, 1.442695
        %v4503 = vpow.pop %v4502
        %v4504 = vmul.f32 %v4446, 1.442695
        %v4505 = vpow.pop %v4504
        %v4506 = vmul.f32 %v4447, 1.442695
        %v4507 = vpow.pop %v4506
        %v4508 = vmul.f32 %v4448, 1.442695
        %v4509 = vpow.pop %v4508
        %v4510 = vmul.f32 %v4449, 1.442695
        %v4511 = vpow.pop %v4510
        %v4512 = vmul.f32 %v4450, 1.442695
        %v4513 = vpow.pop %v4512
        %v4514 = vmul.f32 %v4451, 1.442695
        %v4515 = vpow.pop %v4514
        %v4516 = vadd.f32 %v4453, 1.0
        %v4517 = vadd.f32 %v4455, 1.0
        %v4518 = vadd.f32 %v4457, 1.0
        %v4519 = vadd.f32 %v4459, 1.0
        %v4520 = vadd.f32 %v4461, 1.0
        %v4521 = vadd.f32 %v4463, 1.0
        %v4522 = vadd.f32 %v4465, 1.0
        %v4523 = vadd.f32 %v4467, 1.0
        %v4524 = vadd.f32 %v4469, 1.0
        %v4525 = vadd.f32 %v4471, 1.0
        %v4526 = vadd.f32 %v4473, 1.0
        %v4527 = vadd.f32 %v4475, 1.0
        %v4528 = vadd.f32 %v4477, 1.0
        %v4529 = vadd.f32 %v4479, 1.0
        %v4530 = vadd.f32 %v4481, 1.0
        %v4531 = vadd.f32 %v4483, 1.0
        %v4532 = vadd.f32 %v4485, 1.0
        %v4533 = vadd.f32 %v4487, 1.0
        %v4534 = vadd.f32 %v4489, 1.0
        %v4535 = vadd.f32 %v4491, 1.0
        %v4536 = vadd.f32 %v4493, 1.0
        %v4537 = vadd.f32 %v4495, 1.0
        %v4538 = vadd.f32 %v4497, 1.0
        %v4539 = vadd.f32 %v4499, 1.0
        %v4540 = vadd.f32 %v4501, 1.0
        %v4541 = vadd.f32 %v4503, 1.0
        %v4542 = vadd.f32 %v4505, 1.0
        %v4543 = vadd.f32 %v4507, 1.0
        %v4544 = vadd.f32 %v4509, 1.0
        %v4545 = vadd.f32 %v4511, 1.0
        %v4546 = vadd.f32 %v4513, 1.0
        %v4547 = vadd.f32 %v4515, 1.0
        %v4548 = vrcp.pop %v4516
        %v4549 = vrcp.pop %v4517
        %v4550 = vrcp.pop %v4518
        %v4551 = vrcp.pop %v4519
        %v4552 = vrcp.pop %v4520
        %v4553 = vrcp.pop %v4521
        %v4554 = vrcp.pop %v4522
        %v4555 = vrcp.pop %v4523
        %v4556 = vrcp.pop %v4524
        %v4557 = vrcp.pop %v4525
        %v4558 = vrcp.pop %v4526
        %v4559 = vrcp.pop %v4527
        %v4560 = vrcp.pop %v4528
        %v4561 = vrcp.pop %v4529
        %v4562 = vrcp.pop %v4530
        %v4563 = vrcp.pop %v4531
        %v4564 = vrcp.pop %v4532
        %v4565 = vrcp.pop %v4533
        %v4566 = vrcp.pop %v4534
        %v4567 = vrcp.pop %v4535
        %v4568 = vrcp.pop %v4536
        %v4569 = vrcp.pop %v4537
        %v4570 = vrcp.pop %v4538
        %v4571 = vrcp.pop %v4539
        %v4572 = vrcp.pop %v4540
        %v4573 = vrcp.pop %v4541
        %v4574 = vrcp.pop %v4542
        %v4575 = vrcp.pop %v4543
        %v4576 = vrcp.pop %v4544
        %v4577 = vrcp.pop %v4545
        %v4578 = vrcp.pop %v4546
        %v4579 = vrcp.pop %v4547
        %v4580 = vld [vmem:[%s10] sm:$0xff]
        %v4581 = vld [vmem:[%s10 + $0x8] sm:$0xff]
        %v4582 = vld [vmem:[%s10 + $0x10] sm:$0xff]
        %v4583 = vld [vmem:[%s10 + $0x18] sm:$0xff]
        %v4584 = vld [vmem:[%s10 + $0x20] sm:$0xff]
        %v4585 = vld [vmem:[%s10 + $0x28] sm:$0xff]
        %v4586 = vld [vmem:[%s10 + $0x30] sm:$0xff]
        %v4587 = vld [vmem:[%s10 + $0x38] sm:$0xff]
        %v4588 = vld [vmem:[%s10 + $0x40] sm:$0xff]
        %v4589 = vld [vmem:[%s10 + $0x48] sm:$0xff]
        %v4590 = vld [vmem:[%s10 + $0x50] sm:$0xff]
        %v4591 = vld [vmem:[%s10 + $0x58] sm:$0xff]
        %v4592 = vld [vmem:[%s10 + $0x60] sm:$0xff]
        %v4593 = vld [vmem:[%s10 + $0x68] sm:$0xff]
        %v4594 = vld [vmem:[%s10 + $0x70] sm:$0xff]
        %v4595 = vld [vmem:[%s10 + $0x78] sm:$0xff]
        %v4596 = vld [vmem:[%s10 + $0x80] sm:$0xff]
        %v4597 = vld [vmem:[%s10 + $0x88] sm:$0xff]
        %v4598 = vld [vmem:[%s10 + $0x90] sm:$0xff]
        %v4599 = vld [vmem:[%s10 + $0x98] sm:$0xff]
        %v4600 = vld [vmem:[%s10 + $0xa0] sm:$0xff]
        %v4601 = vld [vmem:[%s10 + $0xa8] sm:$0xff]
        %v4602 = vld [vmem:[%s10 + $0xb0] sm:$0xff]
        %v4603 = vld [vmem:[%s10 + $0xb8] sm:$0xff]
        %v4604 = vld [vmem:[%s10 + $0xc0] sm:$0xff]
        %v4605 = vld [vmem:[%s10 + $0xc8] sm:$0xff]
        %v4606 = vld [vmem:[%s10 + $0xd0] sm:$0xff]
        %v4607 = vld [vmem:[%s10 + $0xd8] sm:$0xff]
        %v4608 = vld [vmem:[%s10 + $0xe0] sm:$0xff]
        %v4609 = vld [vmem:[%s10 + $0xe8] sm:$0xff]
        %v4610 = vld [vmem:[%s10 + $0xf0] sm:$0xff]
        %v4611 = vld [vmem:[%s10 + $0xf8] sm:$0xff]
        %v4612 = vmul.f32 %v4580, %v806
        %v4613 = vmul.f32 %v4581, %v807
        %v4614 = vmul.f32 %v4582, %v808
        %v4615 = vmul.f32 %v4583, %v809
        %v4616 = vmul.f32 %v4584, %v810
        %v4617 = vmul.f32 %v4585, %v811
        %v4618 = vmul.f32 %v4586, %v812
        %v4619 = vmul.f32 %v4587, %v813
        %v4620 = vmul.f32 %v4588, %v814
        %v4621 = vmul.f32 %v4589, %v815
        %v4622 = vmul.f32 %v4590, %v816
        %v4623 = vmul.f32 %v4591, %v817
        %v4624 = vmul.f32 %v4592, %v818
        %v4625 = vmul.f32 %v4593, %v819
        %v4626 = vmul.f32 %v4594, %v820
        %v4627 = vmul.f32 %v4595, %v821
        %v4628 = vmul.f32 %v4596, %v822
        %v4629 = vmul.f32 %v4597, %v823
        %v4630 = vmul.f32 %v4598, %v824
        %v4631 = vmul.f32 %v4599, %v825
        %v4632 = vmul.f32 %v4600, %v826
        %v4633 = vmul.f32 %v4601, %v827
        %v4634 = vmul.f32 %v4602, %v828
        %v4635 = vmul.f32 %v4603, %v829
        %v4636 = vmul.f32 %v4604, %v830
        %v4637 = vmul.f32 %v4605, %v831
        %v4638 = vmul.f32 %v4606, %v832
        %v4639 = vmul.f32 %v4607, %v833
        %v4640 = vmul.f32 %v4608, %v834
        %v4641 = vmul.f32 %v4609, %v835
        %v4642 = vmul.f32 %v4610, %v836
        %v4643 = vmul.f32 %v4611, %v837
        %4676 = vrot.lane.b32.xlu0 %v4612, 32
        %v4677 = vpop.permute.xlu0 %4676
        %4678 = vrot.lane.b32.xlu0 %v4613, 32
        %v4679 = vpop.permute.xlu0 %4678
        %4680 = vrot.lane.b32.xlu0 %v4614, 32
        %v4681 = vpop.permute.xlu0 %4680
        %4682 = vrot.lane.b32.xlu0 %v4615, 32
        %v4683 = vpop.permute.xlu0 %4682
        %4684 = vrot.lane.b32.xlu0 %v4616, 32
        %v4685 = vpop.permute.xlu0 %4684
        %4686 = vrot.lane.b32.xlu0 %v4617, 32
        %v4687 = vpop.permute.xlu0 %4686
        %4688 = vrot.lane.b32.xlu0 %v4618, 32
        %v4689 = vpop.permute.xlu0 %4688
        %4690 = vrot.lane.b32.xlu0 %v4619, 32
        %v4691 = vpop.permute.xlu0 %4690
        %4692 = vrot.lane.b32.xlu0 %v4620, 32
        %v4693 = vpop.permute.xlu0 %4692
        %4694 = vrot.lane.b32.xlu0 %v4621, 32
        %v4695 = vpop.permute.xlu0 %4694
        %4696 = vrot.lane.b32.xlu0 %v4622, 32
        %v4697 = vpop.permute.xlu0 %4696
        %4698 = vrot.lane.b32.xlu0 %v4623, 32
        %v4699 = vpop.permute.xlu0 %4698
        %4700 = vrot.lane.b32.xlu0 %v4624, 32
        %v4701 = vpop.permute.xlu0 %4700
        %4702 = vrot.lane.b32.xlu0 %v4625, 32
        %v4703 = vpop.permute.xlu0 %4702
        %4704 = vrot.lane.b32.xlu0 %v4626, 32
        %v4705 = vpop.permute.xlu0 %4704
        %4706 = vrot.lane.b32.xlu0 %v4627, 32
        %v4707 = vpop.permute.xlu0 %4706
        %4708 = vrot.lane.b32.xlu0 %v4628, 32
        %v4709 = vpop.permute.xlu0 %4708
        %4710 = vrot.lane.b32.xlu0 %v4629, 32
        %v4711 = vpop.permute.xlu0 %4710
        %4712 = vrot.lane.b32.xlu0 %v4630, 32
        %v4713 = vpop.permute.xlu0 %4712
        %4714 = vrot.lane.b32.xlu0 %v4631, 32
        %v4715 = vpop.permute.xlu0 %4714
        %4716 = vrot.lane.b32.xlu0 %v4632, 32
        %v4717 = vpop.permute.xlu0 %4716
        %4718 = vrot.lane.b32.xlu0 %v4633, 32
        %v4719 = vpop.permute.xlu0 %4718
        %4720 = vrot.lane.b32.xlu0 %v4634, 32
        %v4721 = vpop.permute.xlu0 %4720
        %4722 = vrot.lane.b32.xlu0 %v4635, 32
        %v4723 = vpop.permute.xlu0 %4722
        %4724 = vrot.lane.b32.xlu0 %v4636, 32
        %v4725 = vpop.permute.xlu0 %4724
        %4726 = vrot.lane.b32.xlu0 %v4637, 32
        %v4727 = vpop.permute.xlu0 %4726
        %4728 = vrot.lane.b32.xlu0 %v4638, 32
        %v4729 = vpop.permute.xlu0 %4728
        %4730 = vrot.lane.b32.xlu0 %v4639, 32
        %v4731 = vpop.permute.xlu0 %4730
        %4732 = vrot.lane.b32.xlu0 %v4640, 32
        %v4733 = vpop.permute.xlu0 %4732
        %4734 = vrot.lane.b32.xlu0 %v4641, 32
        %v4735 = vpop.permute.xlu0 %4734
        %4736 = vrot.lane.b32.xlu0 %v4642, 32
        %v4737 = vpop.permute.xlu0 %4736
        %4738 = vrot.lane.b32.xlu0 %v4643, 32
        %v4739 = vpop.permute.xlu0 %4738
        %v4772 = vadd.f32 %v4260, %v4677
        %v4773 = vadd.f32 %v4261, %v4679
        %v4774 = vadd.f32 %v4262, %v4681
        %v4775 = vadd.f32 %v4263, %v4683
        %v4776 = vadd.f32 %v4264, %v4685
        %v4777 = vadd.f32 %v4265, %v4687
        %v4778 = vadd.f32 %v4266, %v4689
        %v4779 = vadd.f32 %v4267, %v4691
        %v4780 = vadd.f32 %v4268, %v4693
        %v4781 = vadd.f32 %v4269, %v4695
        %v4782 = vadd.f32 %v4270, %v4697
        %v4783 = vadd.f32 %v4271, %v4699
        %v4784 = vadd.f32 %v4272, %v4701
        %v4785 = vadd.f32 %v4273, %v4703
        %v4786 = vadd.f32 %v4274, %v4705
        %v4787 = vadd.f32 %v4275, %v4707
        %v4788 = vadd.f32 %v4276, %v4709
        %v4789 = vadd.f32 %v4277, %v4711
        %v4790 = vadd.f32 %v4278, %v4713
        %v4791 = vadd.f32 %v4279, %v4715
        %v4792 = vadd.f32 %v4280, %v4717
        %v4793 = vadd.f32 %v4281, %v4719
        %v4794 = vadd.f32 %v4282, %v4721
        %v4795 = vadd.f32 %v4283, %v4723
        %v4796 = vadd.f32 %v4284, %v4725
        %v4797 = vadd.f32 %v4285, %v4727
        %v4798 = vadd.f32 %v4286, %v4729
        %v4799 = vadd.f32 %v4287, %v4731
        %v4800 = vadd.f32 %v4288, %v4733
        %v4801 = vadd.f32 %v4289, %v4735
        %v4802 = vadd.f32 %v4290, %v4737
        %v4803 = vadd.f32 %v4291, %v4739
        %v4804 = vsub.f32 0.0, %v4772
        %v4805 = vsub.f32 0.0, %v4773
        %v4806 = vsub.f32 0.0, %v4774
        %v4807 = vsub.f32 0.0, %v4775
        %v4808 = vsub.f32 0.0, %v4776
        %v4809 = vsub.f32 0.0, %v4777
        %v4810 = vsub.f32 0.0, %v4778
        %v4811 = vsub.f32 0.0, %v4779
        %v4812 = vsub.f32 0.0, %v4780
        %v4813 = vsub.f32 0.0, %v4781
        %v4814 = vsub.f32 0.0, %v4782
        %v4815 = vsub.f32 0.0, %v4783
        %v4816 = vsub.f32 0.0, %v4784
        %v4817 = vsub.f32 0.0, %v4785
        %v4818 = vsub.f32 0.0, %v4786
        %v4819 = vsub.f32 0.0, %v4787
        %v4820 = vsub.f32 0.0, %v4788
        %v4821 = vsub.f32 0.0, %v4789
        %v4822 = vsub.f32 0.0, %v4790
        %v4823 = vsub.f32 0.0, %v4791
        %v4824 = vsub.f32 0.0, %v4792
        %v4825 = vsub.f32 0.0, %v4793
        %v4826 = vsub.f32 0.0, %v4794
        %v4827 = vsub.f32 0.0, %v4795
        %v4828 = vsub.f32 0.0, %v4796
        %v4829 = vsub.f32 0.0, %v4797
        %v4830 = vsub.f32 0.0, %v4798
        %v4831 = vsub.f32 0.0, %v4799
        %v4832 = vsub.f32 0.0, %v4800
        %v4833 = vsub.f32 0.0, %v4801
        %v4834 = vsub.f32 0.0, %v4802
        %v4835 = vsub.f32 0.0, %v4803
        %v4836 = vmul.f32 %v4804, 1.442695
        %v4837 = vpow.pop %v4836
        %v4838 = vmul.f32 %v4805, 1.442695
        %v4839 = vpow.pop %v4838
        %v4840 = vmul.f32 %v4806, 1.442695
        %v4841 = vpow.pop %v4840
        %v4842 = vmul.f32 %v4807, 1.442695
        %v4843 = vpow.pop %v4842
        %v4844 = vmul.f32 %v4808, 1.442695
        %v4845 = vpow.pop %v4844
        %v4846 = vmul.f32 %v4809, 1.442695
        %v4847 = vpow.pop %v4846
        %v4848 = vmul.f32 %v4810, 1.442695
        %v4849 = vpow.pop %v4848
        %v4850 = vmul.f32 %v4811, 1.442695
        %v4851 = vpow.pop %v4850
        %v4852 = vmul.f32 %v4812, 1.442695
        %v4853 = vpow.pop %v4852
        %v4854 = vmul.f32 %v4813, 1.442695
        %v4855 = vpow.pop %v4854
        %v4856 = vmul.f32 %v4814, 1.442695
        %v4857 = vpow.pop %v4856
        %v4858 = vmul.f32 %v4815, 1.442695
        %v4859 = vpow.pop %v4858
        %v4860 = vmul.f32 %v4816, 1.442695
        %v4861 = vpow.pop %v4860
        %v4862 = vmul.f32 %v4817, 1.442695
        %v4863 = vpow.pop %v4862
        %v4864 = vmul.f32 %v4818, 1.442695
        %v4865 = vpow.pop %v4864
        %v4866 = vmul.f32 %v4819, 1.442695
        %v4867 = vpow.pop %v4866
        %v4868 = vmul.f32 %v4820, 1.442695
        %v4869 = vpow.pop %v4868
        %v4870 = vmul.f32 %v4821, 1.442695
        %v4871 = vpow.pop %v4870
        %v4872 = vmul.f32 %v4822, 1.442695
        %v4873 = vpow.pop %v4872
        %v4874 = vmul.f32 %v4823, 1.442695
        %v4875 = vpow.pop %v4874
        %v4876 = vmul.f32 %v4824, 1.442695
        %v4877 = vpow.pop %v4876
        %v4878 = vmul.f32 %v4825, 1.442695
        %v4879 = vpow.pop %v4878
        %v4880 = vmul.f32 %v4826, 1.442695
        %v4881 = vpow.pop %v4880
        %v4882 = vmul.f32 %v4827, 1.442695
        %v4883 = vpow.pop %v4882
        %v4884 = vmul.f32 %v4828, 1.442695
        %v4885 = vpow.pop %v4884
        %v4886 = vmul.f32 %v4829, 1.442695
        %v4887 = vpow.pop %v4886
        %v4888 = vmul.f32 %v4830, 1.442695
        %v4889 = vpow.pop %v4888
        %v4890 = vmul.f32 %v4831, 1.442695
        %v4891 = vpow.pop %v4890
        %v4892 = vmul.f32 %v4832, 1.442695
        %v4893 = vpow.pop %v4892
        %v4894 = vmul.f32 %v4833, 1.442695
        %v4895 = vpow.pop %v4894
        %v4896 = vmul.f32 %v4834, 1.442695
        %v4897 = vpow.pop %v4896
        %v4898 = vmul.f32 %v4835, 1.442695
        %v4899 = vpow.pop %v4898
        %v4900 = vadd.f32 %v4837, 1.0
        %v4901 = vadd.f32 %v4839, 1.0
        %v4902 = vadd.f32 %v4841, 1.0
        %v4903 = vadd.f32 %v4843, 1.0
        %v4904 = vadd.f32 %v4845, 1.0
        %v4905 = vadd.f32 %v4847, 1.0
        %v4906 = vadd.f32 %v4849, 1.0
        %v4907 = vadd.f32 %v4851, 1.0
        %v4908 = vadd.f32 %v4853, 1.0
        %v4909 = vadd.f32 %v4855, 1.0
        %v4910 = vadd.f32 %v4857, 1.0
        %v4911 = vadd.f32 %v4859, 1.0
        %v4912 = vadd.f32 %v4861, 1.0
        %v4913 = vadd.f32 %v4863, 1.0
        %v4914 = vadd.f32 %v4865, 1.0
        %v4915 = vadd.f32 %v4867, 1.0
        %v4916 = vadd.f32 %v4869, 1.0
        %v4917 = vadd.f32 %v4871, 1.0
        %v4918 = vadd.f32 %v4873, 1.0
        %v4919 = vadd.f32 %v4875, 1.0
        %v4920 = vadd.f32 %v4877, 1.0
        %v4921 = vadd.f32 %v4879, 1.0
        %v4922 = vadd.f32 %v4881, 1.0
        %v4923 = vadd.f32 %v4883, 1.0
        %v4924 = vadd.f32 %v4885, 1.0
        %v4925 = vadd.f32 %v4887, 1.0
        %v4926 = vadd.f32 %v4889, 1.0
        %v4927 = vadd.f32 %v4891, 1.0
        %v4928 = vadd.f32 %v4893, 1.0
        %v4929 = vadd.f32 %v4895, 1.0
        %v4930 = vadd.f32 %v4897, 1.0
        %v4931 = vadd.f32 %v4899, 1.0
        %v4932 = vrcp.pop %v4900
        %v4933 = vrcp.pop %v4901
        %v4934 = vrcp.pop %v4902
        %v4935 = vrcp.pop %v4903
        %v4936 = vrcp.pop %v4904
        %v4937 = vrcp.pop %v4905
        %v4938 = vrcp.pop %v4906
        %v4939 = vrcp.pop %v4907
        %v4940 = vrcp.pop %v4908
        %v4941 = vrcp.pop %v4909
        %v4942 = vrcp.pop %v4910
        %v4943 = vrcp.pop %v4911
        %v4944 = vrcp.pop %v4912
        %v4945 = vrcp.pop %v4913
        %v4946 = vrcp.pop %v4914
        %v4947 = vrcp.pop %v4915
        %v4948 = vrcp.pop %v4916
        %v4949 = vrcp.pop %v4917
        %v4950 = vrcp.pop %v4918
        %v4951 = vrcp.pop %v4919
        %v4952 = vrcp.pop %v4920
        %v4953 = vrcp.pop %v4921
        %v4954 = vrcp.pop %v4922
        %v4955 = vrcp.pop %v4923
        %v4956 = vrcp.pop %v4924
        %v4957 = vrcp.pop %v4925
        %v4958 = vrcp.pop %v4926
        %v4959 = vrcp.pop %v4927
        %v4960 = vrcp.pop %v4928
        %v4961 = vrcp.pop %v4929
        %v4962 = vrcp.pop %v4930
        %v4963 = vrcp.pop %v4931
        %v4964 = vld [vmem:[%s11] sm:$0xff]
        %v4965 = vld [vmem:[%s11 + $0x8] sm:$0xff]
        %v4966 = vld [vmem:[%s11 + $0x10] sm:$0xff]
        %v4967 = vld [vmem:[%s11 + $0x18] sm:$0xff]
        %v4968 = vld [vmem:[%s11 + $0x20] sm:$0xff]
        %v4969 = vld [vmem:[%s11 + $0x28] sm:$0xff]
        %v4970 = vld [vmem:[%s11 + $0x30] sm:$0xff]
        %v4971 = vld [vmem:[%s11 + $0x38] sm:$0xff]
        %v4972 = vld [vmem:[%s11 + $0x40] sm:$0xff]
        %v4973 = vld [vmem:[%s11 + $0x48] sm:$0xff]
        %v4974 = vld [vmem:[%s11 + $0x50] sm:$0xff]
        %v4975 = vld [vmem:[%s11 + $0x58] sm:$0xff]
        %v4976 = vld [vmem:[%s11 + $0x60] sm:$0xff]
        %v4977 = vld [vmem:[%s11 + $0x68] sm:$0xff]
        %v4978 = vld [vmem:[%s11 + $0x70] sm:$0xff]
        %v4979 = vld [vmem:[%s11 + $0x78] sm:$0xff]
        %v4980 = vld [vmem:[%s11 + $0x80] sm:$0xff]
        %v4981 = vld [vmem:[%s11 + $0x88] sm:$0xff]
        %v4982 = vld [vmem:[%s11 + $0x90] sm:$0xff]
        %v4983 = vld [vmem:[%s11 + $0x98] sm:$0xff]
        %v4984 = vld [vmem:[%s11 + $0xa0] sm:$0xff]
        %v4985 = vld [vmem:[%s11 + $0xa8] sm:$0xff]
        %v4986 = vld [vmem:[%s11 + $0xb0] sm:$0xff]
        %v4987 = vld [vmem:[%s11 + $0xb8] sm:$0xff]
        %v4988 = vld [vmem:[%s11 + $0xc0] sm:$0xff]
        %v4989 = vld [vmem:[%s11 + $0xc8] sm:$0xff]
        %v4990 = vld [vmem:[%s11 + $0xd0] sm:$0xff]
        %v4991 = vld [vmem:[%s11 + $0xd8] sm:$0xff]
        %v4992 = vld [vmem:[%s11 + $0xe0] sm:$0xff]
        %v4993 = vld [vmem:[%s11 + $0xe8] sm:$0xff]
        %v4994 = vld [vmem:[%s11 + $0xf0] sm:$0xff]
        %v4995 = vld [vmem:[%s11 + $0xf8] sm:$0xff]
        %5028 = vrot.lane.b32.xlu0 %v4292, 64
        %v5029 = vpop.permute.xlu0 %5028
        %5030 = vrot.lane.b32.xlu0 %v4293, 64
        %v5031 = vpop.permute.xlu0 %5030
        %5032 = vrot.lane.b32.xlu0 %v4294, 64
        %v5033 = vpop.permute.xlu0 %5032
        %5034 = vrot.lane.b32.xlu0 %v4295, 64
        %v5035 = vpop.permute.xlu0 %5034
        %5036 = vrot.lane.b32.xlu0 %v4296, 64
        %v5037 = vpop.permute.xlu0 %5036
        %5038 = vrot.lane.b32.xlu0 %v4297, 64
        %v5039 = vpop.permute.xlu0 %5038
        %5040 = vrot.lane.b32.xlu0 %v4298, 64
        %v5041 = vpop.permute.xlu0 %5040
        %5042 = vrot.lane.b32.xlu0 %v4299, 64
        %v5043 = vpop.permute.xlu0 %5042
        %5044 = vrot.lane.b32.xlu0 %v4300, 64
        %v5045 = vpop.permute.xlu0 %5044
        %5046 = vrot.lane.b32.xlu0 %v4301, 64
        %v5047 = vpop.permute.xlu0 %5046
        %5048 = vrot.lane.b32.xlu0 %v4302, 64
        %v5049 = vpop.permute.xlu0 %5048
        %5050 = vrot.lane.b32.xlu0 %v4303, 64
        %v5051 = vpop.permute.xlu0 %5050
        %5052 = vrot.lane.b32.xlu0 %v4304, 64
        %v5053 = vpop.permute.xlu0 %5052
        %5054 = vrot.lane.b32.xlu0 %v4305, 64
        %v5055 = vpop.permute.xlu0 %5054
        %5056 = vrot.lane.b32.xlu0 %v4306, 64
        %v5057 = vpop.permute.xlu0 %5056
        %5058 = vrot.lane.b32.xlu0 %v4307, 64
        %v5059 = vpop.permute.xlu0 %5058
        %5060 = vrot.lane.b32.xlu0 %v4308, 64
        %v5061 = vpop.permute.xlu0 %5060
        %5062 = vrot.lane.b32.xlu0 %v4309, 64
        %v5063 = vpop.permute.xlu0 %5062
        %5064 = vrot.lane.b32.xlu0 %v4310, 64
        %v5065 = vpop.permute.xlu0 %5064
        %5066 = vrot.lane.b32.xlu0 %v4311, 64
        %v5067 = vpop.permute.xlu0 %5066
        %5068 = vrot.lane.b32.xlu0 %v4312, 64
        %v5069 = vpop.permute.xlu0 %5068
        %5070 = vrot.lane.b32.xlu0 %v4313, 64
        %v5071 = vpop.permute.xlu0 %5070
        %5072 = vrot.lane.b32.xlu0 %v4314, 64
        %v5073 = vpop.permute.xlu0 %5072
        %5074 = vrot.lane.b32.xlu0 %v4315, 64
        %v5075 = vpop.permute.xlu0 %5074
        %5076 = vrot.lane.b32.xlu0 %v4316, 64
        %v5077 = vpop.permute.xlu0 %5076
        %5078 = vrot.lane.b32.xlu0 %v4317, 64
        %v5079 = vpop.permute.xlu0 %5078
        %5080 = vrot.lane.b32.xlu0 %v4318, 64
        %v5081 = vpop.permute.xlu0 %5080
        %5082 = vrot.lane.b32.xlu0 %v4319, 64
        %v5083 = vpop.permute.xlu0 %5082
        %5084 = vrot.lane.b32.xlu0 %v4320, 64
        %v5085 = vpop.permute.xlu0 %5084
        %5086 = vrot.lane.b32.xlu0 %v4321, 64
        %v5087 = vpop.permute.xlu0 %5086
        %5088 = vrot.lane.b32.xlu0 %v4322, 64
        %v5089 = vpop.permute.xlu0 %5088
        %5090 = vrot.lane.b32.xlu0 %v4323, 64
        %v5091 = vpop.permute.xlu0 %5090
        %v5124 = vmul.f32 %v4964, %v5029
        %v5125 = vmul.f32 %v4965, %v5031
        %v5126 = vmul.f32 %v4966, %v5033
        %v5127 = vmul.f32 %v4967, %v5035
        %v5128 = vmul.f32 %v4968, %v5037
        %v5129 = vmul.f32 %v4969, %v5039
        %v5130 = vmul.f32 %v4970, %v5041
        %v5131 = vmul.f32 %v4971, %v5043
        %v5132 = vmul.f32 %v4972, %v5045
        %v5133 = vmul.f32 %v4973, %v5047
        %v5134 = vmul.f32 %v4974, %v5049
        %v5135 = vmul.f32 %v4975, %v5051
        %v5136 = vmul.f32 %v4976, %v5053
        %v5137 = vmul.f32 %v4977, %v5055
        %v5138 = vmul.f32 %v4978, %v5057
        %v5139 = vmul.f32 %v4979, %v5059
        %v5140 = vmul.f32 %v4980, %v5061
        %v5141 = vmul.f32 %v4981, %v5063
        %v5142 = vmul.f32 %v4982, %v5065
        %v5143 = vmul.f32 %v4983, %v5067
        %v5144 = vmul.f32 %v4984, %v5069
        %v5145 = vmul.f32 %v4985, %v5071
        %v5146 = vmul.f32 %v4986, %v5073
        %v5147 = vmul.f32 %v4987, %v5075
        %v5148 = vmul.f32 %v4988, %v5077
        %v5149 = vmul.f32 %v4989, %v5079
        %v5150 = vmul.f32 %v4990, %v5081
        %v5151 = vmul.f32 %v4991, %v5083
        %v5152 = vmul.f32 %v4992, %v5085
        %v5153 = vmul.f32 %v4993, %v5087
        %v5154 = vmul.f32 %v4994, %v5089
        %v5155 = vmul.f32 %v4995, %v5091
        %5188 = vrot.lane.b32.xlu0 %v5124, 96
        %v5189 = vpop.permute.xlu0 %5188
        %5190 = vrot.lane.b32.xlu0 %v5125, 96
        %v5191 = vpop.permute.xlu0 %5190
        %5192 = vrot.lane.b32.xlu0 %v5126, 96
        %v5193 = vpop.permute.xlu0 %5192
        %5194 = vrot.lane.b32.xlu0 %v5127, 96
        %v5195 = vpop.permute.xlu0 %5194
        %5196 = vrot.lane.b32.xlu0 %v5128, 96
        %v5197 = vpop.permute.xlu0 %5196
        %5198 = vrot.lane.b32.xlu0 %v5129, 96
        %v5199 = vpop.permute.xlu0 %5198
        %5200 = vrot.lane.b32.xlu0 %v5130, 96
        %v5201 = vpop.permute.xlu0 %5200
        %5202 = vrot.lane.b32.xlu0 %v5131, 96
        %v5203 = vpop.permute.xlu0 %5202
        %5204 = vrot.lane.b32.xlu0 %v5132, 96
        %v5205 = vpop.permute.xlu0 %5204
        %5206 = vrot.lane.b32.xlu0 %v5133, 96
        %v5207 = vpop.permute.xlu0 %5206
        %5208 = vrot.lane.b32.xlu0 %v5134, 96
        %v5209 = vpop.permute.xlu0 %5208
        %5210 = vrot.lane.b32.xlu0 %v5135, 96
        %v5211 = vpop.permute.xlu0 %5210
        %5212 = vrot.lane.b32.xlu0 %v5136, 96
        %v5213 = vpop.permute.xlu0 %5212
        %5214 = vrot.lane.b32.xlu0 %v5137, 96
        %v5215 = vpop.permute.xlu0 %5214
        %5216 = vrot.lane.b32.xlu0 %v5138, 96
        %v5217 = vpop.permute.xlu0 %5216
        %5218 = vrot.lane.b32.xlu0 %v5139, 96
        %v5219 = vpop.permute.xlu0 %5218
        %5220 = vrot.lane.b32.xlu0 %v5140, 96
        %v5221 = vpop.permute.xlu0 %5220
        %5222 = vrot.lane.b32.xlu0 %v5141, 96
        %v5223 = vpop.permute.xlu0 %5222
        %5224 = vrot.lane.b32.xlu0 %v5142, 96
        %v5225 = vpop.permute.xlu0 %5224
        %5226 = vrot.lane.b32.xlu0 %v5143, 96
        %v5227 = vpop.permute.xlu0 %5226
        %5228 = vrot.lane.b32.xlu0 %v5144, 96
        %v5229 = vpop.permute.xlu0 %5228
        %5230 = vrot.lane.b32.xlu0 %v5145, 96
        %v5231 = vpop.permute.xlu0 %5230
        %5232 = vrot.lane.b32.xlu0 %v5146, 96
        %v5233 = vpop.permute.xlu0 %5232
        %5234 = vrot.lane.b32.xlu0 %v5147, 96
        %v5235 = vpop.permute.xlu0 %5234
        %5236 = vrot.lane.b32.xlu0 %v5148, 96
        %v5237 = vpop.permute.xlu0 %5236
        %5238 = vrot.lane.b32.xlu0 %v5149, 96
        %v5239 = vpop.permute.xlu0 %5238
        %5240 = vrot.lane.b32.xlu0 %v5150, 96
        %v5241 = vpop.permute.xlu0 %5240
        %5242 = vrot.lane.b32.xlu0 %v5151, 96
        %v5243 = vpop.permute.xlu0 %5242
        %5244 = vrot.lane.b32.xlu0 %v5152, 96
        %v5245 = vpop.permute.xlu0 %5244
        %5246 = vrot.lane.b32.xlu0 %v5153, 96
        %v5247 = vpop.permute.xlu0 %5246
        %5248 = vrot.lane.b32.xlu0 %v5154, 96
        %v5249 = vpop.permute.xlu0 %5248
        %5250 = vrot.lane.b32.xlu0 %v5155, 96
        %v5251 = vpop.permute.xlu0 %5250
        %v5284 = vadd.f32 %v4260, %v5189
        %v5285 = vadd.f32 %v4261, %v5191
        %v5286 = vadd.f32 %v4262, %v5193
        %v5287 = vadd.f32 %v4263, %v5195
        %v5288 = vadd.f32 %v4264, %v5197
        %v5289 = vadd.f32 %v4265, %v5199
        %v5290 = vadd.f32 %v4266, %v5201
        %v5291 = vadd.f32 %v4267, %v5203
        %v5292 = vadd.f32 %v4268, %v5205
        %v5293 = vadd.f32 %v4269, %v5207
        %v5294 = vadd.f32 %v4270, %v5209
        %v5295 = vadd.f32 %v4271, %v5211
        %v5296 = vadd.f32 %v4272, %v5213
        %v5297 = vadd.f32 %v4273, %v5215
        %v5298 = vadd.f32 %v4274, %v5217
        %v5299 = vadd.f32 %v4275, %v5219
        %v5300 = vadd.f32 %v4276, %v5221
        %v5301 = vadd.f32 %v4277, %v5223
        %v5302 = vadd.f32 %v4278, %v5225
        %v5303 = vadd.f32 %v4279, %v5227
        %v5304 = vadd.f32 %v4280, %v5229
        %v5305 = vadd.f32 %v4281, %v5231
        %v5306 = vadd.f32 %v4282, %v5233
        %v5307 = vadd.f32 %v4283, %v5235
        %v5308 = vadd.f32 %v4284, %v5237
        %v5309 = vadd.f32 %v4285, %v5239
        %v5310 = vadd.f32 %v4286, %v5241
        %v5311 = vadd.f32 %v4287, %v5243
        %v5312 = vadd.f32 %v4288, %v5245
        %v5313 = vadd.f32 %v4289, %v5247
        %v5314 = vadd.f32 %v4290, %v5249
        %v5315 = vadd.f32 %v4291, %v5251
        %v5316 = vsub.f32 0.0, %v5284
        %v5317 = vsub.f32 0.0, %v5285
        %v5318 = vsub.f32 0.0, %v5286
        %v5319 = vsub.f32 0.0, %v5287
        %v5320 = vsub.f32 0.0, %v5288
        %v5321 = vsub.f32 0.0, %v5289
        %v5322 = vsub.f32 0.0, %v5290
        %v5323 = vsub.f32 0.0, %v5291
        %v5324 = vsub.f32 0.0, %v5292
        %v5325 = vsub.f32 0.0, %v5293
        %v5326 = vsub.f32 0.0, %v5294
        %v5327 = vsub.f32 0.0, %v5295
        %v5328 = vsub.f32 0.0, %v5296
        %v5329 = vsub.f32 0.0, %v5297
        %v5330 = vsub.f32 0.0, %v5298
        %v5331 = vsub.f32 0.0, %v5299
        %v5332 = vsub.f32 0.0, %v5300
        %v5333 = vsub.f32 0.0, %v5301
        %v5334 = vsub.f32 0.0, %v5302
        %v5335 = vsub.f32 0.0, %v5303
        %v5336 = vsub.f32 0.0, %v5304
        %v5337 = vsub.f32 0.0, %v5305
        %v5338 = vsub.f32 0.0, %v5306
        %v5339 = vsub.f32 0.0, %v5307
        %v5340 = vsub.f32 0.0, %v5308
        %v5341 = vsub.f32 0.0, %v5309
        %v5342 = vsub.f32 0.0, %v5310
        %v5343 = vsub.f32 0.0, %v5311
        %v5344 = vsub.f32 0.0, %v5312
        %v5345 = vsub.f32 0.0, %v5313
        %v5346 = vsub.f32 0.0, %v5314
        %v5347 = vsub.f32 0.0, %v5315
        %v5348 = vmul.f32 %v5316, 1.442695
        %v5349 = vpow.pop %v5348
        %v5350 = vmul.f32 %v5317, 1.442695
        %v5351 = vpow.pop %v5350
        %v5352 = vmul.f32 %v5318, 1.442695
        %v5353 = vpow.pop %v5352
        %v5354 = vmul.f32 %v5319, 1.442695
        %v5355 = vpow.pop %v5354
        %v5356 = vmul.f32 %v5320, 1.442695
        %v5357 = vpow.pop %v5356
        %v5358 = vmul.f32 %v5321, 1.442695
        %v5359 = vpow.pop %v5358
        %v5360 = vmul.f32 %v5322, 1.442695
        %v5361 = vpow.pop %v5360
        %v5362 = vmul.f32 %v5323, 1.442695
        %v5363 = vpow.pop %v5362
        %v5364 = vmul.f32 %v5324, 1.442695
        %v5365 = vpow.pop %v5364
        %v5366 = vmul.f32 %v5325, 1.442695
        %v5367 = vpow.pop %v5366
        %v5368 = vmul.f32 %v5326, 1.442695
        %v5369 = vpow.pop %v5368
        %v5370 = vmul.f32 %v5327, 1.442695
        %v5371 = vpow.pop %v5370
        %v5372 = vmul.f32 %v5328, 1.442695
        %v5373 = vpow.pop %v5372
        %v5374 = vmul.f32 %v5329, 1.442695
        %v5375 = vpow.pop %v5374
        %v5376 = vmul.f32 %v5330, 1.442695
        %v5377 = vpow.pop %v5376
        %v5378 = vmul.f32 %v5331, 1.442695
        %v5379 = vpow.pop %v5378
        %v5380 = vmul.f32 %v5332, 1.442695
        %v5381 = vpow.pop %v5380
        %v5382 = vmul.f32 %v5333, 1.442695
        %v5383 = vpow.pop %v5382
        %v5384 = vmul.f32 %v5334, 1.442695
        %v5385 = vpow.pop %v5384
        %v5386 = vmul.f32 %v5335, 1.442695
        %v5387 = vpow.pop %v5386
        %v5388 = vmul.f32 %v5336, 1.442695
        %v5389 = vpow.pop %v5388
        %v5390 = vmul.f32 %v5337, 1.442695
        %v5391 = vpow.pop %v5390
        %v5392 = vmul.f32 %v5338, 1.442695
        %v5393 = vpow.pop %v5392
        %v5394 = vmul.f32 %v5339, 1.442695
        %v5395 = vpow.pop %v5394
        %v5396 = vmul.f32 %v5340, 1.442695
        %v5397 = vpow.pop %v5396
        %v5398 = vmul.f32 %v5341, 1.442695
        %v5399 = vpow.pop %v5398
        %v5400 = vmul.f32 %v5342, 1.442695
        %v5401 = vpow.pop %v5400
        %v5402 = vmul.f32 %v5343, 1.442695
        %v5403 = vpow.pop %v5402
        %v5404 = vmul.f32 %v5344, 1.442695
        %v5405 = vpow.pop %v5404
        %v5406 = vmul.f32 %v5345, 1.442695
        %v5407 = vpow.pop %v5406
        %v5408 = vmul.f32 %v5346, 1.442695
        %v5409 = vpow.pop %v5408
        %v5410 = vmul.f32 %v5347, 1.442695
        %v5411 = vpow.pop %v5410
        %v5412 = vadd.f32 %v5349, 1.0
        %v5413 = vadd.f32 %v5351, 1.0
        %v5414 = vadd.f32 %v5353, 1.0
        %v5415 = vadd.f32 %v5355, 1.0
        %v5416 = vadd.f32 %v5357, 1.0
        %v5417 = vadd.f32 %v5359, 1.0
        %v5418 = vadd.f32 %v5361, 1.0
        %v5419 = vadd.f32 %v5363, 1.0
        %v5420 = vadd.f32 %v5365, 1.0
        %v5421 = vadd.f32 %v5367, 1.0
        %v5422 = vadd.f32 %v5369, 1.0
        %v5423 = vadd.f32 %v5371, 1.0
        %v5424 = vadd.f32 %v5373, 1.0
        %v5425 = vadd.f32 %v5375, 1.0
        %v5426 = vadd.f32 %v5377, 1.0
        %v5427 = vadd.f32 %v5379, 1.0
        %v5428 = vadd.f32 %v5381, 1.0
        %v5429 = vadd.f32 %v5383, 1.0
        %v5430 = vadd.f32 %v5385, 1.0
        %v5431 = vadd.f32 %v5387, 1.0
        %v5432 = vadd.f32 %v5389, 1.0
        %v5433 = vadd.f32 %v5391, 1.0
        %v5434 = vadd.f32 %v5393, 1.0
        %v5435 = vadd.f32 %v5395, 1.0
        %v5436 = vadd.f32 %v5397, 1.0
        %v5437 = vadd.f32 %v5399, 1.0
        %v5438 = vadd.f32 %v5401, 1.0
        %v5439 = vadd.f32 %v5403, 1.0
        %v5440 = vadd.f32 %v5405, 1.0
        %v5441 = vadd.f32 %v5407, 1.0
        %v5442 = vadd.f32 %v5409, 1.0
        %v5443 = vadd.f32 %v5411, 1.0
        %v5444 = vrcp.pop %v5412
        %v5445 = vrcp.pop %v5413
        %v5446 = vrcp.pop %v5414
        %v5447 = vrcp.pop %v5415
        %v5448 = vrcp.pop %v5416
        %v5449 = vrcp.pop %v5417
        %v5450 = vrcp.pop %v5418
        %v5451 = vrcp.pop %v5419
        %v5452 = vrcp.pop %v5420
        %v5453 = vrcp.pop %v5421
        %v5454 = vrcp.pop %v5422
        %v5455 = vrcp.pop %v5423
        %v5456 = vrcp.pop %v5424
        %v5457 = vrcp.pop %v5425
        %v5458 = vrcp.pop %v5426
        %v5459 = vrcp.pop %v5427
        %v5460 = vrcp.pop %v5428
        %v5461 = vrcp.pop %v5429
        %v5462 = vrcp.pop %v5430
        %v5463 = vrcp.pop %v5431
        %v5464 = vrcp.pop %v5432
        %v5465 = vrcp.pop %v5433
        %v5466 = vrcp.pop %v5434
        %v5467 = vrcp.pop %v5435
        %v5468 = vrcp.pop %v5436
        %v5469 = vrcp.pop %v5437
        %v5470 = vrcp.pop %v5438
        %v5471 = vrcp.pop %v5439
        %v5472 = vrcp.pop %v5440
        %v5473 = vrcp.pop %v5441
        %v5474 = vrcp.pop %v5442
        %v5475 = vrcp.pop %v5443
        %5508 = vrot.lane.b32.xlu0 %v806, 32
        %v5509 = vpop.permute.xlu0 %5508
        %5510 = vrot.lane.b32.xlu0 %v807, 32
        %v5511 = vpop.permute.xlu0 %5510
        %5512 = vrot.lane.b32.xlu0 %v808, 32
        %v5513 = vpop.permute.xlu0 %5512
        %5514 = vrot.lane.b32.xlu0 %v809, 32
        %v5515 = vpop.permute.xlu0 %5514
        %5516 = vrot.lane.b32.xlu0 %v810, 32
        %v5517 = vpop.permute.xlu0 %5516
        %5518 = vrot.lane.b32.xlu0 %v811, 32
        %v5519 = vpop.permute.xlu0 %5518
        %5520 = vrot.lane.b32.xlu0 %v812, 32
        %v5521 = vpop.permute.xlu0 %5520
        %5522 = vrot.lane.b32.xlu0 %v813, 32
        %v5523 = vpop.permute.xlu0 %5522
        %5524 = vrot.lane.b32.xlu0 %v814, 32
        %v5525 = vpop.permute.xlu0 %5524
        %5526 = vrot.lane.b32.xlu0 %v815, 32
        %v5527 = vpop.permute.xlu0 %5526
        %5528 = vrot.lane.b32.xlu0 %v816, 32
        %v5529 = vpop.permute.xlu0 %5528
        %5530 = vrot.lane.b32.xlu0 %v817, 32
        %v5531 = vpop.permute.xlu0 %5530
        %5532 = vrot.lane.b32.xlu0 %v818, 32
        %v5533 = vpop.permute.xlu0 %5532
        %5534 = vrot.lane.b32.xlu0 %v819, 32
        %v5535 = vpop.permute.xlu0 %5534
        %5536 = vrot.lane.b32.xlu0 %v820, 32
        %v5537 = vpop.permute.xlu0 %5536
        %5538 = vrot.lane.b32.xlu0 %v821, 32
        %v5539 = vpop.permute.xlu0 %5538
        %5540 = vrot.lane.b32.xlu0 %v822, 32
        %v5541 = vpop.permute.xlu0 %5540
        %5542 = vrot.lane.b32.xlu0 %v823, 32
        %v5543 = vpop.permute.xlu0 %5542
        %5544 = vrot.lane.b32.xlu0 %v824, 32
        %v5545 = vpop.permute.xlu0 %5544
        %5546 = vrot.lane.b32.xlu0 %v825, 32
        %v5547 = vpop.permute.xlu0 %5546
        %5548 = vrot.lane.b32.xlu0 %v826, 32
        %v5549 = vpop.permute.xlu0 %5548
        %5550 = vrot.lane.b32.xlu0 %v827, 32
        %v5551 = vpop.permute.xlu0 %5550
        %5552 = vrot.lane.b32.xlu0 %v828, 32
        %v5553 = vpop.permute.xlu0 %5552
        %5554 = vrot.lane.b32.xlu0 %v829, 32
        %v5555 = vpop.permute.xlu0 %5554
        %5556 = vrot.lane.b32.xlu0 %v830, 32
        %v5557 = vpop.permute.xlu0 %5556
        %5558 = vrot.lane.b32.xlu0 %v831, 32
        %v5559 = vpop.permute.xlu0 %5558
        %5560 = vrot.lane.b32.xlu0 %v832, 32
        %v5561 = vpop.permute.xlu0 %5560
        %5562 = vrot.lane.b32.xlu0 %v833, 32
        %v5563 = vpop.permute.xlu0 %5562
        %5564 = vrot.lane.b32.xlu0 %v834, 32
        %v5565 = vpop.permute.xlu0 %5564
        %5566 = vrot.lane.b32.xlu0 %v835, 32
        %v5567 = vpop.permute.xlu0 %5566
        %5568 = vrot.lane.b32.xlu0 %v836, 32
        %v5569 = vpop.permute.xlu0 %5568
        %5570 = vrot.lane.b32.xlu0 %v837, 32
        %v5571 = vpop.permute.xlu0 %5570
        %v5604 = vmul.f32 %v4932, %v5509
        %v5605 = vmul.f32 %v4933, %v5511
        %v5606 = vmul.f32 %v4934, %v5513
        %v5607 = vmul.f32 %v4935, %v5515
        %v5608 = vmul.f32 %v4936, %v5517
        %v5609 = vmul.f32 %v4937, %v5519
        %v5610 = vmul.f32 %v4938, %v5521
        %v5611 = vmul.f32 %v4939, %v5523
        %v5612 = vmul.f32 %v4940, %v5525
        %v5613 = vmul.f32 %v4941, %v5527
        %v5614 = vmul.f32 %v4942, %v5529
        %v5615 = vmul.f32 %v4943, %v5531
        %v5616 = vmul.f32 %v4944, %v5533
        %v5617 = vmul.f32 %v4945, %v5535
        %v5618 = vmul.f32 %v4946, %v5537
        %v5619 = vmul.f32 %v4947, %v5539
        %v5620 = vmul.f32 %v4948, %v5541
        %v5621 = vmul.f32 %v4949, %v5543
        %v5622 = vmul.f32 %v4950, %v5545
        %v5623 = vmul.f32 %v4951, %v5547
        %v5624 = vmul.f32 %v4952, %v5549
        %v5625 = vmul.f32 %v4953, %v5551
        %v5626 = vmul.f32 %v4954, %v5553
        %v5627 = vmul.f32 %v4955, %v5555
        %v5628 = vmul.f32 %v4956, %v5557
        %v5629 = vmul.f32 %v4957, %v5559
        %v5630 = vmul.f32 %v4958, %v5561
        %v5631 = vmul.f32 %v4959, %v5563
        %v5632 = vmul.f32 %v4960, %v5565
        %v5633 = vmul.f32 %v4961, %v5567
        %v5634 = vmul.f32 %v4962, %v5569
        %v5635 = vmul.f32 %v4963, %v5571
        %v5636 = vmul.f32 %v4548, %v5029
        %v5637 = vmul.f32 %v4549, %v5031
        %v5638 = vmul.f32 %v4550, %v5033
        %v5639 = vmul.f32 %v4551, %v5035
        %v5640 = vmul.f32 %v4552, %v5037
        %v5641 = vmul.f32 %v4553, %v5039
        %v5642 = vmul.f32 %v4554, %v5041
        %v5643 = vmul.f32 %v4555, %v5043
        %v5644 = vmul.f32 %v4556, %v5045
        %v5645 = vmul.f32 %v4557, %v5047
        %v5646 = vmul.f32 %v4558, %v5049
        %v5647 = vmul.f32 %v4559, %v5051
        %v5648 = vmul.f32 %v4560, %v5053
        %v5649 = vmul.f32 %v4561, %v5055
        %v5650 = vmul.f32 %v4562, %v5057
        %v5651 = vmul.f32 %v4563, %v5059
        %v5652 = vmul.f32 %v4564, %v5061
        %v5653 = vmul.f32 %v4565, %v5063
        %v5654 = vmul.f32 %v4566, %v5065
        %v5655 = vmul.f32 %v4567, %v5067
        %v5656 = vmul.f32 %v4568, %v5069
        %v5657 = vmul.f32 %v4569, %v5071
        %v5658 = vmul.f32 %v4570, %v5073
        %v5659 = vmul.f32 %v4571, %v5075
        %v5660 = vmul.f32 %v4572, %v5077
        %v5661 = vmul.f32 %v4573, %v5079
        %v5662 = vmul.f32 %v4574, %v5081
        %v5663 = vmul.f32 %v4575, %v5083
        %v5664 = vmul.f32 %v4576, %v5085
        %v5665 = vmul.f32 %v4577, %v5087
        %v5666 = vmul.f32 %v4578, %v5089
        %v5667 = vmul.f32 %v4579, %v5091
        %5700 = vrot.lane.b32.xlu0 %v5636, 32
        %v5701 = vpop.permute.xlu0 %5700
        %5702 = vrot.lane.b32.xlu0 %v5637, 32
        %v5703 = vpop.permute.xlu0 %5702
        %5704 = vrot.lane.b32.xlu0 %v5638, 32
        %v5705 = vpop.permute.xlu0 %5704
        %5706 = vrot.lane.b32.xlu0 %v5639, 32
        %v5707 = vpop.permute.xlu0 %5706
        %5708 = vrot.lane.b32.xlu0 %v5640, 32
        %v5709 = vpop.permute.xlu0 %5708
        %5710 = vrot.lane.b32.xlu0 %v5641, 32
        %v5711 = vpop.permute.xlu0 %5710
        %5712 = vrot.lane.b32.xlu0 %v5642, 32
        %v5713 = vpop.permute.xlu0 %5712
        %5714 = vrot.lane.b32.xlu0 %v5643, 32
        %v5715 = vpop.permute.xlu0 %5714
        %5716 = vrot.lane.b32.xlu0 %v5644, 32
        %v5717 = vpop.permute.xlu0 %5716
        %5718 = vrot.lane.b32.xlu0 %v5645, 32
        %v5719 = vpop.permute.xlu0 %5718
        %5720 = vrot.lane.b32.xlu0 %v5646, 32
        %v5721 = vpop.permute.xlu0 %5720
        %5722 = vrot.lane.b32.xlu0 %v5647, 32
        %v5723 = vpop.permute.xlu0 %5722
        %5724 = vrot.lane.b32.xlu0 %v5648, 32
        %v5725 = vpop.permute.xlu0 %5724
        %5726 = vrot.lane.b32.xlu0 %v5649, 32
        %v5727 = vpop.permute.xlu0 %5726
        %5728 = vrot.lane.b32.xlu0 %v5650, 32
        %v5729 = vpop.permute.xlu0 %5728
        %5730 = vrot.lane.b32.xlu0 %v5651, 32
        %v5731 = vpop.permute.xlu0 %5730
        %5732 = vrot.lane.b32.xlu0 %v5652, 32
        %v5733 = vpop.permute.xlu0 %5732
        %5734 = vrot.lane.b32.xlu0 %v5653, 32
        %v5735 = vpop.permute.xlu0 %5734
        %5736 = vrot.lane.b32.xlu0 %v5654, 32
        %v5737 = vpop.permute.xlu0 %5736
        %5738 = vrot.lane.b32.xlu0 %v5655, 32
        %v5739 = vpop.permute.xlu0 %5738
        %5740 = vrot.lane.b32.xlu0 %v5656, 32
        %v5741 = vpop.permute.xlu0 %5740
        %5742 = vrot.lane.b32.xlu0 %v5657, 32
        %v5743 = vpop.permute.xlu0 %5742
        %5744 = vrot.lane.b32.xlu0 %v5658, 32
        %v5745 = vpop.permute.xlu0 %5744
        %5746 = vrot.lane.b32.xlu0 %v5659, 32
        %v5747 = vpop.permute.xlu0 %5746
        %5748 = vrot.lane.b32.xlu0 %v5660, 32
        %v5749 = vpop.permute.xlu0 %5748
        %5750 = vrot.lane.b32.xlu0 %v5661, 32
        %v5751 = vpop.permute.xlu0 %5750
        %5752 = vrot.lane.b32.xlu0 %v5662, 32
        %v5753 = vpop.permute.xlu0 %5752
        %5754 = vrot.lane.b32.xlu0 %v5663, 32
        %v5755 = vpop.permute.xlu0 %5754
        %5756 = vrot.lane.b32.xlu0 %v5664, 32
        %v5757 = vpop.permute.xlu0 %5756
        %5758 = vrot.lane.b32.xlu0 %v5665, 32
        %v5759 = vpop.permute.xlu0 %5758
        %5760 = vrot.lane.b32.xlu0 %v5666, 32
        %v5761 = vpop.permute.xlu0 %5760
        %5762 = vrot.lane.b32.xlu0 %v5667, 32
        %v5763 = vpop.permute.xlu0 %5762
        %v5796 = vadd.f32 %v5604, %v5701
        %v5797 = vadd.f32 %v5605, %v5703
        %v5798 = vadd.f32 %v5606, %v5705
        %v5799 = vadd.f32 %v5607, %v5707
        %v5800 = vadd.f32 %v5608, %v5709
        %v5801 = vadd.f32 %v5609, %v5711
        %v5802 = vadd.f32 %v5610, %v5713
        %v5803 = vadd.f32 %v5611, %v5715
        %v5804 = vadd.f32 %v5612, %v5717
        %v5805 = vadd.f32 %v5613, %v5719
        %v5806 = vadd.f32 %v5614, %v5721
        %v5807 = vadd.f32 %v5615, %v5723
        %v5808 = vadd.f32 %v5616, %v5725
        %v5809 = vadd.f32 %v5617, %v5727
        %v5810 = vadd.f32 %v5618, %v5729
        %v5811 = vadd.f32 %v5619, %v5731
        %v5812 = vadd.f32 %v5620, %v5733
        %v5813 = vadd.f32 %v5621, %v5735
        %v5814 = vadd.f32 %v5622, %v5737
        %v5815 = vadd.f32 %v5623, %v5739
        %v5816 = vadd.f32 %v5624, %v5741
        %v5817 = vadd.f32 %v5625, %v5743
        %v5818 = vadd.f32 %v5626, %v5745
        %v5819 = vadd.f32 %v5627, %v5747
        %v5820 = vadd.f32 %v5628, %v5749
        %v5821 = vadd.f32 %v5629, %v5751
        %v5822 = vadd.f32 %v5630, %v5753
        %v5823 = vadd.f32 %v5631, %v5755
        %v5824 = vadd.f32 %v5632, %v5757
        %v5825 = vadd.f32 %v5633, %v5759
        %v5826 = vadd.f32 %v5634, %v5761
        %v5827 = vadd.f32 %v5635, %v5763
        %v5828 = vtanh.pop %v5796
        %v5829 = vtanh.pop %v5797
        %v5830 = vtanh.pop %v5798
        %v5831 = vtanh.pop %v5799
        %v5832 = vtanh.pop %v5800
        %v5833 = vtanh.pop %v5801
        %v5834 = vtanh.pop %v5802
        %v5835 = vtanh.pop %v5803
        %v5836 = vtanh.pop %v5804
        %v5837 = vtanh.pop %v5805
        %v5838 = vtanh.pop %v5806
        %v5839 = vtanh.pop %v5807
        %v5840 = vtanh.pop %v5808
        %v5841 = vtanh.pop %v5809
        %v5842 = vtanh.pop %v5810
        %v5843 = vtanh.pop %v5811
        %v5844 = vtanh.pop %v5812
        %v5845 = vtanh.pop %v5813
        %v5846 = vtanh.pop %v5814
        %v5847 = vtanh.pop %v5815
        %v5848 = vtanh.pop %v5816
        %v5849 = vtanh.pop %v5817
        %v5850 = vtanh.pop %v5818
        %v5851 = vtanh.pop %v5819
        %v5852 = vtanh.pop %v5820
        %v5853 = vtanh.pop %v5821
        %v5854 = vtanh.pop %v5822
        %v5855 = vtanh.pop %v5823
        %v5856 = vtanh.pop %v5824
        %v5857 = vtanh.pop %v5825
        %v5858 = vtanh.pop %v5826
        %v5859 = vtanh.pop %v5827
        %5892 = vrot.lane.b32.xlu0 %v5828, 64
        %v5893 = vpop.permute.xlu0 %5892
        %5894 = vrot.lane.b32.xlu0 %v5829, 64
        %v5895 = vpop.permute.xlu0 %5894
        %5896 = vrot.lane.b32.xlu0 %v5830, 64
        %v5897 = vpop.permute.xlu0 %5896
        %5898 = vrot.lane.b32.xlu0 %v5831, 64
        %v5899 = vpop.permute.xlu0 %5898
        %5900 = vrot.lane.b32.xlu0 %v5832, 64
        %v5901 = vpop.permute.xlu0 %5900
        %5902 = vrot.lane.b32.xlu0 %v5833, 64
        %v5903 = vpop.permute.xlu0 %5902
        %5904 = vrot.lane.b32.xlu0 %v5834, 64
        %v5905 = vpop.permute.xlu0 %5904
        %5906 = vrot.lane.b32.xlu0 %v5835, 64
        %v5907 = vpop.permute.xlu0 %5906
        %5908 = vrot.lane.b32.xlu0 %v5836, 64
        %v5909 = vpop.permute.xlu0 %5908
        %5910 = vrot.lane.b32.xlu0 %v5837, 64
        %v5911 = vpop.permute.xlu0 %5910
        %5912 = vrot.lane.b32.xlu0 %v5838, 64
        %v5913 = vpop.permute.xlu0 %5912
        %5914 = vrot.lane.b32.xlu0 %v5839, 64
        %v5915 = vpop.permute.xlu0 %5914
        %5916 = vrot.lane.b32.xlu0 %v5840, 64
        %v5917 = vpop.permute.xlu0 %5916
        %5918 = vrot.lane.b32.xlu0 %v5841, 64
        %v5919 = vpop.permute.xlu0 %5918
        %5920 = vrot.lane.b32.xlu0 %v5842, 64
        %v5921 = vpop.permute.xlu0 %5920
        %5922 = vrot.lane.b32.xlu0 %v5843, 64
        %v5923 = vpop.permute.xlu0 %5922
        %5924 = vrot.lane.b32.xlu0 %v5844, 64
        %v5925 = vpop.permute.xlu0 %5924
        %5926 = vrot.lane.b32.xlu0 %v5845, 64
        %v5927 = vpop.permute.xlu0 %5926
        %5928 = vrot.lane.b32.xlu0 %v5846, 64
        %v5929 = vpop.permute.xlu0 %5928
        %5930 = vrot.lane.b32.xlu0 %v5847, 64
        %v5931 = vpop.permute.xlu0 %5930
        %5932 = vrot.lane.b32.xlu0 %v5848, 64
        %v5933 = vpop.permute.xlu0 %5932
        %5934 = vrot.lane.b32.xlu0 %v5849, 64
        %v5935 = vpop.permute.xlu0 %5934
        %5936 = vrot.lane.b32.xlu0 %v5850, 64
        %v5937 = vpop.permute.xlu0 %5936
        %5938 = vrot.lane.b32.xlu0 %v5851, 64
        %v5939 = vpop.permute.xlu0 %5938
        %5940 = vrot.lane.b32.xlu0 %v5852, 64
        %v5941 = vpop.permute.xlu0 %5940
        %5942 = vrot.lane.b32.xlu0 %v5853, 64
        %v5943 = vpop.permute.xlu0 %5942
        %5944 = vrot.lane.b32.xlu0 %v5854, 64
        %v5945 = vpop.permute.xlu0 %5944
        %5946 = vrot.lane.b32.xlu0 %v5855, 64
        %v5947 = vpop.permute.xlu0 %5946
        %5948 = vrot.lane.b32.xlu0 %v5856, 64
        %v5949 = vpop.permute.xlu0 %5948
        %5950 = vrot.lane.b32.xlu0 %v5857, 64
        %v5951 = vpop.permute.xlu0 %5950
        %5952 = vrot.lane.b32.xlu0 %v5858, 64
        %v5953 = vpop.permute.xlu0 %5952
        %5954 = vrot.lane.b32.xlu0 %v5859, 64
        %v5955 = vpop.permute.xlu0 %5954
        %v5988 = vmul.f32 %v5444, %v5893
        %v5989 = vmul.f32 %v5445, %v5895
        %v5990 = vmul.f32 %v5446, %v5897
        %v5991 = vmul.f32 %v5447, %v5899
        %v5992 = vmul.f32 %v5448, %v5901
        %v5993 = vmul.f32 %v5449, %v5903
        %v5994 = vmul.f32 %v5450, %v5905
        %v5995 = vmul.f32 %v5451, %v5907
        %v5996 = vmul.f32 %v5452, %v5909
        %v5997 = vmul.f32 %v5453, %v5911
        %v5998 = vmul.f32 %v5454, %v5913
        %v5999 = vmul.f32 %v5455, %v5915
        %v6000 = vmul.f32 %v5456, %v5917
        %v6001 = vmul.f32 %v5457, %v5919
        %v6002 = vmul.f32 %v5458, %v5921
        %v6003 = vmul.f32 %v5459, %v5923
        %v6004 = vmul.f32 %v5460, %v5925
        %v6005 = vmul.f32 %v5461, %v5927
        %v6006 = vmul.f32 %v5462, %v5929
        %v6007 = vmul.f32 %v5463, %v5931
        %v6008 = vmul.f32 %v5464, %v5933
        %v6009 = vmul.f32 %v5465, %v5935
        %v6010 = vmul.f32 %v5466, %v5937
        %v6011 = vmul.f32 %v5467, %v5939
        %v6012 = vmul.f32 %v5468, %v5941
        %v6013 = vmul.f32 %v5469, %v5943
        %v6014 = vmul.f32 %v5470, %v5945
        %v6015 = vmul.f32 %v5471, %v5947
        %v6016 = vmul.f32 %v5472, %v5949
        %v6017 = vmul.f32 %v5473, %v5951
        %v6018 = vmul.f32 %v5474, %v5953
        %v6019 = vmul.f32 %v5475, %v5955
        %6052 = vrot.lane.b32.xlu0 %v5988, 32
        %v6053 = vpop.permute.xlu0 %6052
        %6054 = vrot.lane.b32.xlu0 %v5989, 32
        %v6055 = vpop.permute.xlu0 %6054
        %6056 = vrot.lane.b32.xlu0 %v5990, 32
        %v6057 = vpop.permute.xlu0 %6056
        %6058 = vrot.lane.b32.xlu0 %v5991, 32
        %v6059 = vpop.permute.xlu0 %6058
        %6060 = vrot.lane.b32.xlu0 %v5992, 32
        %v6061 = vpop.permute.xlu0 %6060
        %6062 = vrot.lane.b32.xlu0 %v5993, 32
        %v6063 = vpop.permute.xlu0 %6062
        %6064 = vrot.lane.b32.xlu0 %v5994, 32
        %v6065 = vpop.permute.xlu0 %6064
        %6066 = vrot.lane.b32.xlu0 %v5995, 32
        %v6067 = vpop.permute.xlu0 %6066
        %6068 = vrot.lane.b32.xlu0 %v5996, 32
        %v6069 = vpop.permute.xlu0 %6068
        %6070 = vrot.lane.b32.xlu0 %v5997, 32
        %v6071 = vpop.permute.xlu0 %6070
        %6072 = vrot.lane.b32.xlu0 %v5998, 32
        %v6073 = vpop.permute.xlu0 %6072
        %6074 = vrot.lane.b32.xlu0 %v5999, 32
        %v6075 = vpop.permute.xlu0 %6074
        %6076 = vrot.lane.b32.xlu0 %v6000, 32
        %v6077 = vpop.permute.xlu0 %6076
        %6078 = vrot.lane.b32.xlu0 %v6001, 32
        %v6079 = vpop.permute.xlu0 %6078
        %6080 = vrot.lane.b32.xlu0 %v6002, 32
        %v6081 = vpop.permute.xlu0 %6080
        %6082 = vrot.lane.b32.xlu0 %v6003, 32
        %v6083 = vpop.permute.xlu0 %6082
        %6084 = vrot.lane.b32.xlu0 %v6004, 32
        %v6085 = vpop.permute.xlu0 %6084
        %6086 = vrot.lane.b32.xlu0 %v6005, 32
        %v6087 = vpop.permute.xlu0 %6086
        %6088 = vrot.lane.b32.xlu0 %v6006, 32
        %v6089 = vpop.permute.xlu0 %6088
        %6090 = vrot.lane.b32.xlu0 %v6007, 32
        %v6091 = vpop.permute.xlu0 %6090
        %6092 = vrot.lane.b32.xlu0 %v6008, 32
        %v6093 = vpop.permute.xlu0 %6092
        %6094 = vrot.lane.b32.xlu0 %v6009, 32
        %v6095 = vpop.permute.xlu0 %6094
        %6096 = vrot.lane.b32.xlu0 %v6010, 32
        %v6097 = vpop.permute.xlu0 %6096
        %6098 = vrot.lane.b32.xlu0 %v6011, 32
        %v6099 = vpop.permute.xlu0 %6098
        %6100 = vrot.lane.b32.xlu0 %v6012, 32
        %v6101 = vpop.permute.xlu0 %6100
        %6102 = vrot.lane.b32.xlu0 %v6013, 32
        %v6103 = vpop.permute.xlu0 %6102
        %6104 = vrot.lane.b32.xlu0 %v6014, 32
        %v6105 = vpop.permute.xlu0 %6104
        %6106 = vrot.lane.b32.xlu0 %v6015, 32
        %v6107 = vpop.permute.xlu0 %6106
        %6108 = vrot.lane.b32.xlu0 %v6016, 32
        %v6109 = vpop.permute.xlu0 %6108
        %6110 = vrot.lane.b32.xlu0 %v6017, 32
        %v6111 = vpop.permute.xlu0 %6110
        %6112 = vrot.lane.b32.xlu0 %v6018, 32
        %v6113 = vpop.permute.xlu0 %6112
        %6114 = vrot.lane.b32.xlu0 %v6019, 32
        %v6115 = vpop.permute.xlu0 %6114
        %vm6148 = vcmask 261120
        %6149 = vst.msk [vmem:[%s518] sm:$0xff] %vm6148, %v6053
        %6150 = vst.msk [vmem:[%s518 + $0x8] sm:$0xff] %vm6148, %v6055
        %6151 = vst.msk [vmem:[%s518 + $0x10] sm:$0xff] %vm6148, %v6057
        %6152 = vst.msk [vmem:[%s518 + $0x18] sm:$0xff] %vm6148, %v6059
        %6153 = vst.msk [vmem:[%s518 + $0x20] sm:$0xff] %vm6148, %v6061
        %6154 = vst.msk [vmem:[%s518 + $0x28] sm:$0xff] %vm6148, %v6063
        %6155 = vst.msk [vmem:[%s518 + $0x30] sm:$0xff] %vm6148, %v6065
        %6156 = vst.msk [vmem:[%s518 + $0x38] sm:$0xff] %vm6148, %v6067
        %6157 = vst.msk [vmem:[%s518 + $0x40] sm:$0xff] %vm6148, %v6069
        %6158 = vst.msk [vmem:[%s518 + $0x48] sm:$0xff] %vm6148, %v6071
        %6159 = vst.msk [vmem:[%s518 + $0x50] sm:$0xff] %vm6148, %v6073
        %6160 = vst.msk [vmem:[%s518 + $0x58] sm:$0xff] %vm6148, %v6075
        %6161 = vst.msk [vmem:[%s518 + $0x60] sm:$0xff] %vm6148, %v6077
        %6162 = vst.msk [vmem:[%s518 + $0x68] sm:$0xff] %vm6148, %v6079
        %6163 = vst.msk [vmem:[%s518 + $0x70] sm:$0xff] %vm6148, %v6081
        %6164 = vst.msk [vmem:[%s518 + $0x78] sm:$0xff] %vm6148, %v6083
        %6165 = vst.msk [vmem:[%s518 + $0x80] sm:$0xff] %vm6148, %v6085
        %6166 = vst.msk [vmem:[%s518 + $0x88] sm:$0xff] %vm6148, %v6087
        %6167 = vst.msk [vmem:[%s518 + $0x90] sm:$0xff] %vm6148, %v6089
        %6168 = vst.msk [vmem:[%s518 + $0x98] sm:$0xff] %vm6148, %v6091
        %6169 = vst.msk [vmem:[%s518 + $0xa0] sm:$0xff] %vm6148, %v6093
        %6170 = vst.msk [vmem:[%s518 + $0xa8] sm:$0xff] %vm6148, %v6095
        %6171 = vst.msk [vmem:[%s518 + $0xb0] sm:$0xff] %vm6148, %v6097
        %6172 = vst.msk [vmem:[%s518 + $0xb8] sm:$0xff] %vm6148, %v6099
        %6173 = vst.msk [vmem:[%s518 + $0xc0] sm:$0xff] %vm6148, %v6101
        %6174 = vst.msk [vmem:[%s518 + $0xc8] sm:$0xff] %vm6148, %v6103
        %6175 = vst.msk [vmem:[%s518 + $0xd0] sm:$0xff] %vm6148, %v6105
        %6176 = vst.msk [vmem:[%s518 + $0xd8] sm:$0xff] %vm6148, %v6107
        %6177 = vst.msk [vmem:[%s518 + $0xe0] sm:$0xff] %vm6148, %v6109
        %6178 = vst.msk [vmem:[%s518 + $0xe8] sm:$0xff] %vm6148, %v6111
        %6179 = vst.msk [vmem:[%s518 + $0xf0] sm:$0xff] %vm6148, %v6113
        %6180 = vst.msk [vmem:[%s518 + $0xf8] sm:$0xff] %vm6148, %v6115
        %6181 = vst.msk [vmem:[%s525] sm:$0xff] %vm6148, %v6053
        %6182 = vst.msk [vmem:[%s525 + $0x8] sm:$0xff] %vm6148, %v6055
        %6183 = vst.msk [vmem:[%s525 + $0x10] sm:$0xff] %vm6148, %v6057
        %6184 = vst.msk [vmem:[%s525 + $0x18] sm:$0xff] %vm6148, %v6059
        %6185 = vst.msk [vmem:[%s525 + $0x20] sm:$0xff] %vm6148, %v6061
        %6186 = vst.msk [vmem:[%s525 + $0x28] sm:$0xff] %vm6148, %v6063
        %6187 = vst.msk [vmem:[%s525 + $0x30] sm:$0xff] %vm6148, %v6065
        %6188 = vst.msk [vmem:[%s525 + $0x38] sm:$0xff] %vm6148, %v6067
        %6189 = vst.msk [vmem:[%s525 + $0x40] sm:$0xff] %vm6148, %v6069
        %6190 = vst.msk [vmem:[%s525 + $0x48] sm:$0xff] %vm6148, %v6071
        %6191 = vst.msk [vmem:[%s525 + $0x50] sm:$0xff] %vm6148, %v6073
        %6192 = vst.msk [vmem:[%s525 + $0x58] sm:$0xff] %vm6148, %v6075
        %6193 = vst.msk [vmem:[%s525 + $0x60] sm:$0xff] %vm6148, %v6077
        %6194 = vst.msk [vmem:[%s525 + $0x68] sm:$0xff] %vm6148, %v6079
        %6195 = vst.msk [vmem:[%s525 + $0x70] sm:$0xff] %vm6148, %v6081
        %6196 = vst.msk [vmem:[%s525 + $0x78] sm:$0xff] %vm6148, %v6083
        %6197 = vst.msk [vmem:[%s525 + $0x80] sm:$0xff] %vm6148, %v6085
        %6198 = vst.msk [vmem:[%s525 + $0x88] sm:$0xff] %vm6148, %v6087
        %6199 = vst.msk [vmem:[%s525 + $0x90] sm:$0xff] %vm6148, %v6089
        %6200 = vst.msk [vmem:[%s525 + $0x98] sm:$0xff] %vm6148, %v6091
        %6201 = vst.msk [vmem:[%s525 + $0xa0] sm:$0xff] %vm6148, %v6093
        %6202 = vst.msk [vmem:[%s525 + $0xa8] sm:$0xff] %vm6148, %v6095
        %6203 = vst.msk [vmem:[%s525 + $0xb0] sm:$0xff] %vm6148, %v6097
        %6204 = vst.msk [vmem:[%s525 + $0xb8] sm:$0xff] %vm6148, %v6099
        %6205 = vst.msk [vmem:[%s525 + $0xc0] sm:$0xff] %vm6148, %v6101
        %6206 = vst.msk [vmem:[%s525 + $0xc8] sm:$0xff] %vm6148, %v6103
        %6207 = vst.msk [vmem:[%s525 + $0xd0] sm:$0xff] %vm6148, %v6105
        %6208 = vst.msk [vmem:[%s525 + $0xd8] sm:$0xff] %vm6148, %v6107
        %6209 = vst.msk [vmem:[%s525 + $0xe0] sm:$0xff] %vm6148, %v6109
        %6210 = vst.msk [vmem:[%s525 + $0xe8] sm:$0xff] %vm6148, %v6111
        %6211 = vst.msk [vmem:[%s525 + $0xf0] sm:$0xff] %vm6148, %v6113
        %6212 = vst.msk [vmem:[%s525 + $0xf8] sm:$0xff] %vm6148, %v6115
        %6245 = vrot.lane.b32.xlu0 %v5796, 96
        %v6246 = vpop.permute.xlu0 %6245
        %6247 = vrot.lane.b32.xlu0 %v5797, 96
        %v6248 = vpop.permute.xlu0 %6247
        %6249 = vrot.lane.b32.xlu0 %v5798, 96
        %v6250 = vpop.permute.xlu0 %6249
        %6251 = vrot.lane.b32.xlu0 %v5799, 96
        %v6252 = vpop.permute.xlu0 %6251
        %6253 = vrot.lane.b32.xlu0 %v5800, 96
        %v6254 = vpop.permute.xlu0 %6253
        %6255 = vrot.lane.b32.xlu0 %v5801, 96
        %v6256 = vpop.permute.xlu0 %6255
        %6257 = vrot.lane.b32.xlu0 %v5802, 96
        %v6258 = vpop.permute.xlu0 %6257
        %6259 = vrot.lane.b32.xlu0 %v5803, 96
        %v6260 = vpop.permute.xlu0 %6259
        %6261 = vrot.lane.b32.xlu0 %v5804, 96
        %v6262 = vpop.permute.xlu0 %6261
        %6263 = vrot.lane.b32.xlu0 %v5805, 96
        %v6264 = vpop.permute.xlu0 %6263
        %6265 = vrot.lane.b32.xlu0 %v5806, 96
        %v6266 = vpop.permute.xlu0 %6265
        %6267 = vrot.lane.b32.xlu0 %v5807, 96
        %v6268 = vpop.permute.xlu0 %6267
        %6269 = vrot.lane.b32.xlu0 %v5808, 96
        %v6270 = vpop.permute.xlu0 %6269
        %6271 = vrot.lane.b32.xlu0 %v5809, 96
        %v6272 = vpop.permute.xlu0 %6271
        %6273 = vrot.lane.b32.xlu0 %v5810, 96
        %v6274 = vpop.permute.xlu0 %6273
        %6275 = vrot.lane.b32.xlu0 %v5811, 96
        %v6276 = vpop.permute.xlu0 %6275
        %6277 = vrot.lane.b32.xlu0 %v5812, 96
        %v6278 = vpop.permute.xlu0 %6277
        %6279 = vrot.lane.b32.xlu0 %v5813, 96
        %v6280 = vpop.permute.xlu0 %6279
        %6281 = vrot.lane.b32.xlu0 %v5814, 96
        %v6282 = vpop.permute.xlu0 %6281
        %6283 = vrot.lane.b32.xlu0 %v5815, 96
        %v6284 = vpop.permute.xlu0 %6283
        %6285 = vrot.lane.b32.xlu0 %v5816, 96
        %v6286 = vpop.permute.xlu0 %6285
        %6287 = vrot.lane.b32.xlu0 %v5817, 96
        %v6288 = vpop.permute.xlu0 %6287
        %6289 = vrot.lane.b32.xlu0 %v5818, 96
        %v6290 = vpop.permute.xlu0 %6289
        %6291 = vrot.lane.b32.xlu0 %v5819, 96
        %v6292 = vpop.permute.xlu0 %6291
        %6293 = vrot.lane.b32.xlu0 %v5820, 96
        %v6294 = vpop.permute.xlu0 %6293
        %6295 = vrot.lane.b32.xlu0 %v5821, 96
        %v6296 = vpop.permute.xlu0 %6295
        %6297 = vrot.lane.b32.xlu0 %v5822, 96
        %v6298 = vpop.permute.xlu0 %6297
        %6299 = vrot.lane.b32.xlu0 %v5823, 96
        %v6300 = vpop.permute.xlu0 %6299
        %6301 = vrot.lane.b32.xlu0 %v5824, 96
        %v6302 = vpop.permute.xlu0 %6301
        %6303 = vrot.lane.b32.xlu0 %v5825, 96
        %v6304 = vpop.permute.xlu0 %6303
        %6305 = vrot.lane.b32.xlu0 %v5826, 96
        %v6306 = vpop.permute.xlu0 %6305
        %6307 = vrot.lane.b32.xlu0 %v5827, 96
        %v6308 = vpop.permute.xlu0 %6307
        %6341 = vst.msk [vmem:[%s532] sm:$0xff] %vm6148, %v6246
        %6342 = vst.msk [vmem:[%s532 + $0x8] sm:$0xff] %vm6148, %v6248
        %6343 = vst.msk [vmem:[%s532 + $0x10] sm:$0xff] %vm6148, %v6250
        %6344 = vst.msk [vmem:[%s532 + $0x18] sm:$0xff] %vm6148, %v6252
        %6345 = vst.msk [vmem:[%s532 + $0x20] sm:$0xff] %vm6148, %v6254
        %6346 = vst.msk [vmem:[%s532 + $0x28] sm:$0xff] %vm6148, %v6256
        %6347 = vst.msk [vmem:[%s532 + $0x30] sm:$0xff] %vm6148, %v6258
        %6348 = vst.msk [vmem:[%s532 + $0x38] sm:$0xff] %vm6148, %v6260
        %6349 = vst.msk [vmem:[%s532 + $0x40] sm:$0xff] %vm6148, %v6262
        %6350 = vst.msk [vmem:[%s532 + $0x48] sm:$0xff] %vm6148, %v6264
        %6351 = vst.msk [vmem:[%s532 + $0x50] sm:$0xff] %vm6148, %v6266
        %6352 = vst.msk [vmem:[%s532 + $0x58] sm:$0xff] %vm6148, %v6268
        %6353 = vst.msk [vmem:[%s532 + $0x60] sm:$0xff] %vm6148, %v6270
        %6354 = vst.msk [vmem:[%s532 + $0x68] sm:$0xff] %vm6148, %v6272
        %6355 = vst.msk [vmem:[%s532 + $0x70] sm:$0xff] %vm6148, %v6274
        %6356 = vst.msk [vmem:[%s532 + $0x78] sm:$0xff] %vm6148, %v6276
        %6357 = vst.msk [vmem:[%s532 + $0x80] sm:$0xff] %vm6148, %v6278
        %6358 = vst.msk [vmem:[%s532 + $0x88] sm:$0xff] %vm6148, %v6280
        %6359 = vst.msk [vmem:[%s532 + $0x90] sm:$0xff] %vm6148, %v6282
        %6360 = vst.msk [vmem:[%s532 + $0x98] sm:$0xff] %vm6148, %v6284
        %6361 = vst.msk [vmem:[%s532 + $0xa0] sm:$0xff] %vm6148, %v6286
        %6362 = vst.msk [vmem:[%s532 + $0xa8] sm:$0xff] %vm6148, %v6288
        %6363 = vst.msk [vmem:[%s532 + $0xb0] sm:$0xff] %vm6148, %v6290
        %6364 = vst.msk [vmem:[%s532 + $0xb8] sm:$0xff] %vm6148, %v6292
        %6365 = vst.msk [vmem:[%s532 + $0xc0] sm:$0xff] %vm6148, %v6294
        %6366 = vst.msk [vmem:[%s532 + $0xc8] sm:$0xff] %vm6148, %v6296
        %6367 = vst.msk [vmem:[%s532 + $0xd0] sm:$0xff] %vm6148, %v6298
        %6368 = vst.msk [vmem:[%s532 + $0xd8] sm:$0xff] %vm6148, %v6300
        %6369 = vst.msk [vmem:[%s532 + $0xe0] sm:$0xff] %vm6148, %v6302
        %6370 = vst.msk [vmem:[%s532 + $0xe8] sm:$0xff] %vm6148, %v6304
        %6371 = vst.msk [vmem:[%s532 + $0xf0] sm:$0xff] %vm6148, %v6306
        %6372 = vst.msk [vmem:[%s532 + $0xf8] sm:$0xff] %vm6148, %v6308
        %s6373 = sand.u32 %s323, 1
        %s6374 = scalar_lea.sflag [#allocation4], %s6373
        %s6375 = sand.u32 %s323, 1
        %s6376 = smul.addr %s6375, 256
        %s6377 = scalar_lea.vmem [#allocation3], %s6376
        %s6378 = sand.u32 %s32, 1
        %s6379 = scalar_lea.sflag [#allocation6], %s6378
        %s6380 = sand.u32 %s349, 1
        %s6381 = smul.addr %s6380, 256
        %s6382 = scalar_lea.vmem [#allocation5], %s6381
        %s6383 = sand.u32 %s32, 1
        %s6384 = scalar_lea.sflag [#allocation6], %s6383
        %s6385 = sand.u32 %s375, 1
        %s6386 = smul.addr %s6385, 256
        %s6387 = scalar_lea.vmem [#allocation7], %s6386
        // Predicated region
        $region73: #{tpu_custom_call.1} parent=67 // pred_check
          %p6388 = pneg %p333
        $region74: #{tpu_custom_call.1} parent=67 // pred_check_branch
          %6390 = sbr.rel (%p6388) target = $region76
        $region75: #{tpu_custom_call.1} parent=67 // pred_region
          %s6392 = ssub.s32 4096, 4096
          %6393 = vsyncadd %s6374, %s6392
          %s6394 = smul.addr %s37, 32
          %s6395 = smul.addr %s36, 256
          %s6396 = sadd.s32 %s6394, %s6395
          %s6397 = smul.addr %s6396, 128
          %s6398 = scalar_lea.hbm %s12, %s6397
          %s6399 = sshll.u32 %s6377, 4
          %s6400 = int_to_ptr.vmem [resolvable:$true] %s6399
          %6405 = dma.vmem_to_hbm [thread:$0]  %s6400, 4096, %s6398, %s6374, 128, 128, 8
        $region76: #{tpu_custom_call.1} parent=67 // pred_fallthru
          _
        // Predicated region
        $region77: #{tpu_custom_call.1} parent=67 // pred_check
          %p6406 = pneg %p359
        $region78: #{tpu_custom_call.1} parent=67 // pred_check_branch
          %6408 = sbr.rel (%p6406) target = $region80
        $region79: #{tpu_custom_call.1} parent=67 // pred_region
          %s6410 = ssub.s32 4096, 4096
          %6411 = vsyncadd %s6379, %s6410
          %s6412 = smul.addr %s36, 32
          %s6413 = smul.addr %s6412, 128
          %s6414 = scalar_lea.hbm %s13, %s6413
          %s6415 = sshll.u32 %s6382, 4
          %s6416 = int_to_ptr.vmem [resolvable:$true] %s6415
          %6421 = dma.vmem_to_hbm [thread:$0]  %s6416, 4096, %s6414, %s6379, 128, 128, 8
        $region80: #{tpu_custom_call.1} parent=67 // pred_fallthru
          _
        // Predicated region
        $region81: #{tpu_custom_call.1} parent=67 // pred_check
          %p6422 = pneg %p385
        $region82: #{tpu_custom_call.1} parent=67 // pred_check_branch
          %6424 = sbr.rel (%p6422) target = $region84
        $region83: #{tpu_custom_call.1} parent=67 // pred_region
          %s6426 = ssub.s32 4096, 4096
          %6427 = vsyncadd %s6384, %s6426
          %s6428 = smul.addr %s36, 32
          %s6429 = smul.addr %s6428, 128
          %s6430 = scalar_lea.hbm %s14, %s6429
          %s6431 = sshll.u32 %s6387, 4
          %s6432 = int_to_ptr.vmem [resolvable:$true] %s6431
          %6437 = dma.vmem_to_hbm [thread:$0]  %s6432, 4096, %s6430, %s6384, 128, 128, 8
        $region84: #{tpu_custom_call.1} parent=67 // pred_fallthru
          _
      $region68: #{tpu_custom_call.1} parent=5 // pred_fallthru
        _
      %p6438 = scmp.le.s32.totalorder 2, %s27
      // Predicated region
      $region85: #{tpu_custom_call.1} parent=5 // pred_check
        %p6439 = pneg %p6438
      $region86: #{tpu_custom_call.1} parent=5 // pred_check_branch
        %6441 = sbr.rel (%p6439) target = $region88
      $region87: #{tpu_custom_call.1} parent=5 // pred_region
        %s6442 = ssub.s32 %s27, 2
        // Predicated region
        $region89: #{tpu_custom_call.1} parent=87 // pred_check
          %p6443 = pneg %p339
        $region90: #{tpu_custom_call.1} parent=87 // pred_check_branch
          %6445 = sbr.rel (%p6443) target = $region92
        $region91: #{tpu_custom_call.1} parent=87 // pred_region
          %s6446 = sand.u32 %s324, 1
          %s6447 = scalar_lea.sflag [#allocation4], %s6446
          %s6448 = sand.u32 %s324, 1
          %s6449 = smul.addr %s6448, 256
          %s6450 = scalar_lea.vmem [#allocation3], %s6449
          %6451 = dma.done %s6447, 4096
        $region92: #{tpu_custom_call.1} parent=87 // pred_fallthru
          _
        // Predicated region
        $region93: #{tpu_custom_call.1} parent=87 // pred_check
          %p6452 = pneg %p365
        $region94: #{tpu_custom_call.1} parent=87 // pred_check_branch
          %6454 = sbr.rel (%p6452) target = $region96
        $region95: #{tpu_custom_call.1} parent=87 // pred_region
          %s6455 = sand.u32 %s33, 1
          %s6456 = scalar_lea.sflag [#allocation6], %s6455
          %s6457 = sand.u32 %s350, 1
          %s6458 = smul.addr %s6457, 256
          %s6459 = scalar_lea.vmem [#allocation5], %s6458
          %6460 = dma.done %s6456, 4096
        $region96: #{tpu_custom_call.1} parent=87 // pred_fallthru
          _
        // Predicated region
        $region97: #{tpu_custom_call.1} parent=87 // pred_check
          %p6461 = pneg %p391
        $region98: #{tpu_custom_call.1} parent=87 // pred_check_branch
          %6463 = sbr.rel (%p6461) target = $region100
        $region99: #{tpu_custom_call.1} parent=87 // pred_region
          %s6464 = sand.u32 %s33, 1
          %s6465 = scalar_lea.sflag [#allocation6], %s6464
          %s6466 = sand.u32 %s376, 1
          %s6467 = smul.addr %s6466, 256
          %s6468 = scalar_lea.vmem [#allocation7], %s6467
          %6469 = dma.done %s6465, 4096
        $region100: #{tpu_custom_call.1} parent=87 // pred_fallthru
          _
      $region88: #{tpu_custom_call.1} parent=5 // pred_fallthru
        _
    $region6: #{tpu_custom_call.1} parent=1 // loop_footer
      %s31 = sadd.s32 1, %s27
    $region7: #{tpu_custom_call.1} parent=1 // loop_footer_branch
      %26 = sbr.rel target = $region3
    $region8: #{tpu_custom_call.1} parent=1 // loop_exit
      _
    %6470 = vsyncpa [#allocation4], 1
    %s6471 = scalar_lea.sflag [#allocation4], 1
    %6472 = vsyncpa %s6471, 1
    %6473 = vsyncpa [#allocation6], 1
    %s6474 = scalar_lea.sflag [#allocation6], 1
    %6475 = vsyncpa %s6474, 1

</llo_original>
